<compile_context>
chip_gen: v6e
topology: v6e:2x2x1
jax: 0.10.0
libtpu: 0.0.40
codegen_flags: <defaults>
</compile_context>

<pallas_src>
import functools
import math

import jax
import jax.numpy as jnp
from jax.experimental import pallas as pl
from jax.experimental.pallas import tpu as pltpu


# ----------------------------- Pallas kernels -----------------------------

def _mm_kernel(w_ref, p_ref, b_ref, o_ref, *, relu):
    # (Cout, K) bf16 @ (K, tile_m) bf16 -> f32 accumulate, + bias, optional relu.
    acc = jnp.dot(w_ref[...], p_ref[...], preferred_element_type=jnp.float32)
    acc = acc + b_ref[...]
    if relu:
        acc = jnp.maximum(acc, 0.0)
    o_ref[...] = acc


def _bottleneck_kernel(*refs, n_rb):
    # Fused conv4 (+ n_rb ResidualBlocks) + relu(deconv41) at 1x1x1 spatial size.
    # Row-vector layout keeps the output lane-dense; everything stays in VMEM.
    if n_rb:
        x_ref, w4_ref, b4_ref, wrb_ref, wd_ref, bd_ref, o_ref = refs
    else:
        x_ref, w4_ref, b4_ref, wd_ref, bd_ref, o_ref = refs
        wrb_ref = None
    h = jnp.dot(x_ref[...], w4_ref[...], preferred_element_type=jnp.float32)
    h = jnp.maximum(h + b4_ref[...], 0.0)                      # (B, 8*ic)
    for j in range(n_rb):                                      # ResidualBlock j
        r = h
        for l in range(3):                                     # conv,relu,conv,relu,conv
            h = jnp.dot(h, wrb_ref[3 * j + l],
                        preferred_element_type=jnp.float32)
            if l < 2:
                h = jnp.maximum(h, 0.0)
        h = h + r
    y = jnp.dot(h, wd_ref[...], preferred_element_type=jnp.float32) + bd_ref[...]
    o_ref[...] = jnp.maximum(y, 0.0)                           # relu(deconv41(.))


def _blend_kernel(m_ref, v_ref, s_ref, e_ref, o_ref, *, interval):
    # v_i = m_i * vec_i + (1 - m_i) * (w_i * e + (1 - w_i) * s)
    i = pl.program_id(0)
    w = (i.astype(jnp.float32) + 1.0) / float(interval + 1)
    lin = w * e_ref[...] + (1.0 - w) * s_ref[...]              # (B, 3, S)
    m = m_ref[...][:, 0]                                       # (B, 3, S)
    v = v_ref[...][:, 0]
    o_ref[...] = (m * v + (1.0 - m) * lin)[None]               # (1, B, 3, S)


# --------------------------- Pallas call wrappers --------------------------

def matmul_bias(W, P, b, *, relu):
    """out = relu?(W @ P + b[:, None]); bf16 operands, f32 accumulation."""
    Cout, K = W.shape
    _, M = P.shape
    Cp = ((Cout + 7) // 8) * 8                      # sublane-friendly Cout
    if Cp != Cout:
        W = jnp.pad(W, ((0, Cp - Cout), (0, 0)))
        b = jnp.pad(b, (0, Cp - Cout))
    Wb = W.astype(jnp.bfloat16)
    Pb = P.astype(jnp.bfloat16)
    b2 = b.reshape(Cp, 1).astype(jnp.float32)

    # Lane-dense output tile: use the full M when the patch block is small,
    # otherwise split along M in multiples of 128 (keeps blocks v5e-friendly).
    tile_m = M
    if K * M * 2 > 8 * 1024 * 1024:
        for cand in (4096, 2048, 1024, 512, 256, 128):
            if M % cand == 0 and K * cand * 2 <= 8 * 1024 * 1024:
                tile_m = cand
                break
    grid = (M // tile_m,)

    out = pl.pallas_call(
        functools.partial(_mm_kernel, relu=relu),
        out_shape=jax.ShapeDtypeStruct((Cp, M), jnp.float32),
        grid_spec=pltpu.PrefetchScalarGridSpec(
            num_scalar_prefetch=0,
            grid=grid,
            in_specs=[
                pl.BlockSpec((Cp, K), lambda i: (0, 0)),
                pl.BlockSpec((K, tile_m), lambda i: (0, i)),
                pl.BlockSpec((Cp, 1), lambda i: (0, 0)),
            ],
            out_specs=pl.BlockSpec((Cp, tile_m), lambda i: (0, i)),
        ),
        compiler_params=pltpu.CompilerParams(
            dimension_semantics=("parallel",)),
    )(Wb, Pb, b2)
    return out[:Cout] if Cp != Cout else out


def blend(masks, vecs, s, e, interval):
    B, _, D, H, W = vecs.shape                       # channels == 3 * interval
    S = D * H * W
    m4 = masks.reshape(B, interval, 3, S)            # pure reshapes, no transposes
    v4 = vecs.reshape(B, interval, 3, S)
    s2 = s.reshape(B, 3, S)
    e2 = e.reshape(B, 3, S)
    out = pl.pallas_call(
        functools.partial(_blend_kernel, interval=interval),
        out_shape=jax.ShapeDtypeStruct((interval, B, 3, S), jnp.float32),
        grid_spec=pltpu.PrefetchScalarGridSpec(
            num_scalar_prefetch=0,
            grid=(interval,),
            in_specs=[
                pl.BlockSpec((B, 1, 3, S), lambda i: (0, i, 0, 0)),
                pl.BlockSpec((B, 1, 3, S), lambda i: (0, i, 0, 0)),
                pl.BlockSpec((B, 3, S), lambda i: (0, 0, 0)),
                pl.BlockSpec((B, 3, S), lambda i: (0, 0, 0)),
            ],
            out_specs=pl.BlockSpec((1, B, 3, S), lambda i: (i, 0, 0, 0)),
        ),
        compiler_params=pltpu.CompilerParams(
            dimension_semantics=("parallel",)),
    )(m4, v4, s2, e2)
    return out.reshape(interval, B, 3, D, H, W)


# ------------------------ conv glue (im2col in bf16) ------------------------

def _im2col_3d(x, k, stride, pad):
    B, C, D, H, W = x.shape
    xp = jnp.pad(x, ((0, 0), (0, 0), (pad, pad), (pad, pad), (pad, pad)))
    oD = (D + 2 * pad - k) // stride + 1
    oH = (H + 2 * pad - k) // stride + 1
    oW = (W + 2 * pad - k) // stride + 1
    cols = []
    for kd in range(k):
        for kh in range(k):
            for kw in range(k):
                cols.append(xp[:, :,
                               kd:kd + stride * (oD - 1) + 1:stride,
                               kh:kh + stride * (oH - 1) + 1:stride,
                               kw:kw + stride * (oW - 1) + 1:stride])
    patches = jnp.stack(cols, axis=2)                 # (B, C, k^3, oD, oH, oW)
    P = patches.transpose(1, 2, 0, 3, 4, 5).reshape(C * k ** 3, B * oD * oH * oW)
    return P, (oD, oH, oW)


def conv3d(x, w, b, stride, pad, relu):
    B = x.shape[0]
    Cout, Cin, k = w.shape[0], w.shape[1], w.shape[2]
    # Patches are built (and stored) in bf16 -> halves the im2col HBM traffic.
    P, (oD, oH, oW) = _im2col_3d(x.astype(jnp.bfloat16), k, stride, pad)
    out2 = matmul_bias(w.reshape(Cout, Cin * k ** 3), P, b, relu=relu)
    return out2.reshape(Cout, B, oD, oH, oW).transpose(1, 0, 2, 3, 4)


# ConvTranspose3d(k=4,s=2,p=1) via subpixel decomposition: per output parity p
# (per dim), y[2m+p] uses original taps {3,1} (p=0) / {2,0} (p=1) at offsets
# {0,1} / {1,2} of a pad-1, k=3 window over the un-dilated input.
_PHASE_SEL = jnp.zeros((2, 3, 4), jnp.float32)
_PHASE_SEL = _PHASE_SEL.at[0, 0, 3].set(1.0).at[0, 1, 1].set(1.0)
_PHASE_SEL = _PHASE_SEL.at[1, 1, 2].set(1.0).at[1, 2, 0].set(1.0)


def conv_transpose3d(x, w_t, b, relu):
    # w_t: (Cin, Cout, 4, 4, 4) -- PyTorch ConvTranspose3d layout (output_padding=0).
    Cin, Cout, k = w_t.shape[0], w_t.shape[1], w_t.shape[2]
    assert k == 4
    phase_ws = []
    for pd in range(2):
        for ph in range(2):
            for pw in range(2):
                phase_ws.append(jnp.einsum(
                    "iodef,ad,be,cf->oiabc", w_t,
                    _PHASE_SEL[pd], _PHASE_SEL[ph], _PHASE_SEL[pw]))
    w_eff = jnp.concatenate(phase_ws, axis=0)         # (8*Cout, Cin, 3, 3, 3)
    b_eff = jnp.tile(b, 8)
    y = conv3d(x, w_eff, b_eff, 1, 1, relu=relu)      # (B, 8*Cout, N, N, N)
    B, N = y.shape[0], y.shape[2]
    y = y.reshape(B, 2, 2, 2, Cout, N, N, N)
    y = y.transpose(0, 4, 5, 1, 6, 2, 7, 3).reshape(B, Cout, 2 * N, 2 * N, 2 * N)
    return y


def bottleneck(pm, x3, rb):
    """Fused conv4 -> [3x ResidualBlock] -> relu(deconv41) (1^3 spatial)."""
    B, Cin = x3.shape[0], x3.shape[1]
    w4 = pm["conv4"]["w"]                              # (8ic, 4ic, 4, 4, 4)
    Cmid = w4.shape[0]
    wt = pm["deconv41"]["w"]                           # (8ic, 4ic, 4, 4, 4) transposed layout
    Cdec = wt.shape[1]

    # conv4 (k=4,s=2,p=1 on a 2^3 input -> 1^3): the single im2col window is the
    # whole padded 4^3 block, so it is just a reshape (no gather).
    xp = jnp.pad(x3, ((0, 0), (0, 0), (1, 1), (1, 1), (1, 1)))
    xrow = xp.reshape(B, Cin * 64)                     # (B, K4)
    w4_t = w4.reshape(Cmid, Cin * 64).T                # (K4, Cmid)
    b4 = pm["conv4"]["b"].reshape(1, Cmid)

    # deconv41 on a 1^3 input: output phase (pd,ph,pw) uses tap (1+pd,1+ph,1+pw).
    wd_t = jnp.concatenate(
        [wt[:, :, 1 + pd, 1 + ph, 1 + pw]
         for pd in range(2) for ph in range(2) for pw in range(2)],
        axis=1)                                        # (Cmid, 8*Cdec)
    bd = jnp.tile(pm["deconv41"]["b"], 8).reshape(1, 8 * Cdec)

    args = [xrow, w4_t, b4]
    n_rb = 0
    if rb:
        # pad-1 k=3 conv on a 1^3 input -> only the center tap is live (bias=False).
        wrb_t = jnp.stack([blk[l]["w"][:, :, 1, 1, 1].T
                           for blk in pm["rb"] for l in range(3)], axis=0)  # (9, Cmid, Cmid)
        args.append(wrb_t)
        n_rb = len(pm["rb"])
    args += [wd_t, bd]

    out = pl.pallas_call(
        functools.partial(_bottleneck_kernel, n_rb=n_rb),
        out_shape=jax.ShapeDtypeStruct((B, 8 * Cdec), jnp.float32),
    )(*args)
    # pixel shuffle: (B, phase*Cdec + c) -> (B, Cdec, 2, 2, 2)
    return out.reshape(B, 2, 2, 2, Cdec).transpose(0, 4, 1, 2, 3)


# ------------------------------ parameters --------------------------------

def _conv_params(key, cin, cout, k, bias=True, transposed=False):
    kw, kb = jax.random.split(key)
    fan_in = cin * k ** 3
    bound = 1.0 / math.sqrt(fan_in)
    shape = (cin, cout, k, k, k) if transposed else (cout, cin, k, k, k)
    w = jax.random.uniform(kw, shape, jnp.float32, -bound, bound)
    if bias:
        b = jax.random.uniform(kb, (cout,), jnp.float32, -bound, bound)
    else:
        b = jnp.zeros((cout,), jnp.float32)
    return {"w": w, "b": b}


def init_unet_params(key, inc, outc, ic, rb):
    keys = iter(jax.random.split(key, 64))
    p = {}
    p["conv1"] = _conv_params(next(keys), inc, ic, 4)
    p["conv2"] = _conv_params(next(keys), ic, 2 * ic, 4)
    p["conv3"] = _conv_params(next(keys), 2 * ic, 4 * ic, 4)
    p["conv4"] = _conv_params(next(keys), 4 * ic, 8 * ic, 4)
    p["rb"] = []
    if rb:
        for _ in range(3):
            blk = [_conv_params(next(keys), 8 * ic, 8 * ic, 3, bias=False)
                   for _ in range(3)]
            p["rb"].append(blk)
    p["deconv41"] = _conv_params(next(keys), 8 * ic, 4 * ic, 4, transposed=True)
    p["conv_u41"] = _conv_params(next(keys), 8 * ic, 4 * ic, 3)
    p["deconv31"] = _conv_params(next(keys), 4 * ic, 2 * ic, 4, transposed=True)
    p["conv_u31"] = _conv_params(next(keys), 4 * ic, 2 * ic, 3)
    p["deconv21"] = _conv_params(next(keys), 2 * ic, ic, 4, transposed=True)
    p["conv_u21"] = _conv_params(next(keys), 2 * ic, ic, 3)
    p["deconv11"] = _conv_params(next(keys), ic, ic // 2, 4, transposed=True)
    p["conv_u11"] = _conv_params(next(keys), ic // 2, outc, 3)
    return p


# ------------------------------ model forward ------------------------------

def unet_tail(pm, x1, rb):
    """Everything after conv1 for one U-Net (conv1 is shared/stacked outside)."""
    x2 = conv3d(x1, pm["conv2"]["w"], pm["conv2"]["b"], 2, 1, relu=True)
    x3 = conv3d(x2, pm["conv3"]["w"], pm["conv3"]["b"], 2, 1, relu=True)
    u11 = bottleneck(pm, x3, rb)                       # conv4 [+rb] + relu(deconv41)
    u11 = conv3d(jnp.concatenate([x3, u11], axis=1),
                 pm["conv_u41"]["w"], pm["conv_u41"]["b"], 1, 1, relu=True)
    u21 = conv_transpose3d(u11, pm["deconv31"]["w"], pm["deconv31"]["b"], relu=True)
    u21 = conv3d(jnp.concatenate([x2, u21], axis=1),
                 pm["conv_u31"]["w"], pm["conv_u31"]["b"], 1, 1, relu=True)
    u31 = conv_transpose3d(u21, pm["deconv21"]["w"], pm["deconv21"]["b"], relu=True)
    u31 = conv3d(jnp.concatenate([x1, u31], axis=1),
                 pm["conv_u21"]["w"], pm["conv_u21"]["b"], 1, 1, relu=True)
    u41 = conv_transpose3d(u31, pm["deconv11"]["w"], pm["deconv11"]["b"], relu=True)
    out = conv3d(u41, pm["conv_u11"]["w"], pm["conv_u11"]["b"], 1, 1, relu=False)
    return out


def tsrvfd_forward(params, s, e, interval):
    p = jnp.concatenate([s, e], axis=1)
    # Both U-Nets consume the same p: run their conv1's as ONE stacked GEMM
    # sharing a single im2col of p.
    ic = params["interp"]["conv1"]["w"].shape[0]
    w1 = jnp.concatenate([params["interp"]["conv1"]["w"],
                          params["mask"]["conv1"]["w"]], axis=0)
    b1 = jnp.concatenate([params["interp"]["conv1"]["b"],
                          params["mask"]["conv1"]["b"]], axis=0)
    x1_both = conv3d(p, w1, b1, 2, 1, relu=True)
    vecs = unet_tail(params["interp"], x1_both[:, :ic], rb=True)
    # NOTE: the PyTorch Decoder never applies its `ac` (sigmoid) in forward()
    # (that code is commented out), so masks here are raw conv outputs too.
    masks = unet_tail(params["mask"], x1_both[:, ic:], rb=False)
    v = blend(masks, vecs, s, e, interval)             # (interval, B, 3, D, H, W)
    return jnp.squeeze(v)                              # torch.squeeze(torch.stack(v))


# ---------------------------------- main -----------------------------------

if __name__ == "__main__":
    # TSRVFDwoSep(inc=2, outc=2, init_channels=8, num=1)
    inc, outc, init_channels = 2, 2, 8
    B, D, H, W = 1, 16, 16, 16                 # spatial must be /16 (4 downsamples)

    key = jax.random.PRNGKey(0)
    k1, k2, ks, ke = jax.random.split(key, 4)
    params = {
        "interp": init_unet_params(k1, 3 * inc, 3 * outc, init_channels, rb=True),
        "mask": init_unet_params(k2, 3 * inc, 3 * outc, init_channels, rb=False),
    }
    # s, e each carry 3 channels so that cat((s, e), 1) has 3*inc channels.
    s = jax.random.normal(ks, (B, 3, D, H, W), jnp.float32)
    e = jax.random.normal(ke, (B, 3, D, H, W), jnp.float32)

    fwd = jax.jit(functools.partial(tsrvfd_forward, interval=outc))
    out = fwd(params, s, e)
    jax.block_until_ready(out)
    assert out.shape == (outc, 3, D, H, W), out.shape
    print("KERNEL_OK")
</pallas_src>

<mosaic_0001>
module attributes {stable_mosaic.version = 11 : i64} {
  func.func @_mm_kernel(%arg0: i32, %arg1: memref<16x384xbf16, #tpu.memory_space<vmem>>, %arg2: memref<384x512xbf16, #tpu.memory_space<vmem>>, %arg3: memref<16x1xf32, #tpu.memory_space<vmem>>, %arg4: memref<16x512xf32, #tpu.memory_space<vmem>>) attributes {dimension_semantics = [#tpu.dimension_semantics<parallel>], iteration_bounds = array<i64: 1>, scalar_prefetch = 0 : i64, scratch_operands = 0 : i64, tpu.core_type = #tpu.core_type<tc>, window_params = [{pipeline_mode = #tpu.pipeline_mode<synchronous>, transform_indices = @transform_0, window_bounds = array<i64: 16, 384>}, {transform_indices = @transform_1, window_bounds = array<i64: 384, 512>}, {pipeline_mode = #tpu.pipeline_mode<synchronous>, transform_indices = @transform_2, window_bounds = array<i64: 16, 1>}, {transform_indices = @transform_3, window_bounds = array<i64: 16, 512>}]} {
    %c0 = arith.constant 0 : index
    %c0_0 = arith.constant 0 : index
    %0 = vector.load %arg1[%c0, %c0_0] : memref<16x384xbf16, #tpu.memory_space<vmem>>, vector<16x384xbf16>
    %c0_1 = arith.constant 0 : index
    %c0_2 = arith.constant 0 : index
    %1 = vector.load %arg2[%c0_1, %c0_2] : memref<384x512xbf16, #tpu.memory_space<vmem>>, vector<384x512xbf16>
    %cst = arith.constant dense<0.000000e+00> : vector<16x512xf32>
    %2 = tpu.matmul %0, %1, %cst {dimension_numbers = #tpu.dot_dimension_numbers<[1], [0], [0], [1], [0, 0, 1, 1], [], []>} : vector<16x384xbf16>, vector<384x512xbf16>, vector<16x512xf32> -> vector<16x512xf32>
    %c0_3 = arith.constant 0 : index
    %c0_4 = arith.constant 0 : index
    %3 = vector.load %arg3[%c0_3, %c0_4] : memref<16x1xf32, #tpu.memory_space<vmem>>, vector<16x1xf32>
    %4 = vector.broadcast %3 : vector<16x1xf32> to vector<16x512xf32>
    %5 = arith.addf %2, %4 : vector<16x512xf32>
    %cst_5 = arith.constant 0.000000e+00 : f32
    %6 = vector.broadcast %cst_5 : f32 to vector<16x512xf32>
    %7 = arith.maximumf %5, %6 : vector<16x512xf32>
    %c0_6 = arith.constant 0 : index
    %c0_7 = arith.constant 0 : index
    %8 = vector.load %arg4[%c0_6, %c0_7] : memref<16x512xf32, #tpu.memory_space<vmem>>, vector<16x512xf32>
    tpu.vector_store %arg4[%c0_6, %c0_7], %7 {strides = array<i32>} : memref<16x512xf32, #tpu.memory_space<vmem>>, vector<16x512xf32>,
    return
  }
  func.func @transform_0(%arg0: i32) -> (i32, i32) {
    %c0_i32 = arith.constant 0 : i32
    %c0_i32_0 = arith.constant 0 : i32
    %c0_i32_1 = arith.constant 0 : i32
    return %c0_i32, %c0_i32_0 : i32, i32
  }
  func.func @transform_1(%arg0: i32) -> (i32, i32) {
    %c0_i32 = arith.constant 0 : i32
    %c0_i32_0 = arith.constant 0 : i32
    return %c0_i32, %arg0 : i32, i32
  }
  func.func @transform_2(%arg0: i32) -> (i32, i32) {
    %c0_i32 = arith.constant 0 : i32
    %c0_i32_0 = arith.constant 0 : i32
    %c0_i32_1 = arith.constant 0 : i32
    return %c0_i32, %c0_i32_0 : i32, i32
  }
  func.func @transform_3(%arg0: i32) -> (i32, i32) {
    %c0_i32 = arith.constant 0 : i32
    %c0_i32_0 = arith.constant 0 : i32
    return %c0_i32, %arg0 : i32, i32
  }
}

module attributes {stable_mosaic.version = 11 : i64} {
  func.func @_mm_kernel(%arg0: i32, %arg1: memref<16x512xbf16, #tpu.memory_space<vmem>>, %arg2: memref<512x64xbf16, #tpu.memory_space<vmem>>, %arg3: memref<16x1xf32, #tpu.memory_space<vmem>>, %arg4: memref<16x64xf32, #tpu.memory_space<vmem>>) attributes {dimension_semantics = [#tpu.dimension_semantics<parallel>], iteration_bounds = array<i64: 1>, scalar_prefetch = 0 : i64, scratch_operands = 0 : i64, tpu.core_type = #tpu.core_type<tc>, window_params = [{pipeline_mode = #tpu.pipeline_mode<synchronous>, transform_indices = @transform_0, window_bounds = array<i64: 16, 512>}, {transform_indices = @transform_1, window_bounds = array<i64: 512, 64>}, {pipeline_mode = #tpu.pipeline_mode<synchronous>, transform_indices = @transform_2, window_bounds = array<i64: 16, 1>}, {transform_indices = @transform_3, window_bounds = array<i64: 16, 64>}]} {
    %c0 = arith.constant 0 : index
    %c0_0 = arith.constant 0 : index
    %0 = vector.load %arg1[%c0, %c0_0] : memref<16x512xbf16, #tpu.memory_space<vmem>>, vector<16x512xbf16>
    %c0_1 = arith.constant 0 : index
    %c0_2 = arith.constant 0 : index
    %1 = vector.load %arg2[%c0_1, %c0_2] : memref<512x64xbf16, #tpu.memory_space<vmem>>, vector<512x64xbf16>
    %cst = arith.constant dense<0.000000e+00> : vector<16x64xf32>
    %2 = tpu.matmul %0, %1, %cst {dimension_numbers = #tpu.dot_dimension_numbers<[1], [0], [0], [1], [0, 0, 1, 1], [], []>} : vector<16x512xbf16>, vector<512x64xbf16>, vector<16x64xf32> -> vector<16x64xf32>
    %c0_3 = arith.constant 0 : index
    %c0_4 = arith.constant 0 : index
    %3 = vector.load %arg3[%c0_3, %c0_4] : memref<16x1xf32, #tpu.memory_space<vmem>>, vector<16x1xf32>
    %4 = vector.broadcast %3 : vector<16x1xf32> to vector<16x64xf32>
    %5 = arith.addf %2, %4 : vector<16x64xf32>
    %cst_5 = arith.constant 0.000000e+00 : f32
    %6 = vector.broadcast %cst_5 : f32 to vector<16x64xf32>
    %7 = arith.maximumf %5, %6 : vector<16x64xf32>
    %c0_6 = arith.constant 0 : index
    %c0_7 = arith.constant 0 : index
    %8 = vector.load %arg4[%c0_6, %c0_7] : memref<16x64xf32, #tpu.memory_space<vmem>>, vector<16x64xf32>
    tpu.vector_store %arg4[%c0_6, %c0_7], %7 {strides = array<i32>} : memref<16x64xf32, #tpu.memory_space<vmem>>, vector<16x64xf32>,
    return
  }
  func.func @transform_0(%arg0: i32) -> (i32, i32) {
    %c0_i32 = arith.constant 0 : i32
    %c0_i32_0 = arith.constant 0 : i32
    %c0_i32_1 = arith.constant 0 : i32
    return %c0_i32, %c0_i32_0 : i32, i32
  }
  func.func @transform_1(%arg0: i32) -> (i32, i32) {
    %c0_i32 = arith.constant 0 : i32
    %c0_i32_0 = arith.constant 0 : i32
    return %c0_i32, %arg0 : i32, i32
  }
  func.func @transform_2(%arg0: i32) -> (i32, i32) {
    %c0_i32 = arith.constant 0 : i32
    %c0_i32_0 = arith.constant 0 : i32
    %c0_i32_1 = arith.constant 0 : i32
    return %c0_i32, %c0_i32_0 : i32, i32
  }
  func.func @transform_3(%arg0: i32) -> (i32, i32) {
    %c0_i32 = arith.constant 0 : i32
    %c0_i32_0 = arith.constant 0 : i32
    return %c0_i32, %arg0 : i32, i32
  }
}

module attributes {stable_mosaic.version = 11 : i64} {
  func.func @_mm_kernel(%arg0: i32, %arg1: memref<32x1024xbf16, #tpu.memory_space<vmem>>, %arg2: memref<1024x8xbf16, #tpu.memory_space<vmem>>, %arg3: memref<32x1xf32, #tpu.memory_space<vmem>>, %arg4: memref<32x8xf32, #tpu.memory_space<vmem>>) attributes {dimension_semantics = [#tpu.dimension_semantics<parallel>], iteration_bounds = array<i64: 1>, scalar_prefetch = 0 : i64, scratch_operands = 0 : i64, tpu.core_type = #tpu.core_type<tc>, window_params = [{pipeline_mode = #tpu.pipeline_mode<synchronous>, transform_indices = @transform_0, window_bounds = array<i64: 32, 1024>}, {transform_indices = @transform_1, window_bounds = array<i64: 1024, 8>}, {pipeline_mode = #tpu.pipeline_mode<synchronous>, transform_indices = @transform_2, window_bounds = array<i64: 32, 1>}, {transform_indices = @transform_3, window_bounds = array<i64: 32, 8>}]} {
    %c0 = arith.constant 0 : index
    %c0_0 = arith.constant 0 : index
    %0 = vector.load %arg1[%c0, %c0_0] : memref<32x1024xbf16, #tpu.memory_space<vmem>>, vector<32x1024xbf16>
    %c0_1 = arith.constant 0 : index
    %c0_2 = arith.constant 0 : index
    %1 = vector.load %arg2[%c0_1, %c0_2] : memref<1024x8xbf16, #tpu.memory_space<vmem>>, vector<1024x8xbf16>
    %cst = arith.constant dense<0.000000e+00> : vector<32x8xf32>
    %2 = tpu.matmul %0, %1, %cst {dimension_numbers = #tpu.dot_dimension_numbers<[1], [0], [0], [1], [0, 0, 1, 1], [], []>} : vector<32x1024xbf16>, vector<1024x8xbf16>, vector<32x8xf32> -> vector<32x8xf32>
    %c0_3 = arith.constant 0 : index
    %c0_4 = arith.constant 0 : index
    %3 = vector.load %arg3[%c0_3, %c0_4] : memref<32x1xf32, #tpu.memory_space<vmem>>, vector<32x1xf32>
    %4 = vector.broadcast %3 : vector<32x1xf32> to vector<32x8xf32>
    %5 = arith.addf %2, %4 : vector<32x8xf32>
    %cst_5 = arith.constant 0.000000e+00 : f32
    %6 = vector.broadcast %cst_5 : f32 to vector<32x8xf32>
    %7 = arith.maximumf %5, %6 : vector<32x8xf32>
    %c0_6 = arith.constant 0 : index
    %c0_7 = arith.constant 0 : index
    %8 = vector.load %arg4[%c0_6, %c0_7] : memref<32x8xf32, #tpu.memory_space<vmem>>, vector<32x8xf32>
    tpu.vector_store %arg4[%c0_6, %c0_7], %7 {strides = array<i32>} : memref<32x8xf32, #tpu.memory_space<vmem>>, vector<32x8xf32>,
    return
  }
  func.func @transform_0(%arg0: i32) -> (i32, i32) {
    %c0_i32 = arith.constant 0 : i32
    %c0_i32_0 = arith.constant 0 : i32
    %c0_i32_1 = arith.constant 0 : i32
    return %c0_i32, %c0_i32_0 : i32, i32
  }
  func.func @transform_1(%arg0: i32) -> (i32, i32) {
    %c0_i32 = arith.constant 0 : i32
    %c0_i32_0 = arith.constant 0 : i32
    return %c0_i32, %arg0 : i32, i32
  }
  func.func @transform_2(%arg0: i32) -> (i32, i32) {
    %c0_i32 = arith.constant 0 : i32
    %c0_i32_0 = arith.constant 0 : i32
    %c0_i32_1 = arith.constant 0 : i32
    return %c0_i32, %c0_i32_0 : i32, i32
  }
  func.func @transform_3(%arg0: i32) -> (i32, i32) {
    %c0_i32 = arith.constant 0 : i32
    %c0_i32_0 = arith.constant 0 : i32
    return %c0_i32, %arg0 : i32, i32
  }
}

module attributes {stable_mosaic.version = 11 : i64} {
  func.func @_bottleneck_kernel(%arg0: memref<1x2048xf32, #tpu.memory_space<vmem>>, %arg1: memref<2048x64xf32, #tpu.memory_space<vmem>>, %arg2: memref<1x64xf32, #tpu.memory_space<vmem>>, %arg3: memref<9x64x64xf32, #tpu.memory_space<vmem>>, %arg4: memref<64x256xf32, #tpu.memory_space<vmem>>, %arg5: memref<1x256xf32, #tpu.memory_space<vmem>>, %arg6: memref<1x256xf32, #tpu.memory_space<vmem>>) attributes {dimension_semantics = [], scalar_prefetch = 0 : i64, scratch_operands = 0 : i64, tpu.core_type = #tpu.core_type<tc>} {
    %c0 = arith.constant 0 : index
    %c0_0 = arith.constant 0 : index
    %0 = vector.load %arg0[%c0, %c0_0] : memref<1x2048xf32, #tpu.memory_space<vmem>>, vector<1x2048xf32>
    %c0_1 = arith.constant 0 : index
    %c0_2 = arith.constant 0 : index
    %1 = vector.load %arg1[%c0_1, %c0_2] : memref<2048x64xf32, #tpu.memory_space<vmem>>, vector<2048x64xf32>
    %cst = arith.constant dense<0.000000e+00> : vector<1x64xf32>
    %2 = tpu.matmul %0, %1, %cst {dimension_numbers = #tpu.dot_dimension_numbers<[1], [0], [0], [1], [0, 0, 1, 1], [], []>} : vector<1x2048xf32>, vector<2048x64xf32>, vector<1x64xf32> -> vector<1x64xf32>
    %c0_3 = arith.constant 0 : index
    %c0_4 = arith.constant 0 : index
    %3 = vector.load %arg2[%c0_3, %c0_4] : memref<1x64xf32, #tpu.memory_space<vmem>>, vector<1x64xf32>
    %4 = arith.addf %2, %3 : vector<1x64xf32>
    %cst_5 = arith.constant 0.000000e+00 : f32
    %5 = vector.broadcast %cst_5 : f32 to vector<1x64xf32>
    %6 = arith.maximumf %4, %5 : vector<1x64xf32>
    %c0_6 = arith.constant 0 : index
    %c0_7 = arith.constant 0 : index
    %c0_8 = arith.constant 0 : index
    %7 = vector.load %arg3[%c0_6, %c0_7, %c0_8] : memref<9x64x64xf32, #tpu.memory_space<vmem>>, vector<1x64x64xf32>
    %8 = vector.shape_cast %7 : vector<1x64x64xf32> to vector<64x64xf32>
    %cst_9 = arith.constant dense<0.000000e+00> : vector<1x64xf32>
    %9 = tpu.matmul %6, %8, %cst_9 {dimension_numbers = #tpu.dot_dimension_numbers<[1], [0], [0], [1], [0, 0, 1, 1], [], []>} : vector<1x64xf32>, vector<64x64xf32>, vector<1x64xf32> -> vector<1x64xf32>
    %cst_10 = arith.constant 0.000000e+00 : f32
    %10 = vector.broadcast %cst_10 : f32 to vector<1x64xf32>
    %11 = arith.maximumf %9, %10 : vector<1x64xf32>
    %c1 = arith.constant 1 : index
    %c0_11 = arith.constant 0 : index
    %c0_12 = arith.constant 0 : index
    %12 = vector.load %arg3[%c1, %c0_11, %c0_12] : memref<9x64x64xf32, #tpu.memory_space<vmem>>, vector<1x64x64xf32>
    %13 = vector.shape_cast %12 : vector<1x64x64xf32> to vector<64x64xf32>
    %cst_13 = arith.constant dense<0.000000e+00> : vector<1x64xf32>
    %14 = tpu.matmul %11, %13, %cst_13 {dimension_numbers = #tpu.dot_dimension_numbers<[1], [0], [0], [1], [0, 0, 1, 1], [], []>} : vector<1x64xf32>, vector<64x64xf32>, vector<1x64xf32> -> vector<1x64xf32>
    %cst_14 = arith.constant 0.000000e+00 : f32
    %15 = vector.broadcast %cst_14 : f32 to vector<1x64xf32>
    %16 = arith.maximumf %14, %15 : vector<1x64xf32>
    %c2 = arith.constant 2 : index
    %c0_15 = arith.constant 0 : index
    %c0_16 = arith.constant 0 : index
    %17 = vector.load %arg3[%c2, %c0_15, %c0_16] : memref<9x64x64xf32, #tpu.memory_space<vmem>>, vector<1x64x64xf32>
    %18 = vector.shape_cast %17 : vector<1x64x64xf32> to vector<64x64xf32>
    %cst_17 = arith.constant dense<0.000000e+00> : vector<1x64xf32>
    %19 = tpu.matmul %16, %18, %cst_17 {dimension_numbers = #tpu.dot_dimension_numbers<[1], [0], [0], [1], [0, 0, 1, 1], [], []>} : vector<1x64xf32>, vector<64x64xf32>, vector<1x64xf32> -> vector<1x64xf32>
    %20 = arith.addf %19, %6 : vector<1x64xf32>
    %c3 = arith.constant 3 : index
    %c0_18 = arith.constant 0 : index
    %c0_19 = arith.constant 0 : index
    %21 = vector.load %arg3[%c3, %c0_18, %c0_19] : memref<9x64x64xf32, #tpu.memory_space<vmem>>, vector<1x64x64xf32>
    %22 = vector.shape_cast %21 : vector<1x64x64xf32> to vector<64x64xf32>
    %cst_20 = arith.constant dense<0.000000e+00> : vector<1x64xf32>
    %23 = tpu.matmul %20, %22, %cst_20 {dimension_numbers = #tpu.dot_dimension_numbers<[1], [0], [0], [1], [0, 0, 1, 1], [], []>} : vector<1x64xf32>, vector<64x64xf32>, vector<1x64xf32> -> vector<1x64xf32>
    %cst_21 = arith.constant 0.000000e+00 : f32
    %24 = vector.broadcast %cst_21 : f32 to vector<1x64xf32>
    %25 = arith.maximumf %23, %24 : vector<1x64xf32>
    %c4 = arith.constant 4 : index
    %c0_22 = arith.constant 0 : index
    %c0_23 = arith.constant 0 : index
    %26 = vector.load %arg3[%c4, %c0_22, %c0_23] : memref<9x64x64xf32, #tpu.memory_space<vmem>>, vector<1x64x64xf32>
    %27 = vector.shape_cast %26 : vector<1x64x64xf32> to vector<64x64xf32>
    %cst_24 = arith.constant dense<0.000000e+00> : vector<1x64xf32>
    %28 = tpu.matmul %25, %27, %cst_24 {dimension_numbers = #tpu.dot_dimension_numbers<[1], [0], [0], [1], [0, 0, 1, 1], [], []>} : vector<1x64xf32>, vector<64x64xf32>, vector<1x64xf32> -> vector<1x64xf32>
    %cst_25 = arith.constant 0.000000e+00 : f32
    %29 = vector.broadcast %cst_25 : f32 to vector<1x64xf32>
    %30 = arith.maximumf %28, %29 : vector<1x64xf32>
    %c5 = arith.constant 5 : index
    %c0_26 = arith.constant 0 : index
    %c0_27 = arith.constant 0 : index
    %31 = vector.load %arg3[%c5, %c0_26, %c0_27] : memref<9x64x64xf32, #tpu.memory_space<vmem>>, vector<1x64x64xf32>
    %32 = vector.shape_cast %31 : vector<1x64x64xf32> to vector<64x64xf32>
    %cst_28 = arith.constant dense<0.000000e+00> : vector<1x64xf32>
    %33 = tpu.matmul %30, %32, %cst_28 {dimension_numbers = #tpu.dot_dimension_numbers<[1], [0], [0], [1], [0, 0, 1, 1], [], []>} : vector<1x64xf32>, vector<64x64xf32>, vector<1x64xf32> -> vector<1x64xf32>
    %34 = arith.addf %33, %20 : vector<1x64xf32>
    %c6 = arith.constant 6 : index
    %c0_29 = arith.constant 0 : index
    %c0_30 = arith.constant 0 : index
    %35 = vector.load %arg3[%c6, %c0_29, %c0_30] : memref<9x64x64xf32, #tpu.memory_space<vmem>>, vector<1x64x64xf32>
    %36 = vector.shape_cast %35 : vector<1x64x64xf32> to vector<64x64xf32>
    %cst_31 = arith.constant dense<0.000000e+00> : vector<1x64xf32>
    %37 = tpu.matmul %34, %36, %cst_31 {dimension_numbers = #tpu.dot_dimension_numbers<[1], [0], [0], [1], [0, 0, 1, 1], [], []>} : vector<1x64xf32>, vector<64x64xf32>, vector<1x64xf32> -> vector<1x64xf32>
    %cst_32 = arith.constant 0.000000e+00 : f32
    %38 = vector.broadcast %cst_32 : f32 to vector<1x64xf32>
    %39 = arith.maximumf %37, %38 : vector<1x64xf32>
    %c7 = arith.constant 7 : index
    %c0_33 = arith.constant 0 : index
    %c0_34 = arith.constant 0 : index
    %40 = vector.load %arg3[%c7, %c0_33, %c0_34] : memref<9x64x64xf32, #tpu.memory_space<vmem>>, vector<1x64x64xf32>
    %41 = vector.shape_cast %40 : vector<1x64x64xf32> to vector<64x64xf32>
    %cst_35 = arith.constant dense<0.000000e+00> : vector<1x64xf32>
    %42 = tpu.matmul %39, %41, %cst_35 {dimension_numbers = #tpu.dot_dimension_numbers<[1], [0], [0], [1], [0, 0, 1, 1], [], []>} : vector<1x64xf32>, vector<64x64xf32>, vector<1x64xf32> -> vector<1x64xf32>
    %cst_36 = arith.constant 0.000000e+00 : f32
    %43 = vector.broadcast %cst_36 : f32 to vector<1x64xf32>
    %44 = arith.maximumf %42, %43 : vector<1x64xf32>
    %c8 = arith.constant 8 : index
    %c0_37 = arith.constant 0 : index
    %c0_38 = arith.constant 0 : index
    %45 = vector.load %arg3[%c8, %c0_37, %c0_38] : memref<9x64x64xf32, #tpu.memory_space<vmem>>, vector<1x64x64xf32>
    %46 = vector.shape_cast %45 : vector<1x64x64xf32> to vector<64x64xf32>
    %cst_39 = arith.constant dense<0.000000e+00> : vector<1x64xf32>
    %47 = tpu.matmul %44, %46, %cst_39 {dimension_numbers = #tpu.dot_dimension_numbers<[1], [0], [0], [1], [0, 0, 1, 1], [], []>} : vector<1x64xf32>, vector<64x64xf32>, vector<1x64xf32> -> vector<1x64xf32>
    %48 = arith.addf %47, %34 : vector<1x64xf32>
    %c0_40 = arith.constant 0 : index
    %c0_41 = arith.constant 0 : index
    %49 = vector.load %arg4[%c0_40, %c0_41] : memref<64x256xf32, #tpu.memory_space<vmem>>, vector<64x256xf32>
    %cst_42 = arith.constant dense<0.000000e+00> : vector<1x256xf32>
    %50 = tpu.matmul %48, %49, %cst_42 {dimension_numbers = #tpu.dot_dimension_numbers<[1], [0], [0], [1], [0, 0, 1, 1], [], []>} : vector<1x64xf32>, vector<64x256xf32>, vector<1x256xf32> -> vector<1x256xf32>
    %c0_43 = arith.constant 0 : index
    %c0_44 = arith.constant 0 : index
    %51 = vector.load %arg5[%c0_43, %c0_44] : memref<1x256xf32, #tpu.memory_space<vmem>>, vector<1x256xf32>
    %52 = arith.addf %50, %51 : vector<1x256xf32>
    %cst_45 = arith.constant 0.000000e+00 : f32
    %53 = vector.broadcast %cst_45 : f32 to vector<1x256xf32>
    %54 = arith.maximumf %52, %53 : vector<1x256xf32>
    %c0_46 = arith.constant 0 : index
    %c0_47 = arith.constant 0 : index
    %55 = vector.load %arg6[%c0_46, %c0_47] : memref<1x256xf32, #tpu.memory_space<vmem>>, vector<1x256xf32>
    tpu.vector_store %arg6[%c0_46, %c0_47], %54 {strides = array<i32>} : memref<1x256xf32, #tpu.memory_space<vmem>>, vector<1x256xf32>,
    return
  }
}

module attributes {stable_mosaic.version = 11 : i64} {
  func.func @_mm_kernel(%arg0: i32, %arg1: memref<32x1728xbf16, #tpu.memory_space<vmem>>, %arg2: memref<1728x8xbf16, #tpu.memory_space<vmem>>, %arg3: memref<32x1xf32, #tpu.memory_space<vmem>>, %arg4: memref<32x8xf32, #tpu.memory_space<vmem>>) attributes {dimension_semantics = [#tpu.dimension_semantics<parallel>], iteration_bounds = array<i64: 1>, scalar_prefetch = 0 : i64, scratch_operands = 0 : i64, tpu.core_type = #tpu.core_type<tc>, window_params = [{pipeline_mode = #tpu.pipeline_mode<synchronous>, transform_indices = @transform_0, window_bounds = array<i64: 32, 1728>}, {transform_indices = @transform_1, window_bounds = array<i64: 1728, 8>}, {pipeline_mode = #tpu.pipeline_mode<synchronous>, transform_indices = @transform_2, window_bounds = array<i64: 32, 1>}, {transform_indices = @transform_3, window_bounds = array<i64: 32, 8>}]} {
    %c0 = arith.constant 0 : index
    %c0_0 = arith.constant 0 : index
    %0 = vector.load %arg1[%c0, %c0_0] : memref<32x1728xbf16, #tpu.memory_space<vmem>>, vector<32x1728xbf16>
    %c0_1 = arith.constant 0 : index
    %c0_2 = arith.constant 0 : index
    %1 = vector.load %arg2[%c0_1, %c0_2] : memref<1728x8xbf16, #tpu.memory_space<vmem>>, vector<1728x8xbf16>
    %cst = arith.constant dense<0.000000e+00> : vector<32x8xf32>
    %2 = tpu.matmul %0, %1, %cst {dimension_numbers = #tpu.dot_dimension_numbers<[1], [0], [0], [1], [0, 0, 1, 1], [], []>} : vector<32x1728xbf16>, vector<1728x8xbf16>, vector<32x8xf32> -> vector<32x8xf32>
    %c0_3 = arith.constant 0 : index
    %c0_4 = arith.constant 0 : index
    %3 = vector.load %arg3[%c0_3, %c0_4] : memref<32x1xf32, #tpu.memory_space<vmem>>, vector<32x1xf32>
    %4 = vector.broadcast %3 : vector<32x1xf32> to vector<32x8xf32>
    %5 = arith.addf %2, %4 : vector<32x8xf32>
    %cst_5 = arith.constant 0.000000e+00 : f32
    %6 = vector.broadcast %cst_5 : f32 to vector<32x8xf32>
    %7 = arith.maximumf %5, %6 : vector<32x8xf32>
    %c0_6 = arith.constant 0 : index
    %c0_7 = arith.constant 0 : index
    %8 = vector.load %arg4[%c0_6, %c0_7] : memref<32x8xf32, #tpu.memory_space<vmem>>, vector<32x8xf32>
    tpu.vector_store %arg4[%c0_6, %c0_7], %7 {strides = array<i32>} : memref<32x8xf32, #tpu.memory_space<vmem>>, vector<32x8xf32>,
    return
  }
  func.func @transform_0(%arg0: i32) -> (i32, i32) {
    %c0_i32 = arith.constant 0 : i32
    %c0_i32_0 = arith.constant 0 : i32
    %c0_i32_1 = arith.constant 0 : i32
    return %c0_i32, %c0_i32_0 : i32, i32
  }
  func.func @transform_1(%arg0: i32) -> (i32, i32) {
    %c0_i32 = arith.constant 0 : i32
    %c0_i32_0 = arith.constant 0 : i32
    return %c0_i32, %arg0 : i32, i32
  }
  func.func @transform_2(%arg0: i32) -> (i32, i32) {
    %c0_i32 = arith.constant 0 : i32
    %c0_i32_0 = arith.constant 0 : i32
    %c0_i32_1 = arith.constant 0 : i32
    return %c0_i32, %c0_i32_0 : i32, i32
  }
  func.func @transform_3(%arg0: i32) -> (i32, i32) {
    %c0_i32 = arith.constant 0 : i32
    %c0_i32_0 = arith.constant 0 : i32
    return %c0_i32, %arg0 : i32, i32
  }
}

module attributes {stable_mosaic.version = 11 : i64} {
  func.func @_mm_kernel(%arg0: i32, %arg1: memref<128x864xbf16, #tpu.memory_space<vmem>>, %arg2: memref<864x8xbf16, #tpu.memory_space<vmem>>, %arg3: memref<128x1xf32, #tpu.memory_space<vmem>>, %arg4: memref<128x8xf32, #tpu.memory_space<vmem>>) attributes {dimension_semantics = [#tpu.dimension_semantics<parallel>], iteration_bounds = array<i64: 1>, scalar_prefetch = 0 : i64, scratch_operands = 0 : i64, tpu.core_type = #tpu.core_type<tc>, window_params = [{pipeline_mode = #tpu.pipeline_mode<synchronous>, transform_indices = @transform_0, window_bounds = array<i64: 128, 864>}, {transform_indices = @transform_1, window_bounds = array<i64: 864, 8>}, {pipeline_mode = #tpu.pipeline_mode<synchronous>, transform_indices = @transform_2, window_bounds = array<i64: 128, 1>}, {transform_indices = @transform_3, window_bounds = array<i64: 128, 8>}]} {
    %c0 = arith.constant 0 : index
    %c0_0 = arith.constant 0 : index
    %0 = vector.load %arg1[%c0, %c0_0] : memref<128x864xbf16, #tpu.memory_space<vmem>>, vector<128x864xbf16>
    %c0_1 = arith.constant 0 : index
    %c0_2 = arith.constant 0 : index
    %1 = vector.load %arg2[%c0_1, %c0_2] : memref<864x8xbf16, #tpu.memory_space<vmem>>, vector<864x8xbf16>
    %cst = arith.constant dense<0.000000e+00> : vector<128x8xf32>
    %2 = tpu.matmul %0, %1, %cst {dimension_numbers = #tpu.dot_dimension_numbers<[1], [0], [0], [1], [0, 0, 1, 1], [], []>} : vector<128x864xbf16>, vector<864x8xbf16>, vector<128x8xf32> -> vector<128x8xf32>
    %c0_3 = arith.constant 0 : index
    %c0_4 = arith.constant 0 : index
    %3 = vector.load %arg3[%c0_3, %c0_4] : memref<128x1xf32, #tpu.memory_space<vmem>>, vector<128x1xf32>
    %4 = vector.broadcast %3 : vector<128x1xf32> to vector<128x8xf32>
    %5 = arith.addf %2, %4 : vector<128x8xf32>
    %cst_5 = arith.constant 0.000000e+00 : f32
    %6 = vector.broadcast %cst_5 : f32 to vector<128x8xf32>
    %7 = arith.maximumf %5, %6 : vector<128x8xf32>
    %c0_6 = arith.constant 0 : index
    %c0_7 = arith.constant 0 : index
    %8 = vector.load %arg4[%c0_6, %c0_7] : memref<128x8xf32, #tpu.memory_space<vmem>>, vector<128x8xf32>
    tpu.vector_store %arg4[%c0_6, %c0_7], %7 {strides = array<i32>} : memref<128x8xf32, #tpu.memory_space<vmem>>, vector<128x8xf32>,
    return
  }
  func.func @transform_0(%arg0: i32) -> (i32, i32) {
    %c0_i32 = arith.constant 0 : i32
    %c0_i32_0 = arith.constant 0 : i32
    %c0_i32_1 = arith.constant 0 : i32
    return %c0_i32, %c0_i32_0 : i32, i32
  }
  func.func @transform_1(%arg0: i32) -> (i32, i32) {
    %c0_i32 = arith.constant 0 : i32
    %c0_i32_0 = arith.constant 0 : i32
    return %c0_i32, %arg0 : i32, i32
  }
  func.func @transform_2(%arg0: i32) -> (i32, i32) {
    %c0_i32 = arith.constant 0 : i32
    %c0_i32_0 = arith.constant 0 : i32
    %c0_i32_1 = arith.constant 0 : i32
    return %c0_i32, %c0_i32_0 : i32, i32
  }
  func.func @transform_3(%arg0: i32) -> (i32, i32) {
    %c0_i32 = arith.constant 0 : i32
    %c0_i32_0 = arith.constant 0 : i32
    return %c0_i32, %arg0 : i32, i32
  }
}

module attributes {stable_mosaic.version = 11 : i64} {
  func.func @_mm_kernel(%arg0: i32, %arg1: memref<16x864xbf16, #tpu.memory_space<vmem>>, %arg2: memref<864x64xbf16, #tpu.memory_space<vmem>>, %arg3: memref<16x1xf32, #tpu.memory_space<vmem>>, %arg4: memref<16x64xf32, #tpu.memory_space<vmem>>) attributes {dimension_semantics = [#tpu.dimension_semantics<parallel>], iteration_bounds = array<i64: 1>, scalar_prefetch = 0 : i64, scratch_operands = 0 : i64, tpu.core_type = #tpu.core_type<tc>, window_params = [{pipeline_mode = #tpu.pipeline_mode<synchronous>, transform_indices = @transform_0, window_bounds = array<i64: 16, 864>}, {transform_indices = @transform_1, window_bounds = array<i64: 864, 64>}, {pipeline_mode = #tpu.pipeline_mode<synchronous>, transform_indices = @transform_2, window_bounds = array<i64: 16, 1>}, {transform_indices = @transform_3, window_bounds = array<i64: 16, 64>}]} {
    %c0 = arith.constant 0 : index
    %c0_0 = arith.constant 0 : index
    %0 = vector.load %arg1[%c0, %c0_0] : memref<16x864xbf16, #tpu.memory_space<vmem>>, vector<16x864xbf16>
    %c0_1 = arith.constant 0 : index
    %c0_2 = arith.constant 0 : index
    %1 = vector.load %arg2[%c0_1, %c0_2] : memref<864x64xbf16, #tpu.memory_space<vmem>>, vector<864x64xbf16>
    %cst = arith.constant dense<0.000000e+00> : vector<16x64xf32>
    %2 = tpu.matmul %0, %1, %cst {dimension_numbers = #tpu.dot_dimension_numbers<[1], [0], [0], [1], [0, 0, 1, 1], [], []>} : vector<16x864xbf16>, vector<864x64xbf16>, vector<16x64xf32> -> vector<16x64xf32>
    %c0_3 = arith.constant 0 : index
    %c0_4 = arith.constant 0 : index
    %3 = vector.load %arg3[%c0_3, %c0_4] : memref<16x1xf32, #tpu.memory_space<vmem>>, vector<16x1xf32>
    %4 = vector.broadcast %3 : vector<16x1xf32> to vector<16x64xf32>
    %5 = arith.addf %2, %4 : vector<16x64xf32>
    %cst_5 = arith.constant 0.000000e+00 : f32
    %6 = vector.broadcast %cst_5 : f32 to vector<16x64xf32>
    %7 = arith.maximumf %5, %6 : vector<16x64xf32>
    %c0_6 = arith.constant 0 : index
    %c0_7 = arith.constant 0 : index
    %8 = vector.load %arg4[%c0_6, %c0_7] : memref<16x64xf32, #tpu.memory_space<vmem>>, vector<16x64xf32>
    tpu.vector_store %arg4[%c0_6, %c0_7], %7 {strides = array<i32>} : memref<16x64xf32, #tpu.memory_space<vmem>>, vector<16x64xf32>,
    return
  }
  func.func @transform_0(%arg0: i32) -> (i32, i32) {
    %c0_i32 = arith.constant 0 : i32
    %c0_i32_0 = arith.constant 0 : i32
    %c0_i32_1 = arith.constant 0 : i32
    return %c0_i32, %c0_i32_0 : i32, i32
  }
  func.func @transform_1(%arg0: i32) -> (i32, i32) {
    %c0_i32 = arith.constant 0 : i32
    %c0_i32_0 = arith.constant 0 : i32
    return %c0_i32, %arg0 : i32, i32
  }
  func.func @transform_2(%arg0: i32) -> (i32, i32) {
    %c0_i32 = arith.constant 0 : i32
    %c0_i32_0 = arith.constant 0 : i32
    %c0_i32_1 = arith.constant 0 : i32
    return %c0_i32, %c0_i32_0 : i32, i32
  }
  func.func @transform_3(%arg0: i32) -> (i32, i32) {
    %c0_i32 = arith.constant 0 : i32
    %c0_i32_0 = arith.constant 0 : i32
    return %c0_i32, %arg0 : i32, i32
  }
}

module attributes {stable_mosaic.version = 11 : i64} {
  func.func @_mm_kernel(%arg0: i32, %arg1: memref<64x432xbf16, #tpu.memory_space<vmem>>, %arg2: memref<432x64xbf16, #tpu.memory_space<vmem>>, %arg3: memref<64x1xf32, #tpu.memory_space<vmem>>, %arg4: memref<64x64xf32, #tpu.memory_space<vmem>>) attributes {dimension_semantics = [#tpu.dimension_semantics<parallel>], iteration_bounds = array<i64: 1>, scalar_prefetch = 0 : i64, scratch_operands = 0 : i64, tpu.core_type = #tpu.core_type<tc>, window_params = [{pipeline_mode = #tpu.pipeline_mode<synchronous>, transform_indices = @transform_0, window_bounds = array<i64: 64, 432>}, {transform_indices = @transform_1, window_bounds = array<i64: 432, 64>}, {pipeline_mode = #tpu.pipeline_mode<synchronous>, transform_indices = @transform_2, window_bounds = array<i64: 64, 1>}, {transform_indices = @transform_3, window_bounds = array<i64: 64, 64>}]} {
    %c0 = arith.constant 0 : index
    %c0_0 = arith.constant 0 : index
    %0 = vector.load %arg1[%c0, %c0_0] : memref<64x432xbf16, #tpu.memory_space<vmem>>, vector<64x432xbf16>
    %c0_1 = arith.constant 0 : index
    %c0_2 = arith.constant 0 : index
    %1 = vector.load %arg2[%c0_1, %c0_2] : memref<432x64xbf16, #tpu.memory_space<vmem>>, vector<432x64xbf16>
    %cst = arith.constant dense<0.000000e+00> : vector<64x64xf32>
    %2 = tpu.matmul %0, %1, %cst {dimension_numbers = #tpu.dot_dimension_numbers<[1], [0], [0], [1], [0, 0, 1, 1], [], []>} : vector<64x432xbf16>, vector<432x64xbf16>, vector<64x64xf32> -> vector<64x64xf32>
    %c0_3 = arith.constant 0 : index
    %c0_4 = arith.constant 0 : index
    %3 = vector.load %arg3[%c0_3, %c0_4] : memref<64x1xf32, #tpu.memory_space<vmem>>, vector<64x1xf32>
    %4 = vector.broadcast %3 : vector<64x1xf32> to vector<64x64xf32>
    %5 = arith.addf %2, %4 : vector<64x64xf32>
    %cst_5 = arith.constant 0.000000e+00 : f32
    %6 = vector.broadcast %cst_5 : f32 to vector<64x64xf32>
    %7 = arith.maximumf %5, %6 : vector<64x64xf32>
    %c0_6 = arith.constant 0 : index
    %c0_7 = arith.constant 0 : index
    %8 = vector.load %arg4[%c0_6, %c0_7] : memref<64x64xf32, #tpu.memory_space<vmem>>, vector<64x64xf32>
    tpu.vector_store %arg4[%c0_6, %c0_7], %7 {strides = array<i32>} : memref<64x64xf32, #tpu.memory_space<vmem>>, vector<64x64xf32>,
    return
  }
  func.func @transform_0(%arg0: i32) -> (i32, i32) {
    %c0_i32 = arith.constant 0 : i32
    %c0_i32_0 = arith.constant 0 : i32
    %c0_i32_1 = arith.constant 0 : i32
    return %c0_i32, %c0_i32_0 : i32, i32
  }
  func.func @transform_1(%arg0: i32) -> (i32, i32) {
    %c0_i32 = arith.constant 0 : i32
    %c0_i32_0 = arith.constant 0 : i32
    return %c0_i32, %arg0 : i32, i32
  }
  func.func @transform_2(%arg0: i32) -> (i32, i32) {
    %c0_i32 = arith.constant 0 : i32
    %c0_i32_0 = arith.constant 0 : i32
    %c0_i32_1 = arith.constant 0 : i32
    return %c0_i32, %c0_i32_0 : i32, i32
  }
  func.func @transform_3(%arg0: i32) -> (i32, i32) {
    %c0_i32 = arith.constant 0 : i32
    %c0_i32_0 = arith.constant 0 : i32
    return %c0_i32, %arg0 : i32, i32
  }
}

module attributes {stable_mosaic.version = 11 : i64} {
  func.func @_bottleneck_kernel(%arg0: memref<1x2048xf32, #tpu.memory_space<vmem>>, %arg1: memref<2048x64xf32, #tpu.memory_space<vmem>>, %arg2: memref<1x64xf32, #tpu.memory_space<vmem>>, %arg3: memref<64x256xf32, #tpu.memory_space<vmem>>, %arg4: memref<1x256xf32, #tpu.memory_space<vmem>>, %arg5: memref<1x256xf32, #tpu.memory_space<vmem>>) attributes {dimension_semantics = [], scalar_prefetch = 0 : i64, scratch_operands = 0 : i64, tpu.core_type = #tpu.core_type<tc>} {
    %c0 = arith.constant 0 : index
    %c0_0 = arith.constant 0 : index
    %0 = vector.load %arg0[%c0, %c0_0] : memref<1x2048xf32, #tpu.memory_space<vmem>>, vector<1x2048xf32>
    %c0_1 = arith.constant 0 : index
    %c0_2 = arith.constant 0 : index
    %1 = vector.load %arg1[%c0_1, %c0_2] : memref<2048x64xf32, #tpu.memory_space<vmem>>, vector<2048x64xf32>
    %cst = arith.constant dense<0.000000e+00> : vector<1x64xf32>
    %2 = tpu.matmul %0, %1, %cst {dimension_numbers = #tpu.dot_dimension_numbers<[1], [0], [0], [1], [0, 0, 1, 1], [], []>} : vector<1x2048xf32>, vector<2048x64xf32>, vector<1x64xf32> -> vector<1x64xf32>
    %c0_3 = arith.constant 0 : index
    %c0_4 = arith.constant 0 : index
    %3 = vector.load %arg2[%c0_3, %c0_4] : memref<1x64xf32, #tpu.memory_space<vmem>>, vector<1x64xf32>
    %4 = arith.addf %2, %3 : vector<1x64xf32>
    %cst_5 = arith.constant 0.000000e+00 : f32
    %5 = vector.broadcast %cst_5 : f32 to vector<1x64xf32>
    %6 = arith.maximumf %4, %5 : vector<1x64xf32>
    %c0_6 = arith.constant 0 : index
    %c0_7 = arith.constant 0 : index
    %7 = vector.load %arg3[%c0_6, %c0_7] : memref<64x256xf32, #tpu.memory_space<vmem>>, vector<64x256xf32>
    %cst_8 = arith.constant dense<0.000000e+00> : vector<1x256xf32>
    %8 = tpu.matmul %6, %7, %cst_8 {dimension_numbers = #tpu.dot_dimension_numbers<[1], [0], [0], [1], [0, 0, 1, 1], [], []>} : vector<1x64xf32>, vector<64x256xf32>, vector<1x256xf32> -> vector<1x256xf32>
    %c0_9 = arith.constant 0 : index
    %c0_10 = arith.constant 0 : index
    %9 = vector.load %arg4[%c0_9, %c0_10] : memref<1x256xf32, #tpu.memory_space<vmem>>, vector<1x256xf32>
    %10 = arith.addf %8, %9 : vector<1x256xf32>
    %cst_11 = arith.constant 0.000000e+00 : f32
    %11 = vector.broadcast %cst_11 : f32 to vector<1x256xf32>
    %12 = arith.maximumf %10, %11 : vector<1x256xf32>
    %c0_12 = arith.constant 0 : index
    %c0_13 = arith.constant 0 : index
    %13 = vector.load %arg5[%c0_12, %c0_13] : memref<1x256xf32, #tpu.memory_space<vmem>>, vector<1x256xf32>
    tpu.vector_store %arg5[%c0_12, %c0_13], %12 {strides = array<i32>} : memref<1x256xf32, #tpu.memory_space<vmem>>, vector<1x256xf32>,
    return
  }
}

module attributes {stable_mosaic.version = 11 : i64} {
  func.func @_mm_kernel(%arg0: i32, %arg1: memref<8x432xbf16, #tpu.memory_space<vmem>>, %arg2: memref<432x512xbf16, #tpu.memory_space<vmem>>, %arg3: memref<8x1xf32, #tpu.memory_space<vmem>>, %arg4: memref<8x512xf32, #tpu.memory_space<vmem>>) attributes {dimension_semantics = [#tpu.dimension_semantics<parallel>], iteration_bounds = array<i64: 1>, scalar_prefetch = 0 : i64, scratch_operands = 0 : i64, tpu.core_type = #tpu.core_type<tc>, window_params = [{pipeline_mode = #tpu.pipeline_mode<synchronous>, transform_indices = @transform_0, window_bounds = array<i64: 8, 432>}, {transform_indices = @transform_1, window_bounds = array<i64: 432, 512>}, {pipeline_mode = #tpu.pipeline_mode<synchronous>, transform_indices = @transform_2, window_bounds = array<i64: 8, 1>}, {transform_indices = @transform_3, window_bounds = array<i64: 8, 512>}]} {
    %c0 = arith.constant 0 : index
    %c0_0 = arith.constant 0 : index
    %0 = vector.load %arg1[%c0, %c0_0] : memref<8x432xbf16, #tpu.memory_space<vmem>>, vector<8x432xbf16>
    %c0_1 = arith.constant 0 : index
    %c0_2 = arith.constant 0 : index
    %1 = vector.load %arg2[%c0_1, %c0_2] : memref<432x512xbf16, #tpu.memory_space<vmem>>, vector<432x512xbf16>
    %cst = arith.constant dense<0.000000e+00> : vector<8x512xf32>
    %2 = tpu.matmul %0, %1, %cst {dimension_numbers = #tpu.dot_dimension_numbers<[1], [0], [0], [1], [0, 0, 1, 1], [], []>} : vector<8x432xbf16>, vector<432x512xbf16>, vector<8x512xf32> -> vector<8x512xf32>
    %c0_3 = arith.constant 0 : index
    %c0_4 = arith.constant 0 : index
    %3 = vector.load %arg3[%c0_3, %c0_4] : memref<8x1xf32, #tpu.memory_space<vmem>>, vector<8x1xf32>
    %4 = vector.broadcast %3 : vector<8x1xf32> to vector<8x512xf32>
    %5 = arith.addf %2, %4 : vector<8x512xf32>
    %cst_5 = arith.constant 0.000000e+00 : f32
    %6 = vector.broadcast %cst_5 : f32 to vector<8x512xf32>
    %7 = arith.maximumf %5, %6 : vector<8x512xf32>
    %c0_6 = arith.constant 0 : index
    %c0_7 = arith.constant 0 : index
    %8 = vector.load %arg4[%c0_6, %c0_7] : memref<8x512xf32, #tpu.memory_space<vmem>>, vector<8x512xf32>
    tpu.vector_store %arg4[%c0_6, %c0_7], %7 {strides = array<i32>} : memref<8x512xf32, #tpu.memory_space<vmem>>, vector<8x512xf32>,
    return
  }
  func.func @transform_0(%arg0: i32) -> (i32, i32) {
    %c0_i32 = arith.constant 0 : i32
    %c0_i32_0 = arith.constant 0 : i32
    %c0_i32_1 = arith.constant 0 : i32
    return %c0_i32, %c0_i32_0 : i32, i32
  }
  func.func @transform_1(%arg0: i32) -> (i32, i32) {
    %c0_i32 = arith.constant 0 : i32
    %c0_i32_0 = arith.constant 0 : i32
    return %c0_i32, %arg0 : i32, i32
  }
  func.func @transform_2(%arg0: i32) -> (i32, i32) {
    %c0_i32 = arith.constant 0 : i32
    %c0_i32_0 = arith.constant 0 : i32
    %c0_i32_1 = arith.constant 0 : i32
    return %c0_i32, %c0_i32_0 : i32, i32
  }
  func.func @transform_3(%arg0: i32) -> (i32, i32) {
    %c0_i32 = arith.constant 0 : i32
    %c0_i32_0 = arith.constant 0 : i32
    return %c0_i32, %arg0 : i32, i32
  }
}

module attributes {stable_mosaic.version = 11 : i64} {
  func.func @_mm_kernel(%arg0: i32, %arg1: memref<32x216xbf16, #tpu.memory_space<vmem>>, %arg2: memref<216x512xbf16, #tpu.memory_space<vmem>>, %arg3: memref<32x1xf32, #tpu.memory_space<vmem>>, %arg4: memref<32x512xf32, #tpu.memory_space<vmem>>) attributes {dimension_semantics = [#tpu.dimension_semantics<parallel>], iteration_bounds = array<i64: 1>, scalar_prefetch = 0 : i64, scratch_operands = 0 : i64, tpu.core_type = #tpu.core_type<tc>, window_params = [{pipeline_mode = #tpu.pipeline_mode<synchronous>, transform_indices = @transform_0, window_bounds = array<i64: 32, 216>}, {transform_indices = @transform_1, window_bounds = array<i64: 216, 512>}, {pipeline_mode = #tpu.pipeline_mode<synchronous>, transform_indices = @transform_2, window_bounds = array<i64: 32, 1>}, {transform_indices = @transform_3, window_bounds = array<i64: 32, 512>}]} {
    %c0 = arith.constant 0 : index
    %c0_0 = arith.constant 0 : index
    %0 = vector.load %arg1[%c0, %c0_0] : memref<32x216xbf16, #tpu.memory_space<vmem>>, vector<32x216xbf16>
    %c0_1 = arith.constant 0 : index
    %c0_2 = arith.constant 0 : index
    %1 = vector.load %arg2[%c0_1, %c0_2] : memref<216x512xbf16, #tpu.memory_space<vmem>>, vector<216x512xbf16>
    %cst = arith.constant dense<0.000000e+00> : vector<32x512xf32>
    %2 = tpu.matmul %0, %1, %cst {dimension_numbers = #tpu.dot_dimension_numbers<[1], [0], [0], [1], [0, 0, 1, 1], [], []>} : vector<32x216xbf16>, vector<216x512xbf16>, vector<32x512xf32> -> vector<32x512xf32>
    %c0_3 = arith.constant 0 : index
    %c0_4 = arith.constant 0 : index
    %3 = vector.load %arg3[%c0_3, %c0_4] : memref<32x1xf32, #tpu.memory_space<vmem>>, vector<32x1xf32>
    %4 = vector.broadcast %3 : vector<32x1xf32> to vector<32x512xf32>
    %5 = arith.addf %2, %4 : vector<32x512xf32>
    %cst_5 = arith.constant 0.000000e+00 : f32
    %6 = vector.broadcast %cst_5 : f32 to vector<32x512xf32>
    %7 = arith.maximumf %5, %6 : vector<32x512xf32>
    %c0_6 = arith.constant 0 : index
    %c0_7 = arith.constant 0 : index
    %8 = vector.load %arg4[%c0_6, %c0_7] : memref<32x512xf32, #tpu.memory_space<vmem>>, vector<32x512xf32>
    tpu.vector_store %arg4[%c0_6, %c0_7], %7 {strides = array<i32>} : memref<32x512xf32, #tpu.memory_space<vmem>>, vector<32x512xf32>,
    return
  }
  func.func @transform_0(%arg0: i32) -> (i32, i32) {
    %c0_i32 = arith.constant 0 : i32
    %c0_i32_0 = arith.constant 0 : i32
    %c0_i32_1 = arith.constant 0 : i32
    return %c0_i32, %c0_i32_0 : i32, i32
  }
  func.func @transform_1(%arg0: i32) -> (i32, i32) {
    %c0_i32 = arith.constant 0 : i32
    %c0_i32_0 = arith.constant 0 : i32
    return %c0_i32, %arg0 : i32, i32
  }
  func.func @transform_2(%arg0: i32) -> (i32, i32) {
    %c0_i32 = arith.constant 0 : i32
    %c0_i32_0 = arith.constant 0 : i32
    %c0_i32_1 = arith.constant 0 : i32
    return %c0_i32, %c0_i32_0 : i32, i32
  }
  func.func @transform_3(%arg0: i32) -> (i32, i32) {
    %c0_i32 = arith.constant 0 : i32
    %c0_i32_0 = arith.constant 0 : i32
    return %c0_i32, %arg0 : i32, i32
  }
}

module attributes {stable_mosaic.version = 11 : i64} {
  func.func @_mm_kernel(%arg0: i32, %arg1: memref<8x108xbf16, #tpu.memory_space<vmem>>, %arg2: memref<108x4096xbf16, #tpu.memory_space<vmem>>, %arg3: memref<8x1xf32, #tpu.memory_space<vmem>>, %arg4: memref<8x4096xf32, #tpu.memory_space<vmem>>) attributes {dimension_semantics = [#tpu.dimension_semantics<parallel>], iteration_bounds = array<i64: 1>, scalar_prefetch = 0 : i64, scratch_operands = 0 : i64, tpu.core_type = #tpu.core_type<tc>, window_params = [{pipeline_mode = #tpu.pipeline_mode<synchronous>, transform_indices = @transform_0, window_bounds = array<i64: 8, 108>}, {transform_indices = @transform_1, window_bounds = array<i64: 108, 4096>}, {pipeline_mode = #tpu.pipeline_mode<synchronous>, transform_indices = @transform_2, window_bounds = array<i64: 8, 1>}, {transform_indices = @transform_3, window_bounds = array<i64: 8, 4096>}]} {
    %c0 = arith.constant 0 : index
    %c0_0 = arith.constant 0 : index
    %0 = vector.load %arg1[%c0, %c0_0] : memref<8x108xbf16, #tpu.memory_space<vmem>>, vector<8x108xbf16>
    %c0_1 = arith.constant 0 : index
    %c0_2 = arith.constant 0 : index
    %1 = vector.load %arg2[%c0_1, %c0_2] : memref<108x4096xbf16, #tpu.memory_space<vmem>>, vector<108x4096xbf16>
    %cst = arith.constant dense<0.000000e+00> : vector<8x4096xf32>
    %2 = tpu.matmul %0, %1, %cst {dimension_numbers = #tpu.dot_dimension_numbers<[1], [0], [0], [1], [0, 0, 1, 1], [], []>} : vector<8x108xbf16>, vector<108x4096xbf16>, vector<8x4096xf32> -> vector<8x4096xf32>
    %c0_3 = arith.constant 0 : index
    %c0_4 = arith.constant 0 : index
    %3 = vector.load %arg3[%c0_3, %c0_4] : memref<8x1xf32, #tpu.memory_space<vmem>>, vector<8x1xf32>
    %4 = vector.broadcast %3 : vector<8x1xf32> to vector<8x4096xf32>
    %5 = arith.addf %2, %4 : vector<8x4096xf32>
    %c0_5 = arith.constant 0 : index
    %c0_6 = arith.constant 0 : index
    %6 = vector.load %arg4[%c0_5, %c0_6] : memref<8x4096xf32, #tpu.memory_space<vmem>>, vector<8x4096xf32>
    tpu.vector_store %arg4[%c0_5, %c0_6], %5 {strides = array<i32>} : memref<8x4096xf32, #tpu.memory_space<vmem>>, vector<8x4096xf32>,
    return
  }
  func.func @transform_0(%arg0: i32) -> (i32, i32) {
    %c0_i32 = arith.constant 0 : i32
    %c0_i32_0 = arith.constant 0 : i32
    %c0_i32_1 = arith.constant 0 : i32
    return %c0_i32, %c0_i32_0 : i32, i32
  }
  func.func @transform_1(%arg0: i32) -> (i32, i32) {
    %c0_i32 = arith.constant 0 : i32
    %c0_i32_0 = arith.constant 0 : i32
    return %c0_i32, %arg0 : i32, i32
  }
  func.func @transform_2(%arg0: i32) -> (i32, i32) {
    %c0_i32 = arith.constant 0 : i32
    %c0_i32_0 = arith.constant 0 : i32
    %c0_i32_1 = arith.constant 0 : i32
    return %c0_i32, %c0_i32_0 : i32, i32
  }
  func.func @transform_3(%arg0: i32) -> (i32, i32) {
    %c0_i32 = arith.constant 0 : i32
    %c0_i32_0 = arith.constant 0 : i32
    return %c0_i32, %arg0 : i32, i32
  }
}

module attributes {stable_mosaic.version = 11 : i64} {
  func.func @_blend_kernel(%arg0: i32, %arg1: memref<1x1x3x4096xf32, #tpu.memory_space<vmem>>, %arg2: memref<1x1x3x4096xf32, #tpu.memory_space<vmem>>, %arg3: memref<1x3x4096xf32, #tpu.memory_space<vmem>>, %arg4: memref<1x3x4096xf32, #tpu.memory_space<vmem>>, %arg5: memref<1x1x3x4096xf32, #tpu.memory_space<vmem>>) attributes {dimension_semantics = [#tpu.dimension_semantics<parallel>], iteration_bounds = array<i64: 2>, scalar_prefetch = 0 : i64, scratch_operands = 0 : i64, tpu.core_type = #tpu.core_type<tc>, window_params = [{transform_indices = @transform_0, window_bounds = array<i64: 1, 1, 3, 4096>}, {transform_indices = @transform_1, window_bounds = array<i64: 1, 1, 3, 4096>}, {pipeline_mode = #tpu.pipeline_mode<synchronous>, transform_indices = @transform_2, window_bounds = array<i64: 1, 3, 4096>}, {pipeline_mode = #tpu.pipeline_mode<synchronous>, transform_indices = @transform_3, window_bounds = array<i64: 1, 3, 4096>}, {transform_indices = @transform_4, window_bounds = array<i64: 1, 1, 3, 4096>}]} {
    %0 = arith.sitofp %arg0 : i32 to f32
    %cst = arith.constant 1.000000e+00 : f32
    %1 = arith.addf %0, %cst : f32
    %cst_0 = arith.constant 3.000000e+00 : f32
    %2 = arith.divf %1, %cst_0 : f32
    %c0 = arith.constant 0 : index
    %c0_1 = arith.constant 0 : index
    %c0_2 = arith.constant 0 : index
    %3 = vector.load %arg4[%c0, %c0_1, %c0_2] : memref<1x3x4096xf32, #tpu.memory_space<vmem>>, vector<1x3x4096xf32>
    %4 = vector.broadcast %2 : f32 to vector<1x3x4096xf32>
    %5 = arith.mulf %4, %3 : vector<1x3x4096xf32>
    %cst_3 = arith.constant 1.000000e+00 : f32
    %6 = arith.subf %cst_3, %2 : f32
    %c0_4 = arith.constant 0 : index
    %c0_5 = arith.constant 0 : index
    %c0_6 = arith.constant 0 : index
    %7 = vector.load %arg3[%c0_4, %c0_5, %c0_6] : memref<1x3x4096xf32, #tpu.memory_space<vmem>>, vector<1x3x4096xf32>
    %8 = vector.broadcast %6 : f32 to vector<1x3x4096xf32>
    %9 = arith.mulf %8, %7 : vector<1x3x4096xf32>
    %10 = arith.addf %5, %9 : vector<1x3x4096xf32>
    %c0_7 = arith.constant 0 : index
    %c0_8 = arith.constant 0 : index
    %c0_9 = arith.constant 0 : index
    %c0_10 = arith.constant 0 : index
    %11 = vector.load %arg1[%c0_7, %c0_8, %c0_9, %c0_10] : memref<1x1x3x4096xf32, #tpu.memory_space<vmem>>, vector<1x1x3x4096xf32>
    %12 = vector.shape_cast %11 : vector<1x1x3x4096xf32> to vector<1x3x4096xf32>
    %c0_11 = arith.constant 0 : index
    %c0_12 = arith.constant 0 : index
    %c0_13 = arith.constant 0 : index
    %c0_14 = arith.constant 0 : index
    %13 = vector.load %arg2[%c0_11, %c0_12, %c0_13, %c0_14] : memref<1x1x3x4096xf32, #tpu.memory_space<vmem>>, vector<1x1x3x4096xf32>
    %14 = vector.shape_cast %13 : vector<1x1x3x4096xf32> to vector<1x3x4096xf32>
    %15 = arith.mulf %12, %14 : vector<1x3x4096xf32>
    %cst_15 = arith.constant 1.000000e+00 : f32
    %16 = vector.broadcast %cst_15 : f32 to vector<1x3x4096xf32>
    %17 = arith.subf %16, %12 : vector<1x3x4096xf32>
    %18 = arith.mulf %17, %10 : vector<1x3x4096xf32>
    %19 = arith.addf %15, %18 : vector<1x3x4096xf32>
    %20 = vector.shape_cast %19 : vector<1x3x4096xf32> to vector<1x1x3x4096xf32>
    %c0_16 = arith.constant 0 : index
    %c0_17 = arith.constant 0 : index
    %c0_18 = arith.constant 0 : index
    %c0_19 = arith.constant 0 : index
    %21 = vector.load %arg5[%c0_16, %c0_17, %c0_18, %c0_19] : memref<1x1x3x4096xf32, #tpu.memory_space<vmem>>, vector<1x1x3x4096xf32>
    tpu.vector_store %arg5[%c0_16, %c0_17, %c0_18, %c0_19], %20 {strides = array<i32>} : memref<1x1x3x4096xf32, #tpu.memory_space<vmem>>, vector<1x1x3x4096xf32>,
    return
  }
  func.func @transform_0(%arg0: i32) -> (i32, i32, i32, i32) {
    %c0_i32 = arith.constant 0 : i32
    %c0_i32_0 = arith.constant 0 : i32
    %c0_i32_1 = arith.constant 0 : i32
    %c0_i32_2 = arith.constant 0 : i32
    return %c0_i32, %arg0, %c0_i32_0, %c0_i32_1 : i32, i32, i32, i32
  }
  func.func @transform_1(%arg0: i32) -> (i32, i32, i32, i32) {
    %c0_i32 = arith.constant 0 : i32
    %c0_i32_0 = arith.constant 0 : i32
    %c0_i32_1 = arith.constant 0 : i32
    %c0_i32_2 = arith.constant 0 : i32
    return %c0_i32, %arg0, %c0_i32_0, %c0_i32_1 : i32, i32, i32, i32
  }
  func.func @transform_2(%arg0: i32) -> (i32, i32, i32) {
    %c0_i32 = arith.constant 0 : i32
    %c0_i32_0 = arith.constant 0 : i32
    %c0_i32_1 = arith.constant 0 : i32
    %c0_i32_2 = arith.constant 0 : i32
    return %c0_i32, %c0_i32_0, %c0_i32_1 : i32, i32, i32
  }
  func.func @transform_3(%arg0: i32) -> (i32, i32, i32) {
    %c0_i32 = arith.constant 0 : i32
    %c0_i32_0 = arith.constant 0 : i32
    %c0_i32_1 = arith.constant 0 : i32
    %c0_i32_2 = arith.constant 0 : i32
    return %c0_i32, %c0_i32_0, %c0_i32_1 : i32, i32, i32
  }
  func.func @transform_4(%arg0: i32) -> (i32, i32, i32, i32) {
    %c0_i32 = arith.constant 0 : i32
    %c0_i32_0 = arith.constant 0 : i32
    %c0_i32_1 = arith.constant 0 : i32
    %c0_i32_2 = arith.constant 0 : i32
    return %arg0, %c0_i32, %c0_i32_0, %c0_i32_1 : i32, i32, i32, i32
  }
}

</mosaic_0001>

<llo_original>
// kernel: tsrvfd_forward.22
$region0: #{tsrvfd_forward.22}
  #allocation0 [shape = 'u32[]', space=smem, size = 0x4, offset = 0x4, fixed_abs, tag = 'smem constant byte address 0x4 - core index']
  #allocation1 [shape = 'u32[144,128]{1,0:T(1,128)}', space=vmem, size = 0x12000, scoped, tag = 'internal scratch']
  %s0 = inlined_call_operand.vmem [shape: bf16[16,384], index: 0, kind: input, shape index: {}]
  %s1 = inlined_call_operand.vmem [shape: bf16[384,512], index: 1, kind: input, shape index: {}]
  %s2 = inlined_call_operand.vmem [shape: f32[16,1], index: 2, kind: input, shape index: {}]
  %s3 = inlined_call_operand.vmem [shape: f32[16,512], index: 3, kind: output, shape index: {}]
  %s4 = sld [smem:[#allocation0]]
  $region22: #{tsrvfd_forward.22} parent=0
    _
  %s6 = ssub.s32 1, %s4
  %s7 = scalar_select 0, %s6, %s4
  // Predicated region
  $region2: #{tsrvfd_forward.22} parent=0 // pred_check
    _
  $region3: #{tsrvfd_forward.22} parent=0 // pred_check_branch
    %9 = sbr.rel (0) target = $region5
  $region4: #{tsrvfd_forward.22} parent=0 // pred_region
    _
  $region5: #{tsrvfd_forward.22} parent=0 // pred_fallthru
    _
  // Predicated region
  $region6: #{tsrvfd_forward.22} parent=0 // pred_check
    _
  $region7: #{tsrvfd_forward.22} parent=0 // pred_check_branch
    %11 = sbr.rel (0) target = $region9
  $region8: #{tsrvfd_forward.22} parent=0 // pred_region
    _
  $region9: #{tsrvfd_forward.22} parent=0 // pred_fallthru
    _
  // Predicated region
  $region10: #{tsrvfd_forward.22} parent=0 // pred_check
    _
  $region11: #{tsrvfd_forward.22} parent=0 // pred_check_branch
    %13 = sbr.rel (0) target = $region13
  $region12: #{tsrvfd_forward.22} parent=0 // pred_region
    _
  $region13: #{tsrvfd_forward.22} parent=0 // pred_fallthru
    _
  %v15 = vld [vmem:[%s0] sm:$0xff]
  %v16 = vld [vmem:[%s0 + $0x8] sm:$0xf]
  %v17 = vld [vmem:[%s0 + $0xc] sm:$0xff]
  %v18 = vld [vmem:[%s0 + $0x14] sm:$0xf]
  %v19 = vld [vmem:[%s1] sm:$0xff]
  %v20 = vld [vmem:[%s1 + $0x8] sm:$0xff]
  %v21 = vld [vmem:[%s1 + $0x10] sm:$0xff]
  %v22 = vld [vmem:[%s1 + $0x18] sm:$0xff]
  %v23 = vld [vmem:[%s1 + $0x20] sm:$0xff]
  %v24 = vld [vmem:[%s1 + $0x28] sm:$0xff]
  %v25 = vld [vmem:[%s1 + $0x30] sm:$0xff]
  %v26 = vld [vmem:[%s1 + $0x38] sm:$0xff]
  %v27 = vld [vmem:[%s1 + $0x40] sm:$0xff]
  %v28 = vld [vmem:[%s1 + $0x48] sm:$0xff]
  %v29 = vld [vmem:[%s1 + $0x50] sm:$0xff]
  %v30 = vld [vmem:[%s1 + $0x58] sm:$0xff]
  %v31 = vld [vmem:[%s1 + $0x60] sm:$0xff]
  %v32 = vld [vmem:[%s1 + $0x68] sm:$0xff]
  %v33 = vld [vmem:[%s1 + $0x70] sm:$0xff]
  %v34 = vld [vmem:[%s1 + $0x78] sm:$0xff]
  %v35 = vld [vmem:[%s1 + $0x80] sm:$0xff]
  %v36 = vld [vmem:[%s1 + $0x88] sm:$0xff]
  %v37 = vld [vmem:[%s1 + $0x90] sm:$0xff]
  %v38 = vld [vmem:[%s1 + $0x98] sm:$0xff]
  %v39 = vld [vmem:[%s1 + $0xa0] sm:$0xff]
  %v40 = vld [vmem:[%s1 + $0xa8] sm:$0xff]
  %v41 = vld [vmem:[%s1 + $0xb0] sm:$0xff]
  %v42 = vld [vmem:[%s1 + $0xb8] sm:$0xff]
  %v43 = vld [vmem:[%s1 + $0xc0] sm:$0xff]
  %v44 = vld [vmem:[%s1 + $0xc8] sm:$0xff]
  %v45 = vld [vmem:[%s1 + $0xd0] sm:$0xff]
  %v46 = vld [vmem:[%s1 + $0xd8] sm:$0xff]
  %v47 = vld [vmem:[%s1 + $0xe0] sm:$0xff]
  %v48 = vld [vmem:[%s1 + $0xe8] sm:$0xff]
  %v49 = vld [vmem:[%s1 + $0xf0] sm:$0xff]
  %v50 = vld [vmem:[%s1 + $0xf8] sm:$0xff]
  %v51 = vld [vmem:[%s1 + $0x100] sm:$0xff]
  %v52 = vld [vmem:[%s1 + $0x108] sm:$0xff]
  %v53 = vld [vmem:[%s1 + $0x110] sm:$0xff]
  %v54 = vld [vmem:[%s1 + $0x118] sm:$0xff]
  %v55 = vld [vmem:[%s1 + $0x120] sm:$0xff]
  %v56 = vld [vmem:[%s1 + $0x128] sm:$0xff]
  %v57 = vld [vmem:[%s1 + $0x130] sm:$0xff]
  %v58 = vld [vmem:[%s1 + $0x138] sm:$0xff]
  %v59 = vld [vmem:[%s1 + $0x140] sm:$0xff]
  %v60 = vld [vmem:[%s1 + $0x148] sm:$0xff]
  %v61 = vld [vmem:[%s1 + $0x150] sm:$0xff]
  %v62 = vld [vmem:[%s1 + $0x158] sm:$0xff]
  %v63 = vld [vmem:[%s1 + $0x160] sm:$0xff]
  %v64 = vld [vmem:[%s1 + $0x168] sm:$0xff]
  %v65 = vld [vmem:[%s1 + $0x170] sm:$0xff]
  %v66 = vld [vmem:[%s1 + $0x178] sm:$0xff]
  %v67 = vld [vmem:[%s1 + $0x180] sm:$0xff]
  %v68 = vld [vmem:[%s1 + $0x188] sm:$0xff]
  %v69 = vld [vmem:[%s1 + $0x190] sm:$0xff]
  %v70 = vld [vmem:[%s1 + $0x198] sm:$0xff]
  %v71 = vld [vmem:[%s1 + $0x1a0] sm:$0xff]
  %v72 = vld [vmem:[%s1 + $0x1a8] sm:$0xff]
  %v73 = vld [vmem:[%s1 + $0x1b0] sm:$0xff]
  %v74 = vld [vmem:[%s1 + $0x1b8] sm:$0xff]
  %v75 = vld [vmem:[%s1 + $0x1c0] sm:$0xff]
  %v76 = vld [vmem:[%s1 + $0x1c8] sm:$0xff]
  %v77 = vld [vmem:[%s1 + $0x1d0] sm:$0xff]
  %v78 = vld [vmem:[%s1 + $0x1d8] sm:$0xff]
  %v79 = vld [vmem:[%s1 + $0x1e0] sm:$0xff]
  %v80 = vld [vmem:[%s1 + $0x1e8] sm:$0xff]
  %v81 = vld [vmem:[%s1 + $0x1f0] sm:$0xff]
  %v82 = vld [vmem:[%s1 + $0x1f8] sm:$0xff]
  %v83 = vld [vmem:[%s1 + $0x200] sm:$0xff]
  %v84 = vld [vmem:[%s1 + $0x208] sm:$0xff]
  %v85 = vld [vmem:[%s1 + $0x210] sm:$0xff]
  %v86 = vld [vmem:[%s1 + $0x218] sm:$0xff]
  %v87 = vld [vmem:[%s1 + $0x220] sm:$0xff]
  %v88 = vld [vmem:[%s1 + $0x228] sm:$0xff]
  %v89 = vld [vmem:[%s1 + $0x230] sm:$0xff]
  %v90 = vld [vmem:[%s1 + $0x238] sm:$0xff]
  %v91 = vld [vmem:[%s1 + $0x240] sm:$0xff]
  %v92 = vld [vmem:[%s1 + $0x248] sm:$0xff]
  %v93 = vld [vmem:[%s1 + $0x250] sm:$0xff]
  %v94 = vld [vmem:[%s1 + $0x258] sm:$0xff]
  %v95 = vld [vmem:[%s1 + $0x260] sm:$0xff]
  %v96 = vld [vmem:[%s1 + $0x268] sm:$0xff]
  %v97 = vld [vmem:[%s1 + $0x270] sm:$0xff]
  %v98 = vld [vmem:[%s1 + $0x278] sm:$0xff]
  %v99 = vld [vmem:[%s1 + $0x280] sm:$0xff]
  %v100 = vld [vmem:[%s1 + $0x288] sm:$0xff]
  %v101 = vld [vmem:[%s1 + $0x290] sm:$0xff]
  %v102 = vld [vmem:[%s1 + $0x298] sm:$0xff]
  %v103 = vld [vmem:[%s1 + $0x2a0] sm:$0xff]
  %v104 = vld [vmem:[%s1 + $0x2a8] sm:$0xff]
  %v105 = vld [vmem:[%s1 + $0x2b0] sm:$0xff]
  %v106 = vld [vmem:[%s1 + $0x2b8] sm:$0xff]
  %v107 = vld [vmem:[%s1 + $0x2c0] sm:$0xff]
  %v108 = vld [vmem:[%s1 + $0x2c8] sm:$0xff]
  %v109 = vld [vmem:[%s1 + $0x2d0] sm:$0xff]
  %v110 = vld [vmem:[%s1 + $0x2d8] sm:$0xff]
  %v111 = vld [vmem:[%s1 + $0x2e0] sm:$0xff]
  %v112 = vld [vmem:[%s1 + $0x2e8] sm:$0xff]
  %v113 = vld [vmem:[%s1 + $0x2f0] sm:$0xff]
  %v114 = vld [vmem:[%s1 + $0x2f8] sm:$0xff]
  %v115 = vld [vmem:[%s2] sm:$0xff]
  %v116 = vld [vmem:[%s2 + $0x8] sm:$0xff]
  %118 = vset.pattern.permute.xlu0 0
  %119 = vperm.xlu0 %118, %v115
  %v120 = vpop.permute.xlu0 %119
  %123 = vset.pattern.permute.xlu0 0
  %124 = vperm.xlu0 %123, %v116
  %v125 = vpop.permute.xlu0 %124
  %v131 = vunpack.c.l.b16 %v15
  %v132 = vunpack.c.h.b16 %v15
  %v133 = vunpack.c.l.b16 %v16
  %v134 = vunpack.c.l.b16 %v17
  %v135 = vunpack.c.h.b16 %v17
  %v136 = vunpack.c.l.b16 %v18
  %v137 = vpack.c.b16 %v134, %v131
  %v138 = vpack.c.b16 %v135, %v132
  %v139 = vpack.c.b16 %v136, %v133
  %v239 = vunpack.c.l.b16 %v19
  %v240 = vunpack.c.h.b16 %v19
  %v241 = vunpack.c.l.b16 %v20
  %v242 = vunpack.c.h.b16 %v20
  %v243 = vunpack.c.l.b16 %v21
  %v244 = vunpack.c.h.b16 %v21
  %v245 = vunpack.c.l.b16 %v22
  %v246 = vunpack.c.h.b16 %v22
  %v247 = vunpack.c.l.b16 %v23
  %v248 = vunpack.c.h.b16 %v23
  %v249 = vunpack.c.l.b16 %v24
  %v250 = vunpack.c.h.b16 %v24
  %v251 = vunpack.c.l.b16 %v25
  %v252 = vunpack.c.h.b16 %v25
  %v253 = vunpack.c.l.b16 %v26
  %v254 = vunpack.c.h.b16 %v26
  %v255 = vunpack.c.l.b16 %v27
  %v256 = vunpack.c.h.b16 %v27
  %v257 = vunpack.c.l.b16 %v28
  %v258 = vunpack.c.h.b16 %v28
  %v259 = vunpack.c.l.b16 %v29
  %v260 = vunpack.c.h.b16 %v29
  %v261 = vunpack.c.l.b16 %v30
  %v262 = vunpack.c.h.b16 %v30
  %v263 = vunpack.c.l.b16 %v31
  %v264 = vunpack.c.h.b16 %v31
  %v265 = vunpack.c.l.b16 %v32
  %v266 = vunpack.c.h.b16 %v32
  %v267 = vunpack.c.l.b16 %v33
  %v268 = vunpack.c.h.b16 %v33
  %v269 = vunpack.c.l.b16 %v34
  %v270 = vunpack.c.h.b16 %v34
  %v271 = vunpack.c.l.b16 %v35
  %v272 = vunpack.c.h.b16 %v35
  %v273 = vunpack.c.l.b16 %v36
  %v274 = vunpack.c.h.b16 %v36
  %v275 = vunpack.c.l.b16 %v37
  %v276 = vunpack.c.h.b16 %v37
  %v277 = vunpack.c.l.b16 %v38
  %v278 = vunpack.c.h.b16 %v38
  %v279 = vunpack.c.l.b16 %v39
  %v280 = vunpack.c.h.b16 %v39
  %v281 = vunpack.c.l.b16 %v40
  %v282 = vunpack.c.h.b16 %v40
  %v283 = vunpack.c.l.b16 %v41
  %v284 = vunpack.c.h.b16 %v41
  %v285 = vunpack.c.l.b16 %v42
  %v286 = vunpack.c.h.b16 %v42
  %v287 = vunpack.c.l.b16 %v43
  %v288 = vunpack.c.h.b16 %v43
  %v289 = vunpack.c.l.b16 %v44
  %v290 = vunpack.c.h.b16 %v44
  %v291 = vunpack.c.l.b16 %v45
  %v292 = vunpack.c.h.b16 %v45
  %v293 = vunpack.c.l.b16 %v46
  %v294 = vunpack.c.h.b16 %v46
  %v295 = vunpack.c.l.b16 %v47
  %v296 = vunpack.c.h.b16 %v47
  %v297 = vunpack.c.l.b16 %v48
  %v298 = vunpack.c.h.b16 %v48
  %v299 = vunpack.c.l.b16 %v49
  %v300 = vunpack.c.h.b16 %v49
  %v301 = vunpack.c.l.b16 %v50
  %v302 = vunpack.c.h.b16 %v50
  %v303 = vunpack.c.l.b16 %v51
  %v304 = vunpack.c.h.b16 %v51
  %v305 = vunpack.c.l.b16 %v52
  %v306 = vunpack.c.h.b16 %v52
  %v307 = vunpack.c.l.b16 %v53
  %v308 = vunpack.c.h.b16 %v53
  %v309 = vunpack.c.l.b16 %v54
  %v310 = vunpack.c.h.b16 %v54
  %v311 = vunpack.c.l.b16 %v55
  %v312 = vunpack.c.h.b16 %v55
  %v313 = vunpack.c.l.b16 %v56
  %v314 = vunpack.c.h.b16 %v56
  %v315 = vunpack.c.l.b16 %v57
  %v316 = vunpack.c.h.b16 %v57
  %v317 = vunpack.c.l.b16 %v58
  %v318 = vunpack.c.h.b16 %v58
  %v319 = vunpack.c.l.b16 %v59
  %v320 = vunpack.c.h.b16 %v59
  %v321 = vunpack.c.l.b16 %v60
  %v322 = vunpack.c.h.b16 %v60
  %v323 = vunpack.c.l.b16 %v61
  %v324 = vunpack.c.h.b16 %v61
  %v325 = vunpack.c.l.b16 %v62
  %v326 = vunpack.c.h.b16 %v62
  %v327 = vunpack.c.l.b16 %v63
  %v328 = vunpack.c.h.b16 %v63
  %v329 = vunpack.c.l.b16 %v64
  %v330 = vunpack.c.h.b16 %v64
  %v331 = vunpack.c.l.b16 %v65
  %v332 = vunpack.c.h.b16 %v65
  %v333 = vunpack.c.l.b16 %v66
  %v334 = vunpack.c.h.b16 %v66
  %v335 = vunpack.c.l.b16 %v67
  %v336 = vunpack.c.h.b16 %v67
  %v337 = vunpack.c.l.b16 %v68
  %v338 = vunpack.c.h.b16 %v68
  %v339 = vunpack.c.l.b16 %v69
  %v340 = vunpack.c.h.b16 %v69
  %v341 = vunpack.c.l.b16 %v70
  %v342 = vunpack.c.h.b16 %v70
  %v343 = vunpack.c.l.b16 %v71
  %v344 = vunpack.c.h.b16 %v71
  %v345 = vunpack.c.l.b16 %v72
  %v346 = vunpack.c.h.b16 %v72
  %v347 = vunpack.c.l.b16 %v73
  %v348 = vunpack.c.h.b16 %v73
  %v349 = vunpack.c.l.b16 %v74
  %v350 = vunpack.c.h.b16 %v74
  %v351 = vunpack.c.l.b16 %v75
  %v352 = vunpack.c.h.b16 %v75
  %v353 = vunpack.c.l.b16 %v76
  %v354 = vunpack.c.h.b16 %v76
  %v355 = vunpack.c.l.b16 %v77
  %v356 = vunpack.c.h.b16 %v77
  %v357 = vunpack.c.l.b16 %v78
  %v358 = vunpack.c.h.b16 %v78
  %v359 = vunpack.c.l.b16 %v79
  %v360 = vunpack.c.h.b16 %v79
  %v361 = vunpack.c.l.b16 %v80
  %v362 = vunpack.c.h.b16 %v80
  %v363 = vunpack.c.l.b16 %v81
  %v364 = vunpack.c.h.b16 %v81
  %v365 = vunpack.c.l.b16 %v82
  %v366 = vunpack.c.h.b16 %v82
  %v367 = vunpack.c.l.b16 %v83
  %v368 = vunpack.c.h.b16 %v83
  %v369 = vunpack.c.l.b16 %v84
  %v370 = vunpack.c.h.b16 %v84
  %v371 = vunpack.c.l.b16 %v85
  %v372 = vunpack.c.h.b16 %v85
  %v373 = vunpack.c.l.b16 %v86
  %v374 = vunpack.c.h.b16 %v86
  %v375 = vunpack.c.l.b16 %v87
  %v376 = vunpack.c.h.b16 %v87
  %v377 = vunpack.c.l.b16 %v88
  %v378 = vunpack.c.h.b16 %v88
  %v379 = vunpack.c.l.b16 %v89
  %v380 = vunpack.c.h.b16 %v89
  %v381 = vunpack.c.l.b16 %v90
  %v382 = vunpack.c.h.b16 %v90
  %v383 = vunpack.c.l.b16 %v91
  %v384 = vunpack.c.h.b16 %v91
  %v385 = vunpack.c.l.b16 %v92
  %v386 = vunpack.c.h.b16 %v92
  %v387 = vunpack.c.l.b16 %v93
  %v388 = vunpack.c.h.b16 %v93
  %v389 = vunpack.c.l.b16 %v94
  %v390 = vunpack.c.h.b16 %v94
  %v391 = vunpack.c.l.b16 %v95
  %v392 = vunpack.c.h.b16 %v95
  %v393 = vunpack.c.l.b16 %v96
  %v394 = vunpack.c.h.b16 %v96
  %v395 = vunpack.c.l.b16 %v97
  %v396 = vunpack.c.h.b16 %v97
  %v397 = vunpack.c.l.b16 %v98
  %v398 = vunpack.c.h.b16 %v98
  %v399 = vunpack.c.l.b16 %v99
  %v400 = vunpack.c.h.b16 %v99
  %v401 = vunpack.c.l.b16 %v100
  %v402 = vunpack.c.h.b16 %v100
  %v403 = vunpack.c.l.b16 %v101
  %v404 = vunpack.c.h.b16 %v101
  %v405 = vunpack.c.l.b16 %v102
  %v406 = vunpack.c.h.b16 %v102
  %v407 = vunpack.c.l.b16 %v103
  %v408 = vunpack.c.h.b16 %v103
  %v409 = vunpack.c.l.b16 %v104
  %v410 = vunpack.c.h.b16 %v104
  %v411 = vunpack.c.l.b16 %v105
  %v412 = vunpack.c.h.b16 %v105
  %v413 = vunpack.c.l.b16 %v106
  %v414 = vunpack.c.h.b16 %v106
  %v415 = vunpack.c.l.b16 %v107
  %v416 = vunpack.c.h.b16 %v107
  %v417 = vunpack.c.l.b16 %v108
  %v418 = vunpack.c.h.b16 %v108
  %v419 = vunpack.c.l.b16 %v109
  %v420 = vunpack.c.h.b16 %v109
  %v421 = vunpack.c.l.b16 %v110
  %v422 = vunpack.c.h.b16 %v110
  %v423 = vunpack.c.l.b16 %v111
  %v424 = vunpack.c.h.b16 %v111
  %v425 = vunpack.c.l.b16 %v112
  %v426 = vunpack.c.h.b16 %v112
  %v427 = vunpack.c.l.b16 %v113
  %v428 = vunpack.c.h.b16 %v113
  %v429 = vunpack.c.l.b16 %v114
  %v430 = vunpack.c.h.b16 %v114
  %v431 = vpack.c.b16 %v243, %v239
  %v432 = vpack.c.b16 %v244, %v240
  %v433 = vpack.c.b16 %v245, %v241
  %v434 = vpack.c.b16 %v246, %v242
  %v435 = vpack.c.b16 %v251, %v247
  %v436 = vpack.c.b16 %v252, %v248
  %v437 = vpack.c.b16 %v253, %v249
  %v438 = vpack.c.b16 %v254, %v250
  %v439 = vpack.c.b16 %v259, %v255
  %v440 = vpack.c.b16 %v260, %v256
  %v441 = vpack.c.b16 %v261, %v257
  %v442 = vpack.c.b16 %v262, %v258
  %v443 = vpack.c.b16 %v267, %v263
  %v444 = vpack.c.b16 %v268, %v264
  %v445 = vpack.c.b16 %v269, %v265
  %v446 = vpack.c.b16 %v270, %v266
  %v447 = vpack.c.b16 %v275, %v271
  %v448 = vpack.c.b16 %v276, %v272
  %v449 = vpack.c.b16 %v277, %v273
  %v450 = vpack.c.b16 %v278, %v274
  %v451 = vpack.c.b16 %v283, %v279
  %v452 = vpack.c.b16 %v284, %v280
  %v453 = vpack.c.b16 %v285, %v281
  %v454 = vpack.c.b16 %v286, %v282
  %v455 = vpack.c.b16 %v291, %v287
  %v456 = vpack.c.b16 %v292, %v288
  %v457 = vpack.c.b16 %v293, %v289
  %v458 = vpack.c.b16 %v294, %v290
  %v459 = vpack.c.b16 %v299, %v295
  %v460 = vpack.c.b16 %v300, %v296
  %v461 = vpack.c.b16 %v301, %v297
  %v462 = vpack.c.b16 %v302, %v298
  %v463 = vpack.c.b16 %v307, %v303
  %v464 = vpack.c.b16 %v308, %v304
  %v465 = vpack.c.b16 %v309, %v305
  %v466 = vpack.c.b16 %v310, %v306
  %v467 = vpack.c.b16 %v315, %v311
  %v468 = vpack.c.b16 %v316, %v312
  %v469 = vpack.c.b16 %v317, %v313
  %v470 = vpack.c.b16 %v318, %v314
  %v471 = vpack.c.b16 %v323, %v319
  %v472 = vpack.c.b16 %v324, %v320
  %v473 = vpack.c.b16 %v325, %v321
  %v474 = vpack.c.b16 %v326, %v322
  %v475 = vpack.c.b16 %v331, %v327
  %v476 = vpack.c.b16 %v332, %v328
  %v477 = vpack.c.b16 %v333, %v329
  %v478 = vpack.c.b16 %v334, %v330
  %v479 = vpack.c.b16 %v339, %v335
  %v480 = vpack.c.b16 %v340, %v336
  %v481 = vpack.c.b16 %v341, %v337
  %v482 = vpack.c.b16 %v342, %v338
  %v483 = vpack.c.b16 %v347, %v343
  %v484 = vpack.c.b16 %v348, %v344
  %v485 = vpack.c.b16 %v349, %v345
  %v486 = vpack.c.b16 %v350, %v346
  %v487 = vpack.c.b16 %v355, %v351
  %v488 = vpack.c.b16 %v356, %v352
  %v489 = vpack.c.b16 %v357, %v353
  %v490 = vpack.c.b16 %v358, %v354
  %v491 = vpack.c.b16 %v363, %v359
  %v492 = vpack.c.b16 %v364, %v360
  %v493 = vpack.c.b16 %v365, %v361
  %v494 = vpack.c.b16 %v366, %v362
  %v495 = vpack.c.b16 %v371, %v367
  %v496 = vpack.c.b16 %v372, %v368
  %v497 = vpack.c.b16 %v373, %v369
  %v498 = vpack.c.b16 %v374, %v370
  %v499 = vpack.c.b16 %v379, %v375
  %v500 = vpack.c.b16 %v380, %v376
  %v501 = vpack.c.b16 %v381, %v377
  %v502 = vpack.c.b16 %v382, %v378
  %v503 = vpack.c.b16 %v387, %v383
  %v504 = vpack.c.b16 %v388, %v384
  %v505 = vpack.c.b16 %v389, %v385
  %v506 = vpack.c.b16 %v390, %v386
  %v507 = vpack.c.b16 %v395, %v391
  %v508 = vpack.c.b16 %v396, %v392
  %v509 = vpack.c.b16 %v397, %v393
  %v510 = vpack.c.b16 %v398, %v394
  %v511 = vpack.c.b16 %v403, %v399
  %v512 = vpack.c.b16 %v404, %v400
  %v513 = vpack.c.b16 %v405, %v401
  %v514 = vpack.c.b16 %v406, %v402
  %v515 = vpack.c.b16 %v411, %v407
  %v516 = vpack.c.b16 %v412, %v408
  %v517 = vpack.c.b16 %v413, %v409
  %v518 = vpack.c.b16 %v414, %v410
  %v519 = vpack.c.b16 %v419, %v415
  %v520 = vpack.c.b16 %v420, %v416
  %v521 = vpack.c.b16 %v421, %v417
  %v522 = vpack.c.b16 %v422, %v418
  %v523 = vpack.c.b16 %v427, %v423
  %v524 = vpack.c.b16 %v428, %v424
  %v525 = vpack.c.b16 %v429, %v425
  %v526 = vpack.c.b16 %v430, %v426
  %623 = vmatprep.subr.bf16.mxu0 %v460
  %624 = vmatpush1.bf16.msra.mxu0 %v459
  %625 = vmatprep.subr.bf16.mxu0 %v456
  %626 = vmatpush1.bf16.msra.mxu0 %v455
  %627 = vmatprep.subr.bf16.mxu0 %v452
  %628 = vmatpush1.bf16.msra.mxu0 %v451
  %629 = vmatprep.subr.bf16.mxu0 %v448
  %630 = vmatpush1.bf16.msra.mxu0 %v447
  %631 = vmatprep.subr.bf16.mxu0 %v444
  %632 = vmatpush1.bf16.msra.mxu0 %v443
  %633 = vmatprep.subr.bf16.mxu0 %v440
  %634 = vmatpush1.bf16.msra.mxu0 %v439
  %635 = vmatprep.subr.bf16.mxu0 %v436
  %636 = vmatpush1.bf16.msra.mxu0 %v435
  %637 = vmatprep.subr.bf16.mxu0 %v432
  %638 = vmatpush1.bf16.msra.mxu0 %v431
  %639 = vmatprep.subr.bf16.mxu0 %v492
  %640 = vmatpush2.bf16.msra.mxu0 %v491
  %641 = vmatprep.subr.bf16.mxu0 %v488
  %642 = vmatpush2.bf16.msra.mxu0 %v487
  %643 = vmatprep.subr.bf16.mxu0 %v484
  %644 = vmatpush2.bf16.msra.mxu0 %v483
  %645 = vmatprep.subr.bf16.mxu0 %v480
  %646 = vmatpush2.bf16.msra.mxu0 %v479
  %647 = vmatprep.subr.bf16.mxu0 %v476
  %648 = vmatpush2.bf16.msra.mxu0 %v475
  %649 = vmatprep.subr.bf16.mxu0 %v472
  %650 = vmatpush2.bf16.msra.mxu0 %v471
  %651 = vmatprep.subr.bf16.mxu0 %v468
  %652 = vmatpush2.bf16.msra.mxu0 %v467
  %653 = vmatprep.subr.bf16.mxu0 %v464
  %654 = vmatpush2.bf16.msra.mxu0 %v463
  %655 = vmatprep.mubr.bf16.mxu0 %v138
  %656 = vmatmul.mubr.bf16.gmra.mxu0 %v137
  %v657 = vpop.f32.mrf.mxu0
  %v658 = vadd.f32 %v120, %v657
  %v659 = vpop.f32.mrf.mxu0
  %v660 = vadd.f32 %v120, %v659
  %v661 = vpop.f32.mrf.mxu0
  %v662 = vadd.f32 %v125, %v661
  %v663 = vpop.f32.mrf.mxu0
  %v664 = vadd.f32 %v125, %v663
  %665 = vdwg.mxu0
  %666 = vmatprep.subr.bf16.mxu0 %v524
  %667 = vmatpush1.bf16.msra.mxu0 %v523
  %668 = vmatprep.subr.bf16.mxu0 %v520
  %669 = vmatpush1.bf16.msra.mxu0 %v519
  %670 = vmatprep.subr.bf16.mxu0 %v516
  %671 = vmatpush1.bf16.msra.mxu0 %v515
  %672 = vmatprep.subr.bf16.mxu0 %v512
  %673 = vmatpush1.bf16.msra.mxu0 %v511
  %674 = vmatprep.subr.bf16.mxu0 %v508
  %675 = vmatpush1.bf16.msra.mxu0 %v507
  %676 = vmatprep.subr.bf16.mxu0 %v504
  %677 = vmatpush1.bf16.msra.mxu0 %v503
  %678 = vmatprep.subr.bf16.mxu0 %v500
  %679 = vmatpush1.bf16.msra.mxu0 %v499
  %680 = vmatprep.subr.bf16.mxu0 %v496
  %681 = vmatpush1.bf16.msra.mxu0 %v495
  %682 = vmatprep.subr.bf16.mxu0 0
  %683 = vmatpush2.bf16.msra.mxu0 0
  %684 = vmatprep.subr.bf16.mxu0 0
  %685 = vmatpush2.bf16.msra.mxu0 0
  %686 = vmatprep.subr.bf16.mxu0 0
  %687 = vmatpush2.bf16.msra.mxu0 0
  %688 = vmatprep.subr.bf16.mxu0 0
  %689 = vmatpush2.bf16.msra.mxu0 0
  %690 = vmatprep.subr.bf16.mxu0 0
  %691 = vmatpush2.bf16.msra.mxu0 0
  %692 = vmatprep.subr.bf16.mxu0 0
  %693 = vmatpush2.bf16.msra.mxu0 0
  %694 = vmatprep.subr.bf16.mxu0 0
  %695 = vmatpush2.bf16.msra.mxu0 0
  %696 = vmatprep.subr.bf16.mxu0 0
  %697 = vmatpush2.bf16.msra.mxu0 0
  %698 = vmatprep.mubr.bf16.mxu0 0
  %699 = vmatmul.mubr.bf16.gmra.mxu0 %v139
  %v700 = vpop.f32.mrf.mxu0
  %v701 = vadd.f32 %v658, %v700
  %v702 = vpop.f32.mrf.mxu0
  %v703 = vadd.f32 %v660, %v702
  %v704 = vpop.f32.mrf.mxu0
  %v705 = vadd.f32 %v662, %v704
  %v706 = vpop.f32.mrf.mxu0
  %v707 = vadd.f32 %v664, %v706
  %708 = vdwg.mxu0
  %709 = vmatprep.subr.bf16.mxu0 %v462
  %710 = vmatpush1.bf16.msra.mxu0 %v461
  %711 = vmatprep.subr.bf16.mxu0 %v458
  %712 = vmatpush1.bf16.msra.mxu0 %v457
  %713 = vmatprep.subr.bf16.mxu0 %v454
  %714 = vmatpush1.bf16.msra.mxu0 %v453
  %715 = vmatprep.subr.bf16.mxu0 %v450
  %716 = vmatpush1.bf16.msra.mxu0 %v449
  %717 = vmatprep.subr.bf16.mxu0 %v446
  %718 = vmatpush1.bf16.msra.mxu0 %v445
  %719 = vmatprep.subr.bf16.mxu0 %v442
  %720 = vmatpush1.bf16.msra.mxu0 %v441
  %721 = vmatprep.subr.bf16.mxu0 %v438
  %722 = vmatpush1.bf16.msra.mxu0 %v437
  %723 = vmatprep.subr.bf16.mxu0 %v434
  %724 = vmatpush1.bf16.msra.mxu0 %v433
  %725 = vmatprep.subr.bf16.mxu0 %v494
  %726 = vmatpush2.bf16.msra.mxu0 %v493
  %727 = vmatprep.subr.bf16.mxu0 %v490
  %728 = vmatpush2.bf16.msra.mxu0 %v489
  %729 = vmatprep.subr.bf16.mxu0 %v486
  %730 = vmatpush2.bf16.msra.mxu0 %v485
  %731 = vmatprep.subr.bf16.mxu0 %v482
  %732 = vmatpush2.bf16.msra.mxu0 %v481
  %733 = vmatprep.subr.bf16.mxu0 %v478
  %734 = vmatpush2.bf16.msra.mxu0 %v477
  %735 = vmatprep.subr.bf16.mxu0 %v474
  %736 = vmatpush2.bf16.msra.mxu0 %v473
  %737 = vmatprep.subr.bf16.mxu0 %v470
  %738 = vmatpush2.bf16.msra.mxu0 %v469
  %739 = vmatprep.subr.bf16.mxu0 %v466
  %740 = vmatpush2.bf16.msra.mxu0 %v465
  %741 = vmatprep.mubr.bf16.mxu0 %v138
  %742 = vmatmul.mubr.bf16.gmra.mxu0 %v137
  %v743 = vpop.f32.mrf.mxu0
  %v744 = vadd.f32 %v120, %v743
  %v745 = vpop.f32.mrf.mxu0
  %v746 = vadd.f32 %v120, %v745
  %v747 = vpop.f32.mrf.mxu0
  %v748 = vadd.f32 %v125, %v747
  %v749 = vpop.f32.mrf.mxu0
  %v750 = vadd.f32 %v125, %v749
  %751 = vdwg.mxu0
  %752 = vmatprep.subr.bf16.mxu0 %v526
  %753 = vmatpush1.bf16.msra.mxu0 %v525
  %754 = vmatprep.subr.bf16.mxu0 %v522
  %755 = vmatpush1.bf16.msra.mxu0 %v521
  %756 = vmatprep.subr.bf16.mxu0 %v518
  %757 = vmatpush1.bf16.msra.mxu0 %v517
  %758 = vmatprep.subr.bf16.mxu0 %v514
  %759 = vmatpush1.bf16.msra.mxu0 %v513
  %760 = vmatprep.subr.bf16.mxu0 %v510
  %761 = vmatpush1.bf16.msra.mxu0 %v509
  %762 = vmatprep.subr.bf16.mxu0 %v506
  %763 = vmatpush1.bf16.msra.mxu0 %v505
  %764 = vmatprep.subr.bf16.mxu0 %v502
  %765 = vmatpush1.bf16.msra.mxu0 %v501
  %766 = vmatprep.subr.bf16.mxu0 %v498
  %767 = vmatpush1.bf16.msra.mxu0 %v497
  %768 = vmatprep.subr.bf16.mxu0 0
  %769 = vmatpush2.bf16.msra.mxu0 0
  %770 = vmatprep.subr.bf16.mxu0 0
  %771 = vmatpush2.bf16.msra.mxu0 0
  %772 = vmatprep.subr.bf16.mxu0 0
  %773 = vmatpush2.bf16.msra.mxu0 0
  %774 = vmatprep.subr.bf16.mxu0 0
  %775 = vmatpush2.bf16.msra.mxu0 0
  %776 = vmatprep.subr.bf16.mxu0 0
  %777 = vmatpush2.bf16.msra.mxu0 0
  %778 = vmatprep.subr.bf16.mxu0 0
  %779 = vmatpush2.bf16.msra.mxu0 0
  %780 = vmatprep.subr.bf16.mxu0 0
  %781 = vmatpush2.bf16.msra.mxu0 0
  %782 = vmatprep.subr.bf16.mxu0 0
  %783 = vmatpush2.bf16.msra.mxu0 0
  %784 = vmatprep.mubr.bf16.mxu0 0
  %785 = vmatmul.mubr.bf16.gmra.mxu0 %v139
  %v786 = vpop.f32.mrf.mxu0
  %v787 = vadd.f32 %v744, %v786
  %v788 = vpop.f32.mrf.mxu0
  %v789 = vadd.f32 %v746, %v788
  %v790 = vpop.f32.mrf.mxu0
  %v791 = vadd.f32 %v748, %v790
  %v792 = vpop.f32.mrf.mxu0
  %v793 = vadd.f32 %v750, %v792
  %794 = vdwg.mxu0
  %v795 = vmax.f32 %v701, 0.0
  %v796 = vmax.f32 %v703, 0.0
  %v797 = vmax.f32 %v787, 0.0
  %v798 = vmax.f32 %v789, 0.0
  %v799 = vmax.f32 %v705, 0.0
  %v800 = vmax.f32 %v707, 0.0
  %v801 = vmax.f32 %v791, 0.0
  %v802 = vmax.f32 %v793, 0.0
  %803 = vst [vmem:[%s3] sm:$0xff] %v795
  %804 = vst [vmem:[%s3 + $0x8] sm:$0xff] %v796
  %805 = vst [vmem:[%s3 + $0x10] sm:$0xff] %v797
  %806 = vst [vmem:[%s3 + $0x18] sm:$0xff] %v798
  %807 = vst [vmem:[%s3 + $0x20] sm:$0xff] %v799
  %808 = vst [vmem:[%s3 + $0x28] sm:$0xff] %v800
  %809 = vst [vmem:[%s3 + $0x30] sm:$0xff] %v801
  %810 = vst [vmem:[%s3 + $0x38] sm:$0xff] %v802
  // Predicated region
  $region14: #{tsrvfd_forward.22} parent=0 // pred_check
    _
  $region15: #{tsrvfd_forward.22} parent=0 // pred_check_branch
    %812 = sbr.rel (0) target = $region17
  $region16: #{tsrvfd_forward.22} parent=0 // pred_region
    _
  $region17: #{tsrvfd_forward.22} parent=0 // pred_fallthru
    _
  // Predicated region
  $region18: #{tsrvfd_forward.22} parent=0 // pred_check
    _
  $region19: #{tsrvfd_forward.22} parent=0 // pred_check_branch
    %814 = sbr.rel (0) target = $region21
  $region20: #{tsrvfd_forward.22} parent=0 // pred_region
    _
  $region21: #{tsrvfd_forward.22} parent=0 // pred_fallthru
    _

// kernel: tsrvfd_forward.23
$region0: #{tsrvfd_forward.23}
  #allocation0 [shape = 'u32[]', space=smem, size = 0x4, offset = 0x4, fixed_abs, tag = 'smem constant byte address 0x4 - core index']
  #allocation1 [shape = 'u32[144,128]{1,0:T(1,128)}', space=vmem, size = 0x12000, scoped, tag = 'internal scratch']
  %s0 = inlined_call_operand.vmem [shape: bf16[16,512], index: 0, kind: input, shape index: {}]
  %s1 = inlined_call_operand.vmem [shape: bf16[512,64], index: 1, kind: input, shape index: {}]
  %s2 = inlined_call_operand.vmem [shape: f32[16,1], index: 2, kind: input, shape index: {}]
  %s3 = inlined_call_operand.vmem [shape: f32[16,64], index: 3, kind: output, shape index: {}]
  %s4 = sld [smem:[#allocation0]]
  $region22: #{tsrvfd_forward.23} parent=0
    _
  %s6 = ssub.s32 1, %s4
  %s7 = scalar_select 0, %s6, %s4
  // Predicated region
  $region2: #{tsrvfd_forward.23} parent=0 // pred_check
    _
  $region3: #{tsrvfd_forward.23} parent=0 // pred_check_branch
    %9 = sbr.rel (0) target = $region5
  $region4: #{tsrvfd_forward.23} parent=0 // pred_region
    _
  $region5: #{tsrvfd_forward.23} parent=0 // pred_fallthru
    _
  // Predicated region
  $region6: #{tsrvfd_forward.23} parent=0 // pred_check
    _
  $region7: #{tsrvfd_forward.23} parent=0 // pred_check_branch
    %11 = sbr.rel (0) target = $region9
  $region8: #{tsrvfd_forward.23} parent=0 // pred_region
    _
  $region9: #{tsrvfd_forward.23} parent=0 // pred_fallthru
    _
  // Predicated region
  $region10: #{tsrvfd_forward.23} parent=0 // pred_check
    _
  $region11: #{tsrvfd_forward.23} parent=0 // pred_check_branch
    %13 = sbr.rel (0) target = $region13
  $region12: #{tsrvfd_forward.23} parent=0 // pred_region
    _
  $region13: #{tsrvfd_forward.23} parent=0 // pred_fallthru
    _
  %v15 = vld [vmem:[%s0] sm:$0xff]
  %v16 = vld [vmem:[%s0 + $0x8] sm:$0xff]
  %v17 = vld [vmem:[%s0 + $0x10] sm:$0xff]
  %v18 = vld [vmem:[%s0 + $0x18] sm:$0xff]
  %v19 = vld [vmem:[%s1] sm:$0xf]
  %v20 = vld [vmem:[%s1 + $0x4] sm:$0xf]
  %v21 = vld [vmem:[%s1 + $0x8] sm:$0xf]
  %v22 = vld [vmem:[%s1 + $0xc] sm:$0xf]
  %v23 = vld [vmem:[%s1 + $0x10] sm:$0xf]
  %v24 = vld [vmem:[%s1 + $0x14] sm:$0xf]
  %v25 = vld [vmem:[%s1 + $0x18] sm:$0xf]
  %v26 = vld [vmem:[%s1 + $0x1c] sm:$0xf]
  %v27 = vld [vmem:[%s1 + $0x20] sm:$0xf]
  %v28 = vld [vmem:[%s1 + $0x24] sm:$0xf]
  %v29 = vld [vmem:[%s1 + $0x28] sm:$0xf]
  %v30 = vld [vmem:[%s1 + $0x2c] sm:$0xf]
  %v31 = vld [vmem:[%s1 + $0x30] sm:$0xf]
  %v32 = vld [vmem:[%s1 + $0x34] sm:$0xf]
  %v33 = vld [vmem:[%s1 + $0x38] sm:$0xf]
  %v34 = vld [vmem:[%s1 + $0x3c] sm:$0xf]
  %v35 = vld [vmem:[%s1 + $0x40] sm:$0xf]
  %v36 = vld [vmem:[%s1 + $0x44] sm:$0xf]
  %v37 = vld [vmem:[%s1 + $0x48] sm:$0xf]
  %v38 = vld [vmem:[%s1 + $0x4c] sm:$0xf]
  %v39 = vld [vmem:[%s1 + $0x50] sm:$0xf]
  %v40 = vld [vmem:[%s1 + $0x54] sm:$0xf]
  %v41 = vld [vmem:[%s1 + $0x58] sm:$0xf]
  %v42 = vld [vmem:[%s1 + $0x5c] sm:$0xf]
  %v43 = vld [vmem:[%s1 + $0x60] sm:$0xf]
  %v44 = vld [vmem:[%s1 + $0x64] sm:$0xf]
  %v45 = vld [vmem:[%s1 + $0x68] sm:$0xf]
  %v46 = vld [vmem:[%s1 + $0x6c] sm:$0xf]
  %v47 = vld [vmem:[%s1 + $0x70] sm:$0xf]
  %v48 = vld [vmem:[%s1 + $0x74] sm:$0xf]
  %v49 = vld [vmem:[%s1 + $0x78] sm:$0xf]
  %v50 = vld [vmem:[%s1 + $0x7c] sm:$0xf]
  %v51 = vld [vmem:[%s1 + $0x80] sm:$0xf]
  %v52 = vld [vmem:[%s1 + $0x84] sm:$0xf]
  %v53 = vld [vmem:[%s1 + $0x88] sm:$0xf]
  %v54 = vld [vmem:[%s1 + $0x8c] sm:$0xf]
  %v55 = vld [vmem:[%s1 + $0x90] sm:$0xf]
  %v56 = vld [vmem:[%s1 + $0x94] sm:$0xf]
  %v57 = vld [vmem:[%s1 + $0x98] sm:$0xf]
  %v58 = vld [vmem:[%s1 + $0x9c] sm:$0xf]
  %v59 = vld [vmem:[%s1 + $0xa0] sm:$0xf]
  %v60 = vld [vmem:[%s1 + $0xa4] sm:$0xf]
  %v61 = vld [vmem:[%s1 + $0xa8] sm:$0xf]
  %v62 = vld [vmem:[%s1 + $0xac] sm:$0xf]
  %v63 = vld [vmem:[%s1 + $0xb0] sm:$0xf]
  %v64 = vld [vmem:[%s1 + $0xb4] sm:$0xf]
  %v65 = vld [vmem:[%s1 + $0xb8] sm:$0xf]
  %v66 = vld [vmem:[%s1 + $0xbc] sm:$0xf]
  %v67 = vld [vmem:[%s1 + $0xc0] sm:$0xf]
  %v68 = vld [vmem:[%s1 + $0xc4] sm:$0xf]
  %v69 = vld [vmem:[%s1 + $0xc8] sm:$0xf]
  %v70 = vld [vmem:[%s1 + $0xcc] sm:$0xf]
  %v71 = vld [vmem:[%s1 + $0xd0] sm:$0xf]
  %v72 = vld [vmem:[%s1 + $0xd4] sm:$0xf]
  %v73 = vld [vmem:[%s1 + $0xd8] sm:$0xf]
  %v74 = vld [vmem:[%s1 + $0xdc] sm:$0xf]
  %v75 = vld [vmem:[%s1 + $0xe0] sm:$0xf]
  %v76 = vld [vmem:[%s1 + $0xe4] sm:$0xf]
  %v77 = vld [vmem:[%s1 + $0xe8] sm:$0xf]
  %v78 = vld [vmem:[%s1 + $0xec] sm:$0xf]
  %v79 = vld [vmem:[%s1 + $0xf0] sm:$0xf]
  %v80 = vld [vmem:[%s1 + $0xf4] sm:$0xf]
  %v81 = vld [vmem:[%s1 + $0xf8] sm:$0xf]
  %v82 = vld [vmem:[%s1 + $0xfc] sm:$0xf]
  %v83 = vld [vmem:[%s2] sm:$0xff]
  %v84 = vld [vmem:[%s2 + $0x8] sm:$0xff]
  %86 = vset.pattern.permute.xlu0 0
  %87 = vperm.xlu0 %86, %v83
  %v88 = vpop.permute.xlu0 %87
  %91 = vset.pattern.permute.xlu0 0
  %92 = vperm.xlu0 %91, %v84
  %v93 = vpop.permute.xlu0 %92
  %v99 = vunpack.c.l.b16 %v15
  %v100 = vunpack.c.h.b16 %v15
  %v101 = vunpack.c.l.b16 %v16
  %v102 = vunpack.c.h.b16 %v16
  %v103 = vunpack.c.l.b16 %v17
  %v104 = vunpack.c.h.b16 %v17
  %v105 = vunpack.c.l.b16 %v18
  %v106 = vunpack.c.h.b16 %v18
  %v107 = vpack.c.b16 %v103, %v99
  %v108 = vpack.c.b16 %v104, %v100
  %v109 = vpack.c.b16 %v105, %v101
  %v110 = vpack.c.b16 %v106, %v102
  %v179 = vunpack.c.l.b16 %v19
  %v180 = vunpack.c.l.b16 %v20
  %v181 = vunpack.c.l.b16 %v21
  %v182 = vunpack.c.l.b16 %v22
  %v183 = vunpack.c.l.b16 %v23
  %v184 = vunpack.c.l.b16 %v24
  %v185 = vunpack.c.l.b16 %v25
  %v186 = vunpack.c.l.b16 %v26
  %v187 = vunpack.c.l.b16 %v27
  %v188 = vunpack.c.l.b16 %v28
  %v189 = vunpack.c.l.b16 %v29
  %v190 = vunpack.c.l.b16 %v30
  %v191 = vunpack.c.l.b16 %v31
  %v192 = vunpack.c.l.b16 %v32
  %v193 = vunpack.c.l.b16 %v33
  %v194 = vunpack.c.l.b16 %v34
  %v195 = vunpack.c.l.b16 %v35
  %v196 = vunpack.c.l.b16 %v36
  %v197 = vunpack.c.l.b16 %v37
  %v198 = vunpack.c.l.b16 %v38
  %v199 = vunpack.c.l.b16 %v39
  %v200 = vunpack.c.l.b16 %v40
  %v201 = vunpack.c.l.b16 %v41
  %v202 = vunpack.c.l.b16 %v42
  %v203 = vunpack.c.l.b16 %v43
  %v204 = vunpack.c.l.b16 %v44
  %v205 = vunpack.c.l.b16 %v45
  %v206 = vunpack.c.l.b16 %v46
  %v207 = vunpack.c.l.b16 %v47
  %v208 = vunpack.c.l.b16 %v48
  %v209 = vunpack.c.l.b16 %v49
  %v210 = vunpack.c.l.b16 %v50
  %v211 = vunpack.c.l.b16 %v51
  %v212 = vunpack.c.l.b16 %v52
  %v213 = vunpack.c.l.b16 %v53
  %v214 = vunpack.c.l.b16 %v54
  %v215 = vunpack.c.l.b16 %v55
  %v216 = vunpack.c.l.b16 %v56
  %v217 = vunpack.c.l.b16 %v57
  %v218 = vunpack.c.l.b16 %v58
  %v219 = vunpack.c.l.b16 %v59
  %v220 = vunpack.c.l.b16 %v60
  %v221 = vunpack.c.l.b16 %v61
  %v222 = vunpack.c.l.b16 %v62
  %v223 = vunpack.c.l.b16 %v63
  %v224 = vunpack.c.l.b16 %v64
  %v225 = vunpack.c.l.b16 %v65
  %v226 = vunpack.c.l.b16 %v66
  %v227 = vunpack.c.l.b16 %v67
  %v228 = vunpack.c.l.b16 %v68
  %v229 = vunpack.c.l.b16 %v69
  %v230 = vunpack.c.l.b16 %v70
  %v231 = vunpack.c.l.b16 %v71
  %v232 = vunpack.c.l.b16 %v72
  %v233 = vunpack.c.l.b16 %v73
  %v234 = vunpack.c.l.b16 %v74
  %v235 = vunpack.c.l.b16 %v75
  %v236 = vunpack.c.l.b16 %v76
  %v237 = vunpack.c.l.b16 %v77
  %v238 = vunpack.c.l.b16 %v78
  %v239 = vunpack.c.l.b16 %v79
  %v240 = vunpack.c.l.b16 %v80
  %v241 = vunpack.c.l.b16 %v81
  %v242 = vunpack.c.l.b16 %v82
  %v243 = vpack.c.b16 %v180, %v179
  %v244 = vpack.c.b16 %v182, %v181
  %v245 = vpack.c.b16 %v184, %v183
  %v246 = vpack.c.b16 %v186, %v185
  %v247 = vpack.c.b16 %v188, %v187
  %v248 = vpack.c.b16 %v190, %v189
  %v249 = vpack.c.b16 %v192, %v191
  %v250 = vpack.c.b16 %v194, %v193
  %v251 = vpack.c.b16 %v196, %v195
  %v252 = vpack.c.b16 %v198, %v197
  %v253 = vpack.c.b16 %v200, %v199
  %v254 = vpack.c.b16 %v202, %v201
  %v255 = vpack.c.b16 %v204, %v203
  %v256 = vpack.c.b16 %v206, %v205
  %v257 = vpack.c.b16 %v208, %v207
  %v258 = vpack.c.b16 %v210, %v209
  %v259 = vpack.c.b16 %v212, %v211
  %v260 = vpack.c.b16 %v214, %v213
  %v261 = vpack.c.b16 %v216, %v215
  %v262 = vpack.c.b16 %v218, %v217
  %v263 = vpack.c.b16 %v220, %v219
  %v264 = vpack.c.b16 %v222, %v221
  %v265 = vpack.c.b16 %v224, %v223
  %v266 = vpack.c.b16 %v226, %v225
  %v267 = vpack.c.b16 %v228, %v227
  %v268 = vpack.c.b16 %v230, %v229
  %v269 = vpack.c.b16 %v232, %v231
  %v270 = vpack.c.b16 %v234, %v233
  %v271 = vpack.c.b16 %v236, %v235
  %v272 = vpack.c.b16 %v238, %v237
  %v273 = vpack.c.b16 %v240, %v239
  %v274 = vpack.c.b16 %v242, %v241
  %307 = vmatprep.subr.bf16.mxu0 0
  %308 = vmatpush1.bf16.msra.mxu0 %v250
  %309 = vmatprep.subr.bf16.mxu0 0
  %310 = vmatpush1.bf16.msra.mxu0 %v249
  %311 = vmatprep.subr.bf16.mxu0 0
  %312 = vmatpush1.bf16.msra.mxu0 %v248
  %313 = vmatprep.subr.bf16.mxu0 0
  %314 = vmatpush1.bf16.msra.mxu0 %v247
  %315 = vmatprep.subr.bf16.mxu0 0
  %316 = vmatpush1.bf16.msra.mxu0 %v246
  %317 = vmatprep.subr.bf16.mxu0 0
  %318 = vmatpush1.bf16.msra.mxu0 %v245
  %319 = vmatprep.subr.bf16.mxu0 0
  %320 = vmatpush1.bf16.msra.mxu0 %v244
  %321 = vmatprep.subr.bf16.mxu0 0
  %322 = vmatpush1.bf16.msra.mxu0 %v243
  %323 = vmatprep.subr.bf16.mxu0 0
  %324 = vmatpush2.bf16.msra.mxu0 %v258
  %325 = vmatprep.subr.bf16.mxu0 0
  %326 = vmatpush2.bf16.msra.mxu0 %v257
  %327 = vmatprep.subr.bf16.mxu0 0
  %328 = vmatpush2.bf16.msra.mxu0 %v256
  %329 = vmatprep.subr.bf16.mxu0 0
  %330 = vmatpush2.bf16.msra.mxu0 %v255
  %331 = vmatprep.subr.bf16.mxu0 0
  %332 = vmatpush2.bf16.msra.mxu0 %v254
  %333 = vmatprep.subr.bf16.mxu0 0
  %334 = vmatpush2.bf16.msra.mxu0 %v253
  %335 = vmatprep.subr.bf16.mxu0 0
  %336 = vmatpush2.bf16.msra.mxu0 %v252
  %337 = vmatprep.subr.bf16.mxu0 0
  %338 = vmatpush2.bf16.msra.mxu0 %v251
  %339 = vmatprep.mubr.bf16.mxu0 %v108
  %340 = vmatmul.mubr.bf16.gmra.mxu0 %v107
  %v341 = vpop.f32.mrf.mxu0
  %v342 = vadd.f32 %v88, %v341
  %v343 = vpop.f32.mrf.mxu0
  %v344 = vpop.f32.mrf.mxu0
  %v345 = vadd.f32 %v93, %v344
  %v346 = vpop.f32.mrf.mxu0
  %347 = vdwg.mxu0
  %348 = vmatprep.subr.bf16.mxu0 0
  %349 = vmatpush1.bf16.msra.mxu0 %v266
  %350 = vmatprep.subr.bf16.mxu0 0
  %351 = vmatpush1.bf16.msra.mxu0 %v265
  %352 = vmatprep.subr.bf16.mxu0 0
  %353 = vmatpush1.bf16.msra.mxu0 %v264
  %354 = vmatprep.subr.bf16.mxu0 0
  %355 = vmatpush1.bf16.msra.mxu0 %v263
  %356 = vmatprep.subr.bf16.mxu0 0
  %357 = vmatpush1.bf16.msra.mxu0 %v262
  %358 = vmatprep.subr.bf16.mxu0 0
  %359 = vmatpush1.bf16.msra.mxu0 %v261
  %360 = vmatprep.subr.bf16.mxu0 0
  %361 = vmatpush1.bf16.msra.mxu0 %v260
  %362 = vmatprep.subr.bf16.mxu0 0
  %363 = vmatpush1.bf16.msra.mxu0 %v259
  %364 = vmatprep.subr.bf16.mxu0 0
  %365 = vmatpush2.bf16.msra.mxu0 %v274
  %366 = vmatprep.subr.bf16.mxu0 0
  %367 = vmatpush2.bf16.msra.mxu0 %v273
  %368 = vmatprep.subr.bf16.mxu0 0
  %369 = vmatpush2.bf16.msra.mxu0 %v272
  %370 = vmatprep.subr.bf16.mxu0 0
  %371 = vmatpush2.bf16.msra.mxu0 %v271
  %372 = vmatprep.subr.bf16.mxu0 0
  %373 = vmatpush2.bf16.msra.mxu0 %v270
  %374 = vmatprep.subr.bf16.mxu0 0
  %375 = vmatpush2.bf16.msra.mxu0 %v269
  %376 = vmatprep.subr.bf16.mxu0 0
  %377 = vmatpush2.bf16.msra.mxu0 %v268
  %378 = vmatprep.subr.bf16.mxu0 0
  %379 = vmatpush2.bf16.msra.mxu0 %v267
  %380 = vmatprep.mubr.bf16.mxu0 %v110
  %381 = vmatmul.mubr.bf16.gmra.mxu0 %v109
  %v382 = vpop.f32.mrf.mxu0
  %v383 = vadd.f32 %v342, %v382
  %v384 = vpop.f32.mrf.mxu0
  %v385 = vpop.f32.mrf.mxu0
  %v386 = vadd.f32 %v345, %v385
  %v387 = vpop.f32.mrf.mxu0
  %388 = vdwg.mxu0
  %v389 = vmax.f32 %v383, 0.0
  %v390 = vmax.f32 %v386, 0.0
  %vm391 = vcmask 523264
  %392 = vst.msk [vmem:[%s3] sm:$0xff] %vm391, %v389
  %393 = vst.msk [vmem:[%s3 + $0x8] sm:$0xff] %vm391, %v390
  // Predicated region
  $region14: #{tsrvfd_forward.23} parent=0 // pred_check
    _
  $region15: #{tsrvfd_forward.23} parent=0 // pred_check_branch
    %395 = sbr.rel (0) target = $region17
  $region16: #{tsrvfd_forward.23} parent=0 // pred_region
    _
  $region17: #{tsrvfd_forward.23} parent=0 // pred_fallthru
    _
  // Predicated region
  $region18: #{tsrvfd_forward.23} parent=0 // pred_check
    _
  $region19: #{tsrvfd_forward.23} parent=0 // pred_check_branch
    %397 = sbr.rel (0) target = $region21
  $region20: #{tsrvfd_forward.23} parent=0 // pred_region
    _
  $region21: #{tsrvfd_forward.23} parent=0 // pred_fallthru
    _

// kernel: tsrvfd_forward.24
$region0: #{tsrvfd_forward.24}
  #allocation0 [shape = 'u32[]', space=smem, size = 0x4, offset = 0x4, fixed_abs, tag = 'smem constant byte address 0x4 - core index']
  #allocation1 [shape = 'u32[144,128]{1,0:T(1,128)}', space=vmem, size = 0x12000, scoped, tag = 'internal scratch']
  %s0 = inlined_call_operand.vmem [shape: bf16[32,1024], index: 0, kind: input, shape index: {}]
  %s1 = inlined_call_operand.vmem [shape: bf16[1024,8], index: 1, kind: input, shape index: {}]
  %s2 = inlined_call_operand.vmem [shape: f32[32,1], index: 2, kind: input, shape index: {}]
  %s3 = inlined_call_operand.vmem [shape: f32[32,8], index: 3, kind: output, shape index: {}]
  %s4 = sld [smem:[#allocation0]]
  $region22: #{tsrvfd_forward.24} parent=0
    _
  %s6 = ssub.s32 1, %s4
  %s7 = scalar_select 0, %s6, %s4
  // Predicated region
  $region2: #{tsrvfd_forward.24} parent=0 // pred_check
    _
  $region3: #{tsrvfd_forward.24} parent=0 // pred_check_branch
    %9 = sbr.rel (0) target = $region5
  $region4: #{tsrvfd_forward.24} parent=0 // pred_region
    _
  $region5: #{tsrvfd_forward.24} parent=0 // pred_fallthru
    _
  // Predicated region
  $region6: #{tsrvfd_forward.24} parent=0 // pred_check
    _
  $region7: #{tsrvfd_forward.24} parent=0 // pred_check_branch
    %11 = sbr.rel (0) target = $region9
  $region8: #{tsrvfd_forward.24} parent=0 // pred_region
    _
  $region9: #{tsrvfd_forward.24} parent=0 // pred_fallthru
    _
  // Predicated region
  $region10: #{tsrvfd_forward.24} parent=0 // pred_check
    _
  $region11: #{tsrvfd_forward.24} parent=0 // pred_check_branch
    %13 = sbr.rel (0) target = $region13
  $region12: #{tsrvfd_forward.24} parent=0 // pred_region
    _
  $region13: #{tsrvfd_forward.24} parent=0 // pred_fallthru
    _
  %v15 = vld [vmem:[%s0] sm:$0xff]
  %v16 = vld [vmem:[%s0 + $0x8] sm:$0xff]
  %v17 = vld [vmem:[%s0 + $0x10] sm:$0xff]
  %v18 = vld [vmem:[%s0 + $0x18] sm:$0xff]
  %v19 = vld [vmem:[%s0 + $0x20] sm:$0xff]
  %v20 = vld [vmem:[%s0 + $0x28] sm:$0xff]
  %v21 = vld [vmem:[%s0 + $0x30] sm:$0xff]
  %v22 = vld [vmem:[%s0 + $0x38] sm:$0xff]
  %v23 = vld [vmem:[%s0 + $0x40] sm:$0xff]
  %v24 = vld [vmem:[%s0 + $0x48] sm:$0xff]
  %v25 = vld [vmem:[%s0 + $0x50] sm:$0xff]
  %v26 = vld [vmem:[%s0 + $0x58] sm:$0xff]
  %v27 = vld [vmem:[%s0 + $0x60] sm:$0xff]
  %v28 = vld [vmem:[%s0 + $0x68] sm:$0xff]
  %v29 = vld [vmem:[%s0 + $0x70] sm:$0xff]
  %v30 = vld [vmem:[%s0 + $0x78] sm:$0xff]
  %v31 = vld [vmem:[%s1] sm:$0xf]
  %v32 = vld [vmem:[%s1 + $0x4] sm:$0xf]
  %v33 = vld [vmem:[%s1 + $0x8] sm:$0xf]
  %v34 = vld [vmem:[%s1 + $0xc] sm:$0xf]
  %v35 = vld [vmem:[%s1 + $0x10] sm:$0xf]
  %v36 = vld [vmem:[%s1 + $0x14] sm:$0xf]
  %v37 = vld [vmem:[%s1 + $0x18] sm:$0xf]
  %v38 = vld [vmem:[%s1 + $0x1c] sm:$0xf]
  %v39 = vld [vmem:[%s1 + $0x20] sm:$0xf]
  %v40 = vld [vmem:[%s1 + $0x24] sm:$0xf]
  %v41 = vld [vmem:[%s1 + $0x28] sm:$0xf]
  %v42 = vld [vmem:[%s1 + $0x2c] sm:$0xf]
  %v43 = vld [vmem:[%s1 + $0x30] sm:$0xf]
  %v44 = vld [vmem:[%s1 + $0x34] sm:$0xf]
  %v45 = vld [vmem:[%s1 + $0x38] sm:$0xf]
  %v46 = vld [vmem:[%s1 + $0x3c] sm:$0xf]
  %v47 = vld [vmem:[%s1 + $0x40] sm:$0xf]
  %v48 = vld [vmem:[%s1 + $0x44] sm:$0xf]
  %v49 = vld [vmem:[%s1 + $0x48] sm:$0xf]
  %v50 = vld [vmem:[%s1 + $0x4c] sm:$0xf]
  %v51 = vld [vmem:[%s1 + $0x50] sm:$0xf]
  %v52 = vld [vmem:[%s1 + $0x54] sm:$0xf]
  %v53 = vld [vmem:[%s1 + $0x58] sm:$0xf]
  %v54 = vld [vmem:[%s1 + $0x5c] sm:$0xf]
  %v55 = vld [vmem:[%s1 + $0x60] sm:$0xf]
  %v56 = vld [vmem:[%s1 + $0x64] sm:$0xf]
  %v57 = vld [vmem:[%s1 + $0x68] sm:$0xf]
  %v58 = vld [vmem:[%s1 + $0x6c] sm:$0xf]
  %v59 = vld [vmem:[%s1 + $0x70] sm:$0xf]
  %v60 = vld [vmem:[%s1 + $0x74] sm:$0xf]
  %v61 = vld [vmem:[%s1 + $0x78] sm:$0xf]
  %v62 = vld [vmem:[%s1 + $0x7c] sm:$0xf]
  %v63 = vld [vmem:[%s1 + $0x80] sm:$0xf]
  %v64 = vld [vmem:[%s1 + $0x84] sm:$0xf]
  %v65 = vld [vmem:[%s1 + $0x88] sm:$0xf]
  %v66 = vld [vmem:[%s1 + $0x8c] sm:$0xf]
  %v67 = vld [vmem:[%s1 + $0x90] sm:$0xf]
  %v68 = vld [vmem:[%s1 + $0x94] sm:$0xf]
  %v69 = vld [vmem:[%s1 + $0x98] sm:$0xf]
  %v70 = vld [vmem:[%s1 + $0x9c] sm:$0xf]
  %v71 = vld [vmem:[%s1 + $0xa0] sm:$0xf]
  %v72 = vld [vmem:[%s1 + $0xa4] sm:$0xf]
  %v73 = vld [vmem:[%s1 + $0xa8] sm:$0xf]
  %v74 = vld [vmem:[%s1 + $0xac] sm:$0xf]
  %v75 = vld [vmem:[%s1 + $0xb0] sm:$0xf]
  %v76 = vld [vmem:[%s1 + $0xb4] sm:$0xf]
  %v77 = vld [vmem:[%s1 + $0xb8] sm:$0xf]
  %v78 = vld [vmem:[%s1 + $0xbc] sm:$0xf]
  %v79 = vld [vmem:[%s1 + $0xc0] sm:$0xf]
  %v80 = vld [vmem:[%s1 + $0xc4] sm:$0xf]
  %v81 = vld [vmem:[%s1 + $0xc8] sm:$0xf]
  %v82 = vld [vmem:[%s1 + $0xcc] sm:$0xf]
  %v83 = vld [vmem:[%s1 + $0xd0] sm:$0xf]
  %v84 = vld [vmem:[%s1 + $0xd4] sm:$0xf]
  %v85 = vld [vmem:[%s1 + $0xd8] sm:$0xf]
  %v86 = vld [vmem:[%s1 + $0xdc] sm:$0xf]
  %v87 = vld [vmem:[%s1 + $0xe0] sm:$0xf]
  %v88 = vld [vmem:[%s1 + $0xe4] sm:$0xf]
  %v89 = vld [vmem:[%s1 + $0xe8] sm:$0xf]
  %v90 = vld [vmem:[%s1 + $0xec] sm:$0xf]
  %v91 = vld [vmem:[%s1 + $0xf0] sm:$0xf]
  %v92 = vld [vmem:[%s1 + $0xf4] sm:$0xf]
  %v93 = vld [vmem:[%s1 + $0xf8] sm:$0xf]
  %v94 = vld [vmem:[%s1 + $0xfc] sm:$0xf]
  %v95 = vld [vmem:[%s1 + $0x100] sm:$0xf]
  %v96 = vld [vmem:[%s1 + $0x104] sm:$0xf]
  %v97 = vld [vmem:[%s1 + $0x108] sm:$0xf]
  %v98 = vld [vmem:[%s1 + $0x10c] sm:$0xf]
  %v99 = vld [vmem:[%s1 + $0x110] sm:$0xf]
  %v100 = vld [vmem:[%s1 + $0x114] sm:$0xf]
  %v101 = vld [vmem:[%s1 + $0x118] sm:$0xf]
  %v102 = vld [vmem:[%s1 + $0x11c] sm:$0xf]
  %v103 = vld [vmem:[%s1 + $0x120] sm:$0xf]
  %v104 = vld [vmem:[%s1 + $0x124] sm:$0xf]
  %v105 = vld [vmem:[%s1 + $0x128] sm:$0xf]
  %v106 = vld [vmem:[%s1 + $0x12c] sm:$0xf]
  %v107 = vld [vmem:[%s1 + $0x130] sm:$0xf]
  %v108 = vld [vmem:[%s1 + $0x134] sm:$0xf]
  %v109 = vld [vmem:[%s1 + $0x138] sm:$0xf]
  %v110 = vld [vmem:[%s1 + $0x13c] sm:$0xf]
  %v111 = vld [vmem:[%s1 + $0x140] sm:$0xf]
  %v112 = vld [vmem:[%s1 + $0x144] sm:$0xf]
  %v113 = vld [vmem:[%s1 + $0x148] sm:$0xf]
  %v114 = vld [vmem:[%s1 + $0x14c] sm:$0xf]
  %v115 = vld [vmem:[%s1 + $0x150] sm:$0xf]
  %v116 = vld [vmem:[%s1 + $0x154] sm:$0xf]
  %v117 = vld [vmem:[%s1 + $0x158] sm:$0xf]
  %v118 = vld [vmem:[%s1 + $0x15c] sm:$0xf]
  %v119 = vld [vmem:[%s1 + $0x160] sm:$0xf]
  %v120 = vld [vmem:[%s1 + $0x164] sm:$0xf]
  %v121 = vld [vmem:[%s1 + $0x168] sm:$0xf]
  %v122 = vld [vmem:[%s1 + $0x16c] sm:$0xf]
  %v123 = vld [vmem:[%s1 + $0x170] sm:$0xf]
  %v124 = vld [vmem:[%s1 + $0x174] sm:$0xf]
  %v125 = vld [vmem:[%s1 + $0x178] sm:$0xf]
  %v126 = vld [vmem:[%s1 + $0x17c] sm:$0xf]
  %v127 = vld [vmem:[%s1 + $0x180] sm:$0xf]
  %v128 = vld [vmem:[%s1 + $0x184] sm:$0xf]
  %v129 = vld [vmem:[%s1 + $0x188] sm:$0xf]
  %v130 = vld [vmem:[%s1 + $0x18c] sm:$0xf]
  %v131 = vld [vmem:[%s1 + $0x190] sm:$0xf]
  %v132 = vld [vmem:[%s1 + $0x194] sm:$0xf]
  %v133 = vld [vmem:[%s1 + $0x198] sm:$0xf]
  %v134 = vld [vmem:[%s1 + $0x19c] sm:$0xf]
  %v135 = vld [vmem:[%s1 + $0x1a0] sm:$0xf]
  %v136 = vld [vmem:[%s1 + $0x1a4] sm:$0xf]
  %v137 = vld [vmem:[%s1 + $0x1a8] sm:$0xf]
  %v138 = vld [vmem:[%s1 + $0x1ac] sm:$0xf]
  %v139 = vld [vmem:[%s1 + $0x1b0] sm:$0xf]
  %v140 = vld [vmem:[%s1 + $0x1b4] sm:$0xf]
  %v141 = vld [vmem:[%s1 + $0x1b8] sm:$0xf]
  %v142 = vld [vmem:[%s1 + $0x1bc] sm:$0xf]
  %v143 = vld [vmem:[%s1 + $0x1c0] sm:$0xf]
  %v144 = vld [vmem:[%s1 + $0x1c4] sm:$0xf]
  %v145 = vld [vmem:[%s1 + $0x1c8] sm:$0xf]
  %v146 = vld [vmem:[%s1 + $0x1cc] sm:$0xf]
  %v147 = vld [vmem:[%s1 + $0x1d0] sm:$0xf]
  %v148 = vld [vmem:[%s1 + $0x1d4] sm:$0xf]
  %v149 = vld [vmem:[%s1 + $0x1d8] sm:$0xf]
  %v150 = vld [vmem:[%s1 + $0x1dc] sm:$0xf]
  %v151 = vld [vmem:[%s1 + $0x1e0] sm:$0xf]
  %v152 = vld [vmem:[%s1 + $0x1e4] sm:$0xf]
  %v153 = vld [vmem:[%s1 + $0x1e8] sm:$0xf]
  %v154 = vld [vmem:[%s1 + $0x1ec] sm:$0xf]
  %v155 = vld [vmem:[%s1 + $0x1f0] sm:$0xf]
  %v156 = vld [vmem:[%s1 + $0x1f4] sm:$0xf]
  %v157 = vld [vmem:[%s1 + $0x1f8] sm:$0xf]
  %v158 = vld [vmem:[%s1 + $0x1fc] sm:$0xf]
  %v159 = vld [vmem:[%s2] sm:$0xff]
  %v160 = vld [vmem:[%s2 + $0x8] sm:$0xff]
  %v161 = vld [vmem:[%s2 + $0x10] sm:$0xff]
  %v162 = vld [vmem:[%s2 + $0x18] sm:$0xff]
  %164 = vset.pattern.permute.xlu0 0
  %165 = vperm.xlu0 %164, %v159
  %v166 = vpop.permute.xlu0 %165
  %169 = vset.pattern.permute.xlu0 0
  %170 = vperm.xlu0 %169, %v160
  %v171 = vpop.permute.xlu0 %170
  %174 = vset.pattern.permute.xlu0 0
  %175 = vperm.xlu0 %174, %v161
  %v176 = vpop.permute.xlu0 %175
  %179 = vset.pattern.permute.xlu0 0
  %180 = vperm.xlu0 %179, %v162
  %v181 = vpop.permute.xlu0 %180
  %v199 = vunpack.c.l.b16 %v15
  %v200 = vunpack.c.h.b16 %v15
  %v201 = vunpack.c.l.b16 %v16
  %v202 = vunpack.c.h.b16 %v16
  %v203 = vunpack.c.l.b16 %v17
  %v204 = vunpack.c.h.b16 %v17
  %v205 = vunpack.c.l.b16 %v18
  %v206 = vunpack.c.h.b16 %v18
  %v207 = vunpack.c.l.b16 %v19
  %v208 = vunpack.c.h.b16 %v19
  %v209 = vunpack.c.l.b16 %v20
  %v210 = vunpack.c.h.b16 %v20
  %v211 = vunpack.c.l.b16 %v21
  %v212 = vunpack.c.h.b16 %v21
  %v213 = vunpack.c.l.b16 %v22
  %v214 = vunpack.c.h.b16 %v22
  %v215 = vunpack.c.l.b16 %v23
  %v216 = vunpack.c.h.b16 %v23
  %v217 = vunpack.c.l.b16 %v24
  %v218 = vunpack.c.h.b16 %v24
  %v219 = vunpack.c.l.b16 %v25
  %v220 = vunpack.c.h.b16 %v25
  %v221 = vunpack.c.l.b16 %v26
  %v222 = vunpack.c.h.b16 %v26
  %v223 = vunpack.c.l.b16 %v27
  %v224 = vunpack.c.h.b16 %v27
  %v225 = vunpack.c.l.b16 %v28
  %v226 = vunpack.c.h.b16 %v28
  %v227 = vunpack.c.l.b16 %v29
  %v228 = vunpack.c.h.b16 %v29
  %v229 = vunpack.c.l.b16 %v30
  %v230 = vunpack.c.h.b16 %v30
  %v231 = vpack.c.b16 %v207, %v199
  %v232 = vpack.c.b16 %v208, %v200
  %v233 = vpack.c.b16 %v209, %v201
  %v234 = vpack.c.b16 %v210, %v202
  %v235 = vpack.c.b16 %v211, %v203
  %v236 = vpack.c.b16 %v212, %v204
  %v237 = vpack.c.b16 %v213, %v205
  %v238 = vpack.c.b16 %v214, %v206
  %v239 = vpack.c.b16 %v223, %v215
  %v240 = vpack.c.b16 %v224, %v216
  %v241 = vpack.c.b16 %v225, %v217
  %v242 = vpack.c.b16 %v226, %v218
  %v243 = vpack.c.b16 %v227, %v219
  %v244 = vpack.c.b16 %v228, %v220
  %v245 = vpack.c.b16 %v229, %v221
  %v246 = vpack.c.b16 %v230, %v222
  %v391 = vunpack.c.l.b16 %v31
  %v392 = vunpack.c.l.b16 %v32
  %v393 = vunpack.c.l.b16 %v33
  %v394 = vunpack.c.l.b16 %v34
  %v395 = vunpack.c.l.b16 %v35
  %v396 = vunpack.c.l.b16 %v36
  %v397 = vunpack.c.l.b16 %v37
  %v398 = vunpack.c.l.b16 %v38
  %v399 = vunpack.c.l.b16 %v39
  %v400 = vunpack.c.l.b16 %v40
  %v401 = vunpack.c.l.b16 %v41
  %v402 = vunpack.c.l.b16 %v42
  %v403 = vunpack.c.l.b16 %v43
  %v404 = vunpack.c.l.b16 %v44
  %v405 = vunpack.c.l.b16 %v45
  %v406 = vunpack.c.l.b16 %v46
  %v407 = vunpack.c.l.b16 %v47
  %v408 = vunpack.c.l.b16 %v48
  %v409 = vunpack.c.l.b16 %v49
  %v410 = vunpack.c.l.b16 %v50
  %v411 = vunpack.c.l.b16 %v51
  %v412 = vunpack.c.l.b16 %v52
  %v413 = vunpack.c.l.b16 %v53
  %v414 = vunpack.c.l.b16 %v54
  %v415 = vunpack.c.l.b16 %v55
  %v416 = vunpack.c.l.b16 %v56
  %v417 = vunpack.c.l.b16 %v57
  %v418 = vunpack.c.l.b16 %v58
  %v419 = vunpack.c.l.b16 %v59
  %v420 = vunpack.c.l.b16 %v60
  %v421 = vunpack.c.l.b16 %v61
  %v422 = vunpack.c.l.b16 %v62
  %v423 = vunpack.c.l.b16 %v63
  %v424 = vunpack.c.l.b16 %v64
  %v425 = vunpack.c.l.b16 %v65
  %v426 = vunpack.c.l.b16 %v66
  %v427 = vunpack.c.l.b16 %v67
  %v428 = vunpack.c.l.b16 %v68
  %v429 = vunpack.c.l.b16 %v69
  %v430 = vunpack.c.l.b16 %v70
  %v431 = vunpack.c.l.b16 %v71
  %v432 = vunpack.c.l.b16 %v72
  %v433 = vunpack.c.l.b16 %v73
  %v434 = vunpack.c.l.b16 %v74
  %v435 = vunpack.c.l.b16 %v75
  %v436 = vunpack.c.l.b16 %v76
  %v437 = vunpack.c.l.b16 %v77
  %v438 = vunpack.c.l.b16 %v78
  %v439 = vunpack.c.l.b16 %v79
  %v440 = vunpack.c.l.b16 %v80
  %v441 = vunpack.c.l.b16 %v81
  %v442 = vunpack.c.l.b16 %v82
  %v443 = vunpack.c.l.b16 %v83
  %v444 = vunpack.c.l.b16 %v84
  %v445 = vunpack.c.l.b16 %v85
  %v446 = vunpack.c.l.b16 %v86
  %v447 = vunpack.c.l.b16 %v87
  %v448 = vunpack.c.l.b16 %v88
  %v449 = vunpack.c.l.b16 %v89
  %v450 = vunpack.c.l.b16 %v90
  %v451 = vunpack.c.l.b16 %v91
  %v452 = vunpack.c.l.b16 %v92
  %v453 = vunpack.c.l.b16 %v93
  %v454 = vunpack.c.l.b16 %v94
  %v455 = vunpack.c.l.b16 %v95
  %v456 = vunpack.c.l.b16 %v96
  %v457 = vunpack.c.l.b16 %v97
  %v458 = vunpack.c.l.b16 %v98
  %v459 = vunpack.c.l.b16 %v99
  %v460 = vunpack.c.l.b16 %v100
  %v461 = vunpack.c.l.b16 %v101
  %v462 = vunpack.c.l.b16 %v102
  %v463 = vunpack.c.l.b16 %v103
  %v464 = vunpack.c.l.b16 %v104
  %v465 = vunpack.c.l.b16 %v105
  %v466 = vunpack.c.l.b16 %v106
  %v467 = vunpack.c.l.b16 %v107
  %v468 = vunpack.c.l.b16 %v108
  %v469 = vunpack.c.l.b16 %v109
  %v470 = vunpack.c.l.b16 %v110
  %v471 = vunpack.c.l.b16 %v111
  %v472 = vunpack.c.l.b16 %v112
  %v473 = vunpack.c.l.b16 %v113
  %v474 = vunpack.c.l.b16 %v114
  %v475 = vunpack.c.l.b16 %v115
  %v476 = vunpack.c.l.b16 %v116
  %v477 = vunpack.c.l.b16 %v117
  %v478 = vunpack.c.l.b16 %v118
  %v479 = vunpack.c.l.b16 %v119
  %v480 = vunpack.c.l.b16 %v120
  %v481 = vunpack.c.l.b16 %v121
  %v482 = vunpack.c.l.b16 %v122
  %v483 = vunpack.c.l.b16 %v123
  %v484 = vunpack.c.l.b16 %v124
  %v485 = vunpack.c.l.b16 %v125
  %v486 = vunpack.c.l.b16 %v126
  %v487 = vunpack.c.l.b16 %v127
  %v488 = vunpack.c.l.b16 %v128
  %v489 = vunpack.c.l.b16 %v129
  %v490 = vunpack.c.l.b16 %v130
  %v491 = vunpack.c.l.b16 %v131
  %v492 = vunpack.c.l.b16 %v132
  %v493 = vunpack.c.l.b16 %v133
  %v494 = vunpack.c.l.b16 %v134
  %v495 = vunpack.c.l.b16 %v135
  %v496 = vunpack.c.l.b16 %v136
  %v497 = vunpack.c.l.b16 %v137
  %v498 = vunpack.c.l.b16 %v138
  %v499 = vunpack.c.l.b16 %v139
  %v500 = vunpack.c.l.b16 %v140
  %v501 = vunpack.c.l.b16 %v141
  %v502 = vunpack.c.l.b16 %v142
  %v503 = vunpack.c.l.b16 %v143
  %v504 = vunpack.c.l.b16 %v144
  %v505 = vunpack.c.l.b16 %v145
  %v506 = vunpack.c.l.b16 %v146
  %v507 = vunpack.c.l.b16 %v147
  %v508 = vunpack.c.l.b16 %v148
  %v509 = vunpack.c.l.b16 %v149
  %v510 = vunpack.c.l.b16 %v150
  %v511 = vunpack.c.l.b16 %v151
  %v512 = vunpack.c.l.b16 %v152
  %v513 = vunpack.c.l.b16 %v153
  %v514 = vunpack.c.l.b16 %v154
  %v515 = vunpack.c.l.b16 %v155
  %v516 = vunpack.c.l.b16 %v156
  %v517 = vunpack.c.l.b16 %v157
  %v518 = vunpack.c.l.b16 %v158
  %v519 = vpack.c.b16 %v392, %v391
  %v520 = vpack.c.b16 %v394, %v393
  %v521 = vpack.c.b16 %v396, %v395
  %v522 = vpack.c.b16 %v398, %v397
  %v523 = vpack.c.b16 %v400, %v399
  %v524 = vpack.c.b16 %v402, %v401
  %v525 = vpack.c.b16 %v404, %v403
  %v526 = vpack.c.b16 %v406, %v405
  %v527 = vpack.c.b16 %v408, %v407
  %v528 = vpack.c.b16 %v410, %v409
  %v529 = vpack.c.b16 %v412, %v411
  %v530 = vpack.c.b16 %v414, %v413
  %v531 = vpack.c.b16 %v416, %v415
  %v532 = vpack.c.b16 %v418, %v417
  %v533 = vpack.c.b16 %v420, %v419
  %v534 = vpack.c.b16 %v422, %v421
  %v535 = vpack.c.b16 %v424, %v423
  %v536 = vpack.c.b16 %v426, %v425
  %v537 = vpack.c.b16 %v428, %v427
  %v538 = vpack.c.b16 %v430, %v429
  %v539 = vpack.c.b16 %v432, %v431
  %v540 = vpack.c.b16 %v434, %v433
  %v541 = vpack.c.b16 %v436, %v435
  %v542 = vpack.c.b16 %v438, %v437
  %v543 = vpack.c.b16 %v440, %v439
  %v544 = vpack.c.b16 %v442, %v441
  %v545 = vpack.c.b16 %v444, %v443
  %v546 = vpack.c.b16 %v446, %v445
  %v547 = vpack.c.b16 %v448, %v447
  %v548 = vpack.c.b16 %v450, %v449
  %v549 = vpack.c.b16 %v452, %v451
  %v550 = vpack.c.b16 %v454, %v453
  %v551 = vpack.c.b16 %v456, %v455
  %v552 = vpack.c.b16 %v458, %v457
  %v553 = vpack.c.b16 %v460, %v459
  %v554 = vpack.c.b16 %v462, %v461
  %v555 = vpack.c.b16 %v464, %v463
  %v556 = vpack.c.b16 %v466, %v465
  %v557 = vpack.c.b16 %v468, %v467
  %v558 = vpack.c.b16 %v470, %v469
  %v559 = vpack.c.b16 %v472, %v471
  %v560 = vpack.c.b16 %v474, %v473
  %v561 = vpack.c.b16 %v476, %v475
  %v562 = vpack.c.b16 %v478, %v477
  %v563 = vpack.c.b16 %v480, %v479
  %v564 = vpack.c.b16 %v482, %v481
  %v565 = vpack.c.b16 %v484, %v483
  %v566 = vpack.c.b16 %v486, %v485
  %v567 = vpack.c.b16 %v488, %v487
  %v568 = vpack.c.b16 %v490, %v489
  %v569 = vpack.c.b16 %v492, %v491
  %v570 = vpack.c.b16 %v494, %v493
  %v571 = vpack.c.b16 %v496, %v495
  %v572 = vpack.c.b16 %v498, %v497
  %v573 = vpack.c.b16 %v500, %v499
  %v574 = vpack.c.b16 %v502, %v501
  %v575 = vpack.c.b16 %v504, %v503
  %v576 = vpack.c.b16 %v506, %v505
  %v577 = vpack.c.b16 %v508, %v507
  %v578 = vpack.c.b16 %v510, %v509
  %v579 = vpack.c.b16 %v512, %v511
  %v580 = vpack.c.b16 %v514, %v513
  %v581 = vpack.c.b16 %v516, %v515
  %v582 = vpack.c.b16 %v518, %v517
  %647 = vmatprep.subr.bf16.mxu0 0
  %648 = vmatpush1.bf16.msra.mxu0 %v526
  %649 = vmatprep.subr.bf16.mxu0 0
  %650 = vmatpush1.bf16.msra.mxu0 %v525
  %651 = vmatprep.subr.bf16.mxu0 0
  %652 = vmatpush1.bf16.msra.mxu0 %v524
  %653 = vmatprep.subr.bf16.mxu0 0
  %654 = vmatpush1.bf16.msra.mxu0 %v523
  %655 = vmatprep.subr.bf16.mxu0 0
  %656 = vmatpush1.bf16.msra.mxu0 %v522
  %657 = vmatprep.subr.bf16.mxu0 0
  %658 = vmatpush1.bf16.msra.mxu0 %v521
  %659 = vmatprep.subr.bf16.mxu0 0
  %660 = vmatpush1.bf16.msra.mxu0 %v520
  %661 = vmatprep.subr.bf16.mxu0 0
  %662 = vmatpush1.bf16.msra.mxu0 %v519
  %663 = vmatprep.subr.bf16.mxu0 0
  %664 = vmatpush2.bf16.msra.mxu0 %v534
  %665 = vmatprep.subr.bf16.mxu0 0
  %666 = vmatpush2.bf16.msra.mxu0 %v533
  %667 = vmatprep.subr.bf16.mxu0 0
  %668 = vmatpush2.bf16.msra.mxu0 %v532
  %669 = vmatprep.subr.bf16.mxu0 0
  %670 = vmatpush2.bf16.msra.mxu0 %v531
  %671 = vmatprep.subr.bf16.mxu0 0
  %672 = vmatpush2.bf16.msra.mxu0 %v530
  %673 = vmatprep.subr.bf16.mxu0 0
  %674 = vmatpush2.bf16.msra.mxu0 %v529
  %675 = vmatprep.subr.bf16.mxu0 0
  %676 = vmatpush2.bf16.msra.mxu0 %v528
  %677 = vmatprep.subr.bf16.mxu0 0
  %678 = vmatpush2.bf16.msra.mxu0 %v527
  %679 = vmatprep.mubr.bf16.mxu0 %v232
  %680 = vmatmul.mubr.bf16.gmra.mxu0 %v231
  %v681 = vpop.f32.mrf.mxu0
  %v682 = vadd.f32 %v166, %v681
  %v683 = vpop.f32.mrf.mxu0
  %v684 = vpop.f32.mrf.mxu0
  %v685 = vadd.f32 %v171, %v684
  %v686 = vpop.f32.mrf.mxu0
  %687 = vmatprep.mubr.bf16.mxu0 %v240
  %688 = vmatmul.mubr.bf16.gmra.mxu0 %v239
  %v689 = vpop.f32.mrf.mxu0
  %v690 = vadd.f32 %v176, %v689
  %v691 = vpop.f32.mrf.mxu0
  %v692 = vpop.f32.mrf.mxu0
  %v693 = vadd.f32 %v181, %v692
  %v694 = vpop.f32.mrf.mxu0
  %695 = vdwg.mxu0
  %696 = vmatprep.subr.bf16.mxu0 0
  %697 = vmatpush1.bf16.msra.mxu0 %v542
  %698 = vmatprep.subr.bf16.mxu0 0
  %699 = vmatpush1.bf16.msra.mxu0 %v541
  %700 = vmatprep.subr.bf16.mxu0 0
  %701 = vmatpush1.bf16.msra.mxu0 %v540
  %702 = vmatprep.subr.bf16.mxu0 0
  %703 = vmatpush1.bf16.msra.mxu0 %v539
  %704 = vmatprep.subr.bf16.mxu0 0
  %705 = vmatpush1.bf16.msra.mxu0 %v538
  %706 = vmatprep.subr.bf16.mxu0 0
  %707 = vmatpush1.bf16.msra.mxu0 %v537
  %708 = vmatprep.subr.bf16.mxu0 0
  %709 = vmatpush1.bf16.msra.mxu0 %v536
  %710 = vmatprep.subr.bf16.mxu0 0
  %711 = vmatpush1.bf16.msra.mxu0 %v535
  %712 = vmatprep.subr.bf16.mxu0 0
  %713 = vmatpush2.bf16.msra.mxu0 %v550
  %714 = vmatprep.subr.bf16.mxu0 0
  %715 = vmatpush2.bf16.msra.mxu0 %v549
  %716 = vmatprep.subr.bf16.mxu0 0
  %717 = vmatpush2.bf16.msra.mxu0 %v548
  %718 = vmatprep.subr.bf16.mxu0 0
  %719 = vmatpush2.bf16.msra.mxu0 %v547
  %720 = vmatprep.subr.bf16.mxu0 0
  %721 = vmatpush2.bf16.msra.mxu0 %v546
  %722 = vmatprep.subr.bf16.mxu0 0
  %723 = vmatpush2.bf16.msra.mxu0 %v545
  %724 = vmatprep.subr.bf16.mxu0 0
  %725 = vmatpush2.bf16.msra.mxu0 %v544
  %726 = vmatprep.subr.bf16.mxu0 0
  %727 = vmatpush2.bf16.msra.mxu0 %v543
  %728 = vmatprep.mubr.bf16.mxu0 %v234
  %729 = vmatmul.mubr.bf16.gmra.mxu0 %v233
  %v730 = vpop.f32.mrf.mxu0
  %v731 = vadd.f32 %v682, %v730
  %v732 = vpop.f32.mrf.mxu0
  %v733 = vpop.f32.mrf.mxu0
  %v734 = vadd.f32 %v685, %v733
  %v735 = vpop.f32.mrf.mxu0
  %736 = vmatprep.mubr.bf16.mxu0 %v242
  %737 = vmatmul.mubr.bf16.gmra.mxu0 %v241
  %v738 = vpop.f32.mrf.mxu0
  %v739 = vadd.f32 %v690, %v738
  %v740 = vpop.f32.mrf.mxu0
  %v741 = vpop.f32.mrf.mxu0
  %v742 = vadd.f32 %v693, %v741
  %v743 = vpop.f32.mrf.mxu0
  %744 = vdwg.mxu0
  %745 = vmatprep.subr.bf16.mxu0 0
  %746 = vmatpush1.bf16.msra.mxu0 %v558
  %747 = vmatprep.subr.bf16.mxu0 0
  %748 = vmatpush1.bf16.msra.mxu0 %v557
  %749 = vmatprep.subr.bf16.mxu0 0
  %750 = vmatpush1.bf16.msra.mxu0 %v556
  %751 = vmatprep.subr.bf16.mxu0 0
  %752 = vmatpush1.bf16.msra.mxu0 %v555
  %753 = vmatprep.subr.bf16.mxu0 0
  %754 = vmatpush1.bf16.msra.mxu0 %v554
  %755 = vmatprep.subr.bf16.mxu0 0
  %756 = vmatpush1.bf16.msra.mxu0 %v553
  %757 = vmatprep.subr.bf16.mxu0 0
  %758 = vmatpush1.bf16.msra.mxu0 %v552
  %759 = vmatprep.subr.bf16.mxu0 0
  %760 = vmatpush1.bf16.msra.mxu0 %v551
  %761 = vmatprep.subr.bf16.mxu0 0
  %762 = vmatpush2.bf16.msra.mxu0 %v566
  %763 = vmatprep.subr.bf16.mxu0 0
  %764 = vmatpush2.bf16.msra.mxu0 %v565
  %765 = vmatprep.subr.bf16.mxu0 0
  %766 = vmatpush2.bf16.msra.mxu0 %v564
  %767 = vmatprep.subr.bf16.mxu0 0
  %768 = vmatpush2.bf16.msra.mxu0 %v563
  %769 = vmatprep.subr.bf16.mxu0 0
  %770 = vmatpush2.bf16.msra.mxu0 %v562
  %771 = vmatprep.subr.bf16.mxu0 0
  %772 = vmatpush2.bf16.msra.mxu0 %v561
  %773 = vmatprep.subr.bf16.mxu0 0
  %774 = vmatpush2.bf16.msra.mxu0 %v560
  %775 = vmatprep.subr.bf16.mxu0 0
  %776 = vmatpush2.bf16.msra.mxu0 %v559
  %777 = vmatprep.mubr.bf16.mxu0 %v236
  %778 = vmatmul.mubr.bf16.gmra.mxu0 %v235
  %v779 = vpop.f32.mrf.mxu0
  %v780 = vadd.f32 %v731, %v779
  %v781 = vpop.f32.mrf.mxu0
  %v782 = vpop.f32.mrf.mxu0
  %v783 = vadd.f32 %v734, %v782
  %v784 = vpop.f32.mrf.mxu0
  %785 = vmatprep.mubr.bf16.mxu0 %v244
  %786 = vmatmul.mubr.bf16.gmra.mxu0 %v243
  %v787 = vpop.f32.mrf.mxu0
  %v788 = vadd.f32 %v739, %v787
  %v789 = vpop.f32.mrf.mxu0
  %v790 = vpop.f32.mrf.mxu0
  %v791 = vadd.f32 %v742, %v790
  %v792 = vpop.f32.mrf.mxu0
  %793 = vdwg.mxu0
  %794 = vmatprep.subr.bf16.mxu0 0
  %795 = vmatpush1.bf16.msra.mxu0 %v574
  %796 = vmatprep.subr.bf16.mxu0 0
  %797 = vmatpush1.bf16.msra.mxu0 %v573
  %798 = vmatprep.subr.bf16.mxu0 0
  %799 = vmatpush1.bf16.msra.mxu0 %v572
  %800 = vmatprep.subr.bf16.mxu0 0
  %801 = vmatpush1.bf16.msra.mxu0 %v571
  %802 = vmatprep.subr.bf16.mxu0 0
  %803 = vmatpush1.bf16.msra.mxu0 %v570
  %804 = vmatprep.subr.bf16.mxu0 0
  %805 = vmatpush1.bf16.msra.mxu0 %v569
  %806 = vmatprep.subr.bf16.mxu0 0
  %807 = vmatpush1.bf16.msra.mxu0 %v568
  %808 = vmatprep.subr.bf16.mxu0 0
  %809 = vmatpush1.bf16.msra.mxu0 %v567
  %810 = vmatprep.subr.bf16.mxu0 0
  %811 = vmatpush2.bf16.msra.mxu0 %v582
  %812 = vmatprep.subr.bf16.mxu0 0
  %813 = vmatpush2.bf16.msra.mxu0 %v581
  %814 = vmatprep.subr.bf16.mxu0 0
  %815 = vmatpush2.bf16.msra.mxu0 %v580
  %816 = vmatprep.subr.bf16.mxu0 0
  %817 = vmatpush2.bf16.msra.mxu0 %v579
  %818 = vmatprep.subr.bf16.mxu0 0
  %819 = vmatpush2.bf16.msra.mxu0 %v578
  %820 = vmatprep.subr.bf16.mxu0 0
  %821 = vmatpush2.bf16.msra.mxu0 %v577
  %822 = vmatprep.subr.bf16.mxu0 0
  %823 = vmatpush2.bf16.msra.mxu0 %v576
  %824 = vmatprep.subr.bf16.mxu0 0
  %825 = vmatpush2.bf16.msra.mxu0 %v575
  %826 = vmatprep.mubr.bf16.mxu0 %v238
  %827 = vmatmul.mubr.bf16.gmra.mxu0 %v237
  %v828 = vpop.f32.mrf.mxu0
  %v829 = vadd.f32 %v780, %v828
  %v830 = vpop.f32.mrf.mxu0
  %v831 = vpop.f32.mrf.mxu0
  %v832 = vadd.f32 %v783, %v831
  %v833 = vpop.f32.mrf.mxu0
  %834 = vmatprep.mubr.bf16.mxu0 %v246
  %835 = vmatmul.mubr.bf16.gmra.mxu0 %v245
  %v836 = vpop.f32.mrf.mxu0
  %v837 = vadd.f32 %v788, %v836
  %v838 = vpop.f32.mrf.mxu0
  %v839 = vpop.f32.mrf.mxu0
  %v840 = vadd.f32 %v791, %v839
  %v841 = vpop.f32.mrf.mxu0
  %842 = vdwg.mxu0
  %v843 = vmax.f32 %v829, 0.0
  %v844 = vmax.f32 %v832, 0.0
  %v845 = vmax.f32 %v837, 0.0
  %v846 = vmax.f32 %v840, 0.0
  %vm847 = vcmask 64512
  %848 = vst.msk [vmem:[%s3] sm:$0xff] %vm847, %v843
  %849 = vst.msk [vmem:[%s3 + $0x8] sm:$0xff] %vm847, %v844
  %850 = vst.msk [vmem:[%s3 + $0x10] sm:$0xff] %vm847, %v845
  %851 = vst.msk [vmem:[%s3 + $0x18] sm:$0xff] %vm847, %v846
  // Predicated region
  $region14: #{tsrvfd_forward.24} parent=0 // pred_check
    _
  $region15: #{tsrvfd_forward.24} parent=0 // pred_check_branch
    %853 = sbr.rel (0) target = $region17
  $region16: #{tsrvfd_forward.24} parent=0 // pred_region
    _
  $region17: #{tsrvfd_forward.24} parent=0 // pred_fallthru
    _
  // Predicated region
  $region18: #{tsrvfd_forward.24} parent=0 // pred_check
    _
  $region19: #{tsrvfd_forward.24} parent=0 // pred_check_branch
    %855 = sbr.rel (0) target = $region21
  $region20: #{tsrvfd_forward.24} parent=0 // pred_region
    _
  $region21: #{tsrvfd_forward.24} parent=0 // pred_fallthru
    _

// kernel: tile.43
$region0: #{tile.43}
  #allocation0 [shape = 's32[1]{0}', space=sflag, size = 0x4, scoped, tag = 'scoped memory for tile.43']
  %s0 = inlined_call_operand.vmem [shape: f32[32], index: 0, kind: input, shape index: {}]
  %s1 = inlined_call_operand.vmem [shape: f32[8,32], index: 1, kind: output, shape index: {}]
  // Predicated region
  $region2: #{tile.43} parent=0 // pred_check
    _
  $region3: #{tile.43} parent=0 // pred_check_branch
    %3 = sbr.rel (0) target = $region5
  $region4: #{tile.43} parent=0 // pred_region
    _
  $region5: #{tile.43} parent=0 // pred_fallthru
    _
  %v4 = vld [vmem:[%s0] ss:$0 sm:$0xff]
  %5 = vst [vmem:[%s1] sm:$0xff] %v4

// kernel: tile.44
$region0: #{tile.44}
  %s0 = inlined_call_operand.vmem [shape: f32[8,32], index: 0, kind: input, shape index: {}]
  %s1 = inlined_call_operand.vmem [shape: f32[1,256], index: 1, kind: output, shape index: {}]
  $region1: #{tile.44} parent=0
    #allocation0 [shape = 'u8[8192]{0}', space=vmem, size = 0x2000, scoped, tag = 'scoped mem for output reshape']
    %s2 = smov 3
    %v3 = vld [vmem:[%s0] ss:$4 sm:%s2]
    %vm4 = vcmask 261120
    %5 = vst.msk [vmem:[#allocation0] ss:$8 sm:$0x3] %vm4, %v3
    %s6 = scalar_lea.vmem %s0, 3
    %s7 = smov 3
    %v8 = vld [vmem:[%s6] ss:$4 sm:%s7]
    %9 = vrot.lane.b32.xlu0 %v8, 96
    %v10 = vpop.permute.xlu0 %9
    %vm11 = vcmask 1048320
    %12 = vst.msk [vmem:[#allocation0] ss:$8 sm:$0x3] %vm11, %v10
    %s13 = scalar_lea.vmem %s0, 2
    %s14 = smov 3
    %v15 = vld [vmem:[%s13] ss:$4 sm:%s14]
    %16 = vrot.lane.b32.xlu0 %v15, 64
    %v17 = vpop.permute.xlu0 %16
    %vm18 = vcmask 785920
    %19 = vst.msk [vmem:[#allocation0] ss:$8 sm:$0x3] %vm18, %v17
    %s20 = scalar_lea.vmem %s0, 1
    %s21 = smov 3
    %v22 = vld [vmem:[%s20] ss:$4 sm:%s21]
    %23 = vrot.lane.b32.xlu0 %v22, 32
    %v24 = vpop.permute.xlu0 %23
    %vm25 = vcmask 523520
    %26 = vst.msk [vmem:[#allocation0] ss:$8 sm:$0x3] %vm25, %v24
    %s28 = sshll.u32 1, 1
    %s29 = ssub.s32 %s28, 1
    %v31 = vld [vmem:[#allocation0] sm:%s29]
    %s32 = sshll.u32 1, 1
    %s33 = ssub.s32 %s32, 1
    %34 = vst [vmem:[%s1] sm:%s33] %v31
    %s35 = scalar_lea.vmem [#allocation0], 8
    %v36 = vld [vmem:[%s35] sm:%s29]
    %s37 = sshll.u32 1, 1
    %s38 = ssub.s32 %s37, 1
    %s39 = scalar_lea.vmem %s1, 1
    %40 = vst [vmem:[%s39] sm:%s38] %v36

// kernel: tsrvfd_forward.25
$region0: #{tsrvfd_forward.25}
  #allocation0 [shape = 'u32[]', space=smem, size = 0x4, offset = 0x4, fixed_abs, tag = 'smem constant byte address 0x4 - core index']
  #allocation1 [shape = 'u32[144,128]{1,0:T(1,128)}', space=vmem, size = 0x12000, scoped, tag = 'internal scratch']
  %s0 = inlined_call_operand.vmem [shape: f32[1,2048], index: 0, kind: input, shape index: {}]
  %s1 = inlined_call_operand.vmem [shape: f32[2048,64], index: 1, kind: input, shape index: {}]
  %s2 = inlined_call_operand.vmem [shape: f32[1,64], index: 2, kind: input, shape index: {}]
  %s3 = inlined_call_operand.vmem [shape: f32[9,64,64], index: 3, kind: input, shape index: {}]
  %s4 = inlined_call_operand.vmem [shape: f32[64,256], index: 4, kind: input, shape index: {}]
  %s5 = inlined_call_operand.vmem [shape: f32[1,256], index: 5, kind: input, shape index: {}]
  %s6 = inlined_call_operand.vmem [shape: f32[1,256], index: 6, kind: output, shape index: {}]
  %s7 = sld [smem:[#allocation0]]
  $region34: #{tsrvfd_forward.25} parent=0
    _
  %s9 = ssub.s32 1, %s7
  %s10 = scalar_select 0, %s9, %s7
  // Predicated region
  $region2: #{tsrvfd_forward.25} parent=0 // pred_check
    _
  $region3: #{tsrvfd_forward.25} parent=0 // pred_check_branch
    %12 = sbr.rel (0) target = $region5
  $region4: #{tsrvfd_forward.25} parent=0 // pred_region
    _
  $region5: #{tsrvfd_forward.25} parent=0 // pred_fallthru
    _
  // Predicated region
  $region6: #{tsrvfd_forward.25} parent=0 // pred_check
    _
  $region7: #{tsrvfd_forward.25} parent=0 // pred_check_branch
    %14 = sbr.rel (0) target = $region9
  $region8: #{tsrvfd_forward.25} parent=0 // pred_region
    _
  $region9: #{tsrvfd_forward.25} parent=0 // pred_fallthru
    _
  // Predicated region
  $region10: #{tsrvfd_forward.25} parent=0 // pred_check
    _
  $region11: #{tsrvfd_forward.25} parent=0 // pred_check_branch
    %16 = sbr.rel (0) target = $region13
  $region12: #{tsrvfd_forward.25} parent=0 // pred_region
    _
  $region13: #{tsrvfd_forward.25} parent=0 // pred_fallthru
    _
  // Predicated region
  $region14: #{tsrvfd_forward.25} parent=0 // pred_check
    _
  $region15: #{tsrvfd_forward.25} parent=0 // pred_check_branch
    %18 = sbr.rel (0) target = $region17
  $region16: #{tsrvfd_forward.25} parent=0 // pred_region
    _
  $region17: #{tsrvfd_forward.25} parent=0 // pred_fallthru
    _
  // Predicated region
  $region18: #{tsrvfd_forward.25} parent=0 // pred_check
    _
  $region19: #{tsrvfd_forward.25} parent=0 // pred_check_branch
    %20 = sbr.rel (0) target = $region21
  $region20: #{tsrvfd_forward.25} parent=0 // pred_region
    _
  $region21: #{tsrvfd_forward.25} parent=0 // pred_fallthru
    _
  // Predicated region
  $region22: #{tsrvfd_forward.25} parent=0 // pred_check
    _
  $region23: #{tsrvfd_forward.25} parent=0 // pred_check_branch
    %22 = sbr.rel (0) target = $region25
  $region24: #{tsrvfd_forward.25} parent=0 // pred_region
    _
  $region25: #{tsrvfd_forward.25} parent=0 // pred_fallthru
    _
  %v23 = vld [vmem:[%s0] sm:$0xff]
  %v24 = vld [vmem:[%s0 + $0x8] sm:$0xff]
  %v25 = vld [vmem:[%s1] sm:$0xff]
  %v26 = vld [vmem:[%s1 + $0x8] sm:$0xff]
  %v27 = vld [vmem:[%s1 + $0x10] sm:$0xff]
  %v28 = vld [vmem:[%s1 + $0x18] sm:$0xff]
  %v29 = vld [vmem:[%s1 + $0x20] sm:$0xff]
  %v30 = vld [vmem:[%s1 + $0x28] sm:$0xff]
  %v31 = vld [vmem:[%s1 + $0x30] sm:$0xff]
  %v32 = vld [vmem:[%s1 + $0x38] sm:$0xff]
  %v33 = vld [vmem:[%s1 + $0x40] sm:$0xff]
  %v34 = vld [vmem:[%s1 + $0x48] sm:$0xff]
  %v35 = vld [vmem:[%s1 + $0x50] sm:$0xff]
  %v36 = vld [vmem:[%s1 + $0x58] sm:$0xff]
  %v37 = vld [vmem:[%s1 + $0x60] sm:$0xff]
  %v38 = vld [vmem:[%s1 + $0x68] sm:$0xff]
  %v39 = vld [vmem:[%s1 + $0x70] sm:$0xff]
  %v40 = vld [vmem:[%s1 + $0x78] sm:$0xff]
  %v41 = vld [vmem:[%s1 + $0x80] sm:$0xff]
  %v42 = vld [vmem:[%s1 + $0x88] sm:$0xff]
  %v43 = vld [vmem:[%s1 + $0x90] sm:$0xff]
  %v44 = vld [vmem:[%s1 + $0x98] sm:$0xff]
  %v45 = vld [vmem:[%s1 + $0xa0] sm:$0xff]
  %v46 = vld [vmem:[%s1 + $0xa8] sm:$0xff]
  %v47 = vld [vmem:[%s1 + $0xb0] sm:$0xff]
  %v48 = vld [vmem:[%s1 + $0xb8] sm:$0xff]
  %v49 = vld [vmem:[%s1 + $0xc0] sm:$0xff]
  %v50 = vld [vmem:[%s1 + $0xc8] sm:$0xff]
  %v51 = vld [vmem:[%s1 + $0xd0] sm:$0xff]
  %v52 = vld [vmem:[%s1 + $0xd8] sm:$0xff]
  %v53 = vld [vmem:[%s1 + $0xe0] sm:$0xff]
  %v54 = vld [vmem:[%s1 + $0xe8] sm:$0xff]
  %v55 = vld [vmem:[%s1 + $0xf0] sm:$0xff]
  %v56 = vld [vmem:[%s1 + $0xf8] sm:$0xff]
  %v57 = vld [vmem:[%s1 + $0x100] sm:$0xff]
  %v58 = vld [vmem:[%s1 + $0x108] sm:$0xff]
  %v59 = vld [vmem:[%s1 + $0x110] sm:$0xff]
  %v60 = vld [vmem:[%s1 + $0x118] sm:$0xff]
  %v61 = vld [vmem:[%s1 + $0x120] sm:$0xff]
  %v62 = vld [vmem:[%s1 + $0x128] sm:$0xff]
  %v63 = vld [vmem:[%s1 + $0x130] sm:$0xff]
  %v64 = vld [vmem:[%s1 + $0x138] sm:$0xff]
  %v65 = vld [vmem:[%s1 + $0x140] sm:$0xff]
  %v66 = vld [vmem:[%s1 + $0x148] sm:$0xff]
  %v67 = vld [vmem:[%s1 + $0x150] sm:$0xff]
  %v68 = vld [vmem:[%s1 + $0x158] sm:$0xff]
  %v69 = vld [vmem:[%s1 + $0x160] sm:$0xff]
  %v70 = vld [vmem:[%s1 + $0x168] sm:$0xff]
  %v71 = vld [vmem:[%s1 + $0x170] sm:$0xff]
  %v72 = vld [vmem:[%s1 + $0x178] sm:$0xff]
  %v73 = vld [vmem:[%s1 + $0x180] sm:$0xff]
  %v74 = vld [vmem:[%s1 + $0x188] sm:$0xff]
  %v75 = vld [vmem:[%s1 + $0x190] sm:$0xff]
  %v76 = vld [vmem:[%s1 + $0x198] sm:$0xff]
  %v77 = vld [vmem:[%s1 + $0x1a0] sm:$0xff]
  %v78 = vld [vmem:[%s1 + $0x1a8] sm:$0xff]
  %v79 = vld [vmem:[%s1 + $0x1b0] sm:$0xff]
  %v80 = vld [vmem:[%s1 + $0x1b8] sm:$0xff]
  %v81 = vld [vmem:[%s1 + $0x1c0] sm:$0xff]
  %v82 = vld [vmem:[%s1 + $0x1c8] sm:$0xff]
  %v83 = vld [vmem:[%s1 + $0x1d0] sm:$0xff]
  %v84 = vld [vmem:[%s1 + $0x1d8] sm:$0xff]
  %v85 = vld [vmem:[%s1 + $0x1e0] sm:$0xff]
  %v86 = vld [vmem:[%s1 + $0x1e8] sm:$0xff]
  %v87 = vld [vmem:[%s1 + $0x1f0] sm:$0xff]
  %v88 = vld [vmem:[%s1 + $0x1f8] sm:$0xff]
  %v89 = vld [vmem:[%s1 + $0x200] sm:$0xff]
  %v90 = vld [vmem:[%s1 + $0x208] sm:$0xff]
  %v91 = vld [vmem:[%s1 + $0x210] sm:$0xff]
  %v92 = vld [vmem:[%s1 + $0x218] sm:$0xff]
  %v93 = vld [vmem:[%s1 + $0x220] sm:$0xff]
  %v94 = vld [vmem:[%s1 + $0x228] sm:$0xff]
  %v95 = vld [vmem:[%s1 + $0x230] sm:$0xff]
  %v96 = vld [vmem:[%s1 + $0x238] sm:$0xff]
  %v97 = vld [vmem:[%s1 + $0x240] sm:$0xff]
  %v98 = vld [vmem:[%s1 + $0x248] sm:$0xff]
  %v99 = vld [vmem:[%s1 + $0x250] sm:$0xff]
  %v100 = vld [vmem:[%s1 + $0x258] sm:$0xff]
  %v101 = vld [vmem:[%s1 + $0x260] sm:$0xff]
  %v102 = vld [vmem:[%s1 + $0x268] sm:$0xff]
  %v103 = vld [vmem:[%s1 + $0x270] sm:$0xff]
  %v104 = vld [vmem:[%s1 + $0x278] sm:$0xff]
  %v105 = vld [vmem:[%s1 + $0x280] sm:$0xff]
  %v106 = vld [vmem:[%s1 + $0x288] sm:$0xff]
  %v107 = vld [vmem:[%s1 + $0x290] sm:$0xff]
  %v108 = vld [vmem:[%s1 + $0x298] sm:$0xff]
  %v109 = vld [vmem:[%s1 + $0x2a0] sm:$0xff]
  %v110 = vld [vmem:[%s1 + $0x2a8] sm:$0xff]
  %v111 = vld [vmem:[%s1 + $0x2b0] sm:$0xff]
  %v112 = vld [vmem:[%s1 + $0x2b8] sm:$0xff]
  %v113 = vld [vmem:[%s1 + $0x2c0] sm:$0xff]
  %v114 = vld [vmem:[%s1 + $0x2c8] sm:$0xff]
  %v115 = vld [vmem:[%s1 + $0x2d0] sm:$0xff]
  %v116 = vld [vmem:[%s1 + $0x2d8] sm:$0xff]
  %v117 = vld [vmem:[%s1 + $0x2e0] sm:$0xff]
  %v118 = vld [vmem:[%s1 + $0x2e8] sm:$0xff]
  %v119 = vld [vmem:[%s1 + $0x2f0] sm:$0xff]
  %v120 = vld [vmem:[%s1 + $0x2f8] sm:$0xff]
  %v121 = vld [vmem:[%s1 + $0x300] sm:$0xff]
  %v122 = vld [vmem:[%s1 + $0x308] sm:$0xff]
  %v123 = vld [vmem:[%s1 + $0x310] sm:$0xff]
  %v124 = vld [vmem:[%s1 + $0x318] sm:$0xff]
  %v125 = vld [vmem:[%s1 + $0x320] sm:$0xff]
  %v126 = vld [vmem:[%s1 + $0x328] sm:$0xff]
  %v127 = vld [vmem:[%s1 + $0x330] sm:$0xff]
  %v128 = vld [vmem:[%s1 + $0x338] sm:$0xff]
  %v129 = vld [vmem:[%s1 + $0x340] sm:$0xff]
  %v130 = vld [vmem:[%s1 + $0x348] sm:$0xff]
  %v131 = vld [vmem:[%s1 + $0x350] sm:$0xff]
  %v132 = vld [vmem:[%s1 + $0x358] sm:$0xff]
  %v133 = vld [vmem:[%s1 + $0x360] sm:$0xff]
  %v134 = vld [vmem:[%s1 + $0x368] sm:$0xff]
  %v135 = vld [vmem:[%s1 + $0x370] sm:$0xff]
  %v136 = vld [vmem:[%s1 + $0x378] sm:$0xff]
  %v137 = vld [vmem:[%s1 + $0x380] sm:$0xff]
  %v138 = vld [vmem:[%s1 + $0x388] sm:$0xff]
  %v139 = vld [vmem:[%s1 + $0x390] sm:$0xff]
  %v140 = vld [vmem:[%s1 + $0x398] sm:$0xff]
  %v141 = vld [vmem:[%s1 + $0x3a0] sm:$0xff]
  %v142 = vld [vmem:[%s1 + $0x3a8] sm:$0xff]
  %v143 = vld [vmem:[%s1 + $0x3b0] sm:$0xff]
  %v144 = vld [vmem:[%s1 + $0x3b8] sm:$0xff]
  %v145 = vld [vmem:[%s1 + $0x3c0] sm:$0xff]
  %v146 = vld [vmem:[%s1 + $0x3c8] sm:$0xff]
  %v147 = vld [vmem:[%s1 + $0x3d0] sm:$0xff]
  %v148 = vld [vmem:[%s1 + $0x3d8] sm:$0xff]
  %v149 = vld [vmem:[%s1 + $0x3e0] sm:$0xff]
  %v150 = vld [vmem:[%s1 + $0x3e8] sm:$0xff]
  %v151 = vld [vmem:[%s1 + $0x3f0] sm:$0xff]
  %v152 = vld [vmem:[%s1 + $0x3f8] sm:$0xff]
  %v153 = vld [vmem:[%s1 + $0x400] sm:$0xff]
  %v154 = vld [vmem:[%s1 + $0x408] sm:$0xff]
  %v155 = vld [vmem:[%s1 + $0x410] sm:$0xff]
  %v156 = vld [vmem:[%s1 + $0x418] sm:$0xff]
  %v157 = vld [vmem:[%s1 + $0x420] sm:$0xff]
  %v158 = vld [vmem:[%s1 + $0x428] sm:$0xff]
  %v159 = vld [vmem:[%s1 + $0x430] sm:$0xff]
  %v160 = vld [vmem:[%s1 + $0x438] sm:$0xff]
  %v161 = vld [vmem:[%s1 + $0x440] sm:$0xff]
  %v162 = vld [vmem:[%s1 + $0x448] sm:$0xff]
  %v163 = vld [vmem:[%s1 + $0x450] sm:$0xff]
  %v164 = vld [vmem:[%s1 + $0x458] sm:$0xff]
  %v165 = vld [vmem:[%s1 + $0x460] sm:$0xff]
  %v166 = vld [vmem:[%s1 + $0x468] sm:$0xff]
  %v167 = vld [vmem:[%s1 + $0x470] sm:$0xff]
  %v168 = vld [vmem:[%s1 + $0x478] sm:$0xff]
  %v169 = vld [vmem:[%s1 + $0x480] sm:$0xff]
  %v170 = vld [vmem:[%s1 + $0x488] sm:$0xff]
  %v171 = vld [vmem:[%s1 + $0x490] sm:$0xff]
  %v172 = vld [vmem:[%s1 + $0x498] sm:$0xff]
  %v173 = vld [vmem:[%s1 + $0x4a0] sm:$0xff]
  %v174 = vld [vmem:[%s1 + $0x4a8] sm:$0xff]
  %v175 = vld [vmem:[%s1 + $0x4b0] sm:$0xff]
  %v176 = vld [vmem:[%s1 + $0x4b8] sm:$0xff]
  %v177 = vld [vmem:[%s1 + $0x4c0] sm:$0xff]
  %v178 = vld [vmem:[%s1 + $0x4c8] sm:$0xff]
  %v179 = vld [vmem:[%s1 + $0x4d0] sm:$0xff]
  %v180 = vld [vmem:[%s1 + $0x4d8] sm:$0xff]
  %v181 = vld [vmem:[%s1 + $0x4e0] sm:$0xff]
  %v182 = vld [vmem:[%s1 + $0x4e8] sm:$0xff]
  %v183 = vld [vmem:[%s1 + $0x4f0] sm:$0xff]
  %v184 = vld [vmem:[%s1 + $0x4f8] sm:$0xff]
  %v185 = vld [vmem:[%s1 + $0x500] sm:$0xff]
  %v186 = vld [vmem:[%s1 + $0x508] sm:$0xff]
  %v187 = vld [vmem:[%s1 + $0x510] sm:$0xff]
  %v188 = vld [vmem:[%s1 + $0x518] sm:$0xff]
  %v189 = vld [vmem:[%s1 + $0x520] sm:$0xff]
  %v190 = vld [vmem:[%s1 + $0x528] sm:$0xff]
  %v191 = vld [vmem:[%s1 + $0x530] sm:$0xff]
  %v192 = vld [vmem:[%s1 + $0x538] sm:$0xff]
  %v193 = vld [vmem:[%s1 + $0x540] sm:$0xff]
  %v194 = vld [vmem:[%s1 + $0x548] sm:$0xff]
  %v195 = vld [vmem:[%s1 + $0x550] sm:$0xff]
  %v196 = vld [vmem:[%s1 + $0x558] sm:$0xff]
  %v197 = vld [vmem:[%s1 + $0x560] sm:$0xff]
  %v198 = vld [vmem:[%s1 + $0x568] sm:$0xff]
  %v199 = vld [vmem:[%s1 + $0x570] sm:$0xff]
  %v200 = vld [vmem:[%s1 + $0x578] sm:$0xff]
  %v201 = vld [vmem:[%s1 + $0x580] sm:$0xff]
  %v202 = vld [vmem:[%s1 + $0x588] sm:$0xff]
  %v203 = vld [vmem:[%s1 + $0x590] sm:$0xff]
  %v204 = vld [vmem:[%s1 + $0x598] sm:$0xff]
  %v205 = vld [vmem:[%s1 + $0x5a0] sm:$0xff]
  %v206 = vld [vmem:[%s1 + $0x5a8] sm:$0xff]
  %v207 = vld [vmem:[%s1 + $0x5b0] sm:$0xff]
  %v208 = vld [vmem:[%s1 + $0x5b8] sm:$0xff]
  %v209 = vld [vmem:[%s1 + $0x5c0] sm:$0xff]
  %v210 = vld [vmem:[%s1 + $0x5c8] sm:$0xff]
  %v211 = vld [vmem:[%s1 + $0x5d0] sm:$0xff]
  %v212 = vld [vmem:[%s1 + $0x5d8] sm:$0xff]
  %v213 = vld [vmem:[%s1 + $0x5e0] sm:$0xff]
  %v214 = vld [vmem:[%s1 + $0x5e8] sm:$0xff]
  %v215 = vld [vmem:[%s1 + $0x5f0] sm:$0xff]
  %v216 = vld [vmem:[%s1 + $0x5f8] sm:$0xff]
  %v217 = vld [vmem:[%s1 + $0x600] sm:$0xff]
  %v218 = vld [vmem:[%s1 + $0x608] sm:$0xff]
  %v219 = vld [vmem:[%s1 + $0x610] sm:$0xff]
  %v220 = vld [vmem:[%s1 + $0x618] sm:$0xff]
  %v221 = vld [vmem:[%s1 + $0x620] sm:$0xff]
  %v222 = vld [vmem:[%s1 + $0x628] sm:$0xff]
  %v223 = vld [vmem:[%s1 + $0x630] sm:$0xff]
  %v224 = vld [vmem:[%s1 + $0x638] sm:$0xff]
  %v225 = vld [vmem:[%s1 + $0x640] sm:$0xff]
  %v226 = vld [vmem:[%s1 + $0x648] sm:$0xff]
  %v227 = vld [vmem:[%s1 + $0x650] sm:$0xff]
  %v228 = vld [vmem:[%s1 + $0x658] sm:$0xff]
  %v229 = vld [vmem:[%s1 + $0x660] sm:$0xff]
  %v230 = vld [vmem:[%s1 + $0x668] sm:$0xff]
  %v231 = vld [vmem:[%s1 + $0x670] sm:$0xff]
  %v232 = vld [vmem:[%s1 + $0x678] sm:$0xff]
  %v233 = vld [vmem:[%s1 + $0x680] sm:$0xff]
  %v234 = vld [vmem:[%s1 + $0x688] sm:$0xff]
  %v235 = vld [vmem:[%s1 + $0x690] sm:$0xff]
  %v236 = vld [vmem:[%s1 + $0x698] sm:$0xff]
  %v237 = vld [vmem:[%s1 + $0x6a0] sm:$0xff]
  %v238 = vld [vmem:[%s1 + $0x6a8] sm:$0xff]
  %v239 = vld [vmem:[%s1 + $0x6b0] sm:$0xff]
  %v240 = vld [vmem:[%s1 + $0x6b8] sm:$0xff]
  %v241 = vld [vmem:[%s1 + $0x6c0] sm:$0xff]
  %v242 = vld [vmem:[%s1 + $0x6c8] sm:$0xff]
  %v243 = vld [vmem:[%s1 + $0x6d0] sm:$0xff]
  %v244 = vld [vmem:[%s1 + $0x6d8] sm:$0xff]
  %v245 = vld [vmem:[%s1 + $0x6e0] sm:$0xff]
  %v246 = vld [vmem:[%s1 + $0x6e8] sm:$0xff]
  %v247 = vld [vmem:[%s1 + $0x6f0] sm:$0xff]
  %v248 = vld [vmem:[%s1 + $0x6f8] sm:$0xff]
  %v249 = vld [vmem:[%s1 + $0x700] sm:$0xff]
  %v250 = vld [vmem:[%s1 + $0x708] sm:$0xff]
  %v251 = vld [vmem:[%s1 + $0x710] sm:$0xff]
  %v252 = vld [vmem:[%s1 + $0x718] sm:$0xff]
  %v253 = vld [vmem:[%s1 + $0x720] sm:$0xff]
  %v254 = vld [vmem:[%s1 + $0x728] sm:$0xff]
  %v255 = vld [vmem:[%s1 + $0x730] sm:$0xff]
  %v256 = vld [vmem:[%s1 + $0x738] sm:$0xff]
  %v257 = vld [vmem:[%s1 + $0x740] sm:$0xff]
  %v258 = vld [vmem:[%s1 + $0x748] sm:$0xff]
  %v259 = vld [vmem:[%s1 + $0x750] sm:$0xff]
  %v260 = vld [vmem:[%s1 + $0x758] sm:$0xff]
  %v261 = vld [vmem:[%s1 + $0x760] sm:$0xff]
  %v262 = vld [vmem:[%s1 + $0x768] sm:$0xff]
  %v263 = vld [vmem:[%s1 + $0x770] sm:$0xff]
  %v264 = vld [vmem:[%s1 + $0x778] sm:$0xff]
  %v265 = vld [vmem:[%s1 + $0x780] sm:$0xff]
  %v266 = vld [vmem:[%s1 + $0x788] sm:$0xff]
  %v267 = vld [vmem:[%s1 + $0x790] sm:$0xff]
  %v268 = vld [vmem:[%s1 + $0x798] sm:$0xff]
  %v269 = vld [vmem:[%s1 + $0x7a0] sm:$0xff]
  %v270 = vld [vmem:[%s1 + $0x7a8] sm:$0xff]
  %v271 = vld [vmem:[%s1 + $0x7b0] sm:$0xff]
  %v272 = vld [vmem:[%s1 + $0x7b8] sm:$0xff]
  %v273 = vld [vmem:[%s1 + $0x7c0] sm:$0xff]
  %v274 = vld [vmem:[%s1 + $0x7c8] sm:$0xff]
  %v275 = vld [vmem:[%s1 + $0x7d0] sm:$0xff]
  %v276 = vld [vmem:[%s1 + $0x7d8] sm:$0xff]
  %v277 = vld [vmem:[%s1 + $0x7e0] sm:$0xff]
  %v278 = vld [vmem:[%s1 + $0x7e8] sm:$0xff]
  %v279 = vld [vmem:[%s1 + $0x7f0] sm:$0xff]
  %v280 = vld [vmem:[%s1 + $0x7f8] sm:$0xff]
  %v281 = vld [vmem:[%s2] sm:$0x1]
  %v284 = vlaneseq
  %v285 = vshrl.u32 %v284, 7
  %v286 = vsub.s32 0, %v285
  %v287 = vrot.slane %v23, %v286
  %v288 = vlaneseq
  %v289 = vshrl.u32 %v288, 7
  %v290 = vsub.s32 1, %v289
  %v291 = vrot.slane %v23, %v290
  %v292 = vlaneseq
  %v293 = vshrl.u32 %v292, 7
  %v294 = vsub.s32 2, %v293
  %v295 = vrot.slane %v23, %v294
  %v296 = vlaneseq
  %v297 = vshrl.u32 %v296, 7
  %v298 = vsub.s32 3, %v297
  %v299 = vrot.slane %v23, %v298
  %v300 = vlaneseq
  %v301 = vshrl.u32 %v300, 7
  %v302 = vsub.s32 4, %v301
  %v303 = vrot.slane %v23, %v302
  %v304 = vlaneseq
  %v305 = vshrl.u32 %v304, 7
  %v306 = vsub.s32 5, %v305
  %v307 = vrot.slane %v23, %v306
  %v308 = vlaneseq
  %v309 = vshrl.u32 %v308, 7
  %v310 = vsub.s32 6, %v309
  %v311 = vrot.slane %v23, %v310
  %v312 = vlaneseq
  %v313 = vshrl.u32 %v312, 7
  %v314 = vsub.s32 7, %v313
  %v315 = vrot.slane %v23, %v314
  %v316 = vlaneseq
  %v317 = vshrl.u32 %v316, 7
  %v318 = vsub.s32 0, %v317
  %v319 = vrot.slane %v24, %v318
  %v320 = vlaneseq
  %v321 = vshrl.u32 %v320, 7
  %v322 = vsub.s32 1, %v321
  %v323 = vrot.slane %v24, %v322
  %v324 = vlaneseq
  %v325 = vshrl.u32 %v324, 7
  %v326 = vsub.s32 2, %v325
  %v327 = vrot.slane %v24, %v326
  %v328 = vlaneseq
  %v329 = vshrl.u32 %v328, 7
  %v330 = vsub.s32 3, %v329
  %v331 = vrot.slane %v24, %v330
  %v332 = vlaneseq
  %v333 = vshrl.u32 %v332, 7
  %v334 = vsub.s32 4, %v333
  %v335 = vrot.slane %v24, %v334
  %v336 = vlaneseq
  %v337 = vshrl.u32 %v336, 7
  %v338 = vsub.s32 5, %v337
  %v339 = vrot.slane %v24, %v338
  %v340 = vlaneseq
  %v341 = vshrl.u32 %v340, 7
  %v342 = vsub.s32 6, %v341
  %v343 = vrot.slane %v24, %v342
  %v344 = vlaneseq
  %v345 = vshrl.u32 %v344, 7
  %v346 = vsub.s32 7, %v345
  %v347 = vrot.slane %v24, %v346
  %364 = vmatprep.subr.mxu0 0.0
  %365 = vmatpush1.msra.mxu0 %v40
  %366 = vmatprep.subr.mxu0 0.0
  %367 = vmatpush1.msra.mxu0 %v39
  %368 = vmatprep.subr.mxu0 0.0
  %369 = vmatpush1.msra.mxu0 %v38
  %370 = vmatprep.subr.mxu0 0.0
  %371 = vmatpush1.msra.mxu0 %v37
  %372 = vmatprep.subr.mxu0 0.0
  %373 = vmatpush1.msra.mxu0 %v36
  %374 = vmatprep.subr.mxu0 0.0
  %375 = vmatpush1.msra.mxu0 %v35
  %376 = vmatprep.subr.mxu0 0.0
  %377 = vmatpush1.msra.mxu0 %v34
  %378 = vmatprep.subr.mxu0 0.0
  %379 = vmatpush1.msra.mxu0 %v33
  %380 = vmatprep.subr.mxu0 0.0
  %381 = vmatpush1.msra.mxu0 %v32
  %382 = vmatprep.subr.mxu0 0.0
  %383 = vmatpush1.msra.mxu0 %v31
  %384 = vmatprep.subr.mxu0 0.0
  %385 = vmatpush1.msra.mxu0 %v30
  %386 = vmatprep.subr.mxu0 0.0
  %387 = vmatpush1.msra.mxu0 %v29
  %388 = vmatprep.subr.mxu0 0.0
  %389 = vmatpush1.msra.mxu0 %v28
  %390 = vmatprep.subr.mxu0 0.0
  %391 = vmatpush1.msra.mxu0 %v27
  %392 = vmatprep.subr.mxu0 0.0
  %393 = vmatpush1.msra.mxu0 %v26
  %394 = vmatprep.subr.mxu0 0.0
  %395 = vmatpush1.msra.mxu0 %v25
  %396 = vmatprep.subr.mxu0 0.0
  %397 = vmatpush2.msra.mxu0 %v56
  %398 = vmatprep.subr.mxu0 0.0
  %399 = vmatpush2.msra.mxu0 %v55
  %400 = vmatprep.subr.mxu0 0.0
  %401 = vmatpush2.msra.mxu0 %v54
  %402 = vmatprep.subr.mxu0 0.0
  %403 = vmatpush2.msra.mxu0 %v53
  %404 = vmatprep.subr.mxu0 0.0
  %405 = vmatpush2.msra.mxu0 %v52
  %406 = vmatprep.subr.mxu0 0.0
  %407 = vmatpush2.msra.mxu0 %v51
  %408 = vmatprep.subr.mxu0 0.0
  %409 = vmatpush2.msra.mxu0 %v50
  %410 = vmatprep.subr.mxu0 0.0
  %411 = vmatpush2.msra.mxu0 %v49
  %412 = vmatprep.subr.mxu0 0.0
  %413 = vmatpush2.msra.mxu0 %v48
  %414 = vmatprep.subr.mxu0 0.0
  %415 = vmatpush2.msra.mxu0 %v47
  %416 = vmatprep.subr.mxu0 0.0
  %417 = vmatpush2.msra.mxu0 %v46
  %418 = vmatprep.subr.mxu0 0.0
  %419 = vmatpush2.msra.mxu0 %v45
  %420 = vmatprep.subr.mxu0 0.0
  %421 = vmatpush2.msra.mxu0 %v44
  %422 = vmatprep.subr.mxu0 0.0
  %423 = vmatpush2.msra.mxu0 %v43
  %424 = vmatprep.subr.mxu0 0.0
  %425 = vmatpush2.msra.mxu0 %v42
  %426 = vmatprep.subr.mxu0 0.0
  %427 = vmatpush2.msra.mxu0 %v41
  %428 = vmatprep.mubr.f32.mxu0 %v291
  %429 = vmatmul.mubr.f32.gmra.mxu0 %v287
  %v430 = vpop.f32.mrf.mxu0
  %v431 = vadd.f32 %v281, %v430
  %v432 = vpop.f32.mrf.mxu0
  %433 = vdwg.mxu0
  %434 = vmatprep.subr.mxu0 0.0
  %435 = vmatpush1.msra.mxu0 %v72
  %436 = vmatprep.subr.mxu0 0.0
  %437 = vmatpush1.msra.mxu0 %v71
  %438 = vmatprep.subr.mxu0 0.0
  %439 = vmatpush1.msra.mxu0 %v70
  %440 = vmatprep.subr.mxu0 0.0
  %441 = vmatpush1.msra.mxu0 %v69
  %442 = vmatprep.subr.mxu0 0.0
  %443 = vmatpush1.msra.mxu0 %v68
  %444 = vmatprep.subr.mxu0 0.0
  %445 = vmatpush1.msra.mxu0 %v67
  %446 = vmatprep.subr.mxu0 0.0
  %447 = vmatpush1.msra.mxu0 %v66
  %448 = vmatprep.subr.mxu0 0.0
  %449 = vmatpush1.msra.mxu0 %v65
  %450 = vmatprep.subr.mxu0 0.0
  %451 = vmatpush1.msra.mxu0 %v64
  %452 = vmatprep.subr.mxu0 0.0
  %453 = vmatpush1.msra.mxu0 %v63
  %454 = vmatprep.subr.mxu0 0.0
  %455 = vmatpush1.msra.mxu0 %v62
  %456 = vmatprep.subr.mxu0 0.0
  %457 = vmatpush1.msra.mxu0 %v61
  %458 = vmatprep.subr.mxu0 0.0
  %459 = vmatpush1.msra.mxu0 %v60
  %460 = vmatprep.subr.mxu0 0.0
  %461 = vmatpush1.msra.mxu0 %v59
  %462 = vmatprep.subr.mxu0 0.0
  %463 = vmatpush1.msra.mxu0 %v58
  %464 = vmatprep.subr.mxu0 0.0
  %465 = vmatpush1.msra.mxu0 %v57
  %466 = vmatprep.subr.mxu0 0.0
  %467 = vmatpush2.msra.mxu0 %v88
  %468 = vmatprep.subr.mxu0 0.0
  %469 = vmatpush2.msra.mxu0 %v87
  %470 = vmatprep.subr.mxu0 0.0
  %471 = vmatpush2.msra.mxu0 %v86
  %472 = vmatprep.subr.mxu0 0.0
  %473 = vmatpush2.msra.mxu0 %v85
  %474 = vmatprep.subr.mxu0 0.0
  %475 = vmatpush2.msra.mxu0 %v84
  %476 = vmatprep.subr.mxu0 0.0
  %477 = vmatpush2.msra.mxu0 %v83
  %478 = vmatprep.subr.mxu0 0.0
  %479 = vmatpush2.msra.mxu0 %v82
  %480 = vmatprep.subr.mxu0 0.0
  %481 = vmatpush2.msra.mxu0 %v81
  %482 = vmatprep.subr.mxu0 0.0
  %483 = vmatpush2.msra.mxu0 %v80
  %484 = vmatprep.subr.mxu0 0.0
  %485 = vmatpush2.msra.mxu0 %v79
  %486 = vmatprep.subr.mxu0 0.0
  %487 = vmatpush2.msra.mxu0 %v78
  %488 = vmatprep.subr.mxu0 0.0
  %489 = vmatpush2.msra.mxu0 %v77
  %490 = vmatprep.subr.mxu0 0.0
  %491 = vmatpush2.msra.mxu0 %v76
  %492 = vmatprep.subr.mxu0 0.0
  %493 = vmatpush2.msra.mxu0 %v75
  %494 = vmatprep.subr.mxu0 0.0
  %495 = vmatpush2.msra.mxu0 %v74
  %496 = vmatprep.subr.mxu0 0.0
  %497 = vmatpush2.msra.mxu0 %v73
  %498 = vmatprep.mubr.f32.mxu0 %v299
  %499 = vmatmul.mubr.f32.gmra.mxu0 %v295
  %v500 = vpop.f32.mrf.mxu0
  %v501 = vadd.f32 %v431, %v500
  %v502 = vpop.f32.mrf.mxu0
  %503 = vdwg.mxu0
  %504 = vmatprep.subr.mxu0 0.0
  %505 = vmatpush1.msra.mxu0 %v104
  %506 = vmatprep.subr.mxu0 0.0
  %507 = vmatpush1.msra.mxu0 %v103
  %508 = vmatprep.subr.mxu0 0.0
  %509 = vmatpush1.msra.mxu0 %v102
  %510 = vmatprep.subr.mxu0 0.0
  %511 = vmatpush1.msra.mxu0 %v101
  %512 = vmatprep.subr.mxu0 0.0
  %513 = vmatpush1.msra.mxu0 %v100
  %514 = vmatprep.subr.mxu0 0.0
  %515 = vmatpush1.msra.mxu0 %v99
  %516 = vmatprep.subr.mxu0 0.0
  %517 = vmatpush1.msra.mxu0 %v98
  %518 = vmatprep.subr.mxu0 0.0
  %519 = vmatpush1.msra.mxu0 %v97
  %520 = vmatprep.subr.mxu0 0.0
  %521 = vmatpush1.msra.mxu0 %v96
  %522 = vmatprep.subr.mxu0 0.0
  %523 = vmatpush1.msra.mxu0 %v95
  %524 = vmatprep.subr.mxu0 0.0
  %525 = vmatpush1.msra.mxu0 %v94
  %526 = vmatprep.subr.mxu0 0.0
  %527 = vmatpush1.msra.mxu0 %v93
  %528 = vmatprep.subr.mxu0 0.0
  %529 = vmatpush1.msra.mxu0 %v92
  %530 = vmatprep.subr.mxu0 0.0
  %531 = vmatpush1.msra.mxu0 %v91
  %532 = vmatprep.subr.mxu0 0.0
  %533 = vmatpush1.msra.mxu0 %v90
  %534 = vmatprep.subr.mxu0 0.0
  %535 = vmatpush1.msra.mxu0 %v89
  %536 = vmatprep.subr.mxu0 0.0
  %537 = vmatpush2.msra.mxu0 %v120
  %538 = vmatprep.subr.mxu0 0.0
  %539 = vmatpush2.msra.mxu0 %v119
  %540 = vmatprep.subr.mxu0 0.0
  %541 = vmatpush2.msra.mxu0 %v118
  %542 = vmatprep.subr.mxu0 0.0
  %543 = vmatpush2.msra.mxu0 %v117
  %544 = vmatprep.subr.mxu0 0.0
  %545 = vmatpush2.msra.mxu0 %v116
  %546 = vmatprep.subr.mxu0 0.0
  %547 = vmatpush2.msra.mxu0 %v115
  %548 = vmatprep.subr.mxu0 0.0
  %549 = vmatpush2.msra.mxu0 %v114
  %550 = vmatprep.subr.mxu0 0.0
  %551 = vmatpush2.msra.mxu0 %v113
  %552 = vmatprep.subr.mxu0 0.0
  %553 = vmatpush2.msra.mxu0 %v112
  %554 = vmatprep.subr.mxu0 0.0
  %555 = vmatpush2.msra.mxu0 %v111
  %556 = vmatprep.subr.mxu0 0.0
  %557 = vmatpush2.msra.mxu0 %v110
  %558 = vmatprep.subr.mxu0 0.0
  %559 = vmatpush2.msra.mxu0 %v109
  %560 = vmatprep.subr.mxu0 0.0
  %561 = vmatpush2.msra.mxu0 %v108
  %562 = vmatprep.subr.mxu0 0.0
  %563 = vmatpush2.msra.mxu0 %v107
  %564 = vmatprep.subr.mxu0 0.0
  %565 = vmatpush2.msra.mxu0 %v106
  %566 = vmatprep.subr.mxu0 0.0
  %567 = vmatpush2.msra.mxu0 %v105
  %568 = vmatprep.mubr.f32.mxu0 %v307
  %569 = vmatmul.mubr.f32.gmra.mxu0 %v303
  %v570 = vpop.f32.mrf.mxu0
  %v571 = vadd.f32 %v501, %v570
  %v572 = vpop.f32.mrf.mxu0
  %573 = vdwg.mxu0
  %574 = vmatprep.subr.mxu0 0.0
  %575 = vmatpush1.msra.mxu0 %v136
  %576 = vmatprep.subr.mxu0 0.0
  %577 = vmatpush1.msra.mxu0 %v135
  %578 = vmatprep.subr.mxu0 0.0
  %579 = vmatpush1.msra.mxu0 %v134
  %580 = vmatprep.subr.mxu0 0.0
  %581 = vmatpush1.msra.mxu0 %v133
  %582 = vmatprep.subr.mxu0 0.0
  %583 = vmatpush1.msra.mxu0 %v132
  %584 = vmatprep.subr.mxu0 0.0
  %585 = vmatpush1.msra.mxu0 %v131
  %586 = vmatprep.subr.mxu0 0.0
  %587 = vmatpush1.msra.mxu0 %v130
  %588 = vmatprep.subr.mxu0 0.0
  %589 = vmatpush1.msra.mxu0 %v129
  %590 = vmatprep.subr.mxu0 0.0
  %591 = vmatpush1.msra.mxu0 %v128
  %592 = vmatprep.subr.mxu0 0.0
  %593 = vmatpush1.msra.mxu0 %v127
  %594 = vmatprep.subr.mxu0 0.0
  %595 = vmatpush1.msra.mxu0 %v126
  %596 = vmatprep.subr.mxu0 0.0
  %597 = vmatpush1.msra.mxu0 %v125
  %598 = vmatprep.subr.mxu0 0.0
  %599 = vmatpush1.msra.mxu0 %v124
  %600 = vmatprep.subr.mxu0 0.0
  %601 = vmatpush1.msra.mxu0 %v123
  %602 = vmatprep.subr.mxu0 0.0
  %603 = vmatpush1.msra.mxu0 %v122
  %604 = vmatprep.subr.mxu0 0.0
  %605 = vmatpush1.msra.mxu0 %v121
  %606 = vmatprep.subr.mxu0 0.0
  %607 = vmatpush2.msra.mxu0 %v152
  %608 = vmatprep.subr.mxu0 0.0
  %609 = vmatpush2.msra.mxu0 %v151
  %610 = vmatprep.subr.mxu0 0.0
  %611 = vmatpush2.msra.mxu0 %v150
  %612 = vmatprep.subr.mxu0 0.0
  %613 = vmatpush2.msra.mxu0 %v149
  %614 = vmatprep.subr.mxu0 0.0
  %615 = vmatpush2.msra.mxu0 %v148
  %616 = vmatprep.subr.mxu0 0.0
  %617 = vmatpush2.msra.mxu0 %v147
  %618 = vmatprep.subr.mxu0 0.0
  %619 = vmatpush2.msra.mxu0 %v146
  %620 = vmatprep.subr.mxu0 0.0
  %621 = vmatpush2.msra.mxu0 %v145
  %622 = vmatprep.subr.mxu0 0.0
  %623 = vmatpush2.msra.mxu0 %v144
  %624 = vmatprep.subr.mxu0 0.0
  %625 = vmatpush2.msra.mxu0 %v143
  %626 = vmatprep.subr.mxu0 0.0
  %627 = vmatpush2.msra.mxu0 %v142
  %628 = vmatprep.subr.mxu0 0.0
  %629 = vmatpush2.msra.mxu0 %v141
  %630 = vmatprep.subr.mxu0 0.0
  %631 = vmatpush2.msra.mxu0 %v140
  %632 = vmatprep.subr.mxu0 0.0
  %633 = vmatpush2.msra.mxu0 %v139
  %634 = vmatprep.subr.mxu0 0.0
  %635 = vmatpush2.msra.mxu0 %v138
  %636 = vmatprep.subr.mxu0 0.0
  %637 = vmatpush2.msra.mxu0 %v137
  %638 = vmatprep.mubr.f32.mxu0 %v315
  %639 = vmatmul.mubr.f32.gmra.mxu0 %v311
  %v640 = vpop.f32.mrf.mxu0
  %v641 = vadd.f32 %v571, %v640
  %v642 = vpop.f32.mrf.mxu0
  %643 = vdwg.mxu0
  %644 = vmatprep.subr.mxu0 0.0
  %645 = vmatpush1.msra.mxu0 %v168
  %646 = vmatprep.subr.mxu0 0.0
  %647 = vmatpush1.msra.mxu0 %v167
  %648 = vmatprep.subr.mxu0 0.0
  %649 = vmatpush1.msra.mxu0 %v166
  %650 = vmatprep.subr.mxu0 0.0
  %651 = vmatpush1.msra.mxu0 %v165
  %652 = vmatprep.subr.mxu0 0.0
  %653 = vmatpush1.msra.mxu0 %v164
  %654 = vmatprep.subr.mxu0 0.0
  %655 = vmatpush1.msra.mxu0 %v163
  %656 = vmatprep.subr.mxu0 0.0
  %657 = vmatpush1.msra.mxu0 %v162
  %658 = vmatprep.subr.mxu0 0.0
  %659 = vmatpush1.msra.mxu0 %v161
  %660 = vmatprep.subr.mxu0 0.0
  %661 = vmatpush1.msra.mxu0 %v160
  %662 = vmatprep.subr.mxu0 0.0
  %663 = vmatpush1.msra.mxu0 %v159
  %664 = vmatprep.subr.mxu0 0.0
  %665 = vmatpush1.msra.mxu0 %v158
  %666 = vmatprep.subr.mxu0 0.0
  %667 = vmatpush1.msra.mxu0 %v157
  %668 = vmatprep.subr.mxu0 0.0
  %669 = vmatpush1.msra.mxu0 %v156
  %670 = vmatprep.subr.mxu0 0.0
  %671 = vmatpush1.msra.mxu0 %v155
  %672 = vmatprep.subr.mxu0 0.0
  %673 = vmatpush1.msra.mxu0 %v154
  %674 = vmatprep.subr.mxu0 0.0
  %675 = vmatpush1.msra.mxu0 %v153
  %676 = vmatprep.subr.mxu0 0.0
  %677 = vmatpush2.msra.mxu0 %v184
  %678 = vmatprep.subr.mxu0 0.0
  %679 = vmatpush2.msra.mxu0 %v183
  %680 = vmatprep.subr.mxu0 0.0
  %681 = vmatpush2.msra.mxu0 %v182
  %682 = vmatprep.subr.mxu0 0.0
  %683 = vmatpush2.msra.mxu0 %v181
  %684 = vmatprep.subr.mxu0 0.0
  %685 = vmatpush2.msra.mxu0 %v180
  %686 = vmatprep.subr.mxu0 0.0
  %687 = vmatpush2.msra.mxu0 %v179
  %688 = vmatprep.subr.mxu0 0.0
  %689 = vmatpush2.msra.mxu0 %v178
  %690 = vmatprep.subr.mxu0 0.0
  %691 = vmatpush2.msra.mxu0 %v177
  %692 = vmatprep.subr.mxu0 0.0
  %693 = vmatpush2.msra.mxu0 %v176
  %694 = vmatprep.subr.mxu0 0.0
  %695 = vmatpush2.msra.mxu0 %v175
  %696 = vmatprep.subr.mxu0 0.0
  %697 = vmatpush2.msra.mxu0 %v174
  %698 = vmatprep.subr.mxu0 0.0
  %699 = vmatpush2.msra.mxu0 %v173
  %700 = vmatprep.subr.mxu0 0.0
  %701 = vmatpush2.msra.mxu0 %v172
  %702 = vmatprep.subr.mxu0 0.0
  %703 = vmatpush2.msra.mxu0 %v171
  %704 = vmatprep.subr.mxu0 0.0
  %705 = vmatpush2.msra.mxu0 %v170
  %706 = vmatprep.subr.mxu0 0.0
  %707 = vmatpush2.msra.mxu0 %v169
  %708 = vmatprep.mubr.f32.mxu0 %v323
  %709 = vmatmul.mubr.f32.gmra.mxu0 %v319
  %v710 = vpop.f32.mrf.mxu0
  %v711 = vadd.f32 %v641, %v710
  %v712 = vpop.f32.mrf.mxu0
  %713 = vdwg.mxu0
  %714 = vmatprep.subr.mxu0 0.0
  %715 = vmatpush1.msra.mxu0 %v200
  %716 = vmatprep.subr.mxu0 0.0
  %717 = vmatpush1.msra.mxu0 %v199
  %718 = vmatprep.subr.mxu0 0.0
  %719 = vmatpush1.msra.mxu0 %v198
  %720 = vmatprep.subr.mxu0 0.0
  %721 = vmatpush1.msra.mxu0 %v197
  %722 = vmatprep.subr.mxu0 0.0
  %723 = vmatpush1.msra.mxu0 %v196
  %724 = vmatprep.subr.mxu0 0.0
  %725 = vmatpush1.msra.mxu0 %v195
  %726 = vmatprep.subr.mxu0 0.0
  %727 = vmatpush1.msra.mxu0 %v194
  %728 = vmatprep.subr.mxu0 0.0
  %729 = vmatpush1.msra.mxu0 %v193
  %730 = vmatprep.subr.mxu0 0.0
  %731 = vmatpush1.msra.mxu0 %v192
  %732 = vmatprep.subr.mxu0 0.0
  %733 = vmatpush1.msra.mxu0 %v191
  %734 = vmatprep.subr.mxu0 0.0
  %735 = vmatpush1.msra.mxu0 %v190
  %736 = vmatprep.subr.mxu0 0.0
  %737 = vmatpush1.msra.mxu0 %v189
  %738 = vmatprep.subr.mxu0 0.0
  %739 = vmatpush1.msra.mxu0 %v188
  %740 = vmatprep.subr.mxu0 0.0
  %741 = vmatpush1.msra.mxu0 %v187
  %742 = vmatprep.subr.mxu0 0.0
  %743 = vmatpush1.msra.mxu0 %v186
  %744 = vmatprep.subr.mxu0 0.0
  %745 = vmatpush1.msra.mxu0 %v185
  %746 = vmatprep.subr.mxu0 0.0
  %747 = vmatpush2.msra.mxu0 %v216
  %748 = vmatprep.subr.mxu0 0.0
  %749 = vmatpush2.msra.mxu0 %v215
  %750 = vmatprep.subr.mxu0 0.0
  %751 = vmatpush2.msra.mxu0 %v214
  %752 = vmatprep.subr.mxu0 0.0
  %753 = vmatpush2.msra.mxu0 %v213
  %754 = vmatprep.subr.mxu0 0.0
  %755 = vmatpush2.msra.mxu0 %v212
  %756 = vmatprep.subr.mxu0 0.0
  %757 = vmatpush2.msra.mxu0 %v211
  %758 = vmatprep.subr.mxu0 0.0
  %759 = vmatpush2.msra.mxu0 %v210
  %760 = vmatprep.subr.mxu0 0.0
  %761 = vmatpush2.msra.mxu0 %v209
  %762 = vmatprep.subr.mxu0 0.0
  %763 = vmatpush2.msra.mxu0 %v208
  %764 = vmatprep.subr.mxu0 0.0
  %765 = vmatpush2.msra.mxu0 %v207
  %766 = vmatprep.subr.mxu0 0.0
  %767 = vmatpush2.msra.mxu0 %v206
  %768 = vmatprep.subr.mxu0 0.0
  %769 = vmatpush2.msra.mxu0 %v205
  %770 = vmatprep.subr.mxu0 0.0
  %771 = vmatpush2.msra.mxu0 %v204
  %772 = vmatprep.subr.mxu0 0.0
  %773 = vmatpush2.msra.mxu0 %v203
  %774 = vmatprep.subr.mxu0 0.0
  %775 = vmatpush2.msra.mxu0 %v202
  %776 = vmatprep.subr.mxu0 0.0
  %777 = vmatpush2.msra.mxu0 %v201
  %778 = vmatprep.mubr.f32.mxu0 %v331
  %779 = vmatmul.mubr.f32.gmra.mxu0 %v327
  %v780 = vpop.f32.mrf.mxu0
  %v781 = vadd.f32 %v711, %v780
  %v782 = vpop.f32.mrf.mxu0
  %783 = vdwg.mxu0
  %784 = vmatprep.subr.mxu0 0.0
  %785 = vmatpush1.msra.mxu0 %v232
  %786 = vmatprep.subr.mxu0 0.0
  %787 = vmatpush1.msra.mxu0 %v231
  %788 = vmatprep.subr.mxu0 0.0
  %789 = vmatpush1.msra.mxu0 %v230
  %790 = vmatprep.subr.mxu0 0.0
  %791 = vmatpush1.msra.mxu0 %v229
  %792 = vmatprep.subr.mxu0 0.0
  %793 = vmatpush1.msra.mxu0 %v228
  %794 = vmatprep.subr.mxu0 0.0
  %795 = vmatpush1.msra.mxu0 %v227
  %796 = vmatprep.subr.mxu0 0.0
  %797 = vmatpush1.msra.mxu0 %v226
  %798 = vmatprep.subr.mxu0 0.0
  %799 = vmatpush1.msra.mxu0 %v225
  %800 = vmatprep.subr.mxu0 0.0
  %801 = vmatpush1.msra.mxu0 %v224
  %802 = vmatprep.subr.mxu0 0.0
  %803 = vmatpush1.msra.mxu0 %v223
  %804 = vmatprep.subr.mxu0 0.0
  %805 = vmatpush1.msra.mxu0 %v222
  %806 = vmatprep.subr.mxu0 0.0
  %807 = vmatpush1.msra.mxu0 %v221
  %808 = vmatprep.subr.mxu0 0.0
  %809 = vmatpush1.msra.mxu0 %v220
  %810 = vmatprep.subr.mxu0 0.0
  %811 = vmatpush1.msra.mxu0 %v219
  %812 = vmatprep.subr.mxu0 0.0
  %813 = vmatpush1.msra.mxu0 %v218
  %814 = vmatprep.subr.mxu0 0.0
  %815 = vmatpush1.msra.mxu0 %v217
  %816 = vmatprep.subr.mxu0 0.0
  %817 = vmatpush2.msra.mxu0 %v248
  %818 = vmatprep.subr.mxu0 0.0
  %819 = vmatpush2.msra.mxu0 %v247
  %820 = vmatprep.subr.mxu0 0.0
  %821 = vmatpush2.msra.mxu0 %v246
  %822 = vmatprep.subr.mxu0 0.0
  %823 = vmatpush2.msra.mxu0 %v245
  %824 = vmatprep.subr.mxu0 0.0
  %825 = vmatpush2.msra.mxu0 %v244
  %826 = vmatprep.subr.mxu0 0.0
  %827 = vmatpush2.msra.mxu0 %v243
  %828 = vmatprep.subr.mxu0 0.0
  %829 = vmatpush2.msra.mxu0 %v242
  %830 = vmatprep.subr.mxu0 0.0
  %831 = vmatpush2.msra.mxu0 %v241
  %832 = vmatprep.subr.mxu0 0.0
  %833 = vmatpush2.msra.mxu0 %v240
  %834 = vmatprep.subr.mxu0 0.0
  %835 = vmatpush2.msra.mxu0 %v239
  %836 = vmatprep.subr.mxu0 0.0
  %837 = vmatpush2.msra.mxu0 %v238
  %838 = vmatprep.subr.mxu0 0.0
  %839 = vmatpush2.msra.mxu0 %v237
  %840 = vmatprep.subr.mxu0 0.0
  %841 = vmatpush2.msra.mxu0 %v236
  %842 = vmatprep.subr.mxu0 0.0
  %843 = vmatpush2.msra.mxu0 %v235
  %844 = vmatprep.subr.mxu0 0.0
  %845 = vmatpush2.msra.mxu0 %v234
  %846 = vmatprep.subr.mxu0 0.0
  %847 = vmatpush2.msra.mxu0 %v233
  %848 = vmatprep.mubr.f32.mxu0 %v339
  %849 = vmatmul.mubr.f32.gmra.mxu0 %v335
  %v850 = vpop.f32.mrf.mxu0
  %v851 = vadd.f32 %v781, %v850
  %v852 = vpop.f32.mrf.mxu0
  %853 = vdwg.mxu0
  %854 = vmatprep.subr.mxu0 0.0
  %855 = vmatpush1.msra.mxu0 %v264
  %856 = vmatprep.subr.mxu0 0.0
  %857 = vmatpush1.msra.mxu0 %v263
  %858 = vmatprep.subr.mxu0 0.0
  %859 = vmatpush1.msra.mxu0 %v262
  %860 = vmatprep.subr.mxu0 0.0
  %861 = vmatpush1.msra.mxu0 %v261
  %862 = vmatprep.subr.mxu0 0.0
  %863 = vmatpush1.msra.mxu0 %v260
  %864 = vmatprep.subr.mxu0 0.0
  %865 = vmatpush1.msra.mxu0 %v259
  %866 = vmatprep.subr.mxu0 0.0
  %867 = vmatpush1.msra.mxu0 %v258
  %868 = vmatprep.subr.mxu0 0.0
  %869 = vmatpush1.msra.mxu0 %v257
  %870 = vmatprep.subr.mxu0 0.0
  %871 = vmatpush1.msra.mxu0 %v256
  %872 = vmatprep.subr.mxu0 0.0
  %873 = vmatpush1.msra.mxu0 %v255
  %874 = vmatprep.subr.mxu0 0.0
  %875 = vmatpush1.msra.mxu0 %v254
  %876 = vmatprep.subr.mxu0 0.0
  %877 = vmatpush1.msra.mxu0 %v253
  %878 = vmatprep.subr.mxu0 0.0
  %879 = vmatpush1.msra.mxu0 %v252
  %880 = vmatprep.subr.mxu0 0.0
  %881 = vmatpush1.msra.mxu0 %v251
  %882 = vmatprep.subr.mxu0 0.0
  %883 = vmatpush1.msra.mxu0 %v250
  %884 = vmatprep.subr.mxu0 0.0
  %885 = vmatpush1.msra.mxu0 %v249
  %886 = vmatprep.subr.mxu0 0.0
  %887 = vmatpush2.msra.mxu0 %v280
  %888 = vmatprep.subr.mxu0 0.0
  %889 = vmatpush2.msra.mxu0 %v279
  %890 = vmatprep.subr.mxu0 0.0
  %891 = vmatpush2.msra.mxu0 %v278
  %892 = vmatprep.subr.mxu0 0.0
  %893 = vmatpush2.msra.mxu0 %v277
  %894 = vmatprep.subr.mxu0 0.0
  %895 = vmatpush2.msra.mxu0 %v276
  %896 = vmatprep.subr.mxu0 0.0
  %897 = vmatpush2.msra.mxu0 %v275
  %898 = vmatprep.subr.mxu0 0.0
  %899 = vmatpush2.msra.mxu0 %v274
  %900 = vmatprep.subr.mxu0 0.0
  %901 = vmatpush2.msra.mxu0 %v273
  %902 = vmatprep.subr.mxu0 0.0
  %903 = vmatpush2.msra.mxu0 %v272
  %904 = vmatprep.subr.mxu0 0.0
  %905 = vmatpush2.msra.mxu0 %v271
  %906 = vmatprep.subr.mxu0 0.0
  %907 = vmatpush2.msra.mxu0 %v270
  %908 = vmatprep.subr.mxu0 0.0
  %909 = vmatpush2.msra.mxu0 %v269
  %910 = vmatprep.subr.mxu0 0.0
  %911 = vmatpush2.msra.mxu0 %v268
  %912 = vmatprep.subr.mxu0 0.0
  %913 = vmatpush2.msra.mxu0 %v267
  %914 = vmatprep.subr.mxu0 0.0
  %915 = vmatpush2.msra.mxu0 %v266
  %916 = vmatprep.subr.mxu0 0.0
  %917 = vmatpush2.msra.mxu0 %v265
  %918 = vmatprep.mubr.f32.mxu0 %v347
  %919 = vmatmul.mubr.f32.gmra.mxu0 %v343
  %v920 = vpop.f32.mrf.mxu0
  %v921 = vadd.f32 %v851, %v920
  %v922 = vpop.f32.mrf.mxu0
  %923 = vdwg.mxu0
  %v924 = vmax.f32 %v921, 0.0
  %v925 = vld [vmem:[%s3] sm:$0xff]
  %v926 = vld [vmem:[%s3 + $0x8] sm:$0xff]
  %v927 = vld [vmem:[%s3 + $0x10] sm:$0xff]
  %v928 = vld [vmem:[%s3 + $0x18] sm:$0xff]
  %v929 = vld [vmem:[%s3 + $0x20] sm:$0xff]
  %v930 = vld [vmem:[%s3 + $0x28] sm:$0xff]
  %v931 = vld [vmem:[%s3 + $0x30] sm:$0xff]
  %v932 = vld [vmem:[%s3 + $0x38] sm:$0xff]
  %vm933 = vcmask 523264
  %v935 = vsel %vm933, %v924, 0
  %937 = vmatprep.subr.mxu0 0.0
  %938 = vmatpush1.msra.mxu0 0.0
  %939 = vmatprep.subr.mxu0 0.0
  %940 = vmatpush1.msra.mxu0 0.0
  %941 = vmatprep.subr.mxu0 0.0
  %942 = vmatpush1.msra.mxu0 0.0
  %943 = vmatprep.subr.mxu0 0.0
  %944 = vmatpush1.msra.mxu0 0.0
  %945 = vmatprep.subr.mxu0 0.0
  %946 = vmatpush1.msra.mxu0 0.0
  %947 = vmatprep.subr.mxu0 0.0
  %948 = vmatpush1.msra.mxu0 0.0
  %949 = vmatprep.subr.mxu0 0.0
  %950 = vmatpush1.msra.mxu0 0.0
  %951 = vmatprep.subr.mxu0 0.0
  %952 = vmatpush1.msra.mxu0 0.0
  %953 = vmatprep.subr.mxu0 0.0
  %954 = vmatpush1.msra.mxu0 %v932
  %955 = vmatprep.subr.mxu0 0.0
  %956 = vmatpush1.msra.mxu0 %v931
  %957 = vmatprep.subr.mxu0 0.0
  %958 = vmatpush1.msra.mxu0 %v930
  %959 = vmatprep.subr.mxu0 0.0
  %960 = vmatpush1.msra.mxu0 %v929
  %961 = vmatprep.subr.mxu0 0.0
  %962 = vmatpush1.msra.mxu0 %v928
  %963 = vmatprep.subr.mxu0 0.0
  %964 = vmatpush1.msra.mxu0 %v927
  %965 = vmatprep.subr.mxu0 0.0
  %966 = vmatpush1.msra.mxu0 %v926
  %967 = vmatprep.subr.mxu0 0.0
  %968 = vmatpush1.msra.mxu0 %v925
  %969 = vmatprep.subr.mxu0 0.0
  %970 = vmatpush2.msra.mxu0 0.0
  %971 = vmatprep.subr.mxu0 0.0
  %972 = vmatpush2.msra.mxu0 0.0
  %973 = vmatprep.subr.mxu0 0.0
  %974 = vmatpush2.msra.mxu0 0.0
  %975 = vmatprep.subr.mxu0 0.0
  %976 = vmatpush2.msra.mxu0 0.0
  %977 = vmatprep.subr.mxu0 0.0
  %978 = vmatpush2.msra.mxu0 0.0
  %979 = vmatprep.subr.mxu0 0.0
  %980 = vmatpush2.msra.mxu0 0.0
  %981 = vmatprep.subr.mxu0 0.0
  %982 = vmatpush2.msra.mxu0 0.0
  %983 = vmatprep.subr.mxu0 0.0
  %984 = vmatpush2.msra.mxu0 0.0
  %985 = vmatprep.subr.mxu0 0.0
  %986 = vmatpush2.msra.mxu0 0.0
  %987 = vmatprep.subr.mxu0 0.0
  %988 = vmatpush2.msra.mxu0 0.0
  %989 = vmatprep.subr.mxu0 0.0
  %990 = vmatpush2.msra.mxu0 0.0
  %991 = vmatprep.subr.mxu0 0.0
  %992 = vmatpush2.msra.mxu0 0.0
  %993 = vmatprep.subr.mxu0 0.0
  %994 = vmatpush2.msra.mxu0 0.0
  %995 = vmatprep.subr.mxu0 0.0
  %996 = vmatpush2.msra.mxu0 0.0
  %997 = vmatprep.subr.mxu0 0.0
  %998 = vmatpush2.msra.mxu0 0.0
  %999 = vmatprep.subr.mxu0 0.0
  %1000 = vmatpush2.msra.mxu0 0.0
  %1001 = vmatprep.mubr.f32.mxu0 0.0
  %1002 = vmatmul.mubr.f32.gmra.mxu0 %v935
  %v1003 = vpop.f32.mrf.mxu0
  %v1004 = vadd.f32 0.0, %v1003
  %v1005 = vpop.f32.mrf.mxu0
  %1006 = vdwg.mxu0
  %v1007 = vmax.f32 %v1004, 0.0
  %s1008 = scalar_lea.vmem %s3, 64
  %v1009 = vld [vmem:[%s1008] sm:$0xff]
  %v1010 = vld [vmem:[%s1008 + $0x8] sm:$0xff]
  %v1011 = vld [vmem:[%s1008 + $0x10] sm:$0xff]
  %v1012 = vld [vmem:[%s1008 + $0x18] sm:$0xff]
  %v1013 = vld [vmem:[%s1008 + $0x20] sm:$0xff]
  %v1014 = vld [vmem:[%s1008 + $0x28] sm:$0xff]
  %v1015 = vld [vmem:[%s1008 + $0x30] sm:$0xff]
  %v1016 = vld [vmem:[%s1008 + $0x38] sm:$0xff]
  %v1018 = vsel %vm933, %v1007, 0
  %1020 = vmatprep.subr.mxu0 0.0
  %1021 = vmatpush1.msra.mxu0 0.0
  %1022 = vmatprep.subr.mxu0 0.0
  %1023 = vmatpush1.msra.mxu0 0.0
  %1024 = vmatprep.subr.mxu0 0.0
  %1025 = vmatpush1.msra.mxu0 0.0
  %1026 = vmatprep.subr.mxu0 0.0
  %1027 = vmatpush1.msra.mxu0 0.0
  %1028 = vmatprep.subr.mxu0 0.0
  %1029 = vmatpush1.msra.mxu0 0.0
  %1030 = vmatprep.subr.mxu0 0.0
  %1031 = vmatpush1.msra.mxu0 0.0
  %1032 = vmatprep.subr.mxu0 0.0
  %1033 = vmatpush1.msra.mxu0 0.0
  %1034 = vmatprep.subr.mxu0 0.0
  %1035 = vmatpush1.msra.mxu0 0.0
  %1036 = vmatprep.subr.mxu0 0.0
  %1037 = vmatpush1.msra.mxu0 %v1016
  %1038 = vmatprep.subr.mxu0 0.0
  %1039 = vmatpush1.msra.mxu0 %v1015
  %1040 = vmatprep.subr.mxu0 0.0
  %1041 = vmatpush1.msra.mxu0 %v1014
  %1042 = vmatprep.subr.mxu0 0.0
  %1043 = vmatpush1.msra.mxu0 %v1013
  %1044 = vmatprep.subr.mxu0 0.0
  %1045 = vmatpush1.msra.mxu0 %v1012
  %1046 = vmatprep.subr.mxu0 0.0
  %1047 = vmatpush1.msra.mxu0 %v1011
  %1048 = vmatprep.subr.mxu0 0.0
  %1049 = vmatpush1.msra.mxu0 %v1010
  %1050 = vmatprep.subr.mxu0 0.0
  %1051 = vmatpush1.msra.mxu0 %v1009
  %1052 = vmatprep.subr.mxu0 0.0
  %1053 = vmatpush2.msra.mxu0 0.0
  %1054 = vmatprep.subr.mxu0 0.0
  %1055 = vmatpush2.msra.mxu0 0.0
  %1056 = vmatprep.subr.mxu0 0.0
  %1057 = vmatpush2.msra.mxu0 0.0
  %1058 = vmatprep.subr.mxu0 0.0
  %1059 = vmatpush2.msra.mxu0 0.0
  %1060 = vmatprep.subr.mxu0 0.0
  %1061 = vmatpush2.msra.mxu0 0.0
  %1062 = vmatprep.subr.mxu0 0.0
  %1063 = vmatpush2.msra.mxu0 0.0
  %1064 = vmatprep.subr.mxu0 0.0
  %1065 = vmatpush2.msra.mxu0 0.0
  %1066 = vmatprep.subr.mxu0 0.0
  %1067 = vmatpush2.msra.mxu0 0.0
  %1068 = vmatprep.subr.mxu0 0.0
  %1069 = vmatpush2.msra.mxu0 0.0
  %1070 = vmatprep.subr.mxu0 0.0
  %1071 = vmatpush2.msra.mxu0 0.0
  %1072 = vmatprep.subr.mxu0 0.0
  %1073 = vmatpush2.msra.mxu0 0.0
  %1074 = vmatprep.subr.mxu0 0.0
  %1075 = vmatpush2.msra.mxu0 0.0
  %1076 = vmatprep.subr.mxu0 0.0
  %1077 = vmatpush2.msra.mxu0 0.0
  %1078 = vmatprep.subr.mxu0 0.0
  %1079 = vmatpush2.msra.mxu0 0.0
  %1080 = vmatprep.subr.mxu0 0.0
  %1081 = vmatpush2.msra.mxu0 0.0
  %1082 = vmatprep.subr.mxu0 0.0
  %1083 = vmatpush2.msra.mxu0 0.0
  %1084 = vmatprep.mubr.f32.mxu0 0.0
  %1085 = vmatmul.mubr.f32.gmra.mxu0 %v1018
  %v1086 = vpop.f32.mrf.mxu0
  %v1087 = vadd.f32 0.0, %v1086
  %v1088 = vpop.f32.mrf.mxu0
  %1089 = vdwg.mxu0
  %v1090 = vmax.f32 %v1087, 0.0
  %s1091 = scalar_lea.vmem %s3, 128
  %v1092 = vld [vmem:[%s1091] sm:$0xff]
  %v1093 = vld [vmem:[%s1091 + $0x8] sm:$0xff]
  %v1094 = vld [vmem:[%s1091 + $0x10] sm:$0xff]
  %v1095 = vld [vmem:[%s1091 + $0x18] sm:$0xff]
  %v1096 = vld [vmem:[%s1091 + $0x20] sm:$0xff]
  %v1097 = vld [vmem:[%s1091 + $0x28] sm:$0xff]
  %v1098 = vld [vmem:[%s1091 + $0x30] sm:$0xff]
  %v1099 = vld [vmem:[%s1091 + $0x38] sm:$0xff]
  %v1101 = vsel %vm933, %v1090, 0
  %1103 = vmatprep.subr.mxu0 0.0
  %1104 = vmatpush1.msra.mxu0 0.0
  %1105 = vmatprep.subr.mxu0 0.0
  %1106 = vmatpush1.msra.mxu0 0.0
  %1107 = vmatprep.subr.mxu0 0.0
  %1108 = vmatpush1.msra.mxu0 0.0
  %1109 = vmatprep.subr.mxu0 0.0
  %1110 = vmatpush1.msra.mxu0 0.0
  %1111 = vmatprep.subr.mxu0 0.0
  %1112 = vmatpush1.msra.mxu0 0.0
  %1113 = vmatprep.subr.mxu0 0.0
  %1114 = vmatpush1.msra.mxu0 0.0
  %1115 = vmatprep.subr.mxu0 0.0
  %1116 = vmatpush1.msra.mxu0 0.0
  %1117 = vmatprep.subr.mxu0 0.0
  %1118 = vmatpush1.msra.mxu0 0.0
  %1119 = vmatprep.subr.mxu0 0.0
  %1120 = vmatpush1.msra.mxu0 %v1099
  %1121 = vmatprep.subr.mxu0 0.0
  %1122 = vmatpush1.msra.mxu0 %v1098
  %1123 = vmatprep.subr.mxu0 0.0
  %1124 = vmatpush1.msra.mxu0 %v1097
  %1125 = vmatprep.subr.mxu0 0.0
  %1126 = vmatpush1.msra.mxu0 %v1096
  %1127 = vmatprep.subr.mxu0 0.0
  %1128 = vmatpush1.msra.mxu0 %v1095
  %1129 = vmatprep.subr.mxu0 0.0
  %1130 = vmatpush1.msra.mxu0 %v1094
  %1131 = vmatprep.subr.mxu0 0.0
  %1132 = vmatpush1.msra.mxu0 %v1093
  %1133 = vmatprep.subr.mxu0 0.0
  %1134 = vmatpush1.msra.mxu0 %v1092
  %1135 = vmatprep.subr.mxu0 0.0
  %1136 = vmatpush2.msra.mxu0 0.0
  %1137 = vmatprep.subr.mxu0 0.0
  %1138 = vmatpush2.msra.mxu0 0.0
  %1139 = vmatprep.subr.mxu0 0.0
  %1140 = vmatpush2.msra.mxu0 0.0
  %1141 = vmatprep.subr.mxu0 0.0
  %1142 = vmatpush2.msra.mxu0 0.0
  %1143 = vmatprep.subr.mxu0 0.0
  %1144 = vmatpush2.msra.mxu0 0.0
  %1145 = vmatprep.subr.mxu0 0.0
  %1146 = vmatpush2.msra.mxu0 0.0
  %1147 = vmatprep.subr.mxu0 0.0
  %1148 = vmatpush2.msra.mxu0 0.0
  %1149 = vmatprep.subr.mxu0 0.0
  %1150 = vmatpush2.msra.mxu0 0.0
  %1151 = vmatprep.subr.mxu0 0.0
  %1152 = vmatpush2.msra.mxu0 0.0
  %1153 = vmatprep.subr.mxu0 0.0
  %1154 = vmatpush2.msra.mxu0 0.0
  %1155 = vmatprep.subr.mxu0 0.0
  %1156 = vmatpush2.msra.mxu0 0.0
  %1157 = vmatprep.subr.mxu0 0.0
  %1158 = vmatpush2.msra.mxu0 0.0
  %1159 = vmatprep.subr.mxu0 0.0
  %1160 = vmatpush2.msra.mxu0 0.0
  %1161 = vmatprep.subr.mxu0 0.0
  %1162 = vmatpush2.msra.mxu0 0.0
  %1163 = vmatprep.subr.mxu0 0.0
  %1164 = vmatpush2.msra.mxu0 0.0
  %1165 = vmatprep.subr.mxu0 0.0
  %1166 = vmatpush2.msra.mxu0 0.0
  %1167 = vmatprep.mubr.f32.mxu0 0.0
  %1168 = vmatmul.mubr.f32.gmra.mxu0 %v1101
  %v1169 = vpop.f32.mrf.mxu0
  %v1170 = vadd.f32 %v924, %v1169
  %v1171 = vpop.f32.mrf.mxu0
  %1172 = vdwg.mxu0
  %s1173 = scalar_lea.vmem %s3, 192
  %v1174 = vld [vmem:[%s1173] sm:$0xff]
  %v1175 = vld [vmem:[%s1173 + $0x8] sm:$0xff]
  %v1176 = vld [vmem:[%s1173 + $0x10] sm:$0xff]
  %v1177 = vld [vmem:[%s1173 + $0x18] sm:$0xff]
  %v1178 = vld [vmem:[%s1173 + $0x20] sm:$0xff]
  %v1179 = vld [vmem:[%s1173 + $0x28] sm:$0xff]
  %v1180 = vld [vmem:[%s1173 + $0x30] sm:$0xff]
  %v1181 = vld [vmem:[%s1173 + $0x38] sm:$0xff]
  %v1183 = vsel %vm933, %v1170, 0
  %1185 = vmatprep.subr.mxu0 0.0
  %1186 = vmatpush1.msra.mxu0 0.0
  %1187 = vmatprep.subr.mxu0 0.0
  %1188 = vmatpush1.msra.mxu0 0.0
  %1189 = vmatprep.subr.mxu0 0.0
  %1190 = vmatpush1.msra.mxu0 0.0
  %1191 = vmatprep.subr.mxu0 0.0
  %1192 = vmatpush1.msra.mxu0 0.0
  %1193 = vmatprep.subr.mxu0 0.0
  %1194 = vmatpush1.msra.mxu0 0.0
  %1195 = vmatprep.subr.mxu0 0.0
  %1196 = vmatpush1.msra.mxu0 0.0
  %1197 = vmatprep.subr.mxu0 0.0
  %1198 = vmatpush1.msra.mxu0 0.0
  %1199 = vmatprep.subr.mxu0 0.0
  %1200 = vmatpush1.msra.mxu0 0.0
  %1201 = vmatprep.subr.mxu0 0.0
  %1202 = vmatpush1.msra.mxu0 %v1181
  %1203 = vmatprep.subr.mxu0 0.0
  %1204 = vmatpush1.msra.mxu0 %v1180
  %1205 = vmatprep.subr.mxu0 0.0
  %1206 = vmatpush1.msra.mxu0 %v1179
  %1207 = vmatprep.subr.mxu0 0.0
  %1208 = vmatpush1.msra.mxu0 %v1178
  %1209 = vmatprep.subr.mxu0 0.0
  %1210 = vmatpush1.msra.mxu0 %v1177
  %1211 = vmatprep.subr.mxu0 0.0
  %1212 = vmatpush1.msra.mxu0 %v1176
  %1213 = vmatprep.subr.mxu0 0.0
  %1214 = vmatpush1.msra.mxu0 %v1175
  %1215 = vmatprep.subr.mxu0 0.0
  %1216 = vmatpush1.msra.mxu0 %v1174
  %1217 = vmatprep.subr.mxu0 0.0
  %1218 = vmatpush2.msra.mxu0 0.0
  %1219 = vmatprep.subr.mxu0 0.0
  %1220 = vmatpush2.msra.mxu0 0.0
  %1221 = vmatprep.subr.mxu0 0.0
  %1222 = vmatpush2.msra.mxu0 0.0
  %1223 = vmatprep.subr.mxu0 0.0
  %1224 = vmatpush2.msra.mxu0 0.0
  %1225 = vmatprep.subr.mxu0 0.0
  %1226 = vmatpush2.msra.mxu0 0.0
  %1227 = vmatprep.subr.mxu0 0.0
  %1228 = vmatpush2.msra.mxu0 0.0
  %1229 = vmatprep.subr.mxu0 0.0
  %1230 = vmatpush2.msra.mxu0 0.0
  %1231 = vmatprep.subr.mxu0 0.0
  %1232 = vmatpush2.msra.mxu0 0.0
  %1233 = vmatprep.subr.mxu0 0.0
  %1234 = vmatpush2.msra.mxu0 0.0
  %1235 = vmatprep.subr.mxu0 0.0
  %1236 = vmatpush2.msra.mxu0 0.0
  %1237 = vmatprep.subr.mxu0 0.0
  %1238 = vmatpush2.msra.mxu0 0.0
  %1239 = vmatprep.subr.mxu0 0.0
  %1240 = vmatpush2.msra.mxu0 0.0
  %1241 = vmatprep.subr.mxu0 0.0
  %1242 = vmatpush2.msra.mxu0 0.0
  %1243 = vmatprep.subr.mxu0 0.0
  %1244 = vmatpush2.msra.mxu0 0.0
  %1245 = vmatprep.subr.mxu0 0.0
  %1246 = vmatpush2.msra.mxu0 0.0
  %1247 = vmatprep.subr.mxu0 0.0
  %1248 = vmatpush2.msra.mxu0 0.0
  %1249 = vmatprep.mubr.f32.mxu0 0.0
  %1250 = vmatmul.mubr.f32.gmra.mxu0 %v1183
  %v1251 = vpop.f32.mrf.mxu0
  %v1252 = vadd.f32 0.0, %v1251
  %v1253 = vpop.f32.mrf.mxu0
  %1254 = vdwg.mxu0
  %v1255 = vmax.f32 %v1252, 0.0
  %s1256 = scalar_lea.vmem %s3, 256
  %v1257 = vld [vmem:[%s1256] sm:$0xff]
  %v1258 = vld [vmem:[%s1256 + $0x8] sm:$0xff]
  %v1259 = vld [vmem:[%s1256 + $0x10] sm:$0xff]
  %v1260 = vld [vmem:[%s1256 + $0x18] sm:$0xff]
  %v1261 = vld [vmem:[%s1256 + $0x20] sm:$0xff]
  %v1262 = vld [vmem:[%s1256 + $0x28] sm:$0xff]
  %v1263 = vld [vmem:[%s1256 + $0x30] sm:$0xff]
  %v1264 = vld [vmem:[%s1256 + $0x38] sm:$0xff]
  %v1266 = vsel %vm933, %v1255, 0
  %1268 = vmatprep.subr.mxu0 0.0
  %1269 = vmatpush1.msra.mxu0 0.0
  %1270 = vmatprep.subr.mxu0 0.0
  %1271 = vmatpush1.msra.mxu0 0.0
  %1272 = vmatprep.subr.mxu0 0.0
  %1273 = vmatpush1.msra.mxu0 0.0
  %1274 = vmatprep.subr.mxu0 0.0
  %1275 = vmatpush1.msra.mxu0 0.0
  %1276 = vmatprep.subr.mxu0 0.0
  %1277 = vmatpush1.msra.mxu0 0.0
  %1278 = vmatprep.subr.mxu0 0.0
  %1279 = vmatpush1.msra.mxu0 0.0
  %1280 = vmatprep.subr.mxu0 0.0
  %1281 = vmatpush1.msra.mxu0 0.0
  %1282 = vmatprep.subr.mxu0 0.0
  %1283 = vmatpush1.msra.mxu0 0.0
  %1284 = vmatprep.subr.mxu0 0.0
  %1285 = vmatpush1.msra.mxu0 %v1264
  %1286 = vmatprep.subr.mxu0 0.0
  %1287 = vmatpush1.msra.mxu0 %v1263
  %1288 = vmatprep.subr.mxu0 0.0
  %1289 = vmatpush1.msra.mxu0 %v1262
  %1290 = vmatprep.subr.mxu0 0.0
  %1291 = vmatpush1.msra.mxu0 %v1261
  %1292 = vmatprep.subr.mxu0 0.0
  %1293 = vmatpush1.msra.mxu0 %v1260
  %1294 = vmatprep.subr.mxu0 0.0
  %1295 = vmatpush1.msra.mxu0 %v1259
  %1296 = vmatprep.subr.mxu0 0.0
  %1297 = vmatpush1.msra.mxu0 %v1258
  %1298 = vmatprep.subr.mxu0 0.0
  %1299 = vmatpush1.msra.mxu0 %v1257
  %1300 = vmatprep.subr.mxu0 0.0
  %1301 = vmatpush2.msra.mxu0 0.0
  %1302 = vmatprep.subr.mxu0 0.0
  %1303 = vmatpush2.msra.mxu0 0.0
  %1304 = vmatprep.subr.mxu0 0.0
  %1305 = vmatpush2.msra.mxu0 0.0
  %1306 = vmatprep.subr.mxu0 0.0
  %1307 = vmatpush2.msra.mxu0 0.0
  %1308 = vmatprep.subr.mxu0 0.0
  %1309 = vmatpush2.msra.mxu0 0.0
  %1310 = vmatprep.subr.mxu0 0.0
  %1311 = vmatpush2.msra.mxu0 0.0
  %1312 = vmatprep.subr.mxu0 0.0
  %1313 = vmatpush2.msra.mxu0 0.0
  %1314 = vmatprep.subr.mxu0 0.0
  %1315 = vmatpush2.msra.mxu0 0.0
  %1316 = vmatprep.subr.mxu0 0.0
  %1317 = vmatpush2.msra.mxu0 0.0
  %1318 = vmatprep.subr.mxu0 0.0
  %1319 = vmatpush2.msra.mxu0 0.0
  %1320 = vmatprep.subr.mxu0 0.0
  %1321 = vmatpush2.msra.mxu0 0.0
  %1322 = vmatprep.subr.mxu0 0.0
  %1323 = vmatpush2.msra.mxu0 0.0
  %1324 = vmatprep.subr.mxu0 0.0
  %1325 = vmatpush2.msra.mxu0 0.0
  %1326 = vmatprep.subr.mxu0 0.0
  %1327 = vmatpush2.msra.mxu0 0.0
  %1328 = vmatprep.subr.mxu0 0.0
  %1329 = vmatpush2.msra.mxu0 0.0
  %1330 = vmatprep.subr.mxu0 0.0
  %1331 = vmatpush2.msra.mxu0 0.0
  %1332 = vmatprep.mubr.f32.mxu0 0.0
  %1333 = vmatmul.mubr.f32.gmra.mxu0 %v1266
  %v1334 = vpop.f32.mrf.mxu0
  %v1335 = vadd.f32 0.0, %v1334
  %v1336 = vpop.f32.mrf.mxu0
  %1337 = vdwg.mxu0
  %v1338 = vmax.f32 %v1335, 0.0
  %s1339 = scalar_lea.vmem %s3, 320
  %v1340 = vld [vmem:[%s1339] sm:$0xff]
  %v1341 = vld [vmem:[%s1339 + $0x8] sm:$0xff]
  %v1342 = vld [vmem:[%s1339 + $0x10] sm:$0xff]
  %v1343 = vld [vmem:[%s1339 + $0x18] sm:$0xff]
  %v1344 = vld [vmem:[%s1339 + $0x20] sm:$0xff]
  %v1345 = vld [vmem:[%s1339 + $0x28] sm:$0xff]
  %v1346 = vld [vmem:[%s1339 + $0x30] sm:$0xff]
  %v1347 = vld [vmem:[%s1339 + $0x38] sm:$0xff]
  %v1349 = vsel %vm933, %v1338, 0
  %1351 = vmatprep.subr.mxu0 0.0
  %1352 = vmatpush1.msra.mxu0 0.0
  %1353 = vmatprep.subr.mxu0 0.0
  %1354 = vmatpush1.msra.mxu0 0.0
  %1355 = vmatprep.subr.mxu0 0.0
  %1356 = vmatpush1.msra.mxu0 0.0
  %1357 = vmatprep.subr.mxu0 0.0
  %1358 = vmatpush1.msra.mxu0 0.0
  %1359 = vmatprep.subr.mxu0 0.0
  %1360 = vmatpush1.msra.mxu0 0.0
  %1361 = vmatprep.subr.mxu0 0.0
  %1362 = vmatpush1.msra.mxu0 0.0
  %1363 = vmatprep.subr.mxu0 0.0
  %1364 = vmatpush1.msra.mxu0 0.0
  %1365 = vmatprep.subr.mxu0 0.0
  %1366 = vmatpush1.msra.mxu0 0.0
  %1367 = vmatprep.subr.mxu0 0.0
  %1368 = vmatpush1.msra.mxu0 %v1347
  %1369 = vmatprep.subr.mxu0 0.0
  %1370 = vmatpush1.msra.mxu0 %v1346
  %1371 = vmatprep.subr.mxu0 0.0
  %1372 = vmatpush1.msra.mxu0 %v1345
  %1373 = vmatprep.subr.mxu0 0.0
  %1374 = vmatpush1.msra.mxu0 %v1344
  %1375 = vmatprep.subr.mxu0 0.0
  %1376 = vmatpush1.msra.mxu0 %v1343
  %1377 = vmatprep.subr.mxu0 0.0
  %1378 = vmatpush1.msra.mxu0 %v1342
  %1379 = vmatprep.subr.mxu0 0.0
  %1380 = vmatpush1.msra.mxu0 %v1341
  %1381 = vmatprep.subr.mxu0 0.0
  %1382 = vmatpush1.msra.mxu0 %v1340
  %1383 = vmatprep.subr.mxu0 0.0
  %1384 = vmatpush2.msra.mxu0 0.0
  %1385 = vmatprep.subr.mxu0 0.0
  %1386 = vmatpush2.msra.mxu0 0.0
  %1387 = vmatprep.subr.mxu0 0.0
  %1388 = vmatpush2.msra.mxu0 0.0
  %1389 = vmatprep.subr.mxu0 0.0
  %1390 = vmatpush2.msra.mxu0 0.0
  %1391 = vmatprep.subr.mxu0 0.0
  %1392 = vmatpush2.msra.mxu0 0.0
  %1393 = vmatprep.subr.mxu0 0.0
  %1394 = vmatpush2.msra.mxu0 0.0
  %1395 = vmatprep.subr.mxu0 0.0
  %1396 = vmatpush2.msra.mxu0 0.0
  %1397 = vmatprep.subr.mxu0 0.0
  %1398 = vmatpush2.msra.mxu0 0.0
  %1399 = vmatprep.subr.mxu0 0.0
  %1400 = vmatpush2.msra.mxu0 0.0
  %1401 = vmatprep.subr.mxu0 0.0
  %1402 = vmatpush2.msra.mxu0 0.0
  %1403 = vmatprep.subr.mxu0 0.0
  %1404 = vmatpush2.msra.mxu0 0.0
  %1405 = vmatprep.subr.mxu0 0.0
  %1406 = vmatpush2.msra.mxu0 0.0
  %1407 = vmatprep.subr.mxu0 0.0
  %1408 = vmatpush2.msra.mxu0 0.0
  %1409 = vmatprep.subr.mxu0 0.0
  %1410 = vmatpush2.msra.mxu0 0.0
  %1411 = vmatprep.subr.mxu0 0.0
  %1412 = vmatpush2.msra.mxu0 0.0
  %1413 = vmatprep.subr.mxu0 0.0
  %1414 = vmatpush2.msra.mxu0 0.0
  %1415 = vmatprep.mubr.f32.mxu0 0.0
  %1416 = vmatmul.mubr.f32.gmra.mxu0 %v1349
  %v1417 = vpop.f32.mrf.mxu0
  %v1418 = vadd.f32 %v1170, %v1417
  %v1419 = vpop.f32.mrf.mxu0
  %1420 = vdwg.mxu0
  %s1421 = scalar_lea.vmem %s3, 384
  %v1422 = vld [vmem:[%s1421] sm:$0xff]
  %v1423 = vld [vmem:[%s1421 + $0x8] sm:$0xff]
  %v1424 = vld [vmem:[%s1421 + $0x10] sm:$0xff]
  %v1425 = vld [vmem:[%s1421 + $0x18] sm:$0xff]
  %v1426 = vld [vmem:[%s1421 + $0x20] sm:$0xff]
  %v1427 = vld [vmem:[%s1421 + $0x28] sm:$0xff]
  %v1428 = vld [vmem:[%s1421 + $0x30] sm:$0xff]
  %v1429 = vld [vmem:[%s1421 + $0x38] sm:$0xff]
  %v1431 = vsel %vm933, %v1418, 0
  %1433 = vmatprep.subr.mxu0 0.0
  %1434 = vmatpush1.msra.mxu0 0.0
  %1435 = vmatprep.subr.mxu0 0.0
  %1436 = vmatpush1.msra.mxu0 0.0
  %1437 = vmatprep.subr.mxu0 0.0
  %1438 = vmatpush1.msra.mxu0 0.0
  %1439 = vmatprep.subr.mxu0 0.0
  %1440 = vmatpush1.msra.mxu0 0.0
  %1441 = vmatprep.subr.mxu0 0.0
  %1442 = vmatpush1.msra.mxu0 0.0
  %1443 = vmatprep.subr.mxu0 0.0
  %1444 = vmatpush1.msra.mxu0 0.0
  %1445 = vmatprep.subr.mxu0 0.0
  %1446 = vmatpush1.msra.mxu0 0.0
  %1447 = vmatprep.subr.mxu0 0.0
  %1448 = vmatpush1.msra.mxu0 0.0
  %1449 = vmatprep.subr.mxu0 0.0
  %1450 = vmatpush1.msra.mxu0 %v1429
  %1451 = vmatprep.subr.mxu0 0.0
  %1452 = vmatpush1.msra.mxu0 %v1428
  %1453 = vmatprep.subr.mxu0 0.0
  %1454 = vmatpush1.msra.mxu0 %v1427
  %1455 = vmatprep.subr.mxu0 0.0
  %1456 = vmatpush1.msra.mxu0 %v1426
  %1457 = vmatprep.subr.mxu0 0.0
  %1458 = vmatpush1.msra.mxu0 %v1425
  %1459 = vmatprep.subr.mxu0 0.0
  %1460 = vmatpush1.msra.mxu0 %v1424
  %1461 = vmatprep.subr.mxu0 0.0
  %1462 = vmatpush1.msra.mxu0 %v1423
  %1463 = vmatprep.subr.mxu0 0.0
  %1464 = vmatpush1.msra.mxu0 %v1422
  %1465 = vmatprep.subr.mxu0 0.0
  %1466 = vmatpush2.msra.mxu0 0.0
  %1467 = vmatprep.subr.mxu0 0.0
  %1468 = vmatpush2.msra.mxu0 0.0
  %1469 = vmatprep.subr.mxu0 0.0
  %1470 = vmatpush2.msra.mxu0 0.0
  %1471 = vmatprep.subr.mxu0 0.0
  %1472 = vmatpush2.msra.mxu0 0.0
  %1473 = vmatprep.subr.mxu0 0.0
  %1474 = vmatpush2.msra.mxu0 0.0
  %1475 = vmatprep.subr.mxu0 0.0
  %1476 = vmatpush2.msra.mxu0 0.0
  %1477 = vmatprep.subr.mxu0 0.0
  %1478 = vmatpush2.msra.mxu0 0.0
  %1479 = vmatprep.subr.mxu0 0.0
  %1480 = vmatpush2.msra.mxu0 0.0
  %1481 = vmatprep.subr.mxu0 0.0
  %1482 = vmatpush2.msra.mxu0 0.0
  %1483 = vmatprep.subr.mxu0 0.0
  %1484 = vmatpush2.msra.mxu0 0.0
  %1485 = vmatprep.subr.mxu0 0.0
  %1486 = vmatpush2.msra.mxu0 0.0
  %1487 = vmatprep.subr.mxu0 0.0
  %1488 = vmatpush2.msra.mxu0 0.0
  %1489 = vmatprep.subr.mxu0 0.0
  %1490 = vmatpush2.msra.mxu0 0.0
  %1491 = vmatprep.subr.mxu0 0.0
  %1492 = vmatpush2.msra.mxu0 0.0
  %1493 = vmatprep.subr.mxu0 0.0
  %1494 = vmatpush2.msra.mxu0 0.0
  %1495 = vmatprep.subr.mxu0 0.0
  %1496 = vmatpush2.msra.mxu0 0.0
  %1497 = vmatprep.mubr.f32.mxu0 0.0
  %1498 = vmatmul.mubr.f32.gmra.mxu0 %v1431
  %v1499 = vpop.f32.mrf.mxu0
  %v1500 = vadd.f32 0.0, %v1499
  %v1501 = vpop.f32.mrf.mxu0
  %1502 = vdwg.mxu0
  %v1503 = vmax.f32 %v1500, 0.0
  %s1504 = scalar_lea.vmem %s3, 448
  %v1505 = vld [vmem:[%s1504] sm:$0xff]
  %v1506 = vld [vmem:[%s1504 + $0x8] sm:$0xff]
  %v1507 = vld [vmem:[%s1504 + $0x10] sm:$0xff]
  %v1508 = vld [vmem:[%s1504 + $0x18] sm:$0xff]
  %v1509 = vld [vmem:[%s1504 + $0x20] sm:$0xff]
  %v1510 = vld [vmem:[%s1504 + $0x28] sm:$0xff]
  %v1511 = vld [vmem:[%s1504 + $0x30] sm:$0xff]
  %v1512 = vld [vmem:[%s1504 + $0x38] sm:$0xff]
  %v1514 = vsel %vm933, %v1503, 0
  %1516 = vmatprep.subr.mxu0 0.0
  %1517 = vmatpush1.msra.mxu0 0.0
  %1518 = vmatprep.subr.mxu0 0.0
  %1519 = vmatpush1.msra.mxu0 0.0
  %1520 = vmatprep.subr.mxu0 0.0
  %1521 = vmatpush1.msra.mxu0 0.0
  %1522 = vmatprep.subr.mxu0 0.0
  %1523 = vmatpush1.msra.mxu0 0.0
  %1524 = vmatprep.subr.mxu0 0.0
  %1525 = vmatpush1.msra.mxu0 0.0
  %1526 = vmatprep.subr.mxu0 0.0
  %1527 = vmatpush1.msra.mxu0 0.0
  %1528 = vmatprep.subr.mxu0 0.0
  %1529 = vmatpush1.msra.mxu0 0.0
  %1530 = vmatprep.subr.mxu0 0.0
  %1531 = vmatpush1.msra.mxu0 0.0
  %1532 = vmatprep.subr.mxu0 0.0
  %1533 = vmatpush1.msra.mxu0 %v1512
  %1534 = vmatprep.subr.mxu0 0.0
  %1535 = vmatpush1.msra.mxu0 %v1511
  %1536 = vmatprep.subr.mxu0 0.0
  %1537 = vmatpush1.msra.mxu0 %v1510
  %1538 = vmatprep.subr.mxu0 0.0
  %1539 = vmatpush1.msra.mxu0 %v1509
  %1540 = vmatprep.subr.mxu0 0.0
  %1541 = vmatpush1.msra.mxu0 %v1508
  %1542 = vmatprep.subr.mxu0 0.0
  %1543 = vmatpush1.msra.mxu0 %v1507
  %1544 = vmatprep.subr.mxu0 0.0
  %1545 = vmatpush1.msra.mxu0 %v1506
  %1546 = vmatprep.subr.mxu0 0.0
  %1547 = vmatpush1.msra.mxu0 %v1505
  %1548 = vmatprep.subr.mxu0 0.0
  %1549 = vmatpush2.msra.mxu0 0.0
  %1550 = vmatprep.subr.mxu0 0.0
  %1551 = vmatpush2.msra.mxu0 0.0
  %1552 = vmatprep.subr.mxu0 0.0
  %1553 = vmatpush2.msra.mxu0 0.0
  %1554 = vmatprep.subr.mxu0 0.0
  %1555 = vmatpush2.msra.mxu0 0.0
  %1556 = vmatprep.subr.mxu0 0.0
  %1557 = vmatpush2.msra.mxu0 0.0
  %1558 = vmatprep.subr.mxu0 0.0
  %1559 = vmatpush2.msra.mxu0 0.0
  %1560 = vmatprep.subr.mxu0 0.0
  %1561 = vmatpush2.msra.mxu0 0.0
  %1562 = vmatprep.subr.mxu0 0.0
  %1563 = vmatpush2.msra.mxu0 0.0
  %1564 = vmatprep.subr.mxu0 0.0
  %1565 = vmatpush2.msra.mxu0 0.0
  %1566 = vmatprep.subr.mxu0 0.0
  %1567 = vmatpush2.msra.mxu0 0.0
  %1568 = vmatprep.subr.mxu0 0.0
  %1569 = vmatpush2.msra.mxu0 0.0
  %1570 = vmatprep.subr.mxu0 0.0
  %1571 = vmatpush2.msra.mxu0 0.0
  %1572 = vmatprep.subr.mxu0 0.0
  %1573 = vmatpush2.msra.mxu0 0.0
  %1574 = vmatprep.subr.mxu0 0.0
  %1575 = vmatpush2.msra.mxu0 0.0
  %1576 = vmatprep.subr.mxu0 0.0
  %1577 = vmatpush2.msra.mxu0 0.0
  %1578 = vmatprep.subr.mxu0 0.0
  %1579 = vmatpush2.msra.mxu0 0.0
  %1580 = vmatprep.mubr.f32.mxu0 0.0
  %1581 = vmatmul.mubr.f32.gmra.mxu0 %v1514
  %v1582 = vpop.f32.mrf.mxu0
  %v1583 = vadd.f32 0.0, %v1582
  %v1584 = vpop.f32.mrf.mxu0
  %1585 = vdwg.mxu0
  %v1586 = vmax.f32 %v1583, 0.0
  %s1587 = scalar_lea.vmem %s3, 512
  %v1588 = vld [vmem:[%s1587] sm:$0xff]
  %v1589 = vld [vmem:[%s1587 + $0x8] sm:$0xff]
  %v1590 = vld [vmem:[%s1587 + $0x10] sm:$0xff]
  %v1591 = vld [vmem:[%s1587 + $0x18] sm:$0xff]
  %v1592 = vld [vmem:[%s1587 + $0x20] sm:$0xff]
  %v1593 = vld [vmem:[%s1587 + $0x28] sm:$0xff]
  %v1594 = vld [vmem:[%s1587 + $0x30] sm:$0xff]
  %v1595 = vld [vmem:[%s1587 + $0x38] sm:$0xff]
  %v1597 = vsel %vm933, %v1586, 0
  %1599 = vmatprep.subr.mxu0 0.0
  %1600 = vmatpush1.msra.mxu0 0.0
  %1601 = vmatprep.subr.mxu0 0.0
  %1602 = vmatpush1.msra.mxu0 0.0
  %1603 = vmatprep.subr.mxu0 0.0
  %1604 = vmatpush1.msra.mxu0 0.0
  %1605 = vmatprep.subr.mxu0 0.0
  %1606 = vmatpush1.msra.mxu0 0.0
  %1607 = vmatprep.subr.mxu0 0.0
  %1608 = vmatpush1.msra.mxu0 0.0
  %1609 = vmatprep.subr.mxu0 0.0
  %1610 = vmatpush1.msra.mxu0 0.0
  %1611 = vmatprep.subr.mxu0 0.0
  %1612 = vmatpush1.msra.mxu0 0.0
  %1613 = vmatprep.subr.mxu0 0.0
  %1614 = vmatpush1.msra.mxu0 0.0
  %1615 = vmatprep.subr.mxu0 0.0
  %1616 = vmatpush1.msra.mxu0 %v1595
  %1617 = vmatprep.subr.mxu0 0.0
  %1618 = vmatpush1.msra.mxu0 %v1594
  %1619 = vmatprep.subr.mxu0 0.0
  %1620 = vmatpush1.msra.mxu0 %v1593
  %1621 = vmatprep.subr.mxu0 0.0
  %1622 = vmatpush1.msra.mxu0 %v1592
  %1623 = vmatprep.subr.mxu0 0.0
  %1624 = vmatpush1.msra.mxu0 %v1591
  %1625 = vmatprep.subr.mxu0 0.0
  %1626 = vmatpush1.msra.mxu0 %v1590
  %1627 = vmatprep.subr.mxu0 0.0
  %1628 = vmatpush1.msra.mxu0 %v1589
  %1629 = vmatprep.subr.mxu0 0.0
  %1630 = vmatpush1.msra.mxu0 %v1588
  %1631 = vmatprep.subr.mxu0 0.0
  %1632 = vmatpush2.msra.mxu0 0.0
  %1633 = vmatprep.subr.mxu0 0.0
  %1634 = vmatpush2.msra.mxu0 0.0
  %1635 = vmatprep.subr.mxu0 0.0
  %1636 = vmatpush2.msra.mxu0 0.0
  %1637 = vmatprep.subr.mxu0 0.0
  %1638 = vmatpush2.msra.mxu0 0.0
  %1639 = vmatprep.subr.mxu0 0.0
  %1640 = vmatpush2.msra.mxu0 0.0
  %1641 = vmatprep.subr.mxu0 0.0
  %1642 = vmatpush2.msra.mxu0 0.0
  %1643 = vmatprep.subr.mxu0 0.0
  %1644 = vmatpush2.msra.mxu0 0.0
  %1645 = vmatprep.subr.mxu0 0.0
  %1646 = vmatpush2.msra.mxu0 0.0
  %1647 = vmatprep.subr.mxu0 0.0
  %1648 = vmatpush2.msra.mxu0 0.0
  %1649 = vmatprep.subr.mxu0 0.0
  %1650 = vmatpush2.msra.mxu0 0.0
  %1651 = vmatprep.subr.mxu0 0.0
  %1652 = vmatpush2.msra.mxu0 0.0
  %1653 = vmatprep.subr.mxu0 0.0
  %1654 = vmatpush2.msra.mxu0 0.0
  %1655 = vmatprep.subr.mxu0 0.0
  %1656 = vmatpush2.msra.mxu0 0.0
  %1657 = vmatprep.subr.mxu0 0.0
  %1658 = vmatpush2.msra.mxu0 0.0
  %1659 = vmatprep.subr.mxu0 0.0
  %1660 = vmatpush2.msra.mxu0 0.0
  %1661 = vmatprep.subr.mxu0 0.0
  %1662 = vmatpush2.msra.mxu0 0.0
  %1663 = vmatprep.mubr.f32.mxu0 0.0
  %1664 = vmatmul.mubr.f32.gmra.mxu0 %v1597
  %v1665 = vpop.f32.mrf.mxu0
  %v1666 = vadd.f32 %v1418, %v1665
  %v1667 = vpop.f32.mrf.mxu0
  %1668 = vdwg.mxu0
  %v1669 = vld [vmem:[%s4] sm:$0xff]
  %v1670 = vld [vmem:[%s4 + $0x8] sm:$0xff]
  %v1671 = vld [vmem:[%s4 + $0x10] sm:$0xff]
  %v1672 = vld [vmem:[%s4 + $0x18] sm:$0xff]
  %v1673 = vld [vmem:[%s4 + $0x20] sm:$0xff]
  %v1674 = vld [vmem:[%s4 + $0x28] sm:$0xff]
  %v1675 = vld [vmem:[%s4 + $0x30] sm:$0xff]
  %v1676 = vld [vmem:[%s4 + $0x38] sm:$0xff]
  %v1677 = vld [vmem:[%s4 + $0x40] sm:$0xff]
  %v1678 = vld [vmem:[%s4 + $0x48] sm:$0xff]
  %v1679 = vld [vmem:[%s4 + $0x50] sm:$0xff]
  %v1680 = vld [vmem:[%s4 + $0x58] sm:$0xff]
  %v1681 = vld [vmem:[%s4 + $0x60] sm:$0xff]
  %v1682 = vld [vmem:[%s4 + $0x68] sm:$0xff]
  %v1683 = vld [vmem:[%s4 + $0x70] sm:$0xff]
  %v1684 = vld [vmem:[%s4 + $0x78] sm:$0xff]
  %v1685 = vld [vmem:[%s5] sm:$0x3]
  %v1687 = vlaneseq
  %v1688 = vshrl.u32 %v1687, 7
  %v1689 = vsub.s32 0, %v1688
  %v1690 = vrot.slane %v1685, %v1689
  %v1691 = vlaneseq
  %v1692 = vshrl.u32 %v1691, 7
  %v1693 = vsub.s32 1, %v1692
  %v1694 = vrot.slane %v1685, %v1693
  %v1698 = vsel %vm933, %v1666, 0
  %1700 = vmatprep.subr.mxu0 0.0
  %1701 = vmatpush1.msra.mxu0 0.0
  %1702 = vmatprep.subr.mxu0 0.0
  %1703 = vmatpush1.msra.mxu0 0.0
  %1704 = vmatprep.subr.mxu0 0.0
  %1705 = vmatpush1.msra.mxu0 0.0
  %1706 = vmatprep.subr.mxu0 0.0
  %1707 = vmatpush1.msra.mxu0 0.0
  %1708 = vmatprep.subr.mxu0 0.0
  %1709 = vmatpush1.msra.mxu0 0.0
  %1710 = vmatprep.subr.mxu0 0.0
  %1711 = vmatpush1.msra.mxu0 0.0
  %1712 = vmatprep.subr.mxu0 0.0
  %1713 = vmatpush1.msra.mxu0 0.0
  %1714 = vmatprep.subr.mxu0 0.0
  %1715 = vmatpush1.msra.mxu0 0.0
  %1716 = vmatprep.subr.mxu0 %v1684
  %1717 = vmatpush1.msra.mxu0 %v1683
  %1718 = vmatprep.subr.mxu0 %v1682
  %1719 = vmatpush1.msra.mxu0 %v1681
  %1720 = vmatprep.subr.mxu0 %v1680
  %1721 = vmatpush1.msra.mxu0 %v1679
  %1722 = vmatprep.subr.mxu0 %v1678
  %1723 = vmatpush1.msra.mxu0 %v1677
  %1724 = vmatprep.subr.mxu0 %v1676
  %1725 = vmatpush1.msra.mxu0 %v1675
  %1726 = vmatprep.subr.mxu0 %v1674
  %1727 = vmatpush1.msra.mxu0 %v1673
  %1728 = vmatprep.subr.mxu0 %v1672
  %1729 = vmatpush1.msra.mxu0 %v1671
  %1730 = vmatprep.subr.mxu0 %v1670
  %1731 = vmatpush1.msra.mxu0 %v1669
  %1732 = vmatprep.subr.mxu0 0.0
  %1733 = vmatpush2.msra.mxu0 0.0
  %1734 = vmatprep.subr.mxu0 0.0
  %1735 = vmatpush2.msra.mxu0 0.0
  %1736 = vmatprep.subr.mxu0 0.0
  %1737 = vmatpush2.msra.mxu0 0.0
  %1738 = vmatprep.subr.mxu0 0.0
  %1739 = vmatpush2.msra.mxu0 0.0
  %1740 = vmatprep.subr.mxu0 0.0
  %1741 = vmatpush2.msra.mxu0 0.0
  %1742 = vmatprep.subr.mxu0 0.0
  %1743 = vmatpush2.msra.mxu0 0.0
  %1744 = vmatprep.subr.mxu0 0.0
  %1745 = vmatpush2.msra.mxu0 0.0
  %1746 = vmatprep.subr.mxu0 0.0
  %1747 = vmatpush2.msra.mxu0 0.0
  %1748 = vmatprep.subr.mxu0 0.0
  %1749 = vmatpush2.msra.mxu0 0.0
  %1750 = vmatprep.subr.mxu0 0.0
  %1751 = vmatpush2.msra.mxu0 0.0
  %1752 = vmatprep.subr.mxu0 0.0
  %1753 = vmatpush2.msra.mxu0 0.0
  %1754 = vmatprep.subr.mxu0 0.0
  %1755 = vmatpush2.msra.mxu0 0.0
  %1756 = vmatprep.subr.mxu0 0.0
  %1757 = vmatpush2.msra.mxu0 0.0
  %1758 = vmatprep.subr.mxu0 0.0
  %1759 = vmatpush2.msra.mxu0 0.0
  %1760 = vmatprep.subr.mxu0 0.0
  %1761 = vmatpush2.msra.mxu0 0.0
  %1762 = vmatprep.subr.mxu0 0.0
  %1763 = vmatpush2.msra.mxu0 0.0
  %1764 = vmatprep.mubr.f32.mxu0 0.0
  %1765 = vmatmul.mubr.f32.gmra.mxu0 %v1698
  %v1766 = vpop.f32.mrf.mxu0
  %v1767 = vadd.f32 %v1690, %v1766
  %v1768 = vpop.f32.mrf.mxu0
  %v1769 = vadd.f32 %v1694, %v1768
  %1770 = vdwg.mxu0
  %v1771 = vmax.f32 %v1767, 0.0
  %v1772 = vmax.f32 %v1769, 0.0
  %v1775 = vcombine.low %v1771, %v1772
  %v1777 = vunpack.c.l.s4 1966171168
  %v1778 = vunpack.c.0.s8 %v1777
  %v1779 = vlaneseq
  %v1780 = vshrl.u32 %v1779, 7
  %v1781 = vsub.s32 %v1778, %v1780
  %v1782 = vrot.slane %v1775, %v1781
  %v1784 = vunpack.c.l.s4 1966171168
  %v1785 = vunpack.c.0.s8 %v1784
  %v1786 = vlaneseq
  %v1787 = vshrl.u32 %v1786, 7
  %v1788 = vsub.s32 %v1785, %v1787
  %v1789 = vrot.slane %v1782, %v1788
  %v1791 = vlaneseq
  %vm1792 = vcmp.ge.s32.totalorder %v1791, 0
  %vm1793 = vcmp.lt.s32.totalorder %v1791, 256
  %vm1794 = vmand %vm1792, %vm1793
  %1795 = vst.msk [vmem:[%s6] sm:$0x3] %vm1794, %v1789
  // Predicated region
  $region26: #{tsrvfd_forward.25} parent=0 // pred_check
    _
  $region27: #{tsrvfd_forward.25} parent=0 // pred_check_branch
    %1797 = sbr.rel (0) target = $region29
  $region28: #{tsrvfd_forward.25} parent=0 // pred_region
    _
  $region29: #{tsrvfd_forward.25} parent=0 // pred_fallthru
    _
  // Predicated region
  $region30: #{tsrvfd_forward.25} parent=0 // pred_check
    _
  $region31: #{tsrvfd_forward.25} parent=0 // pred_check_branch
    %1799 = sbr.rel (0) target = $region33
  $region32: #{tsrvfd_forward.25} parent=0 // pred_region
    _
  $region33: #{tsrvfd_forward.25} parent=0 // pred_fallthru
    _

// kernel: tsrvfd_forward.26
$region0: #{tsrvfd_forward.26}
  #allocation0 [shape = 'u32[]', space=smem, size = 0x4, offset = 0x4, fixed_abs, tag = 'smem constant byte address 0x4 - core index']
  #allocation1 [shape = 'u32[144,128]{1,0:T(1,128)}', space=vmem, size = 0x12000, scoped, tag = 'internal scratch']
  %s0 = inlined_call_operand.vmem [shape: bf16[32,1728], index: 0, kind: input, shape index: {}]
  %s1 = inlined_call_operand.vmem [shape: bf16[1728,8], index: 1, kind: input, shape index: {}]
  %s2 = inlined_call_operand.vmem [shape: f32[32,1], index: 2, kind: input, shape index: {}]
  %s3 = inlined_call_operand.vmem [shape: f32[32,8], index: 3, kind: output, shape index: {}]
  %s4 = sld [smem:[#allocation0]]
  $region22: #{tsrvfd_forward.26} parent=0
    _
  %s6 = ssub.s32 1, %s4
  %s7 = scalar_select 0, %s6, %s4
  // Predicated region
  $region2: #{tsrvfd_forward.26} parent=0 // pred_check
    _
  $region3: #{tsrvfd_forward.26} parent=0 // pred_check_branch
    %9 = sbr.rel (0) target = $region5
  $region4: #{tsrvfd_forward.26} parent=0 // pred_region
    _
  $region5: #{tsrvfd_forward.26} parent=0 // pred_fallthru
    _
  // Predicated region
  $region6: #{tsrvfd_forward.26} parent=0 // pred_check
    _
  $region7: #{tsrvfd_forward.26} parent=0 // pred_check_branch
    %11 = sbr.rel (0) target = $region9
  $region8: #{tsrvfd_forward.26} parent=0 // pred_region
    _
  $region9: #{tsrvfd_forward.26} parent=0 // pred_fallthru
    _
  // Predicated region
  $region10: #{tsrvfd_forward.26} parent=0 // pred_check
    _
  $region11: #{tsrvfd_forward.26} parent=0 // pred_check_branch
    %13 = sbr.rel (0) target = $region13
  $region12: #{tsrvfd_forward.26} parent=0 // pred_region
    _
  $region13: #{tsrvfd_forward.26} parent=0 // pred_fallthru
    _
  %v15 = vld [vmem:[%s0] sm:$0xff]
  %v16 = vld [vmem:[%s0 + $0x8] sm:$0xff]
  %v17 = vld [vmem:[%s0 + $0x10] sm:$0xff]
  %v18 = vld [vmem:[%s0 + $0x18] sm:$0xff]
  %v19 = vld [vmem:[%s0 + $0x20] sm:$0xff]
  %v20 = vld [vmem:[%s0 + $0x28] sm:$0xff]
  %v21 = vld [vmem:[%s0 + $0x30] sm:$0xff]
  %v22 = vld [vmem:[%s0 + $0x38] sm:$0xff]
  %v23 = vld [vmem:[%s0 + $0x40] sm:$0xff]
  %v24 = vld [vmem:[%s0 + $0x48] sm:$0xff]
  %v25 = vld [vmem:[%s0 + $0x50] sm:$0xff]
  %v26 = vld [vmem:[%s0 + $0x58] sm:$0xff]
  %v27 = vld [vmem:[%s0 + $0x60] sm:$0xff]
  %v28 = vld [vmem:[%s0 + $0x68] sm:$0xff]
  %v29 = vld [vmem:[%s0 + $0x70] sm:$0xff]
  %v30 = vld [vmem:[%s0 + $0x78] sm:$0xff]
  %v31 = vld [vmem:[%s0 + $0x80] sm:$0xff]
  %v32 = vld [vmem:[%s0 + $0x88] sm:$0xff]
  %v33 = vld [vmem:[%s0 + $0x90] sm:$0xff]
  %v34 = vld [vmem:[%s0 + $0x98] sm:$0xff]
  %v35 = vld [vmem:[%s0 + $0xa0] sm:$0xff]
  %v36 = vld [vmem:[%s0 + $0xa8] sm:$0xff]
  %v37 = vld [vmem:[%s0 + $0xb0] sm:$0xff]
  %v38 = vld [vmem:[%s0 + $0xb8] sm:$0xff]
  %v39 = vld [vmem:[%s0 + $0xc0] sm:$0xff]
  %v40 = vld [vmem:[%s0 + $0xc8] sm:$0xff]
  %v41 = vld [vmem:[%s0 + $0xd0] sm:$0xff]
  %v42 = vld [vmem:[%s0 + $0xd8] sm:$0xff]
  %v43 = vld [vmem:[%s1] sm:$0xf]
  %v44 = vld [vmem:[%s1 + $0x4] sm:$0xf]
  %v45 = vld [vmem:[%s1 + $0x8] sm:$0xf]
  %v46 = vld [vmem:[%s1 + $0xc] sm:$0xf]
  %v47 = vld [vmem:[%s1 + $0x10] sm:$0xf]
  %v48 = vld [vmem:[%s1 + $0x14] sm:$0xf]
  %v49 = vld [vmem:[%s1 + $0x18] sm:$0xf]
  %v50 = vld [vmem:[%s1 + $0x1c] sm:$0xf]
  %v51 = vld [vmem:[%s1 + $0x20] sm:$0xf]
  %v52 = vld [vmem:[%s1 + $0x24] sm:$0xf]
  %v53 = vld [vmem:[%s1 + $0x28] sm:$0xf]
  %v54 = vld [vmem:[%s1 + $0x2c] sm:$0xf]
  %v55 = vld [vmem:[%s1 + $0x30] sm:$0xf]
  %v56 = vld [vmem:[%s1 + $0x34] sm:$0xf]
  %v57 = vld [vmem:[%s1 + $0x38] sm:$0xf]
  %v58 = vld [vmem:[%s1 + $0x3c] sm:$0xf]
  %v59 = vld [vmem:[%s1 + $0x40] sm:$0xf]
  %v60 = vld [vmem:[%s1 + $0x44] sm:$0xf]
  %v61 = vld [vmem:[%s1 + $0x48] sm:$0xf]
  %v62 = vld [vmem:[%s1 + $0x4c] sm:$0xf]
  %v63 = vld [vmem:[%s1 + $0x50] sm:$0xf]
  %v64 = vld [vmem:[%s1 + $0x54] sm:$0xf]
  %v65 = vld [vmem:[%s1 + $0x58] sm:$0xf]
  %v66 = vld [vmem:[%s1 + $0x5c] sm:$0xf]
  %v67 = vld [vmem:[%s1 + $0x60] sm:$0xf]
  %v68 = vld [vmem:[%s1 + $0x64] sm:$0xf]
  %v69 = vld [vmem:[%s1 + $0x68] sm:$0xf]
  %v70 = vld [vmem:[%s1 + $0x6c] sm:$0xf]
  %v71 = vld [vmem:[%s1 + $0x70] sm:$0xf]
  %v72 = vld [vmem:[%s1 + $0x74] sm:$0xf]
  %v73 = vld [vmem:[%s1 + $0x78] sm:$0xf]
  %v74 = vld [vmem:[%s1 + $0x7c] sm:$0xf]
  %v75 = vld [vmem:[%s1 + $0x80] sm:$0xf]
  %v76 = vld [vmem:[%s1 + $0x84] sm:$0xf]
  %v77 = vld [vmem:[%s1 + $0x88] sm:$0xf]
  %v78 = vld [vmem:[%s1 + $0x8c] sm:$0xf]
  %v79 = vld [vmem:[%s1 + $0x90] sm:$0xf]
  %v80 = vld [vmem:[%s1 + $0x94] sm:$0xf]
  %v81 = vld [vmem:[%s1 + $0x98] sm:$0xf]
  %v82 = vld [vmem:[%s1 + $0x9c] sm:$0xf]
  %v83 = vld [vmem:[%s1 + $0xa0] sm:$0xf]
  %v84 = vld [vmem:[%s1 + $0xa4] sm:$0xf]
  %v85 = vld [vmem:[%s1 + $0xa8] sm:$0xf]
  %v86 = vld [vmem:[%s1 + $0xac] sm:$0xf]
  %v87 = vld [vmem:[%s1 + $0xb0] sm:$0xf]
  %v88 = vld [vmem:[%s1 + $0xb4] sm:$0xf]
  %v89 = vld [vmem:[%s1 + $0xb8] sm:$0xf]
  %v90 = vld [vmem:[%s1 + $0xbc] sm:$0xf]
  %v91 = vld [vmem:[%s1 + $0xc0] sm:$0xf]
  %v92 = vld [vmem:[%s1 + $0xc4] sm:$0xf]
  %v93 = vld [vmem:[%s1 + $0xc8] sm:$0xf]
  %v94 = vld [vmem:[%s1 + $0xcc] sm:$0xf]
  %v95 = vld [vmem:[%s1 + $0xd0] sm:$0xf]
  %v96 = vld [vmem:[%s1 + $0xd4] sm:$0xf]
  %v97 = vld [vmem:[%s1 + $0xd8] sm:$0xf]
  %v98 = vld [vmem:[%s1 + $0xdc] sm:$0xf]
  %v99 = vld [vmem:[%s1 + $0xe0] sm:$0xf]
  %v100 = vld [vmem:[%s1 + $0xe4] sm:$0xf]
  %v101 = vld [vmem:[%s1 + $0xe8] sm:$0xf]
  %v102 = vld [vmem:[%s1 + $0xec] sm:$0xf]
  %v103 = vld [vmem:[%s1 + $0xf0] sm:$0xf]
  %v104 = vld [vmem:[%s1 + $0xf4] sm:$0xf]
  %v105 = vld [vmem:[%s1 + $0xf8] sm:$0xf]
  %v106 = vld [vmem:[%s1 + $0xfc] sm:$0xf]
  %v107 = vld [vmem:[%s1 + $0x100] sm:$0xf]
  %v108 = vld [vmem:[%s1 + $0x104] sm:$0xf]
  %v109 = vld [vmem:[%s1 + $0x108] sm:$0xf]
  %v110 = vld [vmem:[%s1 + $0x10c] sm:$0xf]
  %v111 = vld [vmem:[%s1 + $0x110] sm:$0xf]
  %v112 = vld [vmem:[%s1 + $0x114] sm:$0xf]
  %v113 = vld [vmem:[%s1 + $0x118] sm:$0xf]
  %v114 = vld [vmem:[%s1 + $0x11c] sm:$0xf]
  %v115 = vld [vmem:[%s1 + $0x120] sm:$0xf]
  %v116 = vld [vmem:[%s1 + $0x124] sm:$0xf]
  %v117 = vld [vmem:[%s1 + $0x128] sm:$0xf]
  %v118 = vld [vmem:[%s1 + $0x12c] sm:$0xf]
  %v119 = vld [vmem:[%s1 + $0x130] sm:$0xf]
  %v120 = vld [vmem:[%s1 + $0x134] sm:$0xf]
  %v121 = vld [vmem:[%s1 + $0x138] sm:$0xf]
  %v122 = vld [vmem:[%s1 + $0x13c] sm:$0xf]
  %v123 = vld [vmem:[%s1 + $0x140] sm:$0xf]
  %v124 = vld [vmem:[%s1 + $0x144] sm:$0xf]
  %v125 = vld [vmem:[%s1 + $0x148] sm:$0xf]
  %v126 = vld [vmem:[%s1 + $0x14c] sm:$0xf]
  %v127 = vld [vmem:[%s1 + $0x150] sm:$0xf]
  %v128 = vld [vmem:[%s1 + $0x154] sm:$0xf]
  %v129 = vld [vmem:[%s1 + $0x158] sm:$0xf]
  %v130 = vld [vmem:[%s1 + $0x15c] sm:$0xf]
  %v131 = vld [vmem:[%s1 + $0x160] sm:$0xf]
  %v132 = vld [vmem:[%s1 + $0x164] sm:$0xf]
  %v133 = vld [vmem:[%s1 + $0x168] sm:$0xf]
  %v134 = vld [vmem:[%s1 + $0x16c] sm:$0xf]
  %v135 = vld [vmem:[%s1 + $0x170] sm:$0xf]
  %v136 = vld [vmem:[%s1 + $0x174] sm:$0xf]
  %v137 = vld [vmem:[%s1 + $0x178] sm:$0xf]
  %v138 = vld [vmem:[%s1 + $0x17c] sm:$0xf]
  %v139 = vld [vmem:[%s1 + $0x180] sm:$0xf]
  %v140 = vld [vmem:[%s1 + $0x184] sm:$0xf]
  %v141 = vld [vmem:[%s1 + $0x188] sm:$0xf]
  %v142 = vld [vmem:[%s1 + $0x18c] sm:$0xf]
  %v143 = vld [vmem:[%s1 + $0x190] sm:$0xf]
  %v144 = vld [vmem:[%s1 + $0x194] sm:$0xf]
  %v145 = vld [vmem:[%s1 + $0x198] sm:$0xf]
  %v146 = vld [vmem:[%s1 + $0x19c] sm:$0xf]
  %v147 = vld [vmem:[%s1 + $0x1a0] sm:$0xf]
  %v148 = vld [vmem:[%s1 + $0x1a4] sm:$0xf]
  %v149 = vld [vmem:[%s1 + $0x1a8] sm:$0xf]
  %v150 = vld [vmem:[%s1 + $0x1ac] sm:$0xf]
  %v151 = vld [vmem:[%s1 + $0x1b0] sm:$0xf]
  %v152 = vld [vmem:[%s1 + $0x1b4] sm:$0xf]
  %v153 = vld [vmem:[%s1 + $0x1b8] sm:$0xf]
  %v154 = vld [vmem:[%s1 + $0x1bc] sm:$0xf]
  %v155 = vld [vmem:[%s1 + $0x1c0] sm:$0xf]
  %v156 = vld [vmem:[%s1 + $0x1c4] sm:$0xf]
  %v157 = vld [vmem:[%s1 + $0x1c8] sm:$0xf]
  %v158 = vld [vmem:[%s1 + $0x1cc] sm:$0xf]
  %v159 = vld [vmem:[%s1 + $0x1d0] sm:$0xf]
  %v160 = vld [vmem:[%s1 + $0x1d4] sm:$0xf]
  %v161 = vld [vmem:[%s1 + $0x1d8] sm:$0xf]
  %v162 = vld [vmem:[%s1 + $0x1dc] sm:$0xf]
  %v163 = vld [vmem:[%s1 + $0x1e0] sm:$0xf]
  %v164 = vld [vmem:[%s1 + $0x1e4] sm:$0xf]
  %v165 = vld [vmem:[%s1 + $0x1e8] sm:$0xf]
  %v166 = vld [vmem:[%s1 + $0x1ec] sm:$0xf]
  %v167 = vld [vmem:[%s1 + $0x1f0] sm:$0xf]
  %v168 = vld [vmem:[%s1 + $0x1f4] sm:$0xf]
  %v169 = vld [vmem:[%s1 + $0x1f8] sm:$0xf]
  %v170 = vld [vmem:[%s1 + $0x1fc] sm:$0xf]
  %v171 = vld [vmem:[%s1 + $0x200] sm:$0xf]
  %v172 = vld [vmem:[%s1 + $0x204] sm:$0xf]
  %v173 = vld [vmem:[%s1 + $0x208] sm:$0xf]
  %v174 = vld [vmem:[%s1 + $0x20c] sm:$0xf]
  %v175 = vld [vmem:[%s1 + $0x210] sm:$0xf]
  %v176 = vld [vmem:[%s1 + $0x214] sm:$0xf]
  %v177 = vld [vmem:[%s1 + $0x218] sm:$0xf]
  %v178 = vld [vmem:[%s1 + $0x21c] sm:$0xf]
  %v179 = vld [vmem:[%s1 + $0x220] sm:$0xf]
  %v180 = vld [vmem:[%s1 + $0x224] sm:$0xf]
  %v181 = vld [vmem:[%s1 + $0x228] sm:$0xf]
  %v182 = vld [vmem:[%s1 + $0x22c] sm:$0xf]
  %v183 = vld [vmem:[%s1 + $0x230] sm:$0xf]
  %v184 = vld [vmem:[%s1 + $0x234] sm:$0xf]
  %v185 = vld [vmem:[%s1 + $0x238] sm:$0xf]
  %v186 = vld [vmem:[%s1 + $0x23c] sm:$0xf]
  %v187 = vld [vmem:[%s1 + $0x240] sm:$0xf]
  %v188 = vld [vmem:[%s1 + $0x244] sm:$0xf]
  %v189 = vld [vmem:[%s1 + $0x248] sm:$0xf]
  %v190 = vld [vmem:[%s1 + $0x24c] sm:$0xf]
  %v191 = vld [vmem:[%s1 + $0x250] sm:$0xf]
  %v192 = vld [vmem:[%s1 + $0x254] sm:$0xf]
  %v193 = vld [vmem:[%s1 + $0x258] sm:$0xf]
  %v194 = vld [vmem:[%s1 + $0x25c] sm:$0xf]
  %v195 = vld [vmem:[%s1 + $0x260] sm:$0xf]
  %v196 = vld [vmem:[%s1 + $0x264] sm:$0xf]
  %v197 = vld [vmem:[%s1 + $0x268] sm:$0xf]
  %v198 = vld [vmem:[%s1 + $0x26c] sm:$0xf]
  %v199 = vld [vmem:[%s1 + $0x270] sm:$0xf]
  %v200 = vld [vmem:[%s1 + $0x274] sm:$0xf]
  %v201 = vld [vmem:[%s1 + $0x278] sm:$0xf]
  %v202 = vld [vmem:[%s1 + $0x27c] sm:$0xf]
  %v203 = vld [vmem:[%s1 + $0x280] sm:$0xf]
  %v204 = vld [vmem:[%s1 + $0x284] sm:$0xf]
  %v205 = vld [vmem:[%s1 + $0x288] sm:$0xf]
  %v206 = vld [vmem:[%s1 + $0x28c] sm:$0xf]
  %v207 = vld [vmem:[%s1 + $0x290] sm:$0xf]
  %v208 = vld [vmem:[%s1 + $0x294] sm:$0xf]
  %v209 = vld [vmem:[%s1 + $0x298] sm:$0xf]
  %v210 = vld [vmem:[%s1 + $0x29c] sm:$0xf]
  %v211 = vld [vmem:[%s1 + $0x2a0] sm:$0xf]
  %v212 = vld [vmem:[%s1 + $0x2a4] sm:$0xf]
  %v213 = vld [vmem:[%s1 + $0x2a8] sm:$0xf]
  %v214 = vld [vmem:[%s1 + $0x2ac] sm:$0xf]
  %v215 = vld [vmem:[%s1 + $0x2b0] sm:$0xf]
  %v216 = vld [vmem:[%s1 + $0x2b4] sm:$0xf]
  %v217 = vld [vmem:[%s1 + $0x2b8] sm:$0xf]
  %v218 = vld [vmem:[%s1 + $0x2bc] sm:$0xf]
  %v219 = vld [vmem:[%s1 + $0x2c0] sm:$0xf]
  %v220 = vld [vmem:[%s1 + $0x2c4] sm:$0xf]
  %v221 = vld [vmem:[%s1 + $0x2c8] sm:$0xf]
  %v222 = vld [vmem:[%s1 + $0x2cc] sm:$0xf]
  %v223 = vld [vmem:[%s1 + $0x2d0] sm:$0xf]
  %v224 = vld [vmem:[%s1 + $0x2d4] sm:$0xf]
  %v225 = vld [vmem:[%s1 + $0x2d8] sm:$0xf]
  %v226 = vld [vmem:[%s1 + $0x2dc] sm:$0xf]
  %v227 = vld [vmem:[%s1 + $0x2e0] sm:$0xf]
  %v228 = vld [vmem:[%s1 + $0x2e4] sm:$0xf]
  %v229 = vld [vmem:[%s1 + $0x2e8] sm:$0xf]
  %v230 = vld [vmem:[%s1 + $0x2ec] sm:$0xf]
  %v231 = vld [vmem:[%s1 + $0x2f0] sm:$0xf]
  %v232 = vld [vmem:[%s1 + $0x2f4] sm:$0xf]
  %v233 = vld [vmem:[%s1 + $0x2f8] sm:$0xf]
  %v234 = vld [vmem:[%s1 + $0x2fc] sm:$0xf]
  %v235 = vld [vmem:[%s1 + $0x300] sm:$0xf]
  %v236 = vld [vmem:[%s1 + $0x304] sm:$0xf]
  %v237 = vld [vmem:[%s1 + $0x308] sm:$0xf]
  %v238 = vld [vmem:[%s1 + $0x30c] sm:$0xf]
  %v239 = vld [vmem:[%s1 + $0x310] sm:$0xf]
  %v240 = vld [vmem:[%s1 + $0x314] sm:$0xf]
  %v241 = vld [vmem:[%s1 + $0x318] sm:$0xf]
  %v242 = vld [vmem:[%s1 + $0x31c] sm:$0xf]
  %v243 = vld [vmem:[%s1 + $0x320] sm:$0xf]
  %v244 = vld [vmem:[%s1 + $0x324] sm:$0xf]
  %v245 = vld [vmem:[%s1 + $0x328] sm:$0xf]
  %v246 = vld [vmem:[%s1 + $0x32c] sm:$0xf]
  %v247 = vld [vmem:[%s1 + $0x330] sm:$0xf]
  %v248 = vld [vmem:[%s1 + $0x334] sm:$0xf]
  %v249 = vld [vmem:[%s1 + $0x338] sm:$0xf]
  %v250 = vld [vmem:[%s1 + $0x33c] sm:$0xf]
  %v251 = vld [vmem:[%s1 + $0x340] sm:$0xf]
  %v252 = vld [vmem:[%s1 + $0x344] sm:$0xf]
  %v253 = vld [vmem:[%s1 + $0x348] sm:$0xf]
  %v254 = vld [vmem:[%s1 + $0x34c] sm:$0xf]
  %v255 = vld [vmem:[%s1 + $0x350] sm:$0xf]
  %v256 = vld [vmem:[%s1 + $0x354] sm:$0xf]
  %v257 = vld [vmem:[%s1 + $0x358] sm:$0xf]
  %v258 = vld [vmem:[%s1 + $0x35c] sm:$0xf]
  %v259 = vld [vmem:[%s2] sm:$0xff]
  %v260 = vld [vmem:[%s2 + $0x8] sm:$0xff]
  %v261 = vld [vmem:[%s2 + $0x10] sm:$0xff]
  %v262 = vld [vmem:[%s2 + $0x18] sm:$0xff]
  %264 = vset.pattern.permute.xlu0 0
  %265 = vperm.xlu0 %264, %v259
  %v266 = vpop.permute.xlu0 %265
  %269 = vset.pattern.permute.xlu0 0
  %270 = vperm.xlu0 %269, %v260
  %v271 = vpop.permute.xlu0 %270
  %274 = vset.pattern.permute.xlu0 0
  %275 = vperm.xlu0 %274, %v261
  %v276 = vpop.permute.xlu0 %275
  %279 = vset.pattern.permute.xlu0 0
  %280 = vperm.xlu0 %279, %v262
  %v281 = vpop.permute.xlu0 %280
  %v311 = vunpack.c.l.b16 %v15
  %v312 = vunpack.c.h.b16 %v15
  %v313 = vunpack.c.l.b16 %v16
  %v314 = vunpack.c.h.b16 %v16
  %v315 = vunpack.c.l.b16 %v17
  %v316 = vunpack.c.h.b16 %v17
  %v317 = vunpack.c.l.b16 %v18
  %v318 = vunpack.c.h.b16 %v18
  %v319 = vunpack.c.l.b16 %v19
  %v320 = vunpack.c.h.b16 %v19
  %v321 = vunpack.c.l.b16 %v20
  %v322 = vunpack.c.h.b16 %v20
  %v323 = vunpack.c.l.b16 %v21
  %v324 = vunpack.c.h.b16 %v21
  %v325 = vunpack.c.l.b16 %v22
  %v326 = vunpack.c.h.b16 %v22
  %v327 = vunpack.c.l.b16 %v23
  %v328 = vunpack.c.h.b16 %v23
  %v329 = vunpack.c.l.b16 %v24
  %v330 = vunpack.c.h.b16 %v24
  %v331 = vunpack.c.l.b16 %v25
  %v332 = vunpack.c.h.b16 %v25
  %v333 = vunpack.c.l.b16 %v26
  %v334 = vunpack.c.h.b16 %v26
  %v335 = vunpack.c.l.b16 %v27
  %v336 = vunpack.c.h.b16 %v27
  %v337 = vunpack.c.l.b16 %v28
  %v338 = vunpack.c.h.b16 %v28
  %v339 = vunpack.c.l.b16 %v29
  %v340 = vunpack.c.h.b16 %v29
  %v341 = vunpack.c.l.b16 %v30
  %v342 = vunpack.c.h.b16 %v30
  %v343 = vunpack.c.l.b16 %v31
  %v344 = vunpack.c.h.b16 %v31
  %v345 = vunpack.c.l.b16 %v32
  %v346 = vunpack.c.h.b16 %v32
  %v347 = vunpack.c.l.b16 %v33
  %v348 = vunpack.c.h.b16 %v33
  %v349 = vunpack.c.l.b16 %v34
  %v350 = vunpack.c.h.b16 %v34
  %v351 = vunpack.c.l.b16 %v35
  %v352 = vunpack.c.h.b16 %v35
  %v353 = vunpack.c.l.b16 %v36
  %v354 = vunpack.c.h.b16 %v36
  %v355 = vunpack.c.l.b16 %v37
  %v356 = vunpack.c.h.b16 %v37
  %v357 = vunpack.c.l.b16 %v38
  %v358 = vunpack.c.h.b16 %v38
  %v359 = vunpack.c.l.b16 %v39
  %v360 = vunpack.c.h.b16 %v39
  %v361 = vunpack.c.l.b16 %v40
  %v362 = vunpack.c.h.b16 %v40
  %v363 = vunpack.c.l.b16 %v41
  %v364 = vunpack.c.h.b16 %v41
  %v365 = vunpack.c.l.b16 %v42
  %v366 = vunpack.c.h.b16 %v42
  %v367 = vpack.c.b16 %v325, %v311
  %v368 = vpack.c.b16 %v326, %v312
  %v369 = vpack.c.b16 %v327, %v313
  %v370 = vpack.c.b16 %v328, %v314
  %v371 = vpack.c.b16 %v329, %v315
  %v372 = vpack.c.b16 %v330, %v316
  %v373 = vpack.c.b16 %v331, %v317
  %v374 = vpack.c.b16 %v332, %v318
  %v375 = vpack.c.b16 %v333, %v319
  %v376 = vpack.c.b16 %v334, %v320
  %v377 = vpack.c.b16 %v335, %v321
  %v378 = vpack.c.b16 %v336, %v322
  %v379 = vpack.c.b16 %v337, %v323
  %v380 = vpack.c.b16 %v338, %v324
  %v381 = vpack.c.b16 %v353, %v339
  %v382 = vpack.c.b16 %v354, %v340
  %v383 = vpack.c.b16 %v355, %v341
  %v384 = vpack.c.b16 %v356, %v342
  %v385 = vpack.c.b16 %v357, %v343
  %v386 = vpack.c.b16 %v358, %v344
  %v387 = vpack.c.b16 %v359, %v345
  %v388 = vpack.c.b16 %v360, %v346
  %v389 = vpack.c.b16 %v361, %v347
  %v390 = vpack.c.b16 %v362, %v348
  %v391 = vpack.c.b16 %v363, %v349
  %v392 = vpack.c.b16 %v364, %v350
  %v393 = vpack.c.b16 %v365, %v351
  %v394 = vpack.c.b16 %v366, %v352
  %v637 = vunpack.c.l.b16 %v43
  %v638 = vunpack.c.l.b16 %v44
  %v639 = vunpack.c.l.b16 %v45
  %v640 = vunpack.c.l.b16 %v46
  %v641 = vunpack.c.l.b16 %v47
  %v642 = vunpack.c.l.b16 %v48
  %v643 = vunpack.c.l.b16 %v49
  %v644 = vunpack.c.l.b16 %v50
  %v645 = vunpack.c.l.b16 %v51
  %v646 = vunpack.c.l.b16 %v52
  %v647 = vunpack.c.l.b16 %v53
  %v648 = vunpack.c.l.b16 %v54
  %v649 = vunpack.c.l.b16 %v55
  %v650 = vunpack.c.l.b16 %v56
  %v651 = vunpack.c.l.b16 %v57
  %v652 = vunpack.c.l.b16 %v58
  %v653 = vunpack.c.l.b16 %v59
  %v654 = vunpack.c.l.b16 %v60
  %v655 = vunpack.c.l.b16 %v61
  %v656 = vunpack.c.l.b16 %v62
  %v657 = vunpack.c.l.b16 %v63
  %v658 = vunpack.c.l.b16 %v64
  %v659 = vunpack.c.l.b16 %v65
  %v660 = vunpack.c.l.b16 %v66
  %v661 = vunpack.c.l.b16 %v67
  %v662 = vunpack.c.l.b16 %v68
  %v663 = vunpack.c.l.b16 %v69
  %v664 = vunpack.c.l.b16 %v70
  %v665 = vunpack.c.l.b16 %v71
  %v666 = vunpack.c.l.b16 %v72
  %v667 = vunpack.c.l.b16 %v73
  %v668 = vunpack.c.l.b16 %v74
  %v669 = vunpack.c.l.b16 %v75
  %v670 = vunpack.c.l.b16 %v76
  %v671 = vunpack.c.l.b16 %v77
  %v672 = vunpack.c.l.b16 %v78
  %v673 = vunpack.c.l.b16 %v79
  %v674 = vunpack.c.l.b16 %v80
  %v675 = vunpack.c.l.b16 %v81
  %v676 = vunpack.c.l.b16 %v82
  %v677 = vunpack.c.l.b16 %v83
  %v678 = vunpack.c.l.b16 %v84
  %v679 = vunpack.c.l.b16 %v85
  %v680 = vunpack.c.l.b16 %v86
  %v681 = vunpack.c.l.b16 %v87
  %v682 = vunpack.c.l.b16 %v88
  %v683 = vunpack.c.l.b16 %v89
  %v684 = vunpack.c.l.b16 %v90
  %v685 = vunpack.c.l.b16 %v91
  %v686 = vunpack.c.l.b16 %v92
  %v687 = vunpack.c.l.b16 %v93
  %v688 = vunpack.c.l.b16 %v94
  %v689 = vunpack.c.l.b16 %v95
  %v690 = vunpack.c.l.b16 %v96
  %v691 = vunpack.c.l.b16 %v97
  %v692 = vunpack.c.l.b16 %v98
  %v693 = vunpack.c.l.b16 %v99
  %v694 = vunpack.c.l.b16 %v100
  %v695 = vunpack.c.l.b16 %v101
  %v696 = vunpack.c.l.b16 %v102
  %v697 = vunpack.c.l.b16 %v103
  %v698 = vunpack.c.l.b16 %v104
  %v699 = vunpack.c.l.b16 %v105
  %v700 = vunpack.c.l.b16 %v106
  %v701 = vunpack.c.l.b16 %v107
  %v702 = vunpack.c.l.b16 %v108
  %v703 = vunpack.c.l.b16 %v109
  %v704 = vunpack.c.l.b16 %v110
  %v705 = vunpack.c.l.b16 %v111
  %v706 = vunpack.c.l.b16 %v112
  %v707 = vunpack.c.l.b16 %v113
  %v708 = vunpack.c.l.b16 %v114
  %v709 = vunpack.c.l.b16 %v115
  %v710 = vunpack.c.l.b16 %v116
  %v711 = vunpack.c.l.b16 %v117
  %v712 = vunpack.c.l.b16 %v118
  %v713 = vunpack.c.l.b16 %v119
  %v714 = vunpack.c.l.b16 %v120
  %v715 = vunpack.c.l.b16 %v121
  %v716 = vunpack.c.l.b16 %v122
  %v717 = vunpack.c.l.b16 %v123
  %v718 = vunpack.c.l.b16 %v124
  %v719 = vunpack.c.l.b16 %v125
  %v720 = vunpack.c.l.b16 %v126
  %v721 = vunpack.c.l.b16 %v127
  %v722 = vunpack.c.l.b16 %v128
  %v723 = vunpack.c.l.b16 %v129
  %v724 = vunpack.c.l.b16 %v130
  %v725 = vunpack.c.l.b16 %v131
  %v726 = vunpack.c.l.b16 %v132
  %v727 = vunpack.c.l.b16 %v133
  %v728 = vunpack.c.l.b16 %v134
  %v729 = vunpack.c.l.b16 %v135
  %v730 = vunpack.c.l.b16 %v136
  %v731 = vunpack.c.l.b16 %v137
  %v732 = vunpack.c.l.b16 %v138
  %v733 = vunpack.c.l.b16 %v139
  %v734 = vunpack.c.l.b16 %v140
  %v735 = vunpack.c.l.b16 %v141
  %v736 = vunpack.c.l.b16 %v142
  %v737 = vunpack.c.l.b16 %v143
  %v738 = vunpack.c.l.b16 %v144
  %v739 = vunpack.c.l.b16 %v145
  %v740 = vunpack.c.l.b16 %v146
  %v741 = vunpack.c.l.b16 %v147
  %v742 = vunpack.c.l.b16 %v148
  %v743 = vunpack.c.l.b16 %v149
  %v744 = vunpack.c.l.b16 %v150
  %v745 = vunpack.c.l.b16 %v151
  %v746 = vunpack.c.l.b16 %v152
  %v747 = vunpack.c.l.b16 %v153
  %v748 = vunpack.c.l.b16 %v154
  %v749 = vunpack.c.l.b16 %v155
  %v750 = vunpack.c.l.b16 %v156
  %v751 = vunpack.c.l.b16 %v157
  %v752 = vunpack.c.l.b16 %v158
  %v753 = vunpack.c.l.b16 %v159
  %v754 = vunpack.c.l.b16 %v160
  %v755 = vunpack.c.l.b16 %v161
  %v756 = vunpack.c.l.b16 %v162
  %v757 = vunpack.c.l.b16 %v163
  %v758 = vunpack.c.l.b16 %v164
  %v759 = vunpack.c.l.b16 %v165
  %v760 = vunpack.c.l.b16 %v166
  %v761 = vunpack.c.l.b16 %v167
  %v762 = vunpack.c.l.b16 %v168
  %v763 = vunpack.c.l.b16 %v169
  %v764 = vunpack.c.l.b16 %v170
  %v765 = vunpack.c.l.b16 %v171
  %v766 = vunpack.c.l.b16 %v172
  %v767 = vunpack.c.l.b16 %v173
  %v768 = vunpack.c.l.b16 %v174
  %v769 = vunpack.c.l.b16 %v175
  %v770 = vunpack.c.l.b16 %v176
  %v771 = vunpack.c.l.b16 %v177
  %v772 = vunpack.c.l.b16 %v178
  %v773 = vunpack.c.l.b16 %v179
  %v774 = vunpack.c.l.b16 %v180
  %v775 = vunpack.c.l.b16 %v181
  %v776 = vunpack.c.l.b16 %v182
  %v777 = vunpack.c.l.b16 %v183
  %v778 = vunpack.c.l.b16 %v184
  %v779 = vunpack.c.l.b16 %v185
  %v780 = vunpack.c.l.b16 %v186
  %v781 = vunpack.c.l.b16 %v187
  %v782 = vunpack.c.l.b16 %v188
  %v783 = vunpack.c.l.b16 %v189
  %v784 = vunpack.c.l.b16 %v190
  %v785 = vunpack.c.l.b16 %v191
  %v786 = vunpack.c.l.b16 %v192
  %v787 = vunpack.c.l.b16 %v193
  %v788 = vunpack.c.l.b16 %v194
  %v789 = vunpack.c.l.b16 %v195
  %v790 = vunpack.c.l.b16 %v196
  %v791 = vunpack.c.l.b16 %v197
  %v792 = vunpack.c.l.b16 %v198
  %v793 = vunpack.c.l.b16 %v199
  %v794 = vunpack.c.l.b16 %v200
  %v795 = vunpack.c.l.b16 %v201
  %v796 = vunpack.c.l.b16 %v202
  %v797 = vunpack.c.l.b16 %v203
  %v798 = vunpack.c.l.b16 %v204
  %v799 = vunpack.c.l.b16 %v205
  %v800 = vunpack.c.l.b16 %v206
  %v801 = vunpack.c.l.b16 %v207
  %v802 = vunpack.c.l.b16 %v208
  %v803 = vunpack.c.l.b16 %v209
  %v804 = vunpack.c.l.b16 %v210
  %v805 = vunpack.c.l.b16 %v211
  %v806 = vunpack.c.l.b16 %v212
  %v807 = vunpack.c.l.b16 %v213
  %v808 = vunpack.c.l.b16 %v214
  %v809 = vunpack.c.l.b16 %v215
  %v810 = vunpack.c.l.b16 %v216
  %v811 = vunpack.c.l.b16 %v217
  %v812 = vunpack.c.l.b16 %v218
  %v813 = vunpack.c.l.b16 %v219
  %v814 = vunpack.c.l.b16 %v220
  %v815 = vunpack.c.l.b16 %v221
  %v816 = vunpack.c.l.b16 %v222
  %v817 = vunpack.c.l.b16 %v223
  %v818 = vunpack.c.l.b16 %v224
  %v819 = vunpack.c.l.b16 %v225
  %v820 = vunpack.c.l.b16 %v226
  %v821 = vunpack.c.l.b16 %v227
  %v822 = vunpack.c.l.b16 %v228
  %v823 = vunpack.c.l.b16 %v229
  %v824 = vunpack.c.l.b16 %v230
  %v825 = vunpack.c.l.b16 %v231
  %v826 = vunpack.c.l.b16 %v232
  %v827 = vunpack.c.l.b16 %v233
  %v828 = vunpack.c.l.b16 %v234
  %v829 = vunpack.c.l.b16 %v235
  %v830 = vunpack.c.l.b16 %v236
  %v831 = vunpack.c.l.b16 %v237
  %v832 = vunpack.c.l.b16 %v238
  %v833 = vunpack.c.l.b16 %v239
  %v834 = vunpack.c.l.b16 %v240
  %v835 = vunpack.c.l.b16 %v241
  %v836 = vunpack.c.l.b16 %v242
  %v837 = vunpack.c.l.b16 %v243
  %v838 = vunpack.c.l.b16 %v244
  %v839 = vunpack.c.l.b16 %v245
  %v840 = vunpack.c.l.b16 %v246
  %v841 = vunpack.c.l.b16 %v247
  %v842 = vunpack.c.l.b16 %v248
  %v843 = vunpack.c.l.b16 %v249
  %v844 = vunpack.c.l.b16 %v250
  %v845 = vunpack.c.l.b16 %v251
  %v846 = vunpack.c.l.b16 %v252
  %v847 = vunpack.c.l.b16 %v253
  %v848 = vunpack.c.l.b16 %v254
  %v849 = vunpack.c.l.b16 %v255
  %v850 = vunpack.c.l.b16 %v256
  %v851 = vunpack.c.l.b16 %v257
  %v852 = vunpack.c.l.b16 %v258
  %v853 = vpack.c.b16 %v638, %v637
  %v854 = vpack.c.b16 %v640, %v639
  %v855 = vpack.c.b16 %v642, %v641
  %v856 = vpack.c.b16 %v644, %v643
  %v857 = vpack.c.b16 %v646, %v645
  %v858 = vpack.c.b16 %v648, %v647
  %v859 = vpack.c.b16 %v650, %v649
  %v860 = vpack.c.b16 %v652, %v651
  %v861 = vpack.c.b16 %v654, %v653
  %v862 = vpack.c.b16 %v656, %v655
  %v863 = vpack.c.b16 %v658, %v657
  %v864 = vpack.c.b16 %v660, %v659
  %v865 = vpack.c.b16 %v662, %v661
  %v866 = vpack.c.b16 %v664, %v663
  %v867 = vpack.c.b16 %v666, %v665
  %v868 = vpack.c.b16 %v668, %v667
  %v869 = vpack.c.b16 %v670, %v669
  %v870 = vpack.c.b16 %v672, %v671
  %v871 = vpack.c.b16 %v674, %v673
  %v872 = vpack.c.b16 %v676, %v675
  %v873 = vpack.c.b16 %v678, %v677
  %v874 = vpack.c.b16 %v680, %v679
  %v875 = vpack.c.b16 %v682, %v681
  %v876 = vpack.c.b16 %v684, %v683
  %v877 = vpack.c.b16 %v686, %v685
  %v878 = vpack.c.b16 %v688, %v687
  %v879 = vpack.c.b16 %v690, %v689
  %v880 = vpack.c.b16 %v692, %v691
  %v881 = vpack.c.b16 %v694, %v693
  %v882 = vpack.c.b16 %v696, %v695
  %v883 = vpack.c.b16 %v698, %v697
  %v884 = vpack.c.b16 %v700, %v699
  %v885 = vpack.c.b16 %v702, %v701
  %v886 = vpack.c.b16 %v704, %v703
  %v887 = vpack.c.b16 %v706, %v705
  %v888 = vpack.c.b16 %v708, %v707
  %v889 = vpack.c.b16 %v710, %v709
  %v890 = vpack.c.b16 %v712, %v711
  %v891 = vpack.c.b16 %v714, %v713
  %v892 = vpack.c.b16 %v716, %v715
  %v893 = vpack.c.b16 %v718, %v717
  %v894 = vpack.c.b16 %v720, %v719
  %v895 = vpack.c.b16 %v722, %v721
  %v896 = vpack.c.b16 %v724, %v723
  %v897 = vpack.c.b16 %v726, %v725
  %v898 = vpack.c.b16 %v728, %v727
  %v899 = vpack.c.b16 %v730, %v729
  %v900 = vpack.c.b16 %v732, %v731
  %v901 = vpack.c.b16 %v734, %v733
  %v902 = vpack.c.b16 %v736, %v735
  %v903 = vpack.c.b16 %v738, %v737
  %v904 = vpack.c.b16 %v740, %v739
  %v905 = vpack.c.b16 %v742, %v741
  %v906 = vpack.c.b16 %v744, %v743
  %v907 = vpack.c.b16 %v746, %v745
  %v908 = vpack.c.b16 %v748, %v747
  %v909 = vpack.c.b16 %v750, %v749
  %v910 = vpack.c.b16 %v752, %v751
  %v911 = vpack.c.b16 %v754, %v753
  %v912 = vpack.c.b16 %v756, %v755
  %v913 = vpack.c.b16 %v758, %v757
  %v914 = vpack.c.b16 %v760, %v759
  %v915 = vpack.c.b16 %v762, %v761
  %v916 = vpack.c.b16 %v764, %v763
  %v917 = vpack.c.b16 %v766, %v765
  %v918 = vpack.c.b16 %v768, %v767
  %v919 = vpack.c.b16 %v770, %v769
  %v920 = vpack.c.b16 %v772, %v771
  %v921 = vpack.c.b16 %v774, %v773
  %v922 = vpack.c.b16 %v776, %v775
  %v923 = vpack.c.b16 %v778, %v777
  %v924 = vpack.c.b16 %v780, %v779
  %v925 = vpack.c.b16 %v782, %v781
  %v926 = vpack.c.b16 %v784, %v783
  %v927 = vpack.c.b16 %v786, %v785
  %v928 = vpack.c.b16 %v788, %v787
  %v929 = vpack.c.b16 %v790, %v789
  %v930 = vpack.c.b16 %v792, %v791
  %v931 = vpack.c.b16 %v794, %v793
  %v932 = vpack.c.b16 %v796, %v795
  %v933 = vpack.c.b16 %v798, %v797
  %v934 = vpack.c.b16 %v800, %v799
  %v935 = vpack.c.b16 %v802, %v801
  %v936 = vpack.c.b16 %v804, %v803
  %v937 = vpack.c.b16 %v806, %v805
  %v938 = vpack.c.b16 %v808, %v807
  %v939 = vpack.c.b16 %v810, %v809
  %v940 = vpack.c.b16 %v812, %v811
  %v941 = vpack.c.b16 %v814, %v813
  %v942 = vpack.c.b16 %v816, %v815
  %v943 = vpack.c.b16 %v818, %v817
  %v944 = vpack.c.b16 %v820, %v819
  %v945 = vpack.c.b16 %v822, %v821
  %v946 = vpack.c.b16 %v824, %v823
  %v947 = vpack.c.b16 %v826, %v825
  %v948 = vpack.c.b16 %v828, %v827
  %v949 = vpack.c.b16 %v830, %v829
  %v950 = vpack.c.b16 %v832, %v831
  %v951 = vpack.c.b16 %v834, %v833
  %v952 = vpack.c.b16 %v836, %v835
  %v953 = vpack.c.b16 %v838, %v837
  %v954 = vpack.c.b16 %v840, %v839
  %v955 = vpack.c.b16 %v842, %v841
  %v956 = vpack.c.b16 %v844, %v843
  %v957 = vpack.c.b16 %v846, %v845
  %v958 = vpack.c.b16 %v848, %v847
  %v959 = vpack.c.b16 %v850, %v849
  %v960 = vpack.c.b16 %v852, %v851
  %vm1069 = vcmask 523264
  %v1071 = vsel %vm1069, %v380, 0
  %v1074 = vsel %vm1069, %v394, 0
  %1076 = vmatprep.subr.bf16.mxu0 0
  %1077 = vmatpush1.bf16.msra.mxu0 %v860
  %1078 = vmatprep.subr.bf16.mxu0 0
  %1079 = vmatpush1.bf16.msra.mxu0 %v859
  %1080 = vmatprep.subr.bf16.mxu0 0
  %1081 = vmatpush1.bf16.msra.mxu0 %v858
  %1082 = vmatprep.subr.bf16.mxu0 0
  %1083 = vmatpush1.bf16.msra.mxu0 %v857
  %1084 = vmatprep.subr.bf16.mxu0 0
  %1085 = vmatpush1.bf16.msra.mxu0 %v856
  %1086 = vmatprep.subr.bf16.mxu0 0
  %1087 = vmatpush1.bf16.msra.mxu0 %v855
  %1088 = vmatprep.subr.bf16.mxu0 0
  %1089 = vmatpush1.bf16.msra.mxu0 %v854
  %1090 = vmatprep.subr.bf16.mxu0 0
  %1091 = vmatpush1.bf16.msra.mxu0 %v853
  %1092 = vmatprep.subr.bf16.mxu0 0
  %1093 = vmatpush2.bf16.msra.mxu0 %v868
  %1094 = vmatprep.subr.bf16.mxu0 0
  %1095 = vmatpush2.bf16.msra.mxu0 %v867
  %1096 = vmatprep.subr.bf16.mxu0 0
  %1097 = vmatpush2.bf16.msra.mxu0 %v866
  %1098 = vmatprep.subr.bf16.mxu0 0
  %1099 = vmatpush2.bf16.msra.mxu0 %v865
  %1100 = vmatprep.subr.bf16.mxu0 0
  %1101 = vmatpush2.bf16.msra.mxu0 %v864
  %1102 = vmatprep.subr.bf16.mxu0 0
  %1103 = vmatpush2.bf16.msra.mxu0 %v863
  %1104 = vmatprep.subr.bf16.mxu0 0
  %1105 = vmatpush2.bf16.msra.mxu0 %v862
  %1106 = vmatprep.subr.bf16.mxu0 0
  %1107 = vmatpush2.bf16.msra.mxu0 %v861
  %1108 = vmatprep.mubr.bf16.mxu0 %v368
  %1109 = vmatmul.mubr.bf16.gmra.mxu0 %v367
  %v1110 = vpop.f32.mrf.mxu0
  %v1111 = vadd.f32 %v266, %v1110
  %v1112 = vpop.f32.mrf.mxu0
  %v1113 = vpop.f32.mrf.mxu0
  %v1114 = vadd.f32 %v271, %v1113
  %v1115 = vpop.f32.mrf.mxu0
  %1116 = vmatprep.mubr.bf16.mxu0 %v382
  %1117 = vmatmul.mubr.bf16.gmra.mxu0 %v381
  %v1118 = vpop.f32.mrf.mxu0
  %v1119 = vadd.f32 %v276, %v1118
  %v1120 = vpop.f32.mrf.mxu0
  %v1121 = vpop.f32.mrf.mxu0
  %v1122 = vadd.f32 %v281, %v1121
  %v1123 = vpop.f32.mrf.mxu0
  %1124 = vdwg.mxu0
  %1125 = vmatprep.subr.bf16.mxu0 0
  %1126 = vmatpush1.bf16.msra.mxu0 %v876
  %1127 = vmatprep.subr.bf16.mxu0 0
  %1128 = vmatpush1.bf16.msra.mxu0 %v875
  %1129 = vmatprep.subr.bf16.mxu0 0
  %1130 = vmatpush1.bf16.msra.mxu0 %v874
  %1131 = vmatprep.subr.bf16.mxu0 0
  %1132 = vmatpush1.bf16.msra.mxu0 %v873
  %1133 = vmatprep.subr.bf16.mxu0 0
  %1134 = vmatpush1.bf16.msra.mxu0 %v872
  %1135 = vmatprep.subr.bf16.mxu0 0
  %1136 = vmatpush1.bf16.msra.mxu0 %v871
  %1137 = vmatprep.subr.bf16.mxu0 0
  %1138 = vmatpush1.bf16.msra.mxu0 %v870
  %1139 = vmatprep.subr.bf16.mxu0 0
  %1140 = vmatpush1.bf16.msra.mxu0 %v869
  %1141 = vmatprep.subr.bf16.mxu0 0
  %1142 = vmatpush2.bf16.msra.mxu0 %v884
  %1143 = vmatprep.subr.bf16.mxu0 0
  %1144 = vmatpush2.bf16.msra.mxu0 %v883
  %1145 = vmatprep.subr.bf16.mxu0 0
  %1146 = vmatpush2.bf16.msra.mxu0 %v882
  %1147 = vmatprep.subr.bf16.mxu0 0
  %1148 = vmatpush2.bf16.msra.mxu0 %v881
  %1149 = vmatprep.subr.bf16.mxu0 0
  %1150 = vmatpush2.bf16.msra.mxu0 %v880
  %1151 = vmatprep.subr.bf16.mxu0 0
  %1152 = vmatpush2.bf16.msra.mxu0 %v879
  %1153 = vmatprep.subr.bf16.mxu0 0
  %1154 = vmatpush2.bf16.msra.mxu0 %v878
  %1155 = vmatprep.subr.bf16.mxu0 0
  %1156 = vmatpush2.bf16.msra.mxu0 %v877
  %1157 = vmatprep.mubr.bf16.mxu0 %v370
  %1158 = vmatmul.mubr.bf16.gmra.mxu0 %v369
  %v1159 = vpop.f32.mrf.mxu0
  %v1160 = vadd.f32 %v1111, %v1159
  %v1161 = vpop.f32.mrf.mxu0
  %v1162 = vpop.f32.mrf.mxu0
  %v1163 = vadd.f32 %v1114, %v1162
  %v1164 = vpop.f32.mrf.mxu0
  %1165 = vmatprep.mubr.bf16.mxu0 %v384
  %1166 = vmatmul.mubr.bf16.gmra.mxu0 %v383
  %v1167 = vpop.f32.mrf.mxu0
  %v1168 = vadd.f32 %v1119, %v1167
  %v1169 = vpop.f32.mrf.mxu0
  %v1170 = vpop.f32.mrf.mxu0
  %v1171 = vadd.f32 %v1122, %v1170
  %v1172 = vpop.f32.mrf.mxu0
  %1173 = vdwg.mxu0
  %1174 = vmatprep.subr.bf16.mxu0 0
  %1175 = vmatpush1.bf16.msra.mxu0 %v892
  %1176 = vmatprep.subr.bf16.mxu0 0
  %1177 = vmatpush1.bf16.msra.mxu0 %v891
  %1178 = vmatprep.subr.bf16.mxu0 0
  %1179 = vmatpush1.bf16.msra.mxu0 %v890
  %1180 = vmatprep.subr.bf16.mxu0 0
  %1181 = vmatpush1.bf16.msra.mxu0 %v889
  %1182 = vmatprep.subr.bf16.mxu0 0
  %1183 = vmatpush1.bf16.msra.mxu0 %v888
  %1184 = vmatprep.subr.bf16.mxu0 0
  %1185 = vmatpush1.bf16.msra.mxu0 %v887
  %1186 = vmatprep.subr.bf16.mxu0 0
  %1187 = vmatpush1.bf16.msra.mxu0 %v886
  %1188 = vmatprep.subr.bf16.mxu0 0
  %1189 = vmatpush1.bf16.msra.mxu0 %v885
  %1190 = vmatprep.subr.bf16.mxu0 0
  %1191 = vmatpush2.bf16.msra.mxu0 %v900
  %1192 = vmatprep.subr.bf16.mxu0 0
  %1193 = vmatpush2.bf16.msra.mxu0 %v899
  %1194 = vmatprep.subr.bf16.mxu0 0
  %1195 = vmatpush2.bf16.msra.mxu0 %v898
  %1196 = vmatprep.subr.bf16.mxu0 0
  %1197 = vmatpush2.bf16.msra.mxu0 %v897
  %1198 = vmatprep.subr.bf16.mxu0 0
  %1199 = vmatpush2.bf16.msra.mxu0 %v896
  %1200 = vmatprep.subr.bf16.mxu0 0
  %1201 = vmatpush2.bf16.msra.mxu0 %v895
  %1202 = vmatprep.subr.bf16.mxu0 0
  %1203 = vmatpush2.bf16.msra.mxu0 %v894
  %1204 = vmatprep.subr.bf16.mxu0 0
  %1205 = vmatpush2.bf16.msra.mxu0 %v893
  %1206 = vmatprep.mubr.bf16.mxu0 %v372
  %1207 = vmatmul.mubr.bf16.gmra.mxu0 %v371
  %v1208 = vpop.f32.mrf.mxu0
  %v1209 = vadd.f32 %v1160, %v1208
  %v1210 = vpop.f32.mrf.mxu0
  %v1211 = vpop.f32.mrf.mxu0
  %v1212 = vadd.f32 %v1163, %v1211
  %v1213 = vpop.f32.mrf.mxu0
  %1214 = vmatprep.mubr.bf16.mxu0 %v386
  %1215 = vmatmul.mubr.bf16.gmra.mxu0 %v385
  %v1216 = vpop.f32.mrf.mxu0
  %v1217 = vadd.f32 %v1168, %v1216
  %v1218 = vpop.f32.mrf.mxu0
  %v1219 = vpop.f32.mrf.mxu0
  %v1220 = vadd.f32 %v1171, %v1219
  %v1221 = vpop.f32.mrf.mxu0
  %1222 = vdwg.mxu0
  %1223 = vmatprep.subr.bf16.mxu0 0
  %1224 = vmatpush1.bf16.msra.mxu0 %v908
  %1225 = vmatprep.subr.bf16.mxu0 0
  %1226 = vmatpush1.bf16.msra.mxu0 %v907
  %1227 = vmatprep.subr.bf16.mxu0 0
  %1228 = vmatpush1.bf16.msra.mxu0 %v906
  %1229 = vmatprep.subr.bf16.mxu0 0
  %1230 = vmatpush1.bf16.msra.mxu0 %v905
  %1231 = vmatprep.subr.bf16.mxu0 0
  %1232 = vmatpush1.bf16.msra.mxu0 %v904
  %1233 = vmatprep.subr.bf16.mxu0 0
  %1234 = vmatpush1.bf16.msra.mxu0 %v903
  %1235 = vmatprep.subr.bf16.mxu0 0
  %1236 = vmatpush1.bf16.msra.mxu0 %v902
  %1237 = vmatprep.subr.bf16.mxu0 0
  %1238 = vmatpush1.bf16.msra.mxu0 %v901
  %1239 = vmatprep.subr.bf16.mxu0 0
  %1240 = vmatpush2.bf16.msra.mxu0 %v916
  %1241 = vmatprep.subr.bf16.mxu0 0
  %1242 = vmatpush2.bf16.msra.mxu0 %v915
  %1243 = vmatprep.subr.bf16.mxu0 0
  %1244 = vmatpush2.bf16.msra.mxu0 %v914
  %1245 = vmatprep.subr.bf16.mxu0 0
  %1246 = vmatpush2.bf16.msra.mxu0 %v913
  %1247 = vmatprep.subr.bf16.mxu0 0
  %1248 = vmatpush2.bf16.msra.mxu0 %v912
  %1249 = vmatprep.subr.bf16.mxu0 0
  %1250 = vmatpush2.bf16.msra.mxu0 %v911
  %1251 = vmatprep.subr.bf16.mxu0 0
  %1252 = vmatpush2.bf16.msra.mxu0 %v910
  %1253 = vmatprep.subr.bf16.mxu0 0
  %1254 = vmatpush2.bf16.msra.mxu0 %v909
  %1255 = vmatprep.mubr.bf16.mxu0 %v374
  %1256 = vmatmul.mubr.bf16.gmra.mxu0 %v373
  %v1257 = vpop.f32.mrf.mxu0
  %v1258 = vadd.f32 %v1209, %v1257
  %v1259 = vpop.f32.mrf.mxu0
  %v1260 = vpop.f32.mrf.mxu0
  %v1261 = vadd.f32 %v1212, %v1260
  %v1262 = vpop.f32.mrf.mxu0
  %1263 = vmatprep.mubr.bf16.mxu0 %v388
  %1264 = vmatmul.mubr.bf16.gmra.mxu0 %v387
  %v1265 = vpop.f32.mrf.mxu0
  %v1266 = vadd.f32 %v1217, %v1265
  %v1267 = vpop.f32.mrf.mxu0
  %v1268 = vpop.f32.mrf.mxu0
  %v1269 = vadd.f32 %v1220, %v1268
  %v1270 = vpop.f32.mrf.mxu0
  %1271 = vdwg.mxu0
  %1272 = vmatprep.subr.bf16.mxu0 0
  %1273 = vmatpush1.bf16.msra.mxu0 %v924
  %1274 = vmatprep.subr.bf16.mxu0 0
  %1275 = vmatpush1.bf16.msra.mxu0 %v923
  %1276 = vmatprep.subr.bf16.mxu0 0
  %1277 = vmatpush1.bf16.msra.mxu0 %v922
  %1278 = vmatprep.subr.bf16.mxu0 0
  %1279 = vmatpush1.bf16.msra.mxu0 %v921
  %1280 = vmatprep.subr.bf16.mxu0 0
  %1281 = vmatpush1.bf16.msra.mxu0 %v920
  %1282 = vmatprep.subr.bf16.mxu0 0
  %1283 = vmatpush1.bf16.msra.mxu0 %v919
  %1284 = vmatprep.subr.bf16.mxu0 0
  %1285 = vmatpush1.bf16.msra.mxu0 %v918
  %1286 = vmatprep.subr.bf16.mxu0 0
  %1287 = vmatpush1.bf16.msra.mxu0 %v917
  %1288 = vmatprep.subr.bf16.mxu0 0
  %1289 = vmatpush2.bf16.msra.mxu0 %v932
  %1290 = vmatprep.subr.bf16.mxu0 0
  %1291 = vmatpush2.bf16.msra.mxu0 %v931
  %1292 = vmatprep.subr.bf16.mxu0 0
  %1293 = vmatpush2.bf16.msra.mxu0 %v930
  %1294 = vmatprep.subr.bf16.mxu0 0
  %1295 = vmatpush2.bf16.msra.mxu0 %v929
  %1296 = vmatprep.subr.bf16.mxu0 0
  %1297 = vmatpush2.bf16.msra.mxu0 %v928
  %1298 = vmatprep.subr.bf16.mxu0 0
  %1299 = vmatpush2.bf16.msra.mxu0 %v927
  %1300 = vmatprep.subr.bf16.mxu0 0
  %1301 = vmatpush2.bf16.msra.mxu0 %v926
  %1302 = vmatprep.subr.bf16.mxu0 0
  %1303 = vmatpush2.bf16.msra.mxu0 %v925
  %1304 = vmatprep.mubr.bf16.mxu0 %v376
  %1305 = vmatmul.mubr.bf16.gmra.mxu0 %v375
  %v1306 = vpop.f32.mrf.mxu0
  %v1307 = vadd.f32 %v1258, %v1306
  %v1308 = vpop.f32.mrf.mxu0
  %v1309 = vpop.f32.mrf.mxu0
  %v1310 = vadd.f32 %v1261, %v1309
  %v1311 = vpop.f32.mrf.mxu0
  %1312 = vmatprep.mubr.bf16.mxu0 %v390
  %1313 = vmatmul.mubr.bf16.gmra.mxu0 %v389
  %v1314 = vpop.f32.mrf.mxu0
  %v1315 = vadd.f32 %v1266, %v1314
  %v1316 = vpop.f32.mrf.mxu0
  %v1317 = vpop.f32.mrf.mxu0
  %v1318 = vadd.f32 %v1269, %v1317
  %v1319 = vpop.f32.mrf.mxu0
  %1320 = vdwg.mxu0
  %1321 = vmatprep.subr.bf16.mxu0 0
  %1322 = vmatpush1.bf16.msra.mxu0 %v940
  %1323 = vmatprep.subr.bf16.mxu0 0
  %1324 = vmatpush1.bf16.msra.mxu0 %v939
  %1325 = vmatprep.subr.bf16.mxu0 0
  %1326 = vmatpush1.bf16.msra.mxu0 %v938
  %1327 = vmatprep.subr.bf16.mxu0 0
  %1328 = vmatpush1.bf16.msra.mxu0 %v937
  %1329 = vmatprep.subr.bf16.mxu0 0
  %1330 = vmatpush1.bf16.msra.mxu0 %v936
  %1331 = vmatprep.subr.bf16.mxu0 0
  %1332 = vmatpush1.bf16.msra.mxu0 %v935
  %1333 = vmatprep.subr.bf16.mxu0 0
  %1334 = vmatpush1.bf16.msra.mxu0 %v934
  %1335 = vmatprep.subr.bf16.mxu0 0
  %1336 = vmatpush1.bf16.msra.mxu0 %v933
  %1337 = vmatprep.subr.bf16.mxu0 0
  %1338 = vmatpush2.bf16.msra.mxu0 %v948
  %1339 = vmatprep.subr.bf16.mxu0 0
  %1340 = vmatpush2.bf16.msra.mxu0 %v947
  %1341 = vmatprep.subr.bf16.mxu0 0
  %1342 = vmatpush2.bf16.msra.mxu0 %v946
  %1343 = vmatprep.subr.bf16.mxu0 0
  %1344 = vmatpush2.bf16.msra.mxu0 %v945
  %1345 = vmatprep.subr.bf16.mxu0 0
  %1346 = vmatpush2.bf16.msra.mxu0 %v944
  %1347 = vmatprep.subr.bf16.mxu0 0
  %1348 = vmatpush2.bf16.msra.mxu0 %v943
  %1349 = vmatprep.subr.bf16.mxu0 0
  %1350 = vmatpush2.bf16.msra.mxu0 %v942
  %1351 = vmatprep.subr.bf16.mxu0 0
  %1352 = vmatpush2.bf16.msra.mxu0 %v941
  %1353 = vmatprep.mubr.bf16.mxu0 %v378
  %1354 = vmatmul.mubr.bf16.gmra.mxu0 %v377
  %v1355 = vpop.f32.mrf.mxu0
  %v1356 = vadd.f32 %v1307, %v1355
  %v1357 = vpop.f32.mrf.mxu0
  %v1358 = vpop.f32.mrf.mxu0
  %v1359 = vadd.f32 %v1310, %v1358
  %v1360 = vpop.f32.mrf.mxu0
  %1361 = vmatprep.mubr.bf16.mxu0 %v392
  %1362 = vmatmul.mubr.bf16.gmra.mxu0 %v391
  %v1363 = vpop.f32.mrf.mxu0
  %v1364 = vadd.f32 %v1315, %v1363
  %v1365 = vpop.f32.mrf.mxu0
  %v1366 = vpop.f32.mrf.mxu0
  %v1367 = vadd.f32 %v1318, %v1366
  %v1368 = vpop.f32.mrf.mxu0
  %1369 = vdwg.mxu0
  %1370 = vmatprep.subr.bf16.mxu0 0
  %1371 = vmatpush1.bf16.msra.mxu0 %v956
  %1372 = vmatprep.subr.bf16.mxu0 0
  %1373 = vmatpush1.bf16.msra.mxu0 %v955
  %1374 = vmatprep.subr.bf16.mxu0 0
  %1375 = vmatpush1.bf16.msra.mxu0 %v954
  %1376 = vmatprep.subr.bf16.mxu0 0
  %1377 = vmatpush1.bf16.msra.mxu0 %v953
  %1378 = vmatprep.subr.bf16.mxu0 0
  %1379 = vmatpush1.bf16.msra.mxu0 %v952
  %1380 = vmatprep.subr.bf16.mxu0 0
  %1381 = vmatpush1.bf16.msra.mxu0 %v951
  %1382 = vmatprep.subr.bf16.mxu0 0
  %1383 = vmatpush1.bf16.msra.mxu0 %v950
  %1384 = vmatprep.subr.bf16.mxu0 0
  %1385 = vmatpush1.bf16.msra.mxu0 %v949
  %1386 = vmatprep.subr.bf16.mxu0 0
  %1387 = vmatpush2.bf16.msra.mxu0 0
  %1388 = vmatprep.subr.bf16.mxu0 0
  %1389 = vmatpush2.bf16.msra.mxu0 0
  %1390 = vmatprep.subr.bf16.mxu0 0
  %1391 = vmatpush2.bf16.msra.mxu0 0
  %1392 = vmatprep.subr.bf16.mxu0 0
  %1393 = vmatpush2.bf16.msra.mxu0 0
  %1394 = vmatprep.subr.bf16.mxu0 0
  %1395 = vmatpush2.bf16.msra.mxu0 %v960
  %1396 = vmatprep.subr.bf16.mxu0 0
  %1397 = vmatpush2.bf16.msra.mxu0 %v959
  %1398 = vmatprep.subr.bf16.mxu0 0
  %1399 = vmatpush2.bf16.msra.mxu0 %v958
  %1400 = vmatprep.subr.bf16.mxu0 0
  %1401 = vmatpush2.bf16.msra.mxu0 %v957
  %1402 = vmatprep.mubr.bf16.mxu0 %v1071
  %1403 = vmatmul.mubr.bf16.gmra.mxu0 %v379
  %v1404 = vpop.f32.mrf.mxu0
  %v1405 = vadd.f32 %v1356, %v1404
  %v1406 = vpop.f32.mrf.mxu0
  %v1407 = vpop.f32.mrf.mxu0
  %v1408 = vadd.f32 %v1359, %v1407
  %v1409 = vpop.f32.mrf.mxu0
  %1410 = vmatprep.mubr.bf16.mxu0 %v1074
  %1411 = vmatmul.mubr.bf16.gmra.mxu0 %v393
  %v1412 = vpop.f32.mrf.mxu0
  %v1413 = vadd.f32 %v1364, %v1412
  %v1414 = vpop.f32.mrf.mxu0
  %v1415 = vpop.f32.mrf.mxu0
  %v1416 = vadd.f32 %v1367, %v1415
  %v1417 = vpop.f32.mrf.mxu0
  %1418 = vdwg.mxu0
  %v1419 = vmax.f32 %v1405, 0.0
  %v1420 = vmax.f32 %v1408, 0.0
  %v1421 = vmax.f32 %v1413, 0.0
  %v1422 = vmax.f32 %v1416, 0.0
  %vm1423 = vcmask 64512
  %1424 = vst.msk [vmem:[%s3] sm:$0xff] %vm1423, %v1419
  %1425 = vst.msk [vmem:[%s3 + $0x8] sm:$0xff] %vm1423, %v1420
  %1426 = vst.msk [vmem:[%s3 + $0x10] sm:$0xff] %vm1423, %v1421
  %1427 = vst.msk [vmem:[%s3 + $0x18] sm:$0xff] %vm1423, %v1422
  // Predicated region
  $region14: #{tsrvfd_forward.26} parent=0 // pred_check
    _
  $region15: #{tsrvfd_forward.26} parent=0 // pred_check_branch
    %1429 = sbr.rel (0) target = $region17
  $region16: #{tsrvfd_forward.26} parent=0 // pred_region
    _
  $region17: #{tsrvfd_forward.26} parent=0 // pred_fallthru
    _
  // Predicated region
  $region18: #{tsrvfd_forward.26} parent=0 // pred_check
    _
  $region19: #{tsrvfd_forward.26} parent=0 // pred_check_branch
    %1431 = sbr.rel (0) target = $region21
  $region20: #{tsrvfd_forward.26} parent=0 // pred_region
    _
  $region21: #{tsrvfd_forward.26} parent=0 // pred_fallthru
    _

// kernel: tile.48
$region0: #{tile.48}
  #allocation0 [shape = 's32[1]{0}', space=sflag, size = 0x4, scoped, tag = 'scoped memory for tile.48']
  %s0 = inlined_call_operand.vmem [shape: f32[16], index: 0, kind: input, shape index: {}]
  %s1 = inlined_call_operand.vmem [shape: f32[8,16], index: 1, kind: output, shape index: {}]
  // Predicated region
  $region2: #{tile.48} parent=0 // pred_check
    _
  $region3: #{tile.48} parent=0 // pred_check_branch
    %3 = sbr.rel (0) target = $region5
  $region4: #{tile.48} parent=0 // pred_region
    _
  $region5: #{tile.48} parent=0 // pred_fallthru
    _
  %v4 = vld [vmem:[%s0] ss:$0 sm:$0xff]
  %5 = vst [vmem:[%s1] sm:$0xff] %v4

// kernel: tile.3
$region0: #{tile.3}
  %s0 = inlined_call_operand.vmem [shape: f32[8,16], index: 0, kind: input, shape index: {}]
  %s1 = inlined_call_operand.vmem [shape: f32[128,1], index: 1, kind: output, shape index: {}]
  %v2 = vld [vmem:[%s0] sm:$0xff]
  %vm3 = vcmask 7168
  %4 = vst.msk [vmem:[%s1] ss:$16 sm:$0x3] %vm3, %v2
  %5 = vst.msk [vmem:[%s1] ss:$16 sm:$0xc] %vm3, %v2
  %6 = vst.msk [vmem:[%s1] ss:$16 sm:$0x30] %vm3, %v2
  %7 = vst.msk [vmem:[%s1] ss:$16 sm:$0xc0] %vm3, %v2
  %v8 = vld [vmem:[%s0] sm:$0xff]
  %9 = vrot.lane.b32.xlu0 %v8, 127
  %v10 = vpop.permute.xlu0 %9
  %vm11 = vcmask 7168
  %s12 = scalar_lea.vmem %s1, 1
  %13 = vst.msk [vmem:[%s12] ss:$16 sm:$0x3] %vm11, %v10
  %s14 = scalar_lea.vmem %s1, 1
  %15 = vst.msk [vmem:[%s14] ss:$16 sm:$0xc] %vm11, %v10
  %s16 = scalar_lea.vmem %s1, 1
  %17 = vst.msk [vmem:[%s16] ss:$16 sm:$0x30] %vm11, %v10
  %s18 = scalar_lea.vmem %s1, 1
  %19 = vst.msk [vmem:[%s18] ss:$16 sm:$0xc0] %vm11, %v10
  %v20 = vld [vmem:[%s0] sm:$0xff]
  %21 = vrot.lane.b32.xlu0 %v20, 126
  %v22 = vpop.permute.xlu0 %21
  %vm23 = vcmask 7168
  %s24 = scalar_lea.vmem %s1, 2
  %25 = vst.msk [vmem:[%s24] ss:$16 sm:$0x3] %vm23, %v22
  %s26 = scalar_lea.vmem %s1, 2
  %27 = vst.msk [vmem:[%s26] ss:$16 sm:$0xc] %vm23, %v22
  %s28 = scalar_lea.vmem %s1, 2
  %29 = vst.msk [vmem:[%s28] ss:$16 sm:$0x30] %vm23, %v22
  %s30 = scalar_lea.vmem %s1, 2
  %31 = vst.msk [vmem:[%s30] ss:$16 sm:$0xc0] %vm23, %v22
  %v32 = vld [vmem:[%s0] sm:$0xff]
  %33 = vrot.lane.b32.xlu0 %v32, 125
  %v34 = vpop.permute.xlu0 %33
  %vm35 = vcmask 7168
  %s36 = scalar_lea.vmem %s1, 3
  %37 = vst.msk [vmem:[%s36] ss:$16 sm:$0x3] %vm35, %v34
  %s38 = scalar_lea.vmem %s1, 3
  %39 = vst.msk [vmem:[%s38] ss:$16 sm:$0xc] %vm35, %v34
  %s40 = scalar_lea.vmem %s1, 3
  %41 = vst.msk [vmem:[%s40] ss:$16 sm:$0x30] %vm35, %v34
  %s42 = scalar_lea.vmem %s1, 3
  %43 = vst.msk [vmem:[%s42] ss:$16 sm:$0xc0] %vm35, %v34
  %v44 = vld [vmem:[%s0] sm:$0xff]
  %45 = vrot.lane.b32.xlu0 %v44, 124
  %v46 = vpop.permute.xlu0 %45
  %vm47 = vcmask 7168
  %s48 = scalar_lea.vmem %s1, 4
  %49 = vst.msk [vmem:[%s48] ss:$16 sm:$0x3] %vm47, %v46
  %s50 = scalar_lea.vmem %s1, 4
  %51 = vst.msk [vmem:[%s50] ss:$16 sm:$0xc] %vm47, %v46
  %s52 = scalar_lea.vmem %s1, 4
  %53 = vst.msk [vmem:[%s52] ss:$16 sm:$0x30] %vm47, %v46
  %s54 = scalar_lea.vmem %s1, 4
  %55 = vst.msk [vmem:[%s54] ss:$16 sm:$0xc0] %vm47, %v46
  %v56 = vld [vmem:[%s0] sm:$0xff]
  %57 = vrot.lane.b32.xlu0 %v56, 123
  %v58 = vpop.permute.xlu0 %57
  %vm59 = vcmask 7168
  %s60 = scalar_lea.vmem %s1, 5
  %61 = vst.msk [vmem:[%s60] ss:$16 sm:$0x3] %vm59, %v58
  %s62 = scalar_lea.vmem %s1, 5
  %63 = vst.msk [vmem:[%s62] ss:$16 sm:$0xc] %vm59, %v58
  %s64 = scalar_lea.vmem %s1, 5
  %65 = vst.msk [vmem:[%s64] ss:$16 sm:$0x30] %vm59, %v58
  %s66 = scalar_lea.vmem %s1, 5
  %67 = vst.msk [vmem:[%s66] ss:$16 sm:$0xc0] %vm59, %v58
  %v68 = vld [vmem:[%s0] sm:$0xff]
  %69 = vrot.lane.b32.xlu0 %v68, 122
  %v70 = vpop.permute.xlu0 %69
  %vm71 = vcmask 7168
  %s72 = scalar_lea.vmem %s1, 6
  %73 = vst.msk [vmem:[%s72] ss:$16 sm:$0x3] %vm71, %v70
  %s74 = scalar_lea.vmem %s1, 6
  %75 = vst.msk [vmem:[%s74] ss:$16 sm:$0xc] %vm71, %v70
  %s76 = scalar_lea.vmem %s1, 6
  %77 = vst.msk [vmem:[%s76] ss:$16 sm:$0x30] %vm71, %v70
  %s78 = scalar_lea.vmem %s1, 6
  %79 = vst.msk [vmem:[%s78] ss:$16 sm:$0xc0] %vm71, %v70
  %v80 = vld [vmem:[%s0] sm:$0xff]
  %81 = vrot.lane.b32.xlu0 %v80, 121
  %v82 = vpop.permute.xlu0 %81
  %vm83 = vcmask 7168
  %s84 = scalar_lea.vmem %s1, 7
  %85 = vst.msk [vmem:[%s84] ss:$16 sm:$0x3] %vm83, %v82
  %s86 = scalar_lea.vmem %s1, 7
  %87 = vst.msk [vmem:[%s86] ss:$16 sm:$0xc] %vm83, %v82
  %s88 = scalar_lea.vmem %s1, 7
  %89 = vst.msk [vmem:[%s88] ss:$16 sm:$0x30] %vm83, %v82
  %s90 = scalar_lea.vmem %s1, 7
  %91 = vst.msk [vmem:[%s90] ss:$16 sm:$0xc0] %vm83, %v82
  %v92 = vld [vmem:[%s0] sm:$0xff]
  %93 = vrot.lane.b32.xlu0 %v92, 120
  %v94 = vpop.permute.xlu0 %93
  %vm95 = vcmask 7168
  %s96 = scalar_lea.vmem %s1, 8
  %97 = vst.msk [vmem:[%s96] ss:$16 sm:$0x3] %vm95, %v94
  %s98 = scalar_lea.vmem %s1, 8
  %99 = vst.msk [vmem:[%s98] ss:$16 sm:$0xc] %vm95, %v94
  %s100 = scalar_lea.vmem %s1, 8
  %101 = vst.msk [vmem:[%s100] ss:$16 sm:$0x30] %vm95, %v94
  %s102 = scalar_lea.vmem %s1, 8
  %103 = vst.msk [vmem:[%s102] ss:$16 sm:$0xc0] %vm95, %v94
  %v104 = vld [vmem:[%s0] sm:$0xff]
  %105 = vrot.lane.b32.xlu0 %v104, 119
  %v106 = vpop.permute.xlu0 %105
  %vm107 = vcmask 7168
  %s108 = scalar_lea.vmem %s1, 9
  %109 = vst.msk [vmem:[%s108] ss:$16 sm:$0x3] %vm107, %v106
  %s110 = scalar_lea.vmem %s1, 9
  %111 = vst.msk [vmem:[%s110] ss:$16 sm:$0xc] %vm107, %v106
  %s112 = scalar_lea.vmem %s1, 9
  %113 = vst.msk [vmem:[%s112] ss:$16 sm:$0x30] %vm107, %v106
  %s114 = scalar_lea.vmem %s1, 9
  %115 = vst.msk [vmem:[%s114] ss:$16 sm:$0xc0] %vm107, %v106
  %v116 = vld [vmem:[%s0] sm:$0xff]
  %117 = vrot.lane.b32.xlu0 %v116, 118
  %v118 = vpop.permute.xlu0 %117
  %vm119 = vcmask 7168
  %s120 = scalar_lea.vmem %s1, 10
  %121 = vst.msk [vmem:[%s120] ss:$16 sm:$0x3] %vm119, %v118
  %s122 = scalar_lea.vmem %s1, 10
  %123 = vst.msk [vmem:[%s122] ss:$16 sm:$0xc] %vm119, %v118
  %s124 = scalar_lea.vmem %s1, 10
  %125 = vst.msk [vmem:[%s124] ss:$16 sm:$0x30] %vm119, %v118
  %s126 = scalar_lea.vmem %s1, 10
  %127 = vst.msk [vmem:[%s126] ss:$16 sm:$0xc0] %vm119, %v118
  %v128 = vld [vmem:[%s0] sm:$0xff]
  %129 = vrot.lane.b32.xlu0 %v128, 117
  %v130 = vpop.permute.xlu0 %129
  %vm131 = vcmask 7168
  %s132 = scalar_lea.vmem %s1, 11
  %133 = vst.msk [vmem:[%s132] ss:$16 sm:$0x3] %vm131, %v130
  %s134 = scalar_lea.vmem %s1, 11
  %135 = vst.msk [vmem:[%s134] ss:$16 sm:$0xc] %vm131, %v130
  %s136 = scalar_lea.vmem %s1, 11
  %137 = vst.msk [vmem:[%s136] ss:$16 sm:$0x30] %vm131, %v130
  %s138 = scalar_lea.vmem %s1, 11
  %139 = vst.msk [vmem:[%s138] ss:$16 sm:$0xc0] %vm131, %v130
  %v140 = vld [vmem:[%s0] sm:$0xff]
  %141 = vrot.lane.b32.xlu0 %v140, 116
  %v142 = vpop.permute.xlu0 %141
  %vm143 = vcmask 7168
  %s144 = scalar_lea.vmem %s1, 12
  %145 = vst.msk [vmem:[%s144] ss:$16 sm:$0x3] %vm143, %v142
  %s146 = scalar_lea.vmem %s1, 12
  %147 = vst.msk [vmem:[%s146] ss:$16 sm:$0xc] %vm143, %v142
  %s148 = scalar_lea.vmem %s1, 12
  %149 = vst.msk [vmem:[%s148] ss:$16 sm:$0x30] %vm143, %v142
  %s150 = scalar_lea.vmem %s1, 12
  %151 = vst.msk [vmem:[%s150] ss:$16 sm:$0xc0] %vm143, %v142
  %v152 = vld [vmem:[%s0] sm:$0xff]
  %153 = vrot.lane.b32.xlu0 %v152, 115
  %v154 = vpop.permute.xlu0 %153
  %vm155 = vcmask 7168
  %s156 = scalar_lea.vmem %s1, 13
  %157 = vst.msk [vmem:[%s156] ss:$16 sm:$0x3] %vm155, %v154
  %s158 = scalar_lea.vmem %s1, 13
  %159 = vst.msk [vmem:[%s158] ss:$16 sm:$0xc] %vm155, %v154
  %s160 = scalar_lea.vmem %s1, 13
  %161 = vst.msk [vmem:[%s160] ss:$16 sm:$0x30] %vm155, %v154
  %s162 = scalar_lea.vmem %s1, 13
  %163 = vst.msk [vmem:[%s162] ss:$16 sm:$0xc0] %vm155, %v154
  %v164 = vld [vmem:[%s0] sm:$0xff]
  %165 = vrot.lane.b32.xlu0 %v164, 114
  %v166 = vpop.permute.xlu0 %165
  %vm167 = vcmask 7168
  %s168 = scalar_lea.vmem %s1, 14
  %169 = vst.msk [vmem:[%s168] ss:$16 sm:$0x3] %vm167, %v166
  %s170 = scalar_lea.vmem %s1, 14
  %171 = vst.msk [vmem:[%s170] ss:$16 sm:$0xc] %vm167, %v166
  %s172 = scalar_lea.vmem %s1, 14
  %173 = vst.msk [vmem:[%s172] ss:$16 sm:$0x30] %vm167, %v166
  %s174 = scalar_lea.vmem %s1, 14
  %175 = vst.msk [vmem:[%s174] ss:$16 sm:$0xc0] %vm167, %v166
  %v176 = vld [vmem:[%s0] sm:$0xff]
  %177 = vrot.lane.b32.xlu0 %v176, 113
  %v178 = vpop.permute.xlu0 %177
  %vm179 = vcmask 7168
  %s180 = scalar_lea.vmem %s1, 15
  %181 = vst.msk [vmem:[%s180] ss:$16 sm:$0x3] %vm179, %v178
  %s182 = scalar_lea.vmem %s1, 15
  %183 = vst.msk [vmem:[%s182] ss:$16 sm:$0xc] %vm179, %v178
  %s184 = scalar_lea.vmem %s1, 15
  %185 = vst.msk [vmem:[%s184] ss:$16 sm:$0x30] %vm179, %v178
  %s186 = scalar_lea.vmem %s1, 15
  %187 = vst.msk [vmem:[%s186] ss:$16 sm:$0xc0] %vm179, %v178

// kernel: tsrvfd_forward.27
$region0: #{tsrvfd_forward.27}
  #allocation0 [shape = 'u32[]', space=smem, size = 0x4, offset = 0x4, fixed_abs, tag = 'smem constant byte address 0x4 - core index']
  #allocation1 [shape = 'u32[144,128]{1,0:T(1,128)}', space=vmem, size = 0x12000, scoped, tag = 'internal scratch']
  %s0 = inlined_call_operand.vmem [shape: bf16[128,864], index: 0, kind: input, shape index: {}]
  %s1 = inlined_call_operand.vmem [shape: bf16[864,8], index: 1, kind: input, shape index: {}]
  %s2 = inlined_call_operand.vmem [shape: f32[128,1], index: 2, kind: input, shape index: {}]
  %s3 = inlined_call_operand.vmem [shape: f32[128,8], index: 3, kind: output, shape index: {}]
  %s4 = sld [smem:[#allocation0]]
  $region22: #{tsrvfd_forward.27} parent=0
    _
  %s6 = ssub.s32 1, %s4
  %s7 = scalar_select 0, %s6, %s4
  // Predicated region
  $region2: #{tsrvfd_forward.27} parent=0 // pred_check
    _
  $region3: #{tsrvfd_forward.27} parent=0 // pred_check_branch
    %9 = sbr.rel (0) target = $region5
  $region4: #{tsrvfd_forward.27} parent=0 // pred_region
    _
  $region5: #{tsrvfd_forward.27} parent=0 // pred_fallthru
    _
  // Predicated region
  $region6: #{tsrvfd_forward.27} parent=0 // pred_check
    _
  $region7: #{tsrvfd_forward.27} parent=0 // pred_check_branch
    %11 = sbr.rel (0) target = $region9
  $region8: #{tsrvfd_forward.27} parent=0 // pred_region
    _
  $region9: #{tsrvfd_forward.27} parent=0 // pred_fallthru
    _
  // Predicated region
  $region10: #{tsrvfd_forward.27} parent=0 // pred_check
    _
  $region11: #{tsrvfd_forward.27} parent=0 // pred_check_branch
    %13 = sbr.rel (0) target = $region13
  $region12: #{tsrvfd_forward.27} parent=0 // pred_region
    _
  $region13: #{tsrvfd_forward.27} parent=0 // pred_fallthru
    _
  %v15 = vld [vmem:[%s0] sm:$0xff]
  %v16 = vld [vmem:[%s0 + $0x8] sm:$0xff]
  %v17 = vld [vmem:[%s0 + $0x10] sm:$0xff]
  %v18 = vld [vmem:[%s0 + $0x18] sm:$0xf]
  %v19 = vld [vmem:[%s0 + $0x1c] sm:$0xff]
  %v20 = vld [vmem:[%s0 + $0x24] sm:$0xff]
  %v21 = vld [vmem:[%s0 + $0x2c] sm:$0xff]
  %v22 = vld [vmem:[%s0 + $0x34] sm:$0xf]
  %v23 = vld [vmem:[%s0 + $0x38] sm:$0xff]
  %v24 = vld [vmem:[%s0 + $0x40] sm:$0xff]
  %v25 = vld [vmem:[%s0 + $0x48] sm:$0xff]
  %v26 = vld [vmem:[%s0 + $0x50] sm:$0xf]
  %v27 = vld [vmem:[%s0 + $0x54] sm:$0xff]
  %v28 = vld [vmem:[%s0 + $0x5c] sm:$0xff]
  %v29 = vld [vmem:[%s0 + $0x64] sm:$0xff]
  %v30 = vld [vmem:[%s0 + $0x6c] sm:$0xf]
  %v31 = vld [vmem:[%s0 + $0x70] sm:$0xff]
  %v32 = vld [vmem:[%s0 + $0x78] sm:$0xff]
  %v33 = vld [vmem:[%s0 + $0x80] sm:$0xff]
  %v34 = vld [vmem:[%s0 + $0x88] sm:$0xf]
  %v35 = vld [vmem:[%s0 + $0x8c] sm:$0xff]
  %v36 = vld [vmem:[%s0 + $0x94] sm:$0xff]
  %v37 = vld [vmem:[%s0 + $0x9c] sm:$0xff]
  %v38 = vld [vmem:[%s0 + $0xa4] sm:$0xf]
  %v39 = vld [vmem:[%s0 + $0xa8] sm:$0xff]
  %v40 = vld [vmem:[%s0 + $0xb0] sm:$0xff]
  %v41 = vld [vmem:[%s0 + $0xb8] sm:$0xff]
  %v42 = vld [vmem:[%s0 + $0xc0] sm:$0xf]
  %v43 = vld [vmem:[%s0 + $0xc4] sm:$0xff]
  %v44 = vld [vmem:[%s0 + $0xcc] sm:$0xff]
  %v45 = vld [vmem:[%s0 + $0xd4] sm:$0xff]
  %v46 = vld [vmem:[%s0 + $0xdc] sm:$0xf]
  %v47 = vld [vmem:[%s0 + $0xe0] sm:$0xff]
  %v48 = vld [vmem:[%s0 + $0xe8] sm:$0xff]
  %v49 = vld [vmem:[%s0 + $0xf0] sm:$0xff]
  %v50 = vld [vmem:[%s0 + $0xf8] sm:$0xf]
  %v51 = vld [vmem:[%s0 + $0xfc] sm:$0xff]
  %v52 = vld [vmem:[%s0 + $0x104] sm:$0xff]
  %v53 = vld [vmem:[%s0 + $0x10c] sm:$0xff]
  %v54 = vld [vmem:[%s0 + $0x114] sm:$0xf]
  %v55 = vld [vmem:[%s0 + $0x118] sm:$0xff]
  %v56 = vld [vmem:[%s0 + $0x120] sm:$0xff]
  %v57 = vld [vmem:[%s0 + $0x128] sm:$0xff]
  %v58 = vld [vmem:[%s0 + $0x130] sm:$0xf]
  %v59 = vld [vmem:[%s0 + $0x134] sm:$0xff]
  %v60 = vld [vmem:[%s0 + $0x13c] sm:$0xff]
  %v61 = vld [vmem:[%s0 + $0x144] sm:$0xff]
  %v62 = vld [vmem:[%s0 + $0x14c] sm:$0xf]
  %v63 = vld [vmem:[%s0 + $0x150] sm:$0xff]
  %v64 = vld [vmem:[%s0 + $0x158] sm:$0xff]
  %v65 = vld [vmem:[%s0 + $0x160] sm:$0xff]
  %v66 = vld [vmem:[%s0 + $0x168] sm:$0xf]
  %v67 = vld [vmem:[%s0 + $0x16c] sm:$0xff]
  %v68 = vld [vmem:[%s0 + $0x174] sm:$0xff]
  %v69 = vld [vmem:[%s0 + $0x17c] sm:$0xff]
  %v70 = vld [vmem:[%s0 + $0x184] sm:$0xf]
  %v71 = vld [vmem:[%s0 + $0x188] sm:$0xff]
  %v72 = vld [vmem:[%s0 + $0x190] sm:$0xff]
  %v73 = vld [vmem:[%s0 + $0x198] sm:$0xff]
  %v74 = vld [vmem:[%s0 + $0x1a0] sm:$0xf]
  %v75 = vld [vmem:[%s0 + $0x1a4] sm:$0xff]
  %v76 = vld [vmem:[%s0 + $0x1ac] sm:$0xff]
  %v77 = vld [vmem:[%s0 + $0x1b4] sm:$0xff]
  %v78 = vld [vmem:[%s0 + $0x1bc] sm:$0xf]
  %v79 = vld [vmem:[%s1] sm:$0xf]
  %v80 = vld [vmem:[%s1 + $0x4] sm:$0xf]
  %v81 = vld [vmem:[%s1 + $0x8] sm:$0xf]
  %v82 = vld [vmem:[%s1 + $0xc] sm:$0xf]
  %v83 = vld [vmem:[%s1 + $0x10] sm:$0xf]
  %v84 = vld [vmem:[%s1 + $0x14] sm:$0xf]
  %v85 = vld [vmem:[%s1 + $0x18] sm:$0xf]
  %v86 = vld [vmem:[%s1 + $0x1c] sm:$0xf]
  %v87 = vld [vmem:[%s1 + $0x20] sm:$0xf]
  %v88 = vld [vmem:[%s1 + $0x24] sm:$0xf]
  %v89 = vld [vmem:[%s1 + $0x28] sm:$0xf]
  %v90 = vld [vmem:[%s1 + $0x2c] sm:$0xf]
  %v91 = vld [vmem:[%s1 + $0x30] sm:$0xf]
  %v92 = vld [vmem:[%s1 + $0x34] sm:$0xf]
  %v93 = vld [vmem:[%s1 + $0x38] sm:$0xf]
  %v94 = vld [vmem:[%s1 + $0x3c] sm:$0xf]
  %v95 = vld [vmem:[%s1 + $0x40] sm:$0xf]
  %v96 = vld [vmem:[%s1 + $0x44] sm:$0xf]
  %v97 = vld [vmem:[%s1 + $0x48] sm:$0xf]
  %v98 = vld [vmem:[%s1 + $0x4c] sm:$0xf]
  %v99 = vld [vmem:[%s1 + $0x50] sm:$0xf]
  %v100 = vld [vmem:[%s1 + $0x54] sm:$0xf]
  %v101 = vld [vmem:[%s1 + $0x58] sm:$0xf]
  %v102 = vld [vmem:[%s1 + $0x5c] sm:$0xf]
  %v103 = vld [vmem:[%s1 + $0x60] sm:$0xf]
  %v104 = vld [vmem:[%s1 + $0x64] sm:$0xf]
  %v105 = vld [vmem:[%s1 + $0x68] sm:$0xf]
  %v106 = vld [vmem:[%s1 + $0x6c] sm:$0xf]
  %v107 = vld [vmem:[%s1 + $0x70] sm:$0xf]
  %v108 = vld [vmem:[%s1 + $0x74] sm:$0xf]
  %v109 = vld [vmem:[%s1 + $0x78] sm:$0xf]
  %v110 = vld [vmem:[%s1 + $0x7c] sm:$0xf]
  %v111 = vld [vmem:[%s1 + $0x80] sm:$0xf]
  %v112 = vld [vmem:[%s1 + $0x84] sm:$0xf]
  %v113 = vld [vmem:[%s1 + $0x88] sm:$0xf]
  %v114 = vld [vmem:[%s1 + $0x8c] sm:$0xf]
  %v115 = vld [vmem:[%s1 + $0x90] sm:$0xf]
  %v116 = vld [vmem:[%s1 + $0x94] sm:$0xf]
  %v117 = vld [vmem:[%s1 + $0x98] sm:$0xf]
  %v118 = vld [vmem:[%s1 + $0x9c] sm:$0xf]
  %v119 = vld [vmem:[%s1 + $0xa0] sm:$0xf]
  %v120 = vld [vmem:[%s1 + $0xa4] sm:$0xf]
  %v121 = vld [vmem:[%s1 + $0xa8] sm:$0xf]
  %v122 = vld [vmem:[%s1 + $0xac] sm:$0xf]
  %v123 = vld [vmem:[%s1 + $0xb0] sm:$0xf]
  %v124 = vld [vmem:[%s1 + $0xb4] sm:$0xf]
  %v125 = vld [vmem:[%s1 + $0xb8] sm:$0xf]
  %v126 = vld [vmem:[%s1 + $0xbc] sm:$0xf]
  %v127 = vld [vmem:[%s1 + $0xc0] sm:$0xf]
  %v128 = vld [vmem:[%s1 + $0xc4] sm:$0xf]
  %v129 = vld [vmem:[%s1 + $0xc8] sm:$0xf]
  %v130 = vld [vmem:[%s1 + $0xcc] sm:$0xf]
  %v131 = vld [vmem:[%s1 + $0xd0] sm:$0xf]
  %v132 = vld [vmem:[%s1 + $0xd4] sm:$0xf]
  %v133 = vld [vmem:[%s1 + $0xd8] sm:$0xf]
  %v134 = vld [vmem:[%s1 + $0xdc] sm:$0xf]
  %v135 = vld [vmem:[%s1 + $0xe0] sm:$0xf]
  %v136 = vld [vmem:[%s1 + $0xe4] sm:$0xf]
  %v137 = vld [vmem:[%s1 + $0xe8] sm:$0xf]
  %v138 = vld [vmem:[%s1 + $0xec] sm:$0xf]
  %v139 = vld [vmem:[%s1 + $0xf0] sm:$0xf]
  %v140 = vld [vmem:[%s1 + $0xf4] sm:$0xf]
  %v141 = vld [vmem:[%s1 + $0xf8] sm:$0xf]
  %v142 = vld [vmem:[%s1 + $0xfc] sm:$0xf]
  %v143 = vld [vmem:[%s1 + $0x100] sm:$0xf]
  %v144 = vld [vmem:[%s1 + $0x104] sm:$0xf]
  %v145 = vld [vmem:[%s1 + $0x108] sm:$0xf]
  %v146 = vld [vmem:[%s1 + $0x10c] sm:$0xf]
  %v147 = vld [vmem:[%s1 + $0x110] sm:$0xf]
  %v148 = vld [vmem:[%s1 + $0x114] sm:$0xf]
  %v149 = vld [vmem:[%s1 + $0x118] sm:$0xf]
  %v150 = vld [vmem:[%s1 + $0x11c] sm:$0xf]
  %v151 = vld [vmem:[%s1 + $0x120] sm:$0xf]
  %v152 = vld [vmem:[%s1 + $0x124] sm:$0xf]
  %v153 = vld [vmem:[%s1 + $0x128] sm:$0xf]
  %v154 = vld [vmem:[%s1 + $0x12c] sm:$0xf]
  %v155 = vld [vmem:[%s1 + $0x130] sm:$0xf]
  %v156 = vld [vmem:[%s1 + $0x134] sm:$0xf]
  %v157 = vld [vmem:[%s1 + $0x138] sm:$0xf]
  %v158 = vld [vmem:[%s1 + $0x13c] sm:$0xf]
  %v159 = vld [vmem:[%s1 + $0x140] sm:$0xf]
  %v160 = vld [vmem:[%s1 + $0x144] sm:$0xf]
  %v161 = vld [vmem:[%s1 + $0x148] sm:$0xf]
  %v162 = vld [vmem:[%s1 + $0x14c] sm:$0xf]
  %v163 = vld [vmem:[%s1 + $0x150] sm:$0xf]
  %v164 = vld [vmem:[%s1 + $0x154] sm:$0xf]
  %v165 = vld [vmem:[%s1 + $0x158] sm:$0xf]
  %v166 = vld [vmem:[%s1 + $0x15c] sm:$0xf]
  %v167 = vld [vmem:[%s1 + $0x160] sm:$0xf]
  %v168 = vld [vmem:[%s1 + $0x164] sm:$0xf]
  %v169 = vld [vmem:[%s1 + $0x168] sm:$0xf]
  %v170 = vld [vmem:[%s1 + $0x16c] sm:$0xf]
  %v171 = vld [vmem:[%s1 + $0x170] sm:$0xf]
  %v172 = vld [vmem:[%s1 + $0x174] sm:$0xf]
  %v173 = vld [vmem:[%s1 + $0x178] sm:$0xf]
  %v174 = vld [vmem:[%s1 + $0x17c] sm:$0xf]
  %v175 = vld [vmem:[%s1 + $0x180] sm:$0xf]
  %v176 = vld [vmem:[%s1 + $0x184] sm:$0xf]
  %v177 = vld [vmem:[%s1 + $0x188] sm:$0xf]
  %v178 = vld [vmem:[%s1 + $0x18c] sm:$0xf]
  %v179 = vld [vmem:[%s1 + $0x190] sm:$0xf]
  %v180 = vld [vmem:[%s1 + $0x194] sm:$0xf]
  %v181 = vld [vmem:[%s1 + $0x198] sm:$0xf]
  %v182 = vld [vmem:[%s1 + $0x19c] sm:$0xf]
  %v183 = vld [vmem:[%s1 + $0x1a0] sm:$0xf]
  %v184 = vld [vmem:[%s1 + $0x1a4] sm:$0xf]
  %v185 = vld [vmem:[%s1 + $0x1a8] sm:$0xf]
  %v186 = vld [vmem:[%s1 + $0x1ac] sm:$0xf]
  %v187 = vld [vmem:[%s2] sm:$0xff]
  %v188 = vld [vmem:[%s2 + $0x8] sm:$0xff]
  %v189 = vld [vmem:[%s2 + $0x10] sm:$0xff]
  %v190 = vld [vmem:[%s2 + $0x18] sm:$0xff]
  %v191 = vld [vmem:[%s2 + $0x20] sm:$0xff]
  %v192 = vld [vmem:[%s2 + $0x28] sm:$0xff]
  %v193 = vld [vmem:[%s2 + $0x30] sm:$0xff]
  %v194 = vld [vmem:[%s2 + $0x38] sm:$0xff]
  %v195 = vld [vmem:[%s2 + $0x40] sm:$0xff]
  %v196 = vld [vmem:[%s2 + $0x48] sm:$0xff]
  %v197 = vld [vmem:[%s2 + $0x50] sm:$0xff]
  %v198 = vld [vmem:[%s2 + $0x58] sm:$0xff]
  %v199 = vld [vmem:[%s2 + $0x60] sm:$0xff]
  %v200 = vld [vmem:[%s2 + $0x68] sm:$0xff]
  %v201 = vld [vmem:[%s2 + $0x70] sm:$0xff]
  %v202 = vld [vmem:[%s2 + $0x78] sm:$0xff]
  %204 = vset.pattern.permute.xlu0 0
  %205 = vperm.xlu0 %204, %v187
  %v206 = vpop.permute.xlu0 %205
  %209 = vset.pattern.permute.xlu0 0
  %210 = vperm.xlu0 %209, %v188
  %v211 = vpop.permute.xlu0 %210
  %214 = vset.pattern.permute.xlu0 0
  %215 = vperm.xlu0 %214, %v189
  %v216 = vpop.permute.xlu0 %215
  %219 = vset.pattern.permute.xlu0 0
  %220 = vperm.xlu0 %219, %v190
  %v221 = vpop.permute.xlu0 %220
  %224 = vset.pattern.permute.xlu0 0
  %225 = vperm.xlu0 %224, %v191
  %v226 = vpop.permute.xlu0 %225
  %229 = vset.pattern.permute.xlu0 0
  %230 = vperm.xlu0 %229, %v192
  %v231 = vpop.permute.xlu0 %230
  %234 = vset.pattern.permute.xlu0 0
  %235 = vperm.xlu0 %234, %v193
  %v236 = vpop.permute.xlu0 %235
  %239 = vset.pattern.permute.xlu0 0
  %240 = vperm.xlu0 %239, %v194
  %v241 = vpop.permute.xlu0 %240
  %244 = vset.pattern.permute.xlu0 0
  %245 = vperm.xlu0 %244, %v195
  %v246 = vpop.permute.xlu0 %245
  %249 = vset.pattern.permute.xlu0 0
  %250 = vperm.xlu0 %249, %v196
  %v251 = vpop.permute.xlu0 %250
  %254 = vset.pattern.permute.xlu0 0
  %255 = vperm.xlu0 %254, %v197
  %v256 = vpop.permute.xlu0 %255
  %259 = vset.pattern.permute.xlu0 0
  %260 = vperm.xlu0 %259, %v198
  %v261 = vpop.permute.xlu0 %260
  %264 = vset.pattern.permute.xlu0 0
  %265 = vperm.xlu0 %264, %v199
  %v266 = vpop.permute.xlu0 %265
  %269 = vset.pattern.permute.xlu0 0
  %270 = vperm.xlu0 %269, %v200
  %v271 = vpop.permute.xlu0 %270
  %274 = vset.pattern.permute.xlu0 0
  %275 = vperm.xlu0 %274, %v201
  %v276 = vpop.permute.xlu0 %275
  %279 = vset.pattern.permute.xlu0 0
  %280 = vperm.xlu0 %279, %v202
  %v281 = vpop.permute.xlu0 %280
  %v347 = vunpack.c.l.b16 %v15
  %v348 = vunpack.c.h.b16 %v15
  %v349 = vunpack.c.l.b16 %v16
  %v350 = vunpack.c.h.b16 %v16
  %v351 = vunpack.c.l.b16 %v17
  %v352 = vunpack.c.h.b16 %v17
  %v353 = vunpack.c.l.b16 %v18
  %v354 = vunpack.c.l.b16 %v19
  %v355 = vunpack.c.h.b16 %v19
  %v356 = vunpack.c.l.b16 %v20
  %v357 = vunpack.c.h.b16 %v20
  %v358 = vunpack.c.l.b16 %v21
  %v359 = vunpack.c.h.b16 %v21
  %v360 = vunpack.c.l.b16 %v22
  %v361 = vunpack.c.l.b16 %v23
  %v362 = vunpack.c.h.b16 %v23
  %v363 = vunpack.c.l.b16 %v24
  %v364 = vunpack.c.h.b16 %v24
  %v365 = vunpack.c.l.b16 %v25
  %v366 = vunpack.c.h.b16 %v25
  %v367 = vunpack.c.l.b16 %v26
  %v368 = vunpack.c.l.b16 %v27
  %v369 = vunpack.c.h.b16 %v27
  %v370 = vunpack.c.l.b16 %v28
  %v371 = vunpack.c.h.b16 %v28
  %v372 = vunpack.c.l.b16 %v29
  %v373 = vunpack.c.h.b16 %v29
  %v374 = vunpack.c.l.b16 %v30
  %v375 = vunpack.c.l.b16 %v31
  %v376 = vunpack.c.h.b16 %v31
  %v377 = vunpack.c.l.b16 %v32
  %v378 = vunpack.c.h.b16 %v32
  %v379 = vunpack.c.l.b16 %v33
  %v380 = vunpack.c.h.b16 %v33
  %v381 = vunpack.c.l.b16 %v34
  %v382 = vunpack.c.l.b16 %v35
  %v383 = vunpack.c.h.b16 %v35
  %v384 = vunpack.c.l.b16 %v36
  %v385 = vunpack.c.h.b16 %v36
  %v386 = vunpack.c.l.b16 %v37
  %v387 = vunpack.c.h.b16 %v37
  %v388 = vunpack.c.l.b16 %v38
  %v389 = vunpack.c.l.b16 %v39
  %v390 = vunpack.c.h.b16 %v39
  %v391 = vunpack.c.l.b16 %v40
  %v392 = vunpack.c.h.b16 %v40
  %v393 = vunpack.c.l.b16 %v41
  %v394 = vunpack.c.h.b16 %v41
  %v395 = vunpack.c.l.b16 %v42
  %v396 = vunpack.c.l.b16 %v43
  %v397 = vunpack.c.h.b16 %v43
  %v398 = vunpack.c.l.b16 %v44
  %v399 = vunpack.c.h.b16 %v44
  %v400 = vunpack.c.l.b16 %v45
  %v401 = vunpack.c.h.b16 %v45
  %v402 = vunpack.c.l.b16 %v46
  %v403 = vunpack.c.l.b16 %v47
  %v404 = vunpack.c.h.b16 %v47
  %v405 = vunpack.c.l.b16 %v48
  %v406 = vunpack.c.h.b16 %v48
  %v407 = vunpack.c.l.b16 %v49
  %v408 = vunpack.c.h.b16 %v49
  %v409 = vunpack.c.l.b16 %v50
  %v410 = vunpack.c.l.b16 %v51
  %v411 = vunpack.c.h.b16 %v51
  %v412 = vunpack.c.l.b16 %v52
  %v413 = vunpack.c.h.b16 %v52
  %v414 = vunpack.c.l.b16 %v53
  %v415 = vunpack.c.h.b16 %v53
  %v416 = vunpack.c.l.b16 %v54
  %v417 = vunpack.c.l.b16 %v55
  %v418 = vunpack.c.h.b16 %v55
  %v419 = vunpack.c.l.b16 %v56
  %v420 = vunpack.c.h.b16 %v56
  %v421 = vunpack.c.l.b16 %v57
  %v422 = vunpack.c.h.b16 %v57
  %v423 = vunpack.c.l.b16 %v58
  %v424 = vunpack.c.l.b16 %v59
  %v425 = vunpack.c.h.b16 %v59
  %v426 = vunpack.c.l.b16 %v60
  %v427 = vunpack.c.h.b16 %v60
  %v428 = vunpack.c.l.b16 %v61
  %v429 = vunpack.c.h.b16 %v61
  %v430 = vunpack.c.l.b16 %v62
  %v431 = vunpack.c.l.b16 %v63
  %v432 = vunpack.c.h.b16 %v63
  %v433 = vunpack.c.l.b16 %v64
  %v434 = vunpack.c.h.b16 %v64
  %v435 = vunpack.c.l.b16 %v65
  %v436 = vunpack.c.h.b16 %v65
  %v437 = vunpack.c.l.b16 %v66
  %v438 = vunpack.c.l.b16 %v67
  %v439 = vunpack.c.h.b16 %v67
  %v440 = vunpack.c.l.b16 %v68
  %v441 = vunpack.c.h.b16 %v68
  %v442 = vunpack.c.l.b16 %v69
  %v443 = vunpack.c.h.b16 %v69
  %v444 = vunpack.c.l.b16 %v70
  %v445 = vunpack.c.l.b16 %v71
  %v446 = vunpack.c.h.b16 %v71
  %v447 = vunpack.c.l.b16 %v72
  %v448 = vunpack.c.h.b16 %v72
  %v449 = vunpack.c.l.b16 %v73
  %v450 = vunpack.c.h.b16 %v73
  %v451 = vunpack.c.l.b16 %v74
  %v452 = vunpack.c.l.b16 %v75
  %v453 = vunpack.c.h.b16 %v75
  %v454 = vunpack.c.l.b16 %v76
  %v455 = vunpack.c.h.b16 %v76
  %v456 = vunpack.c.l.b16 %v77
  %v457 = vunpack.c.h.b16 %v77
  %v458 = vunpack.c.l.b16 %v78
  %v459 = vpack.c.b16 %v354, %v347
  %v460 = vpack.c.b16 %v355, %v348
  %v461 = vpack.c.b16 %v356, %v349
  %v462 = vpack.c.b16 %v357, %v350
  %v463 = vpack.c.b16 %v358, %v351
  %v464 = vpack.c.b16 %v359, %v352
  %v465 = vpack.c.b16 %v360, %v353
  %v466 = vpack.c.b16 %v368, %v361
  %v467 = vpack.c.b16 %v369, %v362
  %v468 = vpack.c.b16 %v370, %v363
  %v469 = vpack.c.b16 %v371, %v364
  %v470 = vpack.c.b16 %v372, %v365
  %v471 = vpack.c.b16 %v373, %v366
  %v472 = vpack.c.b16 %v374, %v367
  %v473 = vpack.c.b16 %v382, %v375
  %v474 = vpack.c.b16 %v383, %v376
  %v475 = vpack.c.b16 %v384, %v377
  %v476 = vpack.c.b16 %v385, %v378
  %v477 = vpack.c.b16 %v386, %v379
  %v478 = vpack.c.b16 %v387, %v380
  %v479 = vpack.c.b16 %v388, %v381
  %v480 = vpack.c.b16 %v396, %v389
  %v481 = vpack.c.b16 %v397, %v390
  %v482 = vpack.c.b16 %v398, %v391
  %v483 = vpack.c.b16 %v399, %v392
  %v484 = vpack.c.b16 %v400, %v393
  %v485 = vpack.c.b16 %v401, %v394
  %v486 = vpack.c.b16 %v402, %v395
  %v487 = vpack.c.b16 %v410, %v403
  %v488 = vpack.c.b16 %v411, %v404
  %v489 = vpack.c.b16 %v412, %v405
  %v490 = vpack.c.b16 %v413, %v406
  %v491 = vpack.c.b16 %v414, %v407
  %v492 = vpack.c.b16 %v415, %v408
  %v493 = vpack.c.b16 %v416, %v409
  %v494 = vpack.c.b16 %v424, %v417
  %v495 = vpack.c.b16 %v425, %v418
  %v496 = vpack.c.b16 %v426, %v419
  %v497 = vpack.c.b16 %v427, %v420
  %v498 = vpack.c.b16 %v428, %v421
  %v499 = vpack.c.b16 %v429, %v422
  %v500 = vpack.c.b16 %v430, %v423
  %v501 = vpack.c.b16 %v438, %v431
  %v502 = vpack.c.b16 %v439, %v432
  %v503 = vpack.c.b16 %v440, %v433
  %v504 = vpack.c.b16 %v441, %v434
  %v505 = vpack.c.b16 %v442, %v435
  %v506 = vpack.c.b16 %v443, %v436
  %v507 = vpack.c.b16 %v444, %v437
  %v508 = vpack.c.b16 %v452, %v445
  %v509 = vpack.c.b16 %v453, %v446
  %v510 = vpack.c.b16 %v454, %v447
  %v511 = vpack.c.b16 %v455, %v448
  %v512 = vpack.c.b16 %v456, %v449
  %v513 = vpack.c.b16 %v457, %v450
  %v514 = vpack.c.b16 %v458, %v451
  %v671 = vunpack.c.l.b16 %v79
  %v672 = vunpack.c.l.b16 %v80
  %v673 = vunpack.c.l.b16 %v81
  %v674 = vunpack.c.l.b16 %v82
  %v675 = vunpack.c.l.b16 %v83
  %v676 = vunpack.c.l.b16 %v84
  %v677 = vunpack.c.l.b16 %v85
  %v678 = vunpack.c.l.b16 %v86
  %v679 = vunpack.c.l.b16 %v87
  %v680 = vunpack.c.l.b16 %v88
  %v681 = vunpack.c.l.b16 %v89
  %v682 = vunpack.c.l.b16 %v90
  %v683 = vunpack.c.l.b16 %v91
  %v684 = vunpack.c.l.b16 %v92
  %v685 = vunpack.c.l.b16 %v93
  %v686 = vunpack.c.l.b16 %v94
  %v687 = vunpack.c.l.b16 %v95
  %v688 = vunpack.c.l.b16 %v96
  %v689 = vunpack.c.l.b16 %v97
  %v690 = vunpack.c.l.b16 %v98
  %v691 = vunpack.c.l.b16 %v99
  %v692 = vunpack.c.l.b16 %v100
  %v693 = vunpack.c.l.b16 %v101
  %v694 = vunpack.c.l.b16 %v102
  %v695 = vunpack.c.l.b16 %v103
  %v696 = vunpack.c.l.b16 %v104
  %v697 = vunpack.c.l.b16 %v105
  %v698 = vunpack.c.l.b16 %v106
  %v699 = vunpack.c.l.b16 %v107
  %v700 = vunpack.c.l.b16 %v108
  %v701 = vunpack.c.l.b16 %v109
  %v702 = vunpack.c.l.b16 %v110
  %v703 = vunpack.c.l.b16 %v111
  %v704 = vunpack.c.l.b16 %v112
  %v705 = vunpack.c.l.b16 %v113
  %v706 = vunpack.c.l.b16 %v114
  %v707 = vunpack.c.l.b16 %v115
  %v708 = vunpack.c.l.b16 %v116
  %v709 = vunpack.c.l.b16 %v117
  %v710 = vunpack.c.l.b16 %v118
  %v711 = vunpack.c.l.b16 %v119
  %v712 = vunpack.c.l.b16 %v120
  %v713 = vunpack.c.l.b16 %v121
  %v714 = vunpack.c.l.b16 %v122
  %v715 = vunpack.c.l.b16 %v123
  %v716 = vunpack.c.l.b16 %v124
  %v717 = vunpack.c.l.b16 %v125
  %v718 = vunpack.c.l.b16 %v126
  %v719 = vunpack.c.l.b16 %v127
  %v720 = vunpack.c.l.b16 %v128
  %v721 = vunpack.c.l.b16 %v129
  %v722 = vunpack.c.l.b16 %v130
  %v723 = vunpack.c.l.b16 %v131
  %v724 = vunpack.c.l.b16 %v132
  %v725 = vunpack.c.l.b16 %v133
  %v726 = vunpack.c.l.b16 %v134
  %v727 = vunpack.c.l.b16 %v135
  %v728 = vunpack.c.l.b16 %v136
  %v729 = vunpack.c.l.b16 %v137
  %v730 = vunpack.c.l.b16 %v138
  %v731 = vunpack.c.l.b16 %v139
  %v732 = vunpack.c.l.b16 %v140
  %v733 = vunpack.c.l.b16 %v141
  %v734 = vunpack.c.l.b16 %v142
  %v735 = vunpack.c.l.b16 %v143
  %v736 = vunpack.c.l.b16 %v144
  %v737 = vunpack.c.l.b16 %v145
  %v738 = vunpack.c.l.b16 %v146
  %v739 = vunpack.c.l.b16 %v147
  %v740 = vunpack.c.l.b16 %v148
  %v741 = vunpack.c.l.b16 %v149
  %v742 = vunpack.c.l.b16 %v150
  %v743 = vunpack.c.l.b16 %v151
  %v744 = vunpack.c.l.b16 %v152
  %v745 = vunpack.c.l.b16 %v153
  %v746 = vunpack.c.l.b16 %v154
  %v747 = vunpack.c.l.b16 %v155
  %v748 = vunpack.c.l.b16 %v156
  %v749 = vunpack.c.l.b16 %v157
  %v750 = vunpack.c.l.b16 %v158
  %v751 = vunpack.c.l.b16 %v159
  %v752 = vunpack.c.l.b16 %v160
  %v753 = vunpack.c.l.b16 %v161
  %v754 = vunpack.c.l.b16 %v162
  %v755 = vunpack.c.l.b16 %v163
  %v756 = vunpack.c.l.b16 %v164
  %v757 = vunpack.c.l.b16 %v165
  %v758 = vunpack.c.l.b16 %v166
  %v759 = vunpack.c.l.b16 %v167
  %v760 = vunpack.c.l.b16 %v168
  %v761 = vunpack.c.l.b16 %v169
  %v762 = vunpack.c.l.b16 %v170
  %v763 = vunpack.c.l.b16 %v171
  %v764 = vunpack.c.l.b16 %v172
  %v765 = vunpack.c.l.b16 %v173
  %v766 = vunpack.c.l.b16 %v174
  %v767 = vunpack.c.l.b16 %v175
  %v768 = vunpack.c.l.b16 %v176
  %v769 = vunpack.c.l.b16 %v177
  %v770 = vunpack.c.l.b16 %v178
  %v771 = vunpack.c.l.b16 %v179
  %v772 = vunpack.c.l.b16 %v180
  %v773 = vunpack.c.l.b16 %v181
  %v774 = vunpack.c.l.b16 %v182
  %v775 = vunpack.c.l.b16 %v183
  %v776 = vunpack.c.l.b16 %v184
  %v777 = vunpack.c.l.b16 %v185
  %v778 = vunpack.c.l.b16 %v186
  %v779 = vpack.c.b16 %v672, %v671
  %v780 = vpack.c.b16 %v674, %v673
  %v781 = vpack.c.b16 %v676, %v675
  %v782 = vpack.c.b16 %v678, %v677
  %v783 = vpack.c.b16 %v680, %v679
  %v784 = vpack.c.b16 %v682, %v681
  %v785 = vpack.c.b16 %v684, %v683
  %v786 = vpack.c.b16 %v686, %v685
  %v787 = vpack.c.b16 %v688, %v687
  %v788 = vpack.c.b16 %v690, %v689
  %v789 = vpack.c.b16 %v692, %v691
  %v790 = vpack.c.b16 %v694, %v693
  %v791 = vpack.c.b16 %v696, %v695
  %v792 = vpack.c.b16 %v698, %v697
  %v793 = vpack.c.b16 %v700, %v699
  %v794 = vpack.c.b16 %v702, %v701
  %v795 = vpack.c.b16 %v704, %v703
  %v796 = vpack.c.b16 %v706, %v705
  %v797 = vpack.c.b16 %v708, %v707
  %v798 = vpack.c.b16 %v710, %v709
  %v799 = vpack.c.b16 %v712, %v711
  %v800 = vpack.c.b16 %v714, %v713
  %v801 = vpack.c.b16 %v716, %v715
  %v802 = vpack.c.b16 %v718, %v717
  %v803 = vpack.c.b16 %v720, %v719
  %v804 = vpack.c.b16 %v722, %v721
  %v805 = vpack.c.b16 %v724, %v723
  %v806 = vpack.c.b16 %v726, %v725
  %v807 = vpack.c.b16 %v728, %v727
  %v808 = vpack.c.b16 %v730, %v729
  %v809 = vpack.c.b16 %v732, %v731
  %v810 = vpack.c.b16 %v734, %v733
  %v811 = vpack.c.b16 %v736, %v735
  %v812 = vpack.c.b16 %v738, %v737
  %v813 = vpack.c.b16 %v740, %v739
  %v814 = vpack.c.b16 %v742, %v741
  %v815 = vpack.c.b16 %v744, %v743
  %v816 = vpack.c.b16 %v746, %v745
  %v817 = vpack.c.b16 %v748, %v747
  %v818 = vpack.c.b16 %v750, %v749
  %v819 = vpack.c.b16 %v752, %v751
  %v820 = vpack.c.b16 %v754, %v753
  %v821 = vpack.c.b16 %v756, %v755
  %v822 = vpack.c.b16 %v758, %v757
  %v823 = vpack.c.b16 %v760, %v759
  %v824 = vpack.c.b16 %v762, %v761
  %v825 = vpack.c.b16 %v764, %v763
  %v826 = vpack.c.b16 %v766, %v765
  %v827 = vpack.c.b16 %v768, %v767
  %v828 = vpack.c.b16 %v770, %v769
  %v829 = vpack.c.b16 %v772, %v771
  %v830 = vpack.c.b16 %v774, %v773
  %v831 = vpack.c.b16 %v776, %v775
  %v832 = vpack.c.b16 %v778, %v777
  %vm887 = vcmask 785408
  %v889 = vsel %vm887, %v465, 0
  %v892 = vsel %vm887, %v472, 0
  %v895 = vsel %vm887, %v479, 0
  %v898 = vsel %vm887, %v486, 0
  %v901 = vsel %vm887, %v493, 0
  %v904 = vsel %vm887, %v500, 0
  %v907 = vsel %vm887, %v507, 0
  %v910 = vsel %vm887, %v514, 0
  %912 = vmatprep.subr.bf16.mxu0 0
  %913 = vmatpush1.bf16.msra.mxu0 %v786
  %914 = vmatprep.subr.bf16.mxu0 0
  %915 = vmatpush1.bf16.msra.mxu0 %v785
  %916 = vmatprep.subr.bf16.mxu0 0
  %917 = vmatpush1.bf16.msra.mxu0 %v784
  %918 = vmatprep.subr.bf16.mxu0 0
  %919 = vmatpush1.bf16.msra.mxu0 %v783
  %920 = vmatprep.subr.bf16.mxu0 0
  %921 = vmatpush1.bf16.msra.mxu0 %v782
  %922 = vmatprep.subr.bf16.mxu0 0
  %923 = vmatpush1.bf16.msra.mxu0 %v781
  %924 = vmatprep.subr.bf16.mxu0 0
  %925 = vmatpush1.bf16.msra.mxu0 %v780
  %926 = vmatprep.subr.bf16.mxu0 0
  %927 = vmatpush1.bf16.msra.mxu0 %v779
  %928 = vmatprep.subr.bf16.mxu0 0
  %929 = vmatpush2.bf16.msra.mxu0 %v794
  %930 = vmatprep.subr.bf16.mxu0 0
  %931 = vmatpush2.bf16.msra.mxu0 %v793
  %932 = vmatprep.subr.bf16.mxu0 0
  %933 = vmatpush2.bf16.msra.mxu0 %v792
  %934 = vmatprep.subr.bf16.mxu0 0
  %935 = vmatpush2.bf16.msra.mxu0 %v791
  %936 = vmatprep.subr.bf16.mxu0 0
  %937 = vmatpush2.bf16.msra.mxu0 %v790
  %938 = vmatprep.subr.bf16.mxu0 0
  %939 = vmatpush2.bf16.msra.mxu0 %v789
  %940 = vmatprep.subr.bf16.mxu0 0
  %941 = vmatpush2.bf16.msra.mxu0 %v788
  %942 = vmatprep.subr.bf16.mxu0 0
  %943 = vmatpush2.bf16.msra.mxu0 %v787
  %944 = vmatprep.mubr.bf16.mxu0 %v460
  %945 = vmatmul.mubr.bf16.gmra.mxu0 %v459
  %v946 = vpop.f32.mrf.mxu0
  %v947 = vadd.f32 %v206, %v946
  %v948 = vpop.f32.mrf.mxu0
  %v949 = vpop.f32.mrf.mxu0
  %v950 = vadd.f32 %v211, %v949
  %v951 = vpop.f32.mrf.mxu0
  %952 = vmatprep.mubr.bf16.mxu0 %v467
  %953 = vmatmul.mubr.bf16.gmra.mxu0 %v466
  %v954 = vpop.f32.mrf.mxu0
  %v955 = vadd.f32 %v216, %v954
  %v956 = vpop.f32.mrf.mxu0
  %v957 = vpop.f32.mrf.mxu0
  %v958 = vadd.f32 %v221, %v957
  %v959 = vpop.f32.mrf.mxu0
  %960 = vmatprep.mubr.bf16.mxu0 %v474
  %961 = vmatmul.mubr.bf16.gmra.mxu0 %v473
  %v962 = vpop.f32.mrf.mxu0
  %v963 = vadd.f32 %v226, %v962
  %v964 = vpop.f32.mrf.mxu0
  %v965 = vpop.f32.mrf.mxu0
  %v966 = vadd.f32 %v231, %v965
  %v967 = vpop.f32.mrf.mxu0
  %968 = vmatprep.mubr.bf16.mxu0 %v481
  %969 = vmatmul.mubr.bf16.gmra.mxu0 %v480
  %v970 = vpop.f32.mrf.mxu0
  %v971 = vadd.f32 %v236, %v970
  %v972 = vpop.f32.mrf.mxu0
  %v973 = vpop.f32.mrf.mxu0
  %v974 = vadd.f32 %v241, %v973
  %v975 = vpop.f32.mrf.mxu0
  %976 = vmatprep.mubr.bf16.mxu0 %v488
  %977 = vmatmul.mubr.bf16.gmra.mxu0 %v487
  %v978 = vpop.f32.mrf.mxu0
  %v979 = vadd.f32 %v246, %v978
  %v980 = vpop.f32.mrf.mxu0
  %v981 = vpop.f32.mrf.mxu0
  %v982 = vadd.f32 %v251, %v981
  %v983 = vpop.f32.mrf.mxu0
  %984 = vmatprep.mubr.bf16.mxu0 %v495
  %985 = vmatmul.mubr.bf16.gmra.mxu0 %v494
  %v986 = vpop.f32.mrf.mxu0
  %v987 = vadd.f32 %v256, %v986
  %v988 = vpop.f32.mrf.mxu0
  %v989 = vpop.f32.mrf.mxu0
  %v990 = vadd.f32 %v261, %v989
  %v991 = vpop.f32.mrf.mxu0
  %992 = vmatprep.mubr.bf16.mxu0 %v502
  %993 = vmatmul.mubr.bf16.gmra.mxu0 %v501
  %v994 = vpop.f32.mrf.mxu0
  %v995 = vadd.f32 %v266, %v994
  %v996 = vpop.f32.mrf.mxu0
  %v997 = vpop.f32.mrf.mxu0
  %v998 = vadd.f32 %v271, %v997
  %v999 = vpop.f32.mrf.mxu0
  %1000 = vmatprep.mubr.bf16.mxu0 %v509
  %1001 = vmatmul.mubr.bf16.gmra.mxu0 %v508
  %v1002 = vpop.f32.mrf.mxu0
  %v1003 = vadd.f32 %v276, %v1002
  %v1004 = vpop.f32.mrf.mxu0
  %v1005 = vpop.f32.mrf.mxu0
  %v1006 = vadd.f32 %v281, %v1005
  %v1007 = vpop.f32.mrf.mxu0
  %1008 = vdwg.mxu0
  %1009 = vmatprep.subr.bf16.mxu0 0
  %1010 = vmatpush1.bf16.msra.mxu0 %v802
  %1011 = vmatprep.subr.bf16.mxu0 0
  %1012 = vmatpush1.bf16.msra.mxu0 %v801
  %1013 = vmatprep.subr.bf16.mxu0 0
  %1014 = vmatpush1.bf16.msra.mxu0 %v800
  %1015 = vmatprep.subr.bf16.mxu0 0
  %1016 = vmatpush1.bf16.msra.mxu0 %v799
  %1017 = vmatprep.subr.bf16.mxu0 0
  %1018 = vmatpush1.bf16.msra.mxu0 %v798
  %1019 = vmatprep.subr.bf16.mxu0 0
  %1020 = vmatpush1.bf16.msra.mxu0 %v797
  %1021 = vmatprep.subr.bf16.mxu0 0
  %1022 = vmatpush1.bf16.msra.mxu0 %v796
  %1023 = vmatprep.subr.bf16.mxu0 0
  %1024 = vmatpush1.bf16.msra.mxu0 %v795
  %1025 = vmatprep.subr.bf16.mxu0 0
  %1026 = vmatpush2.bf16.msra.mxu0 %v810
  %1027 = vmatprep.subr.bf16.mxu0 0
  %1028 = vmatpush2.bf16.msra.mxu0 %v809
  %1029 = vmatprep.subr.bf16.mxu0 0
  %1030 = vmatpush2.bf16.msra.mxu0 %v808
  %1031 = vmatprep.subr.bf16.mxu0 0
  %1032 = vmatpush2.bf16.msra.mxu0 %v807
  %1033 = vmatprep.subr.bf16.mxu0 0
  %1034 = vmatpush2.bf16.msra.mxu0 %v806
  %1035 = vmatprep.subr.bf16.mxu0 0
  %1036 = vmatpush2.bf16.msra.mxu0 %v805
  %1037 = vmatprep.subr.bf16.mxu0 0
  %1038 = vmatpush2.bf16.msra.mxu0 %v804
  %1039 = vmatprep.subr.bf16.mxu0 0
  %1040 = vmatpush2.bf16.msra.mxu0 %v803
  %1041 = vmatprep.mubr.bf16.mxu0 %v462
  %1042 = vmatmul.mubr.bf16.gmra.mxu0 %v461
  %v1043 = vpop.f32.mrf.mxu0
  %v1044 = vadd.f32 %v947, %v1043
  %v1045 = vpop.f32.mrf.mxu0
  %v1046 = vpop.f32.mrf.mxu0
  %v1047 = vadd.f32 %v950, %v1046
  %v1048 = vpop.f32.mrf.mxu0
  %1049 = vmatprep.mubr.bf16.mxu0 %v469
  %1050 = vmatmul.mubr.bf16.gmra.mxu0 %v468
  %v1051 = vpop.f32.mrf.mxu0
  %v1052 = vadd.f32 %v955, %v1051
  %v1053 = vpop.f32.mrf.mxu0
  %v1054 = vpop.f32.mrf.mxu0
  %v1055 = vadd.f32 %v958, %v1054
  %v1056 = vpop.f32.mrf.mxu0
  %1057 = vmatprep.mubr.bf16.mxu0 %v476
  %1058 = vmatmul.mubr.bf16.gmra.mxu0 %v475
  %v1059 = vpop.f32.mrf.mxu0
  %v1060 = vadd.f32 %v963, %v1059
  %v1061 = vpop.f32.mrf.mxu0
  %v1062 = vpop.f32.mrf.mxu0
  %v1063 = vadd.f32 %v966, %v1062
  %v1064 = vpop.f32.mrf.mxu0
  %1065 = vmatprep.mubr.bf16.mxu0 %v483
  %1066 = vmatmul.mubr.bf16.gmra.mxu0 %v482
  %v1067 = vpop.f32.mrf.mxu0
  %v1068 = vadd.f32 %v971, %v1067
  %v1069 = vpop.f32.mrf.mxu0
  %v1070 = vpop.f32.mrf.mxu0
  %v1071 = vadd.f32 %v974, %v1070
  %v1072 = vpop.f32.mrf.mxu0
  %1073 = vmatprep.mubr.bf16.mxu0 %v490
  %1074 = vmatmul.mubr.bf16.gmra.mxu0 %v489
  %v1075 = vpop.f32.mrf.mxu0
  %v1076 = vadd.f32 %v979, %v1075
  %v1077 = vpop.f32.mrf.mxu0
  %v1078 = vpop.f32.mrf.mxu0
  %v1079 = vadd.f32 %v982, %v1078
  %v1080 = vpop.f32.mrf.mxu0
  %1081 = vmatprep.mubr.bf16.mxu0 %v497
  %1082 = vmatmul.mubr.bf16.gmra.mxu0 %v496
  %v1083 = vpop.f32.mrf.mxu0
  %v1084 = vadd.f32 %v987, %v1083
  %v1085 = vpop.f32.mrf.mxu0
  %v1086 = vpop.f32.mrf.mxu0
  %v1087 = vadd.f32 %v990, %v1086
  %v1088 = vpop.f32.mrf.mxu0
  %1089 = vmatprep.mubr.bf16.mxu0 %v504
  %1090 = vmatmul.mubr.bf16.gmra.mxu0 %v503
  %v1091 = vpop.f32.mrf.mxu0
  %v1092 = vadd.f32 %v995, %v1091
  %v1093 = vpop.f32.mrf.mxu0
  %v1094 = vpop.f32.mrf.mxu0
  %v1095 = vadd.f32 %v998, %v1094
  %v1096 = vpop.f32.mrf.mxu0
  %1097 = vmatprep.mubr.bf16.mxu0 %v511
  %1098 = vmatmul.mubr.bf16.gmra.mxu0 %v510
  %v1099 = vpop.f32.mrf.mxu0
  %v1100 = vadd.f32 %v1003, %v1099
  %v1101 = vpop.f32.mrf.mxu0
  %v1102 = vpop.f32.mrf.mxu0
  %v1103 = vadd.f32 %v1006, %v1102
  %v1104 = vpop.f32.mrf.mxu0
  %1105 = vdwg.mxu0
  %1106 = vmatprep.subr.bf16.mxu0 0
  %1107 = vmatpush1.bf16.msra.mxu0 %v818
  %1108 = vmatprep.subr.bf16.mxu0 0
  %1109 = vmatpush1.bf16.msra.mxu0 %v817
  %1110 = vmatprep.subr.bf16.mxu0 0
  %1111 = vmatpush1.bf16.msra.mxu0 %v816
  %1112 = vmatprep.subr.bf16.mxu0 0
  %1113 = vmatpush1.bf16.msra.mxu0 %v815
  %1114 = vmatprep.subr.bf16.mxu0 0
  %1115 = vmatpush1.bf16.msra.mxu0 %v814
  %1116 = vmatprep.subr.bf16.mxu0 0
  %1117 = vmatpush1.bf16.msra.mxu0 %v813
  %1118 = vmatprep.subr.bf16.mxu0 0
  %1119 = vmatpush1.bf16.msra.mxu0 %v812
  %1120 = vmatprep.subr.bf16.mxu0 0
  %1121 = vmatpush1.bf16.msra.mxu0 %v811
  %1122 = vmatprep.subr.bf16.mxu0 0
  %1123 = vmatpush2.bf16.msra.mxu0 %v826
  %1124 = vmatprep.subr.bf16.mxu0 0
  %1125 = vmatpush2.bf16.msra.mxu0 %v825
  %1126 = vmatprep.subr.bf16.mxu0 0
  %1127 = vmatpush2.bf16.msra.mxu0 %v824
  %1128 = vmatprep.subr.bf16.mxu0 0
  %1129 = vmatpush2.bf16.msra.mxu0 %v823
  %1130 = vmatprep.subr.bf16.mxu0 0
  %1131 = vmatpush2.bf16.msra.mxu0 %v822
  %1132 = vmatprep.subr.bf16.mxu0 0
  %1133 = vmatpush2.bf16.msra.mxu0 %v821
  %1134 = vmatprep.subr.bf16.mxu0 0
  %1135 = vmatpush2.bf16.msra.mxu0 %v820
  %1136 = vmatprep.subr.bf16.mxu0 0
  %1137 = vmatpush2.bf16.msra.mxu0 %v819
  %1138 = vmatprep.mubr.bf16.mxu0 %v464
  %1139 = vmatmul.mubr.bf16.gmra.mxu0 %v463
  %v1140 = vpop.f32.mrf.mxu0
  %v1141 = vadd.f32 %v1044, %v1140
  %v1142 = vpop.f32.mrf.mxu0
  %v1143 = vpop.f32.mrf.mxu0
  %v1144 = vadd.f32 %v1047, %v1143
  %v1145 = vpop.f32.mrf.mxu0
  %1146 = vmatprep.mubr.bf16.mxu0 %v471
  %1147 = vmatmul.mubr.bf16.gmra.mxu0 %v470
  %v1148 = vpop.f32.mrf.mxu0
  %v1149 = vadd.f32 %v1052, %v1148
  %v1150 = vpop.f32.mrf.mxu0
  %v1151 = vpop.f32.mrf.mxu0
  %v1152 = vadd.f32 %v1055, %v1151
  %v1153 = vpop.f32.mrf.mxu0
  %1154 = vmatprep.mubr.bf16.mxu0 %v478
  %1155 = vmatmul.mubr.bf16.gmra.mxu0 %v477
  %v1156 = vpop.f32.mrf.mxu0
  %v1157 = vadd.f32 %v1060, %v1156
  %v1158 = vpop.f32.mrf.mxu0
  %v1159 = vpop.f32.mrf.mxu0
  %v1160 = vadd.f32 %v1063, %v1159
  %v1161 = vpop.f32.mrf.mxu0
  %1162 = vmatprep.mubr.bf16.mxu0 %v485
  %1163 = vmatmul.mubr.bf16.gmra.mxu0 %v484
  %v1164 = vpop.f32.mrf.mxu0
  %v1165 = vadd.f32 %v1068, %v1164
  %v1166 = vpop.f32.mrf.mxu0
  %v1167 = vpop.f32.mrf.mxu0
  %v1168 = vadd.f32 %v1071, %v1167
  %v1169 = vpop.f32.mrf.mxu0
  %1170 = vmatprep.mubr.bf16.mxu0 %v492
  %1171 = vmatmul.mubr.bf16.gmra.mxu0 %v491
  %v1172 = vpop.f32.mrf.mxu0
  %v1173 = vadd.f32 %v1076, %v1172
  %v1174 = vpop.f32.mrf.mxu0
  %v1175 = vpop.f32.mrf.mxu0
  %v1176 = vadd.f32 %v1079, %v1175
  %v1177 = vpop.f32.mrf.mxu0
  %1178 = vmatprep.mubr.bf16.mxu0 %v499
  %1179 = vmatmul.mubr.bf16.gmra.mxu0 %v498
  %v1180 = vpop.f32.mrf.mxu0
  %v1181 = vadd.f32 %v1084, %v1180
  %v1182 = vpop.f32.mrf.mxu0
  %v1183 = vpop.f32.mrf.mxu0
  %v1184 = vadd.f32 %v1087, %v1183
  %v1185 = vpop.f32.mrf.mxu0
  %1186 = vmatprep.mubr.bf16.mxu0 %v506
  %1187 = vmatmul.mubr.bf16.gmra.mxu0 %v505
  %v1188 = vpop.f32.mrf.mxu0
  %v1189 = vadd.f32 %v1092, %v1188
  %v1190 = vpop.f32.mrf.mxu0
  %v1191 = vpop.f32.mrf.mxu0
  %v1192 = vadd.f32 %v1095, %v1191
  %v1193 = vpop.f32.mrf.mxu0
  %1194 = vmatprep.mubr.bf16.mxu0 %v513
  %1195 = vmatmul.mubr.bf16.gmra.mxu0 %v512
  %v1196 = vpop.f32.mrf.mxu0
  %v1197 = vadd.f32 %v1100, %v1196
  %v1198 = vpop.f32.mrf.mxu0
  %v1199 = vpop.f32.mrf.mxu0
  %v1200 = vadd.f32 %v1103, %v1199
  %v1201 = vpop.f32.mrf.mxu0
  %1202 = vdwg.mxu0
  %1203 = vmatprep.subr.bf16.mxu0 0
  %1204 = vmatpush1.bf16.msra.mxu0 0
  %1205 = vmatprep.subr.bf16.mxu0 0
  %1206 = vmatpush1.bf16.msra.mxu0 0
  %1207 = vmatprep.subr.bf16.mxu0 0
  %1208 = vmatpush1.bf16.msra.mxu0 %v832
  %1209 = vmatprep.subr.bf16.mxu0 0
  %1210 = vmatpush1.bf16.msra.mxu0 %v831
  %1211 = vmatprep.subr.bf16.mxu0 0
  %1212 = vmatpush1.bf16.msra.mxu0 %v830
  %1213 = vmatprep.subr.bf16.mxu0 0
  %1214 = vmatpush1.bf16.msra.mxu0 %v829
  %1215 = vmatprep.subr.bf16.mxu0 0
  %1216 = vmatpush1.bf16.msra.mxu0 %v828
  %1217 = vmatprep.subr.bf16.mxu0 0
  %1218 = vmatpush1.bf16.msra.mxu0 %v827
  %1219 = vmatprep.subr.bf16.mxu0 0
  %1220 = vmatpush2.bf16.msra.mxu0 0
  %1221 = vmatprep.subr.bf16.mxu0 0
  %1222 = vmatpush2.bf16.msra.mxu0 0
  %1223 = vmatprep.subr.bf16.mxu0 0
  %1224 = vmatpush2.bf16.msra.mxu0 0
  %1225 = vmatprep.subr.bf16.mxu0 0
  %1226 = vmatpush2.bf16.msra.mxu0 0
  %1227 = vmatprep.subr.bf16.mxu0 0
  %1228 = vmatpush2.bf16.msra.mxu0 0
  %1229 = vmatprep.subr.bf16.mxu0 0
  %1230 = vmatpush2.bf16.msra.mxu0 0
  %1231 = vmatprep.subr.bf16.mxu0 0
  %1232 = vmatpush2.bf16.msra.mxu0 0
  %1233 = vmatprep.subr.bf16.mxu0 0
  %1234 = vmatpush2.bf16.msra.mxu0 0
  %1235 = vmatprep.mubr.bf16.mxu0 0
  %1236 = vmatmul.mubr.bf16.gmra.mxu0 %v889
  %v1237 = vpop.f32.mrf.mxu0
  %v1238 = vadd.f32 %v1141, %v1237
  %v1239 = vpop.f32.mrf.mxu0
  %v1240 = vpop.f32.mrf.mxu0
  %v1241 = vadd.f32 %v1144, %v1240
  %v1242 = vpop.f32.mrf.mxu0
  %1243 = vmatprep.mubr.bf16.mxu0 0
  %1244 = vmatmul.mubr.bf16.gmra.mxu0 %v892
  %v1245 = vpop.f32.mrf.mxu0
  %v1246 = vadd.f32 %v1149, %v1245
  %v1247 = vpop.f32.mrf.mxu0
  %v1248 = vpop.f32.mrf.mxu0
  %v1249 = vadd.f32 %v1152, %v1248
  %v1250 = vpop.f32.mrf.mxu0
  %1251 = vmatprep.mubr.bf16.mxu0 0
  %1252 = vmatmul.mubr.bf16.gmra.mxu0 %v895
  %v1253 = vpop.f32.mrf.mxu0
  %v1254 = vadd.f32 %v1157, %v1253
  %v1255 = vpop.f32.mrf.mxu0
  %v1256 = vpop.f32.mrf.mxu0
  %v1257 = vadd.f32 %v1160, %v1256
  %v1258 = vpop.f32.mrf.mxu0
  %1259 = vmatprep.mubr.bf16.mxu0 0
  %1260 = vmatmul.mubr.bf16.gmra.mxu0 %v898
  %v1261 = vpop.f32.mrf.mxu0
  %v1262 = vadd.f32 %v1165, %v1261
  %v1263 = vpop.f32.mrf.mxu0
  %v1264 = vpop.f32.mrf.mxu0
  %v1265 = vadd.f32 %v1168, %v1264
  %v1266 = vpop.f32.mrf.mxu0
  %1267 = vmatprep.mubr.bf16.mxu0 0
  %1268 = vmatmul.mubr.bf16.gmra.mxu0 %v901
  %v1269 = vpop.f32.mrf.mxu0
  %v1270 = vadd.f32 %v1173, %v1269
  %v1271 = vpop.f32.mrf.mxu0
  %v1272 = vpop.f32.mrf.mxu0
  %v1273 = vadd.f32 %v1176, %v1272
  %v1274 = vpop.f32.mrf.mxu0
  %1275 = vmatprep.mubr.bf16.mxu0 0
  %1276 = vmatmul.mubr.bf16.gmra.mxu0 %v904
  %v1277 = vpop.f32.mrf.mxu0
  %v1278 = vadd.f32 %v1181, %v1277
  %v1279 = vpop.f32.mrf.mxu0
  %v1280 = vpop.f32.mrf.mxu0
  %v1281 = vadd.f32 %v1184, %v1280
  %v1282 = vpop.f32.mrf.mxu0
  %1283 = vmatprep.mubr.bf16.mxu0 0
  %1284 = vmatmul.mubr.bf16.gmra.mxu0 %v907
  %v1285 = vpop.f32.mrf.mxu0
  %v1286 = vadd.f32 %v1189, %v1285
  %v1287 = vpop.f32.mrf.mxu0
  %v1288 = vpop.f32.mrf.mxu0
  %v1289 = vadd.f32 %v1192, %v1288
  %v1290 = vpop.f32.mrf.mxu0
  %1291 = vmatprep.mubr.bf16.mxu0 0
  %1292 = vmatmul.mubr.bf16.gmra.mxu0 %v910
  %v1293 = vpop.f32.mrf.mxu0
  %v1294 = vadd.f32 %v1197, %v1293
  %v1295 = vpop.f32.mrf.mxu0
  %v1296 = vpop.f32.mrf.mxu0
  %v1297 = vadd.f32 %v1200, %v1296
  %v1298 = vpop.f32.mrf.mxu0
  %1299 = vdwg.mxu0
  %v1300 = vmax.f32 %v1238, 0.0
  %v1301 = vmax.f32 %v1241, 0.0
  %v1302 = vmax.f32 %v1246, 0.0
  %v1303 = vmax.f32 %v1249, 0.0
  %v1304 = vmax.f32 %v1254, 0.0
  %v1305 = vmax.f32 %v1257, 0.0
  %v1306 = vmax.f32 %v1262, 0.0
  %v1307 = vmax.f32 %v1265, 0.0
  %v1308 = vmax.f32 %v1270, 0.0
  %v1309 = vmax.f32 %v1273, 0.0
  %v1310 = vmax.f32 %v1278, 0.0
  %v1311 = vmax.f32 %v1281, 0.0
  %v1312 = vmax.f32 %v1286, 0.0
  %v1313 = vmax.f32 %v1289, 0.0
  %v1314 = vmax.f32 %v1294, 0.0
  %v1315 = vmax.f32 %v1297, 0.0
  %vm1316 = vcmask 64512
  %1317 = vst.msk [vmem:[%s3] sm:$0xff] %vm1316, %v1300
  %1318 = vst.msk [vmem:[%s3 + $0x8] sm:$0xff] %vm1316, %v1301
  %1319 = vst.msk [vmem:[%s3 + $0x10] sm:$0xff] %vm1316, %v1302
  %1320 = vst.msk [vmem:[%s3 + $0x18] sm:$0xff] %vm1316, %v1303
  %1321 = vst.msk [vmem:[%s3 + $0x20] sm:$0xff] %vm1316, %v1304
  %1322 = vst.msk [vmem:[%s3 + $0x28] sm:$0xff] %vm1316, %v1305
  %1323 = vst.msk [vmem:[%s3 + $0x30] sm:$0xff] %vm1316, %v1306
  %1324 = vst.msk [vmem:[%s3 + $0x38] sm:$0xff] %vm1316, %v1307
  %1325 = vst.msk [vmem:[%s3 + $0x40] sm:$0xff] %vm1316, %v1308
  %1326 = vst.msk [vmem:[%s3 + $0x48] sm:$0xff] %vm1316, %v1309
  %1327 = vst.msk [vmem:[%s3 + $0x50] sm:$0xff] %vm1316, %v1310
  %1328 = vst.msk [vmem:[%s3 + $0x58] sm:$0xff] %vm1316, %v1311
  %1329 = vst.msk [vmem:[%s3 + $0x60] sm:$0xff] %vm1316, %v1312
  %1330 = vst.msk [vmem:[%s3 + $0x68] sm:$0xff] %vm1316, %v1313
  %1331 = vst.msk [vmem:[%s3 + $0x70] sm:$0xff] %vm1316, %v1314
  %1332 = vst.msk [vmem:[%s3 + $0x78] sm:$0xff] %vm1316, %v1315
  // Predicated region
  $region14: #{tsrvfd_forward.27} parent=0 // pred_check
    _
  $region15: #{tsrvfd_forward.27} parent=0 // pred_check_branch
    %1334 = sbr.rel (0) target = $region17
  $region16: #{tsrvfd_forward.27} parent=0 // pred_region
    _
  $region17: #{tsrvfd_forward.27} parent=0 // pred_fallthru
    _
  // Predicated region
  $region18: #{tsrvfd_forward.27} parent=0 // pred_check
    _
  $region19: #{tsrvfd_forward.27} parent=0 // pred_check_branch
    %1336 = sbr.rel (0) target = $region21
  $region20: #{tsrvfd_forward.27} parent=0 // pred_region
    _
  $region21: #{tsrvfd_forward.27} parent=0 // pred_fallthru
    _

// kernel: tsrvfd_forward.28
$region0: #{tsrvfd_forward.28}
  #allocation0 [shape = 'u32[]', space=smem, size = 0x4, offset = 0x4, fixed_abs, tag = 'smem constant byte address 0x4 - core index']
  #allocation1 [shape = 'u32[144,128]{1,0:T(1,128)}', space=vmem, size = 0x12000, scoped, tag = 'internal scratch']
  %s0 = inlined_call_operand.vmem [shape: bf16[16,864], index: 0, kind: input, shape index: {}]
  %s1 = inlined_call_operand.vmem [shape: bf16[864,64], index: 1, kind: input, shape index: {}]
  %s2 = inlined_call_operand.vmem [shape: f32[16,1], index: 2, kind: input, shape index: {}]
  %s3 = inlined_call_operand.vmem [shape: f32[16,64], index: 3, kind: output, shape index: {}]
  %s4 = sld [smem:[#allocation0]]
  $region22: #{tsrvfd_forward.28} parent=0
    _
  %s6 = ssub.s32 1, %s4
  %s7 = scalar_select 0, %s6, %s4
  // Predicated region
  $region2: #{tsrvfd_forward.28} parent=0 // pred_check
    _
  $region3: #{tsrvfd_forward.28} parent=0 // pred_check_branch
    %9 = sbr.rel (0) target = $region5
  $region4: #{tsrvfd_forward.28} parent=0 // pred_region
    _
  $region5: #{tsrvfd_forward.28} parent=0 // pred_fallthru
    _
  // Predicated region
  $region6: #{tsrvfd_forward.28} parent=0 // pred_check
    _
  $region7: #{tsrvfd_forward.28} parent=0 // pred_check_branch
    %11 = sbr.rel (0) target = $region9
  $region8: #{tsrvfd_forward.28} parent=0 // pred_region
    _
  $region9: #{tsrvfd_forward.28} parent=0 // pred_fallthru
    _
  // Predicated region
  $region10: #{tsrvfd_forward.28} parent=0 // pred_check
    _
  $region11: #{tsrvfd_forward.28} parent=0 // pred_check_branch
    %13 = sbr.rel (0) target = $region13
  $region12: #{tsrvfd_forward.28} parent=0 // pred_region
    _
  $region13: #{tsrvfd_forward.28} parent=0 // pred_fallthru
    _
  %v15 = vld [vmem:[%s0] sm:$0xff]
  %v16 = vld [vmem:[%s0 + $0x8] sm:$0xff]
  %v17 = vld [vmem:[%s0 + $0x10] sm:$0xff]
  %v18 = vld [vmem:[%s0 + $0x18] sm:$0xf]
  %v19 = vld [vmem:[%s0 + $0x1c] sm:$0xff]
  %v20 = vld [vmem:[%s0 + $0x24] sm:$0xff]
  %v21 = vld [vmem:[%s0 + $0x2c] sm:$0xff]
  %v22 = vld [vmem:[%s0 + $0x34] sm:$0xf]
  %v23 = vld [vmem:[%s1] sm:$0xf]
  %v24 = vld [vmem:[%s1 + $0x4] sm:$0xf]
  %v25 = vld [vmem:[%s1 + $0x8] sm:$0xf]
  %v26 = vld [vmem:[%s1 + $0xc] sm:$0xf]
  %v27 = vld [vmem:[%s1 + $0x10] sm:$0xf]
  %v28 = vld [vmem:[%s1 + $0x14] sm:$0xf]
  %v29 = vld [vmem:[%s1 + $0x18] sm:$0xf]
  %v30 = vld [vmem:[%s1 + $0x1c] sm:$0xf]
  %v31 = vld [vmem:[%s1 + $0x20] sm:$0xf]
  %v32 = vld [vmem:[%s1 + $0x24] sm:$0xf]
  %v33 = vld [vmem:[%s1 + $0x28] sm:$0xf]
  %v34 = vld [vmem:[%s1 + $0x2c] sm:$0xf]
  %v35 = vld [vmem:[%s1 + $0x30] sm:$0xf]
  %v36 = vld [vmem:[%s1 + $0x34] sm:$0xf]
  %v37 = vld [vmem:[%s1 + $0x38] sm:$0xf]
  %v38 = vld [vmem:[%s1 + $0x3c] sm:$0xf]
  %v39 = vld [vmem:[%s1 + $0x40] sm:$0xf]
  %v40 = vld [vmem:[%s1 + $0x44] sm:$0xf]
  %v41 = vld [vmem:[%s1 + $0x48] sm:$0xf]
  %v42 = vld [vmem:[%s1 + $0x4c] sm:$0xf]
  %v43 = vld [vmem:[%s1 + $0x50] sm:$0xf]
  %v44 = vld [vmem:[%s1 + $0x54] sm:$0xf]
  %v45 = vld [vmem:[%s1 + $0x58] sm:$0xf]
  %v46 = vld [vmem:[%s1 + $0x5c] sm:$0xf]
  %v47 = vld [vmem:[%s1 + $0x60] sm:$0xf]
  %v48 = vld [vmem:[%s1 + $0x64] sm:$0xf]
  %v49 = vld [vmem:[%s1 + $0x68] sm:$0xf]
  %v50 = vld [vmem:[%s1 + $0x6c] sm:$0xf]
  %v51 = vld [vmem:[%s1 + $0x70] sm:$0xf]
  %v52 = vld [vmem:[%s1 + $0x74] sm:$0xf]
  %v53 = vld [vmem:[%s1 + $0x78] sm:$0xf]
  %v54 = vld [vmem:[%s1 + $0x7c] sm:$0xf]
  %v55 = vld [vmem:[%s1 + $0x80] sm:$0xf]
  %v56 = vld [vmem:[%s1 + $0x84] sm:$0xf]
  %v57 = vld [vmem:[%s1 + $0x88] sm:$0xf]
  %v58 = vld [vmem:[%s1 + $0x8c] sm:$0xf]
  %v59 = vld [vmem:[%s1 + $0x90] sm:$0xf]
  %v60 = vld [vmem:[%s1 + $0x94] sm:$0xf]
  %v61 = vld [vmem:[%s1 + $0x98] sm:$0xf]
  %v62 = vld [vmem:[%s1 + $0x9c] sm:$0xf]
  %v63 = vld [vmem:[%s1 + $0xa0] sm:$0xf]
  %v64 = vld [vmem:[%s1 + $0xa4] sm:$0xf]
  %v65 = vld [vmem:[%s1 + $0xa8] sm:$0xf]
  %v66 = vld [vmem:[%s1 + $0xac] sm:$0xf]
  %v67 = vld [vmem:[%s1 + $0xb0] sm:$0xf]
  %v68 = vld [vmem:[%s1 + $0xb4] sm:$0xf]
  %v69 = vld [vmem:[%s1 + $0xb8] sm:$0xf]
  %v70 = vld [vmem:[%s1 + $0xbc] sm:$0xf]
  %v71 = vld [vmem:[%s1 + $0xc0] sm:$0xf]
  %v72 = vld [vmem:[%s1 + $0xc4] sm:$0xf]
  %v73 = vld [vmem:[%s1 + $0xc8] sm:$0xf]
  %v74 = vld [vmem:[%s1 + $0xcc] sm:$0xf]
  %v75 = vld [vmem:[%s1 + $0xd0] sm:$0xf]
  %v76 = vld [vmem:[%s1 + $0xd4] sm:$0xf]
  %v77 = vld [vmem:[%s1 + $0xd8] sm:$0xf]
  %v78 = vld [vmem:[%s1 + $0xdc] sm:$0xf]
  %v79 = vld [vmem:[%s1 + $0xe0] sm:$0xf]
  %v80 = vld [vmem:[%s1 + $0xe4] sm:$0xf]
  %v81 = vld [vmem:[%s1 + $0xe8] sm:$0xf]
  %v82 = vld [vmem:[%s1 + $0xec] sm:$0xf]
  %v83 = vld [vmem:[%s1 + $0xf0] sm:$0xf]
  %v84 = vld [vmem:[%s1 + $0xf4] sm:$0xf]
  %v85 = vld [vmem:[%s1 + $0xf8] sm:$0xf]
  %v86 = vld [vmem:[%s1 + $0xfc] sm:$0xf]
  %v87 = vld [vmem:[%s1 + $0x100] sm:$0xf]
  %v88 = vld [vmem:[%s1 + $0x104] sm:$0xf]
  %v89 = vld [vmem:[%s1 + $0x108] sm:$0xf]
  %v90 = vld [vmem:[%s1 + $0x10c] sm:$0xf]
  %v91 = vld [vmem:[%s1 + $0x110] sm:$0xf]
  %v92 = vld [vmem:[%s1 + $0x114] sm:$0xf]
  %v93 = vld [vmem:[%s1 + $0x118] sm:$0xf]
  %v94 = vld [vmem:[%s1 + $0x11c] sm:$0xf]
  %v95 = vld [vmem:[%s1 + $0x120] sm:$0xf]
  %v96 = vld [vmem:[%s1 + $0x124] sm:$0xf]
  %v97 = vld [vmem:[%s1 + $0x128] sm:$0xf]
  %v98 = vld [vmem:[%s1 + $0x12c] sm:$0xf]
  %v99 = vld [vmem:[%s1 + $0x130] sm:$0xf]
  %v100 = vld [vmem:[%s1 + $0x134] sm:$0xf]
  %v101 = vld [vmem:[%s1 + $0x138] sm:$0xf]
  %v102 = vld [vmem:[%s1 + $0x13c] sm:$0xf]
  %v103 = vld [vmem:[%s1 + $0x140] sm:$0xf]
  %v104 = vld [vmem:[%s1 + $0x144] sm:$0xf]
  %v105 = vld [vmem:[%s1 + $0x148] sm:$0xf]
  %v106 = vld [vmem:[%s1 + $0x14c] sm:$0xf]
  %v107 = vld [vmem:[%s1 + $0x150] sm:$0xf]
  %v108 = vld [vmem:[%s1 + $0x154] sm:$0xf]
  %v109 = vld [vmem:[%s1 + $0x158] sm:$0xf]
  %v110 = vld [vmem:[%s1 + $0x15c] sm:$0xf]
  %v111 = vld [vmem:[%s1 + $0x160] sm:$0xf]
  %v112 = vld [vmem:[%s1 + $0x164] sm:$0xf]
  %v113 = vld [vmem:[%s1 + $0x168] sm:$0xf]
  %v114 = vld [vmem:[%s1 + $0x16c] sm:$0xf]
  %v115 = vld [vmem:[%s1 + $0x170] sm:$0xf]
  %v116 = vld [vmem:[%s1 + $0x174] sm:$0xf]
  %v117 = vld [vmem:[%s1 + $0x178] sm:$0xf]
  %v118 = vld [vmem:[%s1 + $0x17c] sm:$0xf]
  %v119 = vld [vmem:[%s1 + $0x180] sm:$0xf]
  %v120 = vld [vmem:[%s1 + $0x184] sm:$0xf]
  %v121 = vld [vmem:[%s1 + $0x188] sm:$0xf]
  %v122 = vld [vmem:[%s1 + $0x18c] sm:$0xf]
  %v123 = vld [vmem:[%s1 + $0x190] sm:$0xf]
  %v124 = vld [vmem:[%s1 + $0x194] sm:$0xf]
  %v125 = vld [vmem:[%s1 + $0x198] sm:$0xf]
  %v126 = vld [vmem:[%s1 + $0x19c] sm:$0xf]
  %v127 = vld [vmem:[%s1 + $0x1a0] sm:$0xf]
  %v128 = vld [vmem:[%s1 + $0x1a4] sm:$0xf]
  %v129 = vld [vmem:[%s1 + $0x1a8] sm:$0xf]
  %v130 = vld [vmem:[%s1 + $0x1ac] sm:$0xf]
  %v131 = vld [vmem:[%s2] sm:$0xff]
  %v132 = vld [vmem:[%s2 + $0x8] sm:$0xff]
  %134 = vset.pattern.permute.xlu0 0
  %135 = vperm.xlu0 %134, %v131
  %v136 = vpop.permute.xlu0 %135
  %139 = vset.pattern.permute.xlu0 0
  %140 = vperm.xlu0 %139, %v132
  %v141 = vpop.permute.xlu0 %140
  %v151 = vunpack.c.l.b16 %v15
  %v152 = vunpack.c.h.b16 %v15
  %v153 = vunpack.c.l.b16 %v16
  %v154 = vunpack.c.h.b16 %v16
  %v155 = vunpack.c.l.b16 %v17
  %v156 = vunpack.c.h.b16 %v17
  %v157 = vunpack.c.l.b16 %v18
  %v158 = vunpack.c.l.b16 %v19
  %v159 = vunpack.c.h.b16 %v19
  %v160 = vunpack.c.l.b16 %v20
  %v161 = vunpack.c.h.b16 %v20
  %v162 = vunpack.c.l.b16 %v21
  %v163 = vunpack.c.h.b16 %v21
  %v164 = vunpack.c.l.b16 %v22
  %v165 = vpack.c.b16 %v158, %v151
  %v166 = vpack.c.b16 %v159, %v152
  %v167 = vpack.c.b16 %v160, %v153
  %v168 = vpack.c.b16 %v161, %v154
  %v169 = vpack.c.b16 %v162, %v155
  %v170 = vpack.c.b16 %v163, %v156
  %v171 = vpack.c.b16 %v164, %v157
  %v286 = vunpack.c.l.b16 %v23
  %v287 = vunpack.c.l.b16 %v24
  %v288 = vunpack.c.l.b16 %v25
  %v289 = vunpack.c.l.b16 %v26
  %v290 = vunpack.c.l.b16 %v27
  %v291 = vunpack.c.l.b16 %v28
  %v292 = vunpack.c.l.b16 %v29
  %v293 = vunpack.c.l.b16 %v30
  %v294 = vunpack.c.l.b16 %v31
  %v295 = vunpack.c.l.b16 %v32
  %v296 = vunpack.c.l.b16 %v33
  %v297 = vunpack.c.l.b16 %v34
  %v298 = vunpack.c.l.b16 %v35
  %v299 = vunpack.c.l.b16 %v36
  %v300 = vunpack.c.l.b16 %v37
  %v301 = vunpack.c.l.b16 %v38
  %v302 = vunpack.c.l.b16 %v39
  %v303 = vunpack.c.l.b16 %v40
  %v304 = vunpack.c.l.b16 %v41
  %v305 = vunpack.c.l.b16 %v42
  %v306 = vunpack.c.l.b16 %v43
  %v307 = vunpack.c.l.b16 %v44
  %v308 = vunpack.c.l.b16 %v45
  %v309 = vunpack.c.l.b16 %v46
  %v310 = vunpack.c.l.b16 %v47
  %v311 = vunpack.c.l.b16 %v48
  %v312 = vunpack.c.l.b16 %v49
  %v313 = vunpack.c.l.b16 %v50
  %v314 = vunpack.c.l.b16 %v51
  %v315 = vunpack.c.l.b16 %v52
  %v316 = vunpack.c.l.b16 %v53
  %v317 = vunpack.c.l.b16 %v54
  %v318 = vunpack.c.l.b16 %v55
  %v319 = vunpack.c.l.b16 %v56
  %v320 = vunpack.c.l.b16 %v57
  %v321 = vunpack.c.l.b16 %v58
  %v322 = vunpack.c.l.b16 %v59
  %v323 = vunpack.c.l.b16 %v60
  %v324 = vunpack.c.l.b16 %v61
  %v325 = vunpack.c.l.b16 %v62
  %v326 = vunpack.c.l.b16 %v63
  %v327 = vunpack.c.l.b16 %v64
  %v328 = vunpack.c.l.b16 %v65
  %v329 = vunpack.c.l.b16 %v66
  %v330 = vunpack.c.l.b16 %v67
  %v331 = vunpack.c.l.b16 %v68
  %v332 = vunpack.c.l.b16 %v69
  %v333 = vunpack.c.l.b16 %v70
  %v334 = vunpack.c.l.b16 %v71
  %v335 = vunpack.c.l.b16 %v72
  %v336 = vunpack.c.l.b16 %v73
  %v337 = vunpack.c.l.b16 %v74
  %v338 = vunpack.c.l.b16 %v75
  %v339 = vunpack.c.l.b16 %v76
  %v340 = vunpack.c.l.b16 %v77
  %v341 = vunpack.c.l.b16 %v78
  %v342 = vunpack.c.l.b16 %v79
  %v343 = vunpack.c.l.b16 %v80
  %v344 = vunpack.c.l.b16 %v81
  %v345 = vunpack.c.l.b16 %v82
  %v346 = vunpack.c.l.b16 %v83
  %v347 = vunpack.c.l.b16 %v84
  %v348 = vunpack.c.l.b16 %v85
  %v349 = vunpack.c.l.b16 %v86
  %v350 = vunpack.c.l.b16 %v87
  %v351 = vunpack.c.l.b16 %v88
  %v352 = vunpack.c.l.b16 %v89
  %v353 = vunpack.c.l.b16 %v90
  %v354 = vunpack.c.l.b16 %v91
  %v355 = vunpack.c.l.b16 %v92
  %v356 = vunpack.c.l.b16 %v93
  %v357 = vunpack.c.l.b16 %v94
  %v358 = vunpack.c.l.b16 %v95
  %v359 = vunpack.c.l.b16 %v96
  %v360 = vunpack.c.l.b16 %v97
  %v361 = vunpack.c.l.b16 %v98
  %v362 = vunpack.c.l.b16 %v99
  %v363 = vunpack.c.l.b16 %v100
  %v364 = vunpack.c.l.b16 %v101
  %v365 = vunpack.c.l.b16 %v102
  %v366 = vunpack.c.l.b16 %v103
  %v367 = vunpack.c.l.b16 %v104
  %v368 = vunpack.c.l.b16 %v105
  %v369 = vunpack.c.l.b16 %v106
  %v370 = vunpack.c.l.b16 %v107
  %v371 = vunpack.c.l.b16 %v108
  %v372 = vunpack.c.l.b16 %v109
  %v373 = vunpack.c.l.b16 %v110
  %v374 = vunpack.c.l.b16 %v111
  %v375 = vunpack.c.l.b16 %v112
  %v376 = vunpack.c.l.b16 %v113
  %v377 = vunpack.c.l.b16 %v114
  %v378 = vunpack.c.l.b16 %v115
  %v379 = vunpack.c.l.b16 %v116
  %v380 = vunpack.c.l.b16 %v117
  %v381 = vunpack.c.l.b16 %v118
  %v382 = vunpack.c.l.b16 %v119
  %v383 = vunpack.c.l.b16 %v120
  %v384 = vunpack.c.l.b16 %v121
  %v385 = vunpack.c.l.b16 %v122
  %v386 = vunpack.c.l.b16 %v123
  %v387 = vunpack.c.l.b16 %v124
  %v388 = vunpack.c.l.b16 %v125
  %v389 = vunpack.c.l.b16 %v126
  %v390 = vunpack.c.l.b16 %v127
  %v391 = vunpack.c.l.b16 %v128
  %v392 = vunpack.c.l.b16 %v129
  %v393 = vunpack.c.l.b16 %v130
  %v394 = vpack.c.b16 %v287, %v286
  %v395 = vpack.c.b16 %v289, %v288
  %v396 = vpack.c.b16 %v291, %v290
  %v397 = vpack.c.b16 %v293, %v292
  %v398 = vpack.c.b16 %v295, %v294
  %v399 = vpack.c.b16 %v297, %v296
  %v400 = vpack.c.b16 %v299, %v298
  %v401 = vpack.c.b16 %v301, %v300
  %v402 = vpack.c.b16 %v303, %v302
  %v403 = vpack.c.b16 %v305, %v304
  %v404 = vpack.c.b16 %v307, %v306
  %v405 = vpack.c.b16 %v309, %v308
  %v406 = vpack.c.b16 %v311, %v310
  %v407 = vpack.c.b16 %v313, %v312
  %v408 = vpack.c.b16 %v315, %v314
  %v409 = vpack.c.b16 %v317, %v316
  %v410 = vpack.c.b16 %v319, %v318
  %v411 = vpack.c.b16 %v321, %v320
  %v412 = vpack.c.b16 %v323, %v322
  %v413 = vpack.c.b16 %v325, %v324
  %v414 = vpack.c.b16 %v327, %v326
  %v415 = vpack.c.b16 %v329, %v328
  %v416 = vpack.c.b16 %v331, %v330
  %v417 = vpack.c.b16 %v333, %v332
  %v418 = vpack.c.b16 %v335, %v334
  %v419 = vpack.c.b16 %v337, %v336
  %v420 = vpack.c.b16 %v339, %v338
  %v421 = vpack.c.b16 %v341, %v340
  %v422 = vpack.c.b16 %v343, %v342
  %v423 = vpack.c.b16 %v345, %v344
  %v424 = vpack.c.b16 %v347, %v346
  %v425 = vpack.c.b16 %v349, %v348
  %v426 = vpack.c.b16 %v351, %v350
  %v427 = vpack.c.b16 %v353, %v352
  %v428 = vpack.c.b16 %v355, %v354
  %v429 = vpack.c.b16 %v357, %v356
  %v430 = vpack.c.b16 %v359, %v358
  %v431 = vpack.c.b16 %v361, %v360
  %v432 = vpack.c.b16 %v363, %v362
  %v433 = vpack.c.b16 %v365, %v364
  %v434 = vpack.c.b16 %v367, %v366
  %v435 = vpack.c.b16 %v369, %v368
  %v436 = vpack.c.b16 %v371, %v370
  %v437 = vpack.c.b16 %v373, %v372
  %v438 = vpack.c.b16 %v375, %v374
  %v439 = vpack.c.b16 %v377, %v376
  %v440 = vpack.c.b16 %v379, %v378
  %v441 = vpack.c.b16 %v381, %v380
  %v442 = vpack.c.b16 %v383, %v382
  %v443 = vpack.c.b16 %v385, %v384
  %v444 = vpack.c.b16 %v387, %v386
  %v445 = vpack.c.b16 %v389, %v388
  %v446 = vpack.c.b16 %v391, %v390
  %v447 = vpack.c.b16 %v393, %v392
  %vm502 = vcmask 785408
  %v504 = vsel %vm502, %v171, 0
  %506 = vmatprep.subr.bf16.mxu0 0
  %507 = vmatpush1.bf16.msra.mxu0 %v401
  %508 = vmatprep.subr.bf16.mxu0 0
  %509 = vmatpush1.bf16.msra.mxu0 %v400
  %510 = vmatprep.subr.bf16.mxu0 0
  %511 = vmatpush1.bf16.msra.mxu0 %v399
  %512 = vmatprep.subr.bf16.mxu0 0
  %513 = vmatpush1.bf16.msra.mxu0 %v398
  %514 = vmatprep.subr.bf16.mxu0 0
  %515 = vmatpush1.bf16.msra.mxu0 %v397
  %516 = vmatprep.subr.bf16.mxu0 0
  %517 = vmatpush1.bf16.msra.mxu0 %v396
  %518 = vmatprep.subr.bf16.mxu0 0
  %519 = vmatpush1.bf16.msra.mxu0 %v395
  %520 = vmatprep.subr.bf16.mxu0 0
  %521 = vmatpush1.bf16.msra.mxu0 %v394
  %522 = vmatprep.subr.bf16.mxu0 0
  %523 = vmatpush2.bf16.msra.mxu0 %v409
  %524 = vmatprep.subr.bf16.mxu0 0
  %525 = vmatpush2.bf16.msra.mxu0 %v408
  %526 = vmatprep.subr.bf16.mxu0 0
  %527 = vmatpush2.bf16.msra.mxu0 %v407
  %528 = vmatprep.subr.bf16.mxu0 0
  %529 = vmatpush2.bf16.msra.mxu0 %v406
  %530 = vmatprep.subr.bf16.mxu0 0
  %531 = vmatpush2.bf16.msra.mxu0 %v405
  %532 = vmatprep.subr.bf16.mxu0 0
  %533 = vmatpush2.bf16.msra.mxu0 %v404
  %534 = vmatprep.subr.bf16.mxu0 0
  %535 = vmatpush2.bf16.msra.mxu0 %v403
  %536 = vmatprep.subr.bf16.mxu0 0
  %537 = vmatpush2.bf16.msra.mxu0 %v402
  %538 = vmatprep.mubr.bf16.mxu0 %v166
  %539 = vmatmul.mubr.bf16.gmra.mxu0 %v165
  %v540 = vpop.f32.mrf.mxu0
  %v541 = vadd.f32 %v136, %v540
  %v542 = vpop.f32.mrf.mxu0
  %v543 = vpop.f32.mrf.mxu0
  %v544 = vadd.f32 %v141, %v543
  %v545 = vpop.f32.mrf.mxu0
  %546 = vdwg.mxu0
  %547 = vmatprep.subr.bf16.mxu0 0
  %548 = vmatpush1.bf16.msra.mxu0 %v417
  %549 = vmatprep.subr.bf16.mxu0 0
  %550 = vmatpush1.bf16.msra.mxu0 %v416
  %551 = vmatprep.subr.bf16.mxu0 0
  %552 = vmatpush1.bf16.msra.mxu0 %v415
  %553 = vmatprep.subr.bf16.mxu0 0
  %554 = vmatpush1.bf16.msra.mxu0 %v414
  %555 = vmatprep.subr.bf16.mxu0 0
  %556 = vmatpush1.bf16.msra.mxu0 %v413
  %557 = vmatprep.subr.bf16.mxu0 0
  %558 = vmatpush1.bf16.msra.mxu0 %v412
  %559 = vmatprep.subr.bf16.mxu0 0
  %560 = vmatpush1.bf16.msra.mxu0 %v411
  %561 = vmatprep.subr.bf16.mxu0 0
  %562 = vmatpush1.bf16.msra.mxu0 %v410
  %563 = vmatprep.subr.bf16.mxu0 0
  %564 = vmatpush2.bf16.msra.mxu0 %v425
  %565 = vmatprep.subr.bf16.mxu0 0
  %566 = vmatpush2.bf16.msra.mxu0 %v424
  %567 = vmatprep.subr.bf16.mxu0 0
  %568 = vmatpush2.bf16.msra.mxu0 %v423
  %569 = vmatprep.subr.bf16.mxu0 0
  %570 = vmatpush2.bf16.msra.mxu0 %v422
  %571 = vmatprep.subr.bf16.mxu0 0
  %572 = vmatpush2.bf16.msra.mxu0 %v421
  %573 = vmatprep.subr.bf16.mxu0 0
  %574 = vmatpush2.bf16.msra.mxu0 %v420
  %575 = vmatprep.subr.bf16.mxu0 0
  %576 = vmatpush2.bf16.msra.mxu0 %v419
  %577 = vmatprep.subr.bf16.mxu0 0
  %578 = vmatpush2.bf16.msra.mxu0 %v418
  %579 = vmatprep.mubr.bf16.mxu0 %v168
  %580 = vmatmul.mubr.bf16.gmra.mxu0 %v167
  %v581 = vpop.f32.mrf.mxu0
  %v582 = vadd.f32 %v541, %v581
  %v583 = vpop.f32.mrf.mxu0
  %v584 = vpop.f32.mrf.mxu0
  %v585 = vadd.f32 %v544, %v584
  %v586 = vpop.f32.mrf.mxu0
  %587 = vdwg.mxu0
  %588 = vmatprep.subr.bf16.mxu0 0
  %589 = vmatpush1.bf16.msra.mxu0 %v433
  %590 = vmatprep.subr.bf16.mxu0 0
  %591 = vmatpush1.bf16.msra.mxu0 %v432
  %592 = vmatprep.subr.bf16.mxu0 0
  %593 = vmatpush1.bf16.msra.mxu0 %v431
  %594 = vmatprep.subr.bf16.mxu0 0
  %595 = vmatpush1.bf16.msra.mxu0 %v430
  %596 = vmatprep.subr.bf16.mxu0 0
  %597 = vmatpush1.bf16.msra.mxu0 %v429
  %598 = vmatprep.subr.bf16.mxu0 0
  %599 = vmatpush1.bf16.msra.mxu0 %v428
  %600 = vmatprep.subr.bf16.mxu0 0
  %601 = vmatpush1.bf16.msra.mxu0 %v427
  %602 = vmatprep.subr.bf16.mxu0 0
  %603 = vmatpush1.bf16.msra.mxu0 %v426
  %604 = vmatprep.subr.bf16.mxu0 0
  %605 = vmatpush2.bf16.msra.mxu0 %v441
  %606 = vmatprep.subr.bf16.mxu0 0
  %607 = vmatpush2.bf16.msra.mxu0 %v440
  %608 = vmatprep.subr.bf16.mxu0 0
  %609 = vmatpush2.bf16.msra.mxu0 %v439
  %610 = vmatprep.subr.bf16.mxu0 0
  %611 = vmatpush2.bf16.msra.mxu0 %v438
  %612 = vmatprep.subr.bf16.mxu0 0
  %613 = vmatpush2.bf16.msra.mxu0 %v437
  %614 = vmatprep.subr.bf16.mxu0 0
  %615 = vmatpush2.bf16.msra.mxu0 %v436
  %616 = vmatprep.subr.bf16.mxu0 0
  %617 = vmatpush2.bf16.msra.mxu0 %v435
  %618 = vmatprep.subr.bf16.mxu0 0
  %619 = vmatpush2.bf16.msra.mxu0 %v434
  %620 = vmatprep.mubr.bf16.mxu0 %v170
  %621 = vmatmul.mubr.bf16.gmra.mxu0 %v169
  %v622 = vpop.f32.mrf.mxu0
  %v623 = vadd.f32 %v582, %v622
  %v624 = vpop.f32.mrf.mxu0
  %v625 = vpop.f32.mrf.mxu0
  %v626 = vadd.f32 %v585, %v625
  %v627 = vpop.f32.mrf.mxu0
  %628 = vdwg.mxu0
  %629 = vmatprep.subr.bf16.mxu0 0
  %630 = vmatpush1.bf16.msra.mxu0 0
  %631 = vmatprep.subr.bf16.mxu0 0
  %632 = vmatpush1.bf16.msra.mxu0 0
  %633 = vmatprep.subr.bf16.mxu0 0
  %634 = vmatpush1.bf16.msra.mxu0 %v447
  %635 = vmatprep.subr.bf16.mxu0 0
  %636 = vmatpush1.bf16.msra.mxu0 %v446
  %637 = vmatprep.subr.bf16.mxu0 0
  %638 = vmatpush1.bf16.msra.mxu0 %v445
  %639 = vmatprep.subr.bf16.mxu0 0
  %640 = vmatpush1.bf16.msra.mxu0 %v444
  %641 = vmatprep.subr.bf16.mxu0 0
  %642 = vmatpush1.bf16.msra.mxu0 %v443
  %643 = vmatprep.subr.bf16.mxu0 0
  %644 = vmatpush1.bf16.msra.mxu0 %v442
  %645 = vmatprep.subr.bf16.mxu0 0
  %646 = vmatpush2.bf16.msra.mxu0 0
  %647 = vmatprep.subr.bf16.mxu0 0
  %648 = vmatpush2.bf16.msra.mxu0 0
  %649 = vmatprep.subr.bf16.mxu0 0
  %650 = vmatpush2.bf16.msra.mxu0 0
  %651 = vmatprep.subr.bf16.mxu0 0
  %652 = vmatpush2.bf16.msra.mxu0 0
  %653 = vmatprep.subr.bf16.mxu0 0
  %654 = vmatpush2.bf16.msra.mxu0 0
  %655 = vmatprep.subr.bf16.mxu0 0
  %656 = vmatpush2.bf16.msra.mxu0 0
  %657 = vmatprep.subr.bf16.mxu0 0
  %658 = vmatpush2.bf16.msra.mxu0 0
  %659 = vmatprep.subr.bf16.mxu0 0
  %660 = vmatpush2.bf16.msra.mxu0 0
  %661 = vmatprep.mubr.bf16.mxu0 0
  %662 = vmatmul.mubr.bf16.gmra.mxu0 %v504
  %v663 = vpop.f32.mrf.mxu0
  %v664 = vadd.f32 %v623, %v663
  %v665 = vpop.f32.mrf.mxu0
  %v666 = vpop.f32.mrf.mxu0
  %v667 = vadd.f32 %v626, %v666
  %v668 = vpop.f32.mrf.mxu0
  %669 = vdwg.mxu0
  %v670 = vmax.f32 %v664, 0.0
  %v671 = vmax.f32 %v667, 0.0
  %vm672 = vcmask 523264
  %673 = vst.msk [vmem:[%s3] sm:$0xff] %vm672, %v670
  %674 = vst.msk [vmem:[%s3 + $0x8] sm:$0xff] %vm672, %v671
  // Predicated region
  $region14: #{tsrvfd_forward.28} parent=0 // pred_check
    _
  $region15: #{tsrvfd_forward.28} parent=0 // pred_check_branch
    %676 = sbr.rel (0) target = $region17
  $region16: #{tsrvfd_forward.28} parent=0 // pred_region
    _
  $region17: #{tsrvfd_forward.28} parent=0 // pred_fallthru
    _
  // Predicated region
  $region18: #{tsrvfd_forward.28} parent=0 // pred_check
    _
  $region19: #{tsrvfd_forward.28} parent=0 // pred_check_branch
    %678 = sbr.rel (0) target = $region21
  $region20: #{tsrvfd_forward.28} parent=0 // pred_region
    _
  $region21: #{tsrvfd_forward.28} parent=0 // pred_fallthru
    _

// kernel: tile.53
$region0: #{tile.53}
  #allocation0 [shape = 's32[1]{0}', space=sflag, size = 0x4, scoped, tag = 'scoped memory for tile.53']
  %s0 = inlined_call_operand.vmem [shape: f32[8], index: 0, kind: input, shape index: {}]
  %s1 = inlined_call_operand.vmem [shape: f32[8,8], index: 1, kind: output, shape index: {}]
  // Predicated region
  $region2: #{tile.53} parent=0 // pred_check
    _
  $region3: #{tile.53} parent=0 // pred_check_branch
    %3 = sbr.rel (0) target = $region5
  $region4: #{tile.53} parent=0 // pred_region
    _
  $region5: #{tile.53} parent=0 // pred_fallthru
    _
  %v4 = vld [vmem:[%s0] ss:$0 sm:$0xff]
  %5 = vst [vmem:[%s1] sm:$0xff] %v4

// kernel: tile.4
$region0: #{tile.4}
  %s0 = inlined_call_operand.vmem [shape: f32[8,8], index: 0, kind: input, shape index: {}]
  %s1 = inlined_call_operand.vmem [shape: f32[64,1], index: 1, kind: output, shape index: {}]
  %v2 = vld [vmem:[%s0] sm:$0xff]
  %vm3 = vcmask 7168
  %4 = vst.msk [vmem:[%s1] ss:$8 sm:$0xf] %vm3, %v2
  %5 = vst.msk [vmem:[%s1] ss:$8 sm:$0xf0] %vm3, %v2
  %v6 = vld [vmem:[%s0] sm:$0xff]
  %7 = vrot.lane.b32.xlu0 %v6, 127
  %v8 = vpop.permute.xlu0 %7
  %vm9 = vcmask 7168
  %s10 = scalar_lea.vmem %s1, 1
  %11 = vst.msk [vmem:[%s10] ss:$8 sm:$0xf] %vm9, %v8
  %s12 = scalar_lea.vmem %s1, 1
  %13 = vst.msk [vmem:[%s12] ss:$8 sm:$0xf0] %vm9, %v8
  %v14 = vld [vmem:[%s0] sm:$0xff]
  %15 = vrot.lane.b32.xlu0 %v14, 126
  %v16 = vpop.permute.xlu0 %15
  %vm17 = vcmask 7168
  %s18 = scalar_lea.vmem %s1, 2
  %19 = vst.msk [vmem:[%s18] ss:$8 sm:$0xf] %vm17, %v16
  %s20 = scalar_lea.vmem %s1, 2
  %21 = vst.msk [vmem:[%s20] ss:$8 sm:$0xf0] %vm17, %v16
  %v22 = vld [vmem:[%s0] sm:$0xff]
  %23 = vrot.lane.b32.xlu0 %v22, 125
  %v24 = vpop.permute.xlu0 %23
  %vm25 = vcmask 7168
  %s26 = scalar_lea.vmem %s1, 3
  %27 = vst.msk [vmem:[%s26] ss:$8 sm:$0xf] %vm25, %v24
  %s28 = scalar_lea.vmem %s1, 3
  %29 = vst.msk [vmem:[%s28] ss:$8 sm:$0xf0] %vm25, %v24
  %v30 = vld [vmem:[%s0] sm:$0xff]
  %31 = vrot.lane.b32.xlu0 %v30, 124
  %v32 = vpop.permute.xlu0 %31
  %vm33 = vcmask 7168
  %s34 = scalar_lea.vmem %s1, 4
  %35 = vst.msk [vmem:[%s34] ss:$8 sm:$0xf] %vm33, %v32
  %s36 = scalar_lea.vmem %s1, 4
  %37 = vst.msk [vmem:[%s36] ss:$8 sm:$0xf0] %vm33, %v32
  %v38 = vld [vmem:[%s0] sm:$0xff]
  %39 = vrot.lane.b32.xlu0 %v38, 123
  %v40 = vpop.permute.xlu0 %39
  %vm41 = vcmask 7168
  %s42 = scalar_lea.vmem %s1, 5
  %43 = vst.msk [vmem:[%s42] ss:$8 sm:$0xf] %vm41, %v40
  %s44 = scalar_lea.vmem %s1, 5
  %45 = vst.msk [vmem:[%s44] ss:$8 sm:$0xf0] %vm41, %v40
  %v46 = vld [vmem:[%s0] sm:$0xff]
  %47 = vrot.lane.b32.xlu0 %v46, 122
  %v48 = vpop.permute.xlu0 %47
  %vm49 = vcmask 7168
  %s50 = scalar_lea.vmem %s1, 6
  %51 = vst.msk [vmem:[%s50] ss:$8 sm:$0xf] %vm49, %v48
  %s52 = scalar_lea.vmem %s1, 6
  %53 = vst.msk [vmem:[%s52] ss:$8 sm:$0xf0] %vm49, %v48
  %v54 = vld [vmem:[%s0] sm:$0xff]
  %55 = vrot.lane.b32.xlu0 %v54, 121
  %v56 = vpop.permute.xlu0 %55
  %vm57 = vcmask 7168
  %s58 = scalar_lea.vmem %s1, 7
  %59 = vst.msk [vmem:[%s58] ss:$8 sm:$0xf] %vm57, %v56
  %s60 = scalar_lea.vmem %s1, 7
  %61 = vst.msk [vmem:[%s60] ss:$8 sm:$0xf0] %vm57, %v56

// kernel: tsrvfd_forward.29
$region0: #{tsrvfd_forward.29}
  #allocation0 [shape = 'u32[]', space=smem, size = 0x4, offset = 0x4, fixed_abs, tag = 'smem constant byte address 0x4 - core index']
  #allocation1 [shape = 'u32[144,128]{1,0:T(1,128)}', space=vmem, size = 0x12000, scoped, tag = 'internal scratch']
  %s0 = inlined_call_operand.vmem [shape: bf16[64,432], index: 0, kind: input, shape index: {}]
  %s1 = inlined_call_operand.vmem [shape: bf16[432,64], index: 1, kind: input, shape index: {}]
  %s2 = inlined_call_operand.vmem [shape: f32[64,1], index: 2, kind: input, shape index: {}]
  %s3 = inlined_call_operand.vmem [shape: f32[64,64], index: 3, kind: output, shape index: {}]
  %s4 = sld [smem:[#allocation0]]
  $region22: #{tsrvfd_forward.29} parent=0
    _
  %s6 = ssub.s32 1, %s4
  %s7 = scalar_select 0, %s6, %s4
  // Predicated region
  $region2: #{tsrvfd_forward.29} parent=0 // pred_check
    _
  $region3: #{tsrvfd_forward.29} parent=0 // pred_check_branch
    %9 = sbr.rel (0) target = $region5
  $region4: #{tsrvfd_forward.29} parent=0 // pred_region
    _
  $region5: #{tsrvfd_forward.29} parent=0 // pred_fallthru
    _
  // Predicated region
  $region6: #{tsrvfd_forward.29} parent=0 // pred_check
    _
  $region7: #{tsrvfd_forward.29} parent=0 // pred_check_branch
    %11 = sbr.rel (0) target = $region9
  $region8: #{tsrvfd_forward.29} parent=0 // pred_region
    _
  $region9: #{tsrvfd_forward.29} parent=0 // pred_fallthru
    _
  // Predicated region
  $region10: #{tsrvfd_forward.29} parent=0 // pred_check
    _
  $region11: #{tsrvfd_forward.29} parent=0 // pred_check_branch
    %13 = sbr.rel (0) target = $region13
  $region12: #{tsrvfd_forward.29} parent=0 // pred_region
    _
  $region13: #{tsrvfd_forward.29} parent=0 // pred_fallthru
    _
  %v15 = vld [vmem:[%s0] sm:$0xff]
  %v16 = vld [vmem:[%s0 + $0x8] sm:$0xff]
  %v17 = vld [vmem:[%s0 + $0x10] sm:$0xff]
  %v18 = vld [vmem:[%s0 + $0x18] sm:$0xff]
  %v19 = vld [vmem:[%s0 + $0x20] sm:$0xff]
  %v20 = vld [vmem:[%s0 + $0x28] sm:$0xff]
  %v21 = vld [vmem:[%s0 + $0x30] sm:$0xff]
  %v22 = vld [vmem:[%s0 + $0x38] sm:$0xff]
  %v23 = vld [vmem:[%s0 + $0x40] sm:$0xff]
  %v24 = vld [vmem:[%s0 + $0x48] sm:$0xff]
  %v25 = vld [vmem:[%s0 + $0x50] sm:$0xff]
  %v26 = vld [vmem:[%s0 + $0x58] sm:$0xff]
  %v27 = vld [vmem:[%s0 + $0x60] sm:$0xff]
  %v28 = vld [vmem:[%s0 + $0x68] sm:$0xff]
  %v29 = vld [vmem:[%s0 + $0x70] sm:$0xff]
  %v30 = vld [vmem:[%s0 + $0x78] sm:$0xff]
  %v31 = vld [vmem:[%s1] sm:$0xf]
  %v32 = vld [vmem:[%s1 + $0x4] sm:$0xf]
  %v33 = vld [vmem:[%s1 + $0x8] sm:$0xf]
  %v34 = vld [vmem:[%s1 + $0xc] sm:$0xf]
  %v35 = vld [vmem:[%s1 + $0x10] sm:$0xf]
  %v36 = vld [vmem:[%s1 + $0x14] sm:$0xf]
  %v37 = vld [vmem:[%s1 + $0x18] sm:$0xf]
  %v38 = vld [vmem:[%s1 + $0x1c] sm:$0xf]
  %v39 = vld [vmem:[%s1 + $0x20] sm:$0xf]
  %v40 = vld [vmem:[%s1 + $0x24] sm:$0xf]
  %v41 = vld [vmem:[%s1 + $0x28] sm:$0xf]
  %v42 = vld [vmem:[%s1 + $0x2c] sm:$0xf]
  %v43 = vld [vmem:[%s1 + $0x30] sm:$0xf]
  %v44 = vld [vmem:[%s1 + $0x34] sm:$0xf]
  %v45 = vld [vmem:[%s1 + $0x38] sm:$0xf]
  %v46 = vld [vmem:[%s1 + $0x3c] sm:$0xf]
  %v47 = vld [vmem:[%s1 + $0x40] sm:$0xf]
  %v48 = vld [vmem:[%s1 + $0x44] sm:$0xf]
  %v49 = vld [vmem:[%s1 + $0x48] sm:$0xf]
  %v50 = vld [vmem:[%s1 + $0x4c] sm:$0xf]
  %v51 = vld [vmem:[%s1 + $0x50] sm:$0xf]
  %v52 = vld [vmem:[%s1 + $0x54] sm:$0xf]
  %v53 = vld [vmem:[%s1 + $0x58] sm:$0xf]
  %v54 = vld [vmem:[%s1 + $0x5c] sm:$0xf]
  %v55 = vld [vmem:[%s1 + $0x60] sm:$0xf]
  %v56 = vld [vmem:[%s1 + $0x64] sm:$0xf]
  %v57 = vld [vmem:[%s1 + $0x68] sm:$0xf]
  %v58 = vld [vmem:[%s1 + $0x6c] sm:$0xf]
  %v59 = vld [vmem:[%s1 + $0x70] sm:$0xf]
  %v60 = vld [vmem:[%s1 + $0x74] sm:$0xf]
  %v61 = vld [vmem:[%s1 + $0x78] sm:$0xf]
  %v62 = vld [vmem:[%s1 + $0x7c] sm:$0xf]
  %v63 = vld [vmem:[%s1 + $0x80] sm:$0xf]
  %v64 = vld [vmem:[%s1 + $0x84] sm:$0xf]
  %v65 = vld [vmem:[%s1 + $0x88] sm:$0xf]
  %v66 = vld [vmem:[%s1 + $0x8c] sm:$0xf]
  %v67 = vld [vmem:[%s1 + $0x90] sm:$0xf]
  %v68 = vld [vmem:[%s1 + $0x94] sm:$0xf]
  %v69 = vld [vmem:[%s1 + $0x98] sm:$0xf]
  %v70 = vld [vmem:[%s1 + $0x9c] sm:$0xf]
  %v71 = vld [vmem:[%s1 + $0xa0] sm:$0xf]
  %v72 = vld [vmem:[%s1 + $0xa4] sm:$0xf]
  %v73 = vld [vmem:[%s1 + $0xa8] sm:$0xf]
  %v74 = vld [vmem:[%s1 + $0xac] sm:$0xf]
  %v75 = vld [vmem:[%s1 + $0xb0] sm:$0xf]
  %v76 = vld [vmem:[%s1 + $0xb4] sm:$0xf]
  %v77 = vld [vmem:[%s1 + $0xb8] sm:$0xf]
  %v78 = vld [vmem:[%s1 + $0xbc] sm:$0xf]
  %v79 = vld [vmem:[%s1 + $0xc0] sm:$0xf]
  %v80 = vld [vmem:[%s1 + $0xc4] sm:$0xf]
  %v81 = vld [vmem:[%s1 + $0xc8] sm:$0xf]
  %v82 = vld [vmem:[%s1 + $0xcc] sm:$0xf]
  %v83 = vld [vmem:[%s1 + $0xd0] sm:$0xf]
  %v84 = vld [vmem:[%s1 + $0xd4] sm:$0xf]
  %v85 = vld [vmem:[%s2] sm:$0xff]
  %v86 = vld [vmem:[%s2 + $0x8] sm:$0xff]
  %v87 = vld [vmem:[%s2 + $0x10] sm:$0xff]
  %v88 = vld [vmem:[%s2 + $0x18] sm:$0xff]
  %v89 = vld [vmem:[%s2 + $0x20] sm:$0xff]
  %v90 = vld [vmem:[%s2 + $0x28] sm:$0xff]
  %v91 = vld [vmem:[%s2 + $0x30] sm:$0xff]
  %v92 = vld [vmem:[%s2 + $0x38] sm:$0xff]
  %94 = vset.pattern.permute.xlu0 0
  %95 = vperm.xlu0 %94, %v85
  %v96 = vpop.permute.xlu0 %95
  %99 = vset.pattern.permute.xlu0 0
  %100 = vperm.xlu0 %99, %v86
  %v101 = vpop.permute.xlu0 %100
  %104 = vset.pattern.permute.xlu0 0
  %105 = vperm.xlu0 %104, %v87
  %v106 = vpop.permute.xlu0 %105
  %109 = vset.pattern.permute.xlu0 0
  %110 = vperm.xlu0 %109, %v88
  %v111 = vpop.permute.xlu0 %110
  %114 = vset.pattern.permute.xlu0 0
  %115 = vperm.xlu0 %114, %v89
  %v116 = vpop.permute.xlu0 %115
  %119 = vset.pattern.permute.xlu0 0
  %120 = vperm.xlu0 %119, %v90
  %v121 = vpop.permute.xlu0 %120
  %124 = vset.pattern.permute.xlu0 0
  %125 = vperm.xlu0 %124, %v91
  %v126 = vpop.permute.xlu0 %125
  %129 = vset.pattern.permute.xlu0 0
  %130 = vperm.xlu0 %129, %v92
  %v131 = vpop.permute.xlu0 %130
  %v149 = vunpack.c.l.b16 %v15
  %v150 = vunpack.c.h.b16 %v15
  %v151 = vunpack.c.l.b16 %v16
  %v152 = vunpack.c.h.b16 %v16
  %v153 = vunpack.c.l.b16 %v17
  %v154 = vunpack.c.h.b16 %v17
  %v155 = vunpack.c.l.b16 %v18
  %v156 = vunpack.c.h.b16 %v18
  %v157 = vunpack.c.l.b16 %v19
  %v158 = vunpack.c.h.b16 %v19
  %v159 = vunpack.c.l.b16 %v20
  %v160 = vunpack.c.h.b16 %v20
  %v161 = vunpack.c.l.b16 %v21
  %v162 = vunpack.c.h.b16 %v21
  %v163 = vunpack.c.l.b16 %v22
  %v164 = vunpack.c.h.b16 %v22
  %v165 = vunpack.c.l.b16 %v23
  %v166 = vunpack.c.h.b16 %v23
  %v167 = vunpack.c.l.b16 %v24
  %v168 = vunpack.c.h.b16 %v24
  %v169 = vunpack.c.l.b16 %v25
  %v170 = vunpack.c.h.b16 %v25
  %v171 = vunpack.c.l.b16 %v26
  %v172 = vunpack.c.h.b16 %v26
  %v173 = vunpack.c.l.b16 %v27
  %v174 = vunpack.c.h.b16 %v27
  %v175 = vunpack.c.l.b16 %v28
  %v176 = vunpack.c.h.b16 %v28
  %v177 = vunpack.c.l.b16 %v29
  %v178 = vunpack.c.h.b16 %v29
  %v179 = vunpack.c.l.b16 %v30
  %v180 = vunpack.c.h.b16 %v30
  %v181 = vpack.c.b16 %v153, %v149
  %v182 = vpack.c.b16 %v154, %v150
  %v183 = vpack.c.b16 %v155, %v151
  %v184 = vpack.c.b16 %v156, %v152
  %v185 = vpack.c.b16 %v161, %v157
  %v186 = vpack.c.b16 %v162, %v158
  %v187 = vpack.c.b16 %v163, %v159
  %v188 = vpack.c.b16 %v164, %v160
  %v189 = vpack.c.b16 %v169, %v165
  %v190 = vpack.c.b16 %v170, %v166
  %v191 = vpack.c.b16 %v171, %v167
  %v192 = vpack.c.b16 %v172, %v168
  %v193 = vpack.c.b16 %v177, %v173
  %v194 = vpack.c.b16 %v178, %v174
  %v195 = vpack.c.b16 %v179, %v175
  %v196 = vpack.c.b16 %v180, %v176
  %v263 = vunpack.c.l.b16 %v31
  %v264 = vunpack.c.l.b16 %v32
  %v265 = vunpack.c.l.b16 %v33
  %v266 = vunpack.c.l.b16 %v34
  %v267 = vunpack.c.l.b16 %v35
  %v268 = vunpack.c.l.b16 %v36
  %v269 = vunpack.c.l.b16 %v37
  %v270 = vunpack.c.l.b16 %v38
  %v271 = vunpack.c.l.b16 %v39
  %v272 = vunpack.c.l.b16 %v40
  %v273 = vunpack.c.l.b16 %v41
  %v274 = vunpack.c.l.b16 %v42
  %v275 = vunpack.c.l.b16 %v43
  %v276 = vunpack.c.l.b16 %v44
  %v277 = vunpack.c.l.b16 %v45
  %v278 = vunpack.c.l.b16 %v46
  %v279 = vunpack.c.l.b16 %v47
  %v280 = vunpack.c.l.b16 %v48
  %v281 = vunpack.c.l.b16 %v49
  %v282 = vunpack.c.l.b16 %v50
  %v283 = vunpack.c.l.b16 %v51
  %v284 = vunpack.c.l.b16 %v52
  %v285 = vunpack.c.l.b16 %v53
  %v286 = vunpack.c.l.b16 %v54
  %v287 = vunpack.c.l.b16 %v55
  %v288 = vunpack.c.l.b16 %v56
  %v289 = vunpack.c.l.b16 %v57
  %v290 = vunpack.c.l.b16 %v58
  %v291 = vunpack.c.l.b16 %v59
  %v292 = vunpack.c.l.b16 %v60
  %v293 = vunpack.c.l.b16 %v61
  %v294 = vunpack.c.l.b16 %v62
  %v295 = vunpack.c.l.b16 %v63
  %v296 = vunpack.c.l.b16 %v64
  %v297 = vunpack.c.l.b16 %v65
  %v298 = vunpack.c.l.b16 %v66
  %v299 = vunpack.c.l.b16 %v67
  %v300 = vunpack.c.l.b16 %v68
  %v301 = vunpack.c.l.b16 %v69
  %v302 = vunpack.c.l.b16 %v70
  %v303 = vunpack.c.l.b16 %v71
  %v304 = vunpack.c.l.b16 %v72
  %v305 = vunpack.c.l.b16 %v73
  %v306 = vunpack.c.l.b16 %v74
  %v307 = vunpack.c.l.b16 %v75
  %v308 = vunpack.c.l.b16 %v76
  %v309 = vunpack.c.l.b16 %v77
  %v310 = vunpack.c.l.b16 %v78
  %v311 = vunpack.c.l.b16 %v79
  %v312 = vunpack.c.l.b16 %v80
  %v313 = vunpack.c.l.b16 %v81
  %v314 = vunpack.c.l.b16 %v82
  %v315 = vunpack.c.l.b16 %v83
  %v316 = vunpack.c.l.b16 %v84
  %v317 = vpack.c.b16 %v264, %v263
  %v318 = vpack.c.b16 %v266, %v265
  %v319 = vpack.c.b16 %v268, %v267
  %v320 = vpack.c.b16 %v270, %v269
  %v321 = vpack.c.b16 %v272, %v271
  %v322 = vpack.c.b16 %v274, %v273
  %v323 = vpack.c.b16 %v276, %v275
  %v324 = vpack.c.b16 %v278, %v277
  %v325 = vpack.c.b16 %v280, %v279
  %v326 = vpack.c.b16 %v282, %v281
  %v327 = vpack.c.b16 %v284, %v283
  %v328 = vpack.c.b16 %v286, %v285
  %v329 = vpack.c.b16 %v288, %v287
  %v330 = vpack.c.b16 %v290, %v289
  %v331 = vpack.c.b16 %v292, %v291
  %v332 = vpack.c.b16 %v294, %v293
  %v333 = vpack.c.b16 %v296, %v295
  %v334 = vpack.c.b16 %v298, %v297
  %v335 = vpack.c.b16 %v300, %v299
  %v336 = vpack.c.b16 %v302, %v301
  %v337 = vpack.c.b16 %v304, %v303
  %v338 = vpack.c.b16 %v306, %v305
  %v339 = vpack.c.b16 %v308, %v307
  %v340 = vpack.c.b16 %v310, %v309
  %v341 = vpack.c.b16 %v312, %v311
  %v342 = vpack.c.b16 %v314, %v313
  %v343 = vpack.c.b16 %v316, %v315
  %vm371 = vcmask 392192
  %v373 = vsel %vm371, %v184, 0
  %v376 = vsel %vm371, %v188, 0
  %v379 = vsel %vm371, %v192, 0
  %v382 = vsel %vm371, %v196, 0
  %384 = vmatprep.subr.bf16.mxu0 0
  %385 = vmatpush1.bf16.msra.mxu0 %v324
  %386 = vmatprep.subr.bf16.mxu0 0
  %387 = vmatpush1.bf16.msra.mxu0 %v323
  %388 = vmatprep.subr.bf16.mxu0 0
  %389 = vmatpush1.bf16.msra.mxu0 %v322
  %390 = vmatprep.subr.bf16.mxu0 0
  %391 = vmatpush1.bf16.msra.mxu0 %v321
  %392 = vmatprep.subr.bf16.mxu0 0
  %393 = vmatpush1.bf16.msra.mxu0 %v320
  %394 = vmatprep.subr.bf16.mxu0 0
  %395 = vmatpush1.bf16.msra.mxu0 %v319
  %396 = vmatprep.subr.bf16.mxu0 0
  %397 = vmatpush1.bf16.msra.mxu0 %v318
  %398 = vmatprep.subr.bf16.mxu0 0
  %399 = vmatpush1.bf16.msra.mxu0 %v317
  %400 = vmatprep.subr.bf16.mxu0 0
  %401 = vmatpush2.bf16.msra.mxu0 %v332
  %402 = vmatprep.subr.bf16.mxu0 0
  %403 = vmatpush2.bf16.msra.mxu0 %v331
  %404 = vmatprep.subr.bf16.mxu0 0
  %405 = vmatpush2.bf16.msra.mxu0 %v330
  %406 = vmatprep.subr.bf16.mxu0 0
  %407 = vmatpush2.bf16.msra.mxu0 %v329
  %408 = vmatprep.subr.bf16.mxu0 0
  %409 = vmatpush2.bf16.msra.mxu0 %v328
  %410 = vmatprep.subr.bf16.mxu0 0
  %411 = vmatpush2.bf16.msra.mxu0 %v327
  %412 = vmatprep.subr.bf16.mxu0 0
  %413 = vmatpush2.bf16.msra.mxu0 %v326
  %414 = vmatprep.subr.bf16.mxu0 0
  %415 = vmatpush2.bf16.msra.mxu0 %v325
  %416 = vmatprep.mubr.bf16.mxu0 %v182
  %417 = vmatmul.mubr.bf16.gmra.mxu0 %v181
  %v418 = vpop.f32.mrf.mxu0
  %v419 = vadd.f32 %v96, %v418
  %v420 = vpop.f32.mrf.mxu0
  %v421 = vpop.f32.mrf.mxu0
  %v422 = vadd.f32 %v101, %v421
  %v423 = vpop.f32.mrf.mxu0
  %424 = vmatprep.mubr.bf16.mxu0 %v186
  %425 = vmatmul.mubr.bf16.gmra.mxu0 %v185
  %v426 = vpop.f32.mrf.mxu0
  %v427 = vadd.f32 %v106, %v426
  %v428 = vpop.f32.mrf.mxu0
  %v429 = vpop.f32.mrf.mxu0
  %v430 = vadd.f32 %v111, %v429
  %v431 = vpop.f32.mrf.mxu0
  %432 = vmatprep.mubr.bf16.mxu0 %v190
  %433 = vmatmul.mubr.bf16.gmra.mxu0 %v189
  %v434 = vpop.f32.mrf.mxu0
  %v435 = vadd.f32 %v116, %v434
  %v436 = vpop.f32.mrf.mxu0
  %v437 = vpop.f32.mrf.mxu0
  %v438 = vadd.f32 %v121, %v437
  %v439 = vpop.f32.mrf.mxu0
  %440 = vmatprep.mubr.bf16.mxu0 %v194
  %441 = vmatmul.mubr.bf16.gmra.mxu0 %v193
  %v442 = vpop.f32.mrf.mxu0
  %v443 = vadd.f32 %v126, %v442
  %v444 = vpop.f32.mrf.mxu0
  %v445 = vpop.f32.mrf.mxu0
  %v446 = vadd.f32 %v131, %v445
  %v447 = vpop.f32.mrf.mxu0
  %448 = vdwg.mxu0
  %449 = vmatprep.subr.bf16.mxu0 0
  %450 = vmatpush1.bf16.msra.mxu0 %v340
  %451 = vmatprep.subr.bf16.mxu0 0
  %452 = vmatpush1.bf16.msra.mxu0 %v339
  %453 = vmatprep.subr.bf16.mxu0 0
  %454 = vmatpush1.bf16.msra.mxu0 %v338
  %455 = vmatprep.subr.bf16.mxu0 0
  %456 = vmatpush1.bf16.msra.mxu0 %v337
  %457 = vmatprep.subr.bf16.mxu0 0
  %458 = vmatpush1.bf16.msra.mxu0 %v336
  %459 = vmatprep.subr.bf16.mxu0 0
  %460 = vmatpush1.bf16.msra.mxu0 %v335
  %461 = vmatprep.subr.bf16.mxu0 0
  %462 = vmatpush1.bf16.msra.mxu0 %v334
  %463 = vmatprep.subr.bf16.mxu0 0
  %464 = vmatpush1.bf16.msra.mxu0 %v333
  %465 = vmatprep.subr.bf16.mxu0 0
  %466 = vmatpush2.bf16.msra.mxu0 0
  %467 = vmatprep.subr.bf16.mxu0 0
  %468 = vmatpush2.bf16.msra.mxu0 0
  %469 = vmatprep.subr.bf16.mxu0 0
  %470 = vmatpush2.bf16.msra.mxu0 0
  %471 = vmatprep.subr.bf16.mxu0 0
  %472 = vmatpush2.bf16.msra.mxu0 0
  %473 = vmatprep.subr.bf16.mxu0 0
  %474 = vmatpush2.bf16.msra.mxu0 0
  %475 = vmatprep.subr.bf16.mxu0 0
  %476 = vmatpush2.bf16.msra.mxu0 %v343
  %477 = vmatprep.subr.bf16.mxu0 0
  %478 = vmatpush2.bf16.msra.mxu0 %v342
  %479 = vmatprep.subr.bf16.mxu0 0
  %480 = vmatpush2.bf16.msra.mxu0 %v341
  %481 = vmatprep.mubr.bf16.mxu0 %v373
  %482 = vmatmul.mubr.bf16.gmra.mxu0 %v183
  %v483 = vpop.f32.mrf.mxu0
  %v484 = vadd.f32 %v419, %v483
  %v485 = vpop.f32.mrf.mxu0
  %v486 = vpop.f32.mrf.mxu0
  %v487 = vadd.f32 %v422, %v486
  %v488 = vpop.f32.mrf.mxu0
  %489 = vmatprep.mubr.bf16.mxu0 %v376
  %490 = vmatmul.mubr.bf16.gmra.mxu0 %v187
  %v491 = vpop.f32.mrf.mxu0
  %v492 = vadd.f32 %v427, %v491
  %v493 = vpop.f32.mrf.mxu0
  %v494 = vpop.f32.mrf.mxu0
  %v495 = vadd.f32 %v430, %v494
  %v496 = vpop.f32.mrf.mxu0
  %497 = vmatprep.mubr.bf16.mxu0 %v379
  %498 = vmatmul.mubr.bf16.gmra.mxu0 %v191
  %v499 = vpop.f32.mrf.mxu0
  %v500 = vadd.f32 %v435, %v499
  %v501 = vpop.f32.mrf.mxu0
  %v502 = vpop.f32.mrf.mxu0
  %v503 = vadd.f32 %v438, %v502
  %v504 = vpop.f32.mrf.mxu0
  %505 = vmatprep.mubr.bf16.mxu0 %v382
  %506 = vmatmul.mubr.bf16.gmra.mxu0 %v195
  %v507 = vpop.f32.mrf.mxu0
  %v508 = vadd.f32 %v443, %v507
  %v509 = vpop.f32.mrf.mxu0
  %v510 = vpop.f32.mrf.mxu0
  %v511 = vadd.f32 %v446, %v510
  %v512 = vpop.f32.mrf.mxu0
  %513 = vdwg.mxu0
  %v514 = vmax.f32 %v484, 0.0
  %v515 = vmax.f32 %v487, 0.0
  %v516 = vmax.f32 %v492, 0.0
  %v517 = vmax.f32 %v495, 0.0
  %v518 = vmax.f32 %v500, 0.0
  %v519 = vmax.f32 %v503, 0.0
  %v520 = vmax.f32 %v508, 0.0
  %v521 = vmax.f32 %v511, 0.0
  %vm522 = vcmask 523264
  %523 = vst.msk [vmem:[%s3] sm:$0xff] %vm522, %v514
  %524 = vst.msk [vmem:[%s3 + $0x8] sm:$0xff] %vm522, %v515
  %525 = vst.msk [vmem:[%s3 + $0x10] sm:$0xff] %vm522, %v516
  %526 = vst.msk [vmem:[%s3 + $0x18] sm:$0xff] %vm522, %v517
  %527 = vst.msk [vmem:[%s3 + $0x20] sm:$0xff] %vm522, %v518
  %528 = vst.msk [vmem:[%s3 + $0x28] sm:$0xff] %vm522, %v519
  %529 = vst.msk [vmem:[%s3 + $0x30] sm:$0xff] %vm522, %v520
  %530 = vst.msk [vmem:[%s3 + $0x38] sm:$0xff] %vm522, %v521
  // Predicated region
  $region14: #{tsrvfd_forward.29} parent=0 // pred_check
    _
  $region15: #{tsrvfd_forward.29} parent=0 // pred_check_branch
    %532 = sbr.rel (0) target = $region17
  $region16: #{tsrvfd_forward.29} parent=0 // pred_region
    _
  $region17: #{tsrvfd_forward.29} parent=0 // pred_fallthru
    _
  // Predicated region
  $region18: #{tsrvfd_forward.29} parent=0 // pred_check
    _
  $region19: #{tsrvfd_forward.29} parent=0 // pred_check_branch
    %534 = sbr.rel (0) target = $region21
  $region20: #{tsrvfd_forward.29} parent=0 // pred_region
    _
  $region21: #{tsrvfd_forward.29} parent=0 // pred_fallthru
    _

// kernel: tsrvfd_forward.35
$region0: #{tsrvfd_forward.35}
  #allocation0 [shape = 'u32[]', space=smem, size = 0x4, offset = 0x4, fixed_abs, tag = 'smem constant byte address 0x4 - core index']
  #allocation1 [shape = 'u32[144,128]{1,0:T(1,128)}', space=vmem, size = 0x12000, scoped, tag = 'internal scratch']
  %s0 = inlined_call_operand.vmem [shape: f32[1,2048], index: 0, kind: input, shape index: {}]
  %s1 = inlined_call_operand.vmem [shape: f32[2048,64], index: 1, kind: input, shape index: {}]
  %s2 = inlined_call_operand.vmem [shape: f32[1,64], index: 2, kind: input, shape index: {}]
  %s3 = inlined_call_operand.vmem [shape: f32[64,256], index: 3, kind: input, shape index: {}]
  %s4 = inlined_call_operand.vmem [shape: f32[1,256], index: 4, kind: input, shape index: {}]
  %s5 = inlined_call_operand.vmem [shape: f32[1,256], index: 5, kind: output, shape index: {}]
  %s6 = sld [smem:[#allocation0]]
  $region30: #{tsrvfd_forward.35} parent=0
    _
  %s8 = ssub.s32 1, %s6
  %s9 = scalar_select 0, %s8, %s6
  // Predicated region
  $region2: #{tsrvfd_forward.35} parent=0 // pred_check
    _
  $region3: #{tsrvfd_forward.35} parent=0 // pred_check_branch
    %11 = sbr.rel (0) target = $region5
  $region4: #{tsrvfd_forward.35} parent=0 // pred_region
    _
  $region5: #{tsrvfd_forward.35} parent=0 // pred_fallthru
    _
  // Predicated region
  $region6: #{tsrvfd_forward.35} parent=0 // pred_check
    _
  $region7: #{tsrvfd_forward.35} parent=0 // pred_check_branch
    %13 = sbr.rel (0) target = $region9
  $region8: #{tsrvfd_forward.35} parent=0 // pred_region
    _
  $region9: #{tsrvfd_forward.35} parent=0 // pred_fallthru
    _
  // Predicated region
  $region10: #{tsrvfd_forward.35} parent=0 // pred_check
    _
  $region11: #{tsrvfd_forward.35} parent=0 // pred_check_branch
    %15 = sbr.rel (0) target = $region13
  $region12: #{tsrvfd_forward.35} parent=0 // pred_region
    _
  $region13: #{tsrvfd_forward.35} parent=0 // pred_fallthru
    _
  // Predicated region
  $region14: #{tsrvfd_forward.35} parent=0 // pred_check
    _
  $region15: #{tsrvfd_forward.35} parent=0 // pred_check_branch
    %17 = sbr.rel (0) target = $region17
  $region16: #{tsrvfd_forward.35} parent=0 // pred_region
    _
  $region17: #{tsrvfd_forward.35} parent=0 // pred_fallthru
    _
  // Predicated region
  $region18: #{tsrvfd_forward.35} parent=0 // pred_check
    _
  $region19: #{tsrvfd_forward.35} parent=0 // pred_check_branch
    %19 = sbr.rel (0) target = $region21
  $region20: #{tsrvfd_forward.35} parent=0 // pred_region
    _
  $region21: #{tsrvfd_forward.35} parent=0 // pred_fallthru
    _
  %v20 = vld [vmem:[%s0] sm:$0xff]
  %v21 = vld [vmem:[%s0 + $0x8] sm:$0xff]
  %v22 = vld [vmem:[%s1] sm:$0xff]
  %v23 = vld [vmem:[%s1 + $0x8] sm:$0xff]
  %v24 = vld [vmem:[%s1 + $0x10] sm:$0xff]
  %v25 = vld [vmem:[%s1 + $0x18] sm:$0xff]
  %v26 = vld [vmem:[%s1 + $0x20] sm:$0xff]
  %v27 = vld [vmem:[%s1 + $0x28] sm:$0xff]
  %v28 = vld [vmem:[%s1 + $0x30] sm:$0xff]
  %v29 = vld [vmem:[%s1 + $0x38] sm:$0xff]
  %v30 = vld [vmem:[%s1 + $0x40] sm:$0xff]
  %v31 = vld [vmem:[%s1 + $0x48] sm:$0xff]
  %v32 = vld [vmem:[%s1 + $0x50] sm:$0xff]
  %v33 = vld [vmem:[%s1 + $0x58] sm:$0xff]
  %v34 = vld [vmem:[%s1 + $0x60] sm:$0xff]
  %v35 = vld [vmem:[%s1 + $0x68] sm:$0xff]
  %v36 = vld [vmem:[%s1 + $0x70] sm:$0xff]
  %v37 = vld [vmem:[%s1 + $0x78] sm:$0xff]
  %v38 = vld [vmem:[%s1 + $0x80] sm:$0xff]
  %v39 = vld [vmem:[%s1 + $0x88] sm:$0xff]
  %v40 = vld [vmem:[%s1 + $0x90] sm:$0xff]
  %v41 = vld [vmem:[%s1 + $0x98] sm:$0xff]
  %v42 = vld [vmem:[%s1 + $0xa0] sm:$0xff]
  %v43 = vld [vmem:[%s1 + $0xa8] sm:$0xff]
  %v44 = vld [vmem:[%s1 + $0xb0] sm:$0xff]
  %v45 = vld [vmem:[%s1 + $0xb8] sm:$0xff]
  %v46 = vld [vmem:[%s1 + $0xc0] sm:$0xff]
  %v47 = vld [vmem:[%s1 + $0xc8] sm:$0xff]
  %v48 = vld [vmem:[%s1 + $0xd0] sm:$0xff]
  %v49 = vld [vmem:[%s1 + $0xd8] sm:$0xff]
  %v50 = vld [vmem:[%s1 + $0xe0] sm:$0xff]
  %v51 = vld [vmem:[%s1 + $0xe8] sm:$0xff]
  %v52 = vld [vmem:[%s1 + $0xf0] sm:$0xff]
  %v53 = vld [vmem:[%s1 + $0xf8] sm:$0xff]
  %v54 = vld [vmem:[%s1 + $0x100] sm:$0xff]
  %v55 = vld [vmem:[%s1 + $0x108] sm:$0xff]
  %v56 = vld [vmem:[%s1 + $0x110] sm:$0xff]
  %v57 = vld [vmem:[%s1 + $0x118] sm:$0xff]
  %v58 = vld [vmem:[%s1 + $0x120] sm:$0xff]
  %v59 = vld [vmem:[%s1 + $0x128] sm:$0xff]
  %v60 = vld [vmem:[%s1 + $0x130] sm:$0xff]
  %v61 = vld [vmem:[%s1 + $0x138] sm:$0xff]
  %v62 = vld [vmem:[%s1 + $0x140] sm:$0xff]
  %v63 = vld [vmem:[%s1 + $0x148] sm:$0xff]
  %v64 = vld [vmem:[%s1 + $0x150] sm:$0xff]
  %v65 = vld [vmem:[%s1 + $0x158] sm:$0xff]
  %v66 = vld [vmem:[%s1 + $0x160] sm:$0xff]
  %v67 = vld [vmem:[%s1 + $0x168] sm:$0xff]
  %v68 = vld [vmem:[%s1 + $0x170] sm:$0xff]
  %v69 = vld [vmem:[%s1 + $0x178] sm:$0xff]
  %v70 = vld [vmem:[%s1 + $0x180] sm:$0xff]
  %v71 = vld [vmem:[%s1 + $0x188] sm:$0xff]
  %v72 = vld [vmem:[%s1 + $0x190] sm:$0xff]
  %v73 = vld [vmem:[%s1 + $0x198] sm:$0xff]
  %v74 = vld [vmem:[%s1 + $0x1a0] sm:$0xff]
  %v75 = vld [vmem:[%s1 + $0x1a8] sm:$0xff]
  %v76 = vld [vmem:[%s1 + $0x1b0] sm:$0xff]
  %v77 = vld [vmem:[%s1 + $0x1b8] sm:$0xff]
  %v78 = vld [vmem:[%s1 + $0x1c0] sm:$0xff]
  %v79 = vld [vmem:[%s1 + $0x1c8] sm:$0xff]
  %v80 = vld [vmem:[%s1 + $0x1d0] sm:$0xff]
  %v81 = vld [vmem:[%s1 + $0x1d8] sm:$0xff]
  %v82 = vld [vmem:[%s1 + $0x1e0] sm:$0xff]
  %v83 = vld [vmem:[%s1 + $0x1e8] sm:$0xff]
  %v84 = vld [vmem:[%s1 + $0x1f0] sm:$0xff]
  %v85 = vld [vmem:[%s1 + $0x1f8] sm:$0xff]
  %v86 = vld [vmem:[%s1 + $0x200] sm:$0xff]
  %v87 = vld [vmem:[%s1 + $0x208] sm:$0xff]
  %v88 = vld [vmem:[%s1 + $0x210] sm:$0xff]
  %v89 = vld [vmem:[%s1 + $0x218] sm:$0xff]
  %v90 = vld [vmem:[%s1 + $0x220] sm:$0xff]
  %v91 = vld [vmem:[%s1 + $0x228] sm:$0xff]
  %v92 = vld [vmem:[%s1 + $0x230] sm:$0xff]
  %v93 = vld [vmem:[%s1 + $0x238] sm:$0xff]
  %v94 = vld [vmem:[%s1 + $0x240] sm:$0xff]
  %v95 = vld [vmem:[%s1 + $0x248] sm:$0xff]
  %v96 = vld [vmem:[%s1 + $0x250] sm:$0xff]
  %v97 = vld [vmem:[%s1 + $0x258] sm:$0xff]
  %v98 = vld [vmem:[%s1 + $0x260] sm:$0xff]
  %v99 = vld [vmem:[%s1 + $0x268] sm:$0xff]
  %v100 = vld [vmem:[%s1 + $0x270] sm:$0xff]
  %v101 = vld [vmem:[%s1 + $0x278] sm:$0xff]
  %v102 = vld [vmem:[%s1 + $0x280] sm:$0xff]
  %v103 = vld [vmem:[%s1 + $0x288] sm:$0xff]
  %v104 = vld [vmem:[%s1 + $0x290] sm:$0xff]
  %v105 = vld [vmem:[%s1 + $0x298] sm:$0xff]
  %v106 = vld [vmem:[%s1 + $0x2a0] sm:$0xff]
  %v107 = vld [vmem:[%s1 + $0x2a8] sm:$0xff]
  %v108 = vld [vmem:[%s1 + $0x2b0] sm:$0xff]
  %v109 = vld [vmem:[%s1 + $0x2b8] sm:$0xff]
  %v110 = vld [vmem:[%s1 + $0x2c0] sm:$0xff]
  %v111 = vld [vmem:[%s1 + $0x2c8] sm:$0xff]
  %v112 = vld [vmem:[%s1 + $0x2d0] sm:$0xff]
  %v113 = vld [vmem:[%s1 + $0x2d8] sm:$0xff]
  %v114 = vld [vmem:[%s1 + $0x2e0] sm:$0xff]
  %v115 = vld [vmem:[%s1 + $0x2e8] sm:$0xff]
  %v116 = vld [vmem:[%s1 + $0x2f0] sm:$0xff]
  %v117 = vld [vmem:[%s1 + $0x2f8] sm:$0xff]
  %v118 = vld [vmem:[%s1 + $0x300] sm:$0xff]
  %v119 = vld [vmem:[%s1 + $0x308] sm:$0xff]
  %v120 = vld [vmem:[%s1 + $0x310] sm:$0xff]
  %v121 = vld [vmem:[%s1 + $0x318] sm:$0xff]
  %v122 = vld [vmem:[%s1 + $0x320] sm:$0xff]
  %v123 = vld [vmem:[%s1 + $0x328] sm:$0xff]
  %v124 = vld [vmem:[%s1 + $0x330] sm:$0xff]
  %v125 = vld [vmem:[%s1 + $0x338] sm:$0xff]
  %v126 = vld [vmem:[%s1 + $0x340] sm:$0xff]
  %v127 = vld [vmem:[%s1 + $0x348] sm:$0xff]
  %v128 = vld [vmem:[%s1 + $0x350] sm:$0xff]
  %v129 = vld [vmem:[%s1 + $0x358] sm:$0xff]
  %v130 = vld [vmem:[%s1 + $0x360] sm:$0xff]
  %v131 = vld [vmem:[%s1 + $0x368] sm:$0xff]
  %v132 = vld [vmem:[%s1 + $0x370] sm:$0xff]
  %v133 = vld [vmem:[%s1 + $0x378] sm:$0xff]
  %v134 = vld [vmem:[%s1 + $0x380] sm:$0xff]
  %v135 = vld [vmem:[%s1 + $0x388] sm:$0xff]
  %v136 = vld [vmem:[%s1 + $0x390] sm:$0xff]
  %v137 = vld [vmem:[%s1 + $0x398] sm:$0xff]
  %v138 = vld [vmem:[%s1 + $0x3a0] sm:$0xff]
  %v139 = vld [vmem:[%s1 + $0x3a8] sm:$0xff]
  %v140 = vld [vmem:[%s1 + $0x3b0] sm:$0xff]
  %v141 = vld [vmem:[%s1 + $0x3b8] sm:$0xff]
  %v142 = vld [vmem:[%s1 + $0x3c0] sm:$0xff]
  %v143 = vld [vmem:[%s1 + $0x3c8] sm:$0xff]
  %v144 = vld [vmem:[%s1 + $0x3d0] sm:$0xff]
  %v145 = vld [vmem:[%s1 + $0x3d8] sm:$0xff]
  %v146 = vld [vmem:[%s1 + $0x3e0] sm:$0xff]
  %v147 = vld [vmem:[%s1 + $0x3e8] sm:$0xff]
  %v148 = vld [vmem:[%s1 + $0x3f0] sm:$0xff]
  %v149 = vld [vmem:[%s1 + $0x3f8] sm:$0xff]
  %v150 = vld [vmem:[%s1 + $0x400] sm:$0xff]
  %v151 = vld [vmem:[%s1 + $0x408] sm:$0xff]
  %v152 = vld [vmem:[%s1 + $0x410] sm:$0xff]
  %v153 = vld [vmem:[%s1 + $0x418] sm:$0xff]
  %v154 = vld [vmem:[%s1 + $0x420] sm:$0xff]
  %v155 = vld [vmem:[%s1 + $0x428] sm:$0xff]
  %v156 = vld [vmem:[%s1 + $0x430] sm:$0xff]
  %v157 = vld [vmem:[%s1 + $0x438] sm:$0xff]
  %v158 = vld [vmem:[%s1 + $0x440] sm:$0xff]
  %v159 = vld [vmem:[%s1 + $0x448] sm:$0xff]
  %v160 = vld [vmem:[%s1 + $0x450] sm:$0xff]
  %v161 = vld [vmem:[%s1 + $0x458] sm:$0xff]
  %v162 = vld [vmem:[%s1 + $0x460] sm:$0xff]
  %v163 = vld [vmem:[%s1 + $0x468] sm:$0xff]
  %v164 = vld [vmem:[%s1 + $0x470] sm:$0xff]
  %v165 = vld [vmem:[%s1 + $0x478] sm:$0xff]
  %v166 = vld [vmem:[%s1 + $0x480] sm:$0xff]
  %v167 = vld [vmem:[%s1 + $0x488] sm:$0xff]
  %v168 = vld [vmem:[%s1 + $0x490] sm:$0xff]
  %v169 = vld [vmem:[%s1 + $0x498] sm:$0xff]
  %v170 = vld [vmem:[%s1 + $0x4a0] sm:$0xff]
  %v171 = vld [vmem:[%s1 + $0x4a8] sm:$0xff]
  %v172 = vld [vmem:[%s1 + $0x4b0] sm:$0xff]
  %v173 = vld [vmem:[%s1 + $0x4b8] sm:$0xff]
  %v174 = vld [vmem:[%s1 + $0x4c0] sm:$0xff]
  %v175 = vld [vmem:[%s1 + $0x4c8] sm:$0xff]
  %v176 = vld [vmem:[%s1 + $0x4d0] sm:$0xff]
  %v177 = vld [vmem:[%s1 + $0x4d8] sm:$0xff]
  %v178 = vld [vmem:[%s1 + $0x4e0] sm:$0xff]
  %v179 = vld [vmem:[%s1 + $0x4e8] sm:$0xff]
  %v180 = vld [vmem:[%s1 + $0x4f0] sm:$0xff]
  %v181 = vld [vmem:[%s1 + $0x4f8] sm:$0xff]
  %v182 = vld [vmem:[%s1 + $0x500] sm:$0xff]
  %v183 = vld [vmem:[%s1 + $0x508] sm:$0xff]
  %v184 = vld [vmem:[%s1 + $0x510] sm:$0xff]
  %v185 = vld [vmem:[%s1 + $0x518] sm:$0xff]
  %v186 = vld [vmem:[%s1 + $0x520] sm:$0xff]
  %v187 = vld [vmem:[%s1 + $0x528] sm:$0xff]
  %v188 = vld [vmem:[%s1 + $0x530] sm:$0xff]
  %v189 = vld [vmem:[%s1 + $0x538] sm:$0xff]
  %v190 = vld [vmem:[%s1 + $0x540] sm:$0xff]
  %v191 = vld [vmem:[%s1 + $0x548] sm:$0xff]
  %v192 = vld [vmem:[%s1 + $0x550] sm:$0xff]
  %v193 = vld [vmem:[%s1 + $0x558] sm:$0xff]
  %v194 = vld [vmem:[%s1 + $0x560] sm:$0xff]
  %v195 = vld [vmem:[%s1 + $0x568] sm:$0xff]
  %v196 = vld [vmem:[%s1 + $0x570] sm:$0xff]
  %v197 = vld [vmem:[%s1 + $0x578] sm:$0xff]
  %v198 = vld [vmem:[%s1 + $0x580] sm:$0xff]
  %v199 = vld [vmem:[%s1 + $0x588] sm:$0xff]
  %v200 = vld [vmem:[%s1 + $0x590] sm:$0xff]
  %v201 = vld [vmem:[%s1 + $0x598] sm:$0xff]
  %v202 = vld [vmem:[%s1 + $0x5a0] sm:$0xff]
  %v203 = vld [vmem:[%s1 + $0x5a8] sm:$0xff]
  %v204 = vld [vmem:[%s1 + $0x5b0] sm:$0xff]
  %v205 = vld [vmem:[%s1 + $0x5b8] sm:$0xff]
  %v206 = vld [vmem:[%s1 + $0x5c0] sm:$0xff]
  %v207 = vld [vmem:[%s1 + $0x5c8] sm:$0xff]
  %v208 = vld [vmem:[%s1 + $0x5d0] sm:$0xff]
  %v209 = vld [vmem:[%s1 + $0x5d8] sm:$0xff]
  %v210 = vld [vmem:[%s1 + $0x5e0] sm:$0xff]
  %v211 = vld [vmem:[%s1 + $0x5e8] sm:$0xff]
  %v212 = vld [vmem:[%s1 + $0x5f0] sm:$0xff]
  %v213 = vld [vmem:[%s1 + $0x5f8] sm:$0xff]
  %v214 = vld [vmem:[%s1 + $0x600] sm:$0xff]
  %v215 = vld [vmem:[%s1 + $0x608] sm:$0xff]
  %v216 = vld [vmem:[%s1 + $0x610] sm:$0xff]
  %v217 = vld [vmem:[%s1 + $0x618] sm:$0xff]
  %v218 = vld [vmem:[%s1 + $0x620] sm:$0xff]
  %v219 = vld [vmem:[%s1 + $0x628] sm:$0xff]
  %v220 = vld [vmem:[%s1 + $0x630] sm:$0xff]
  %v221 = vld [vmem:[%s1 + $0x638] sm:$0xff]
  %v222 = vld [vmem:[%s1 + $0x640] sm:$0xff]
  %v223 = vld [vmem:[%s1 + $0x648] sm:$0xff]
  %v224 = vld [vmem:[%s1 + $0x650] sm:$0xff]
  %v225 = vld [vmem:[%s1 + $0x658] sm:$0xff]
  %v226 = vld [vmem:[%s1 + $0x660] sm:$0xff]
  %v227 = vld [vmem:[%s1 + $0x668] sm:$0xff]
  %v228 = vld [vmem:[%s1 + $0x670] sm:$0xff]
  %v229 = vld [vmem:[%s1 + $0x678] sm:$0xff]
  %v230 = vld [vmem:[%s1 + $0x680] sm:$0xff]
  %v231 = vld [vmem:[%s1 + $0x688] sm:$0xff]
  %v232 = vld [vmem:[%s1 + $0x690] sm:$0xff]
  %v233 = vld [vmem:[%s1 + $0x698] sm:$0xff]
  %v234 = vld [vmem:[%s1 + $0x6a0] sm:$0xff]
  %v235 = vld [vmem:[%s1 + $0x6a8] sm:$0xff]
  %v236 = vld [vmem:[%s1 + $0x6b0] sm:$0xff]
  %v237 = vld [vmem:[%s1 + $0x6b8] sm:$0xff]
  %v238 = vld [vmem:[%s1 + $0x6c0] sm:$0xff]
  %v239 = vld [vmem:[%s1 + $0x6c8] sm:$0xff]
  %v240 = vld [vmem:[%s1 + $0x6d0] sm:$0xff]
  %v241 = vld [vmem:[%s1 + $0x6d8] sm:$0xff]
  %v242 = vld [vmem:[%s1 + $0x6e0] sm:$0xff]
  %v243 = vld [vmem:[%s1 + $0x6e8] sm:$0xff]
  %v244 = vld [vmem:[%s1 + $0x6f0] sm:$0xff]
  %v245 = vld [vmem:[%s1 + $0x6f8] sm:$0xff]
  %v246 = vld [vmem:[%s1 + $0x700] sm:$0xff]
  %v247 = vld [vmem:[%s1 + $0x708] sm:$0xff]
  %v248 = vld [vmem:[%s1 + $0x710] sm:$0xff]
  %v249 = vld [vmem:[%s1 + $0x718] sm:$0xff]
  %v250 = vld [vmem:[%s1 + $0x720] sm:$0xff]
  %v251 = vld [vmem:[%s1 + $0x728] sm:$0xff]
  %v252 = vld [vmem:[%s1 + $0x730] sm:$0xff]
  %v253 = vld [vmem:[%s1 + $0x738] sm:$0xff]
  %v254 = vld [vmem:[%s1 + $0x740] sm:$0xff]
  %v255 = vld [vmem:[%s1 + $0x748] sm:$0xff]
  %v256 = vld [vmem:[%s1 + $0x750] sm:$0xff]
  %v257 = vld [vmem:[%s1 + $0x758] sm:$0xff]
  %v258 = vld [vmem:[%s1 + $0x760] sm:$0xff]
  %v259 = vld [vmem:[%s1 + $0x768] sm:$0xff]
  %v260 = vld [vmem:[%s1 + $0x770] sm:$0xff]
  %v261 = vld [vmem:[%s1 + $0x778] sm:$0xff]
  %v262 = vld [vmem:[%s1 + $0x780] sm:$0xff]
  %v263 = vld [vmem:[%s1 + $0x788] sm:$0xff]
  %v264 = vld [vmem:[%s1 + $0x790] sm:$0xff]
  %v265 = vld [vmem:[%s1 + $0x798] sm:$0xff]
  %v266 = vld [vmem:[%s1 + $0x7a0] sm:$0xff]
  %v267 = vld [vmem:[%s1 + $0x7a8] sm:$0xff]
  %v268 = vld [vmem:[%s1 + $0x7b0] sm:$0xff]
  %v269 = vld [vmem:[%s1 + $0x7b8] sm:$0xff]
  %v270 = vld [vmem:[%s1 + $0x7c0] sm:$0xff]
  %v271 = vld [vmem:[%s1 + $0x7c8] sm:$0xff]
  %v272 = vld [vmem:[%s1 + $0x7d0] sm:$0xff]
  %v273 = vld [vmem:[%s1 + $0x7d8] sm:$0xff]
  %v274 = vld [vmem:[%s1 + $0x7e0] sm:$0xff]
  %v275 = vld [vmem:[%s1 + $0x7e8] sm:$0xff]
  %v276 = vld [vmem:[%s1 + $0x7f0] sm:$0xff]
  %v277 = vld [vmem:[%s1 + $0x7f8] sm:$0xff]
  %v278 = vld [vmem:[%s2] sm:$0x1]
  %v281 = vlaneseq
  %v282 = vshrl.u32 %v281, 7
  %v283 = vsub.s32 0, %v282
  %v284 = vrot.slane %v20, %v283
  %v285 = vlaneseq
  %v286 = vshrl.u32 %v285, 7
  %v287 = vsub.s32 1, %v286
  %v288 = vrot.slane %v20, %v287
  %v289 = vlaneseq
  %v290 = vshrl.u32 %v289, 7
  %v291 = vsub.s32 2, %v290
  %v292 = vrot.slane %v20, %v291
  %v293 = vlaneseq
  %v294 = vshrl.u32 %v293, 7
  %v295 = vsub.s32 3, %v294
  %v296 = vrot.slane %v20, %v295
  %v297 = vlaneseq
  %v298 = vshrl.u32 %v297, 7
  %v299 = vsub.s32 4, %v298
  %v300 = vrot.slane %v20, %v299
  %v301 = vlaneseq
  %v302 = vshrl.u32 %v301, 7
  %v303 = vsub.s32 5, %v302
  %v304 = vrot.slane %v20, %v303
  %v305 = vlaneseq
  %v306 = vshrl.u32 %v305, 7
  %v307 = vsub.s32 6, %v306
  %v308 = vrot.slane %v20, %v307
  %v309 = vlaneseq
  %v310 = vshrl.u32 %v309, 7
  %v311 = vsub.s32 7, %v310
  %v312 = vrot.slane %v20, %v311
  %v313 = vlaneseq
  %v314 = vshrl.u32 %v313, 7
  %v315 = vsub.s32 0, %v314
  %v316 = vrot.slane %v21, %v315
  %v317 = vlaneseq
  %v318 = vshrl.u32 %v317, 7
  %v319 = vsub.s32 1, %v318
  %v320 = vrot.slane %v21, %v319
  %v321 = vlaneseq
  %v322 = vshrl.u32 %v321, 7
  %v323 = vsub.s32 2, %v322
  %v324 = vrot.slane %v21, %v323
  %v325 = vlaneseq
  %v326 = vshrl.u32 %v325, 7
  %v327 = vsub.s32 3, %v326
  %v328 = vrot.slane %v21, %v327
  %v329 = vlaneseq
  %v330 = vshrl.u32 %v329, 7
  %v331 = vsub.s32 4, %v330
  %v332 = vrot.slane %v21, %v331
  %v333 = vlaneseq
  %v334 = vshrl.u32 %v333, 7
  %v335 = vsub.s32 5, %v334
  %v336 = vrot.slane %v21, %v335
  %v337 = vlaneseq
  %v338 = vshrl.u32 %v337, 7
  %v339 = vsub.s32 6, %v338
  %v340 = vrot.slane %v21, %v339
  %v341 = vlaneseq
  %v342 = vshrl.u32 %v341, 7
  %v343 = vsub.s32 7, %v342
  %v344 = vrot.slane %v21, %v343
  %361 = vmatprep.subr.mxu0 0.0
  %362 = vmatpush1.msra.mxu0 %v37
  %363 = vmatprep.subr.mxu0 0.0
  %364 = vmatpush1.msra.mxu0 %v36
  %365 = vmatprep.subr.mxu0 0.0
  %366 = vmatpush1.msra.mxu0 %v35
  %367 = vmatprep.subr.mxu0 0.0
  %368 = vmatpush1.msra.mxu0 %v34
  %369 = vmatprep.subr.mxu0 0.0
  %370 = vmatpush1.msra.mxu0 %v33
  %371 = vmatprep.subr.mxu0 0.0
  %372 = vmatpush1.msra.mxu0 %v32
  %373 = vmatprep.subr.mxu0 0.0
  %374 = vmatpush1.msra.mxu0 %v31
  %375 = vmatprep.subr.mxu0 0.0
  %376 = vmatpush1.msra.mxu0 %v30
  %377 = vmatprep.subr.mxu0 0.0
  %378 = vmatpush1.msra.mxu0 %v29
  %379 = vmatprep.subr.mxu0 0.0
  %380 = vmatpush1.msra.mxu0 %v28
  %381 = vmatprep.subr.mxu0 0.0
  %382 = vmatpush1.msra.mxu0 %v27
  %383 = vmatprep.subr.mxu0 0.0
  %384 = vmatpush1.msra.mxu0 %v26
  %385 = vmatprep.subr.mxu0 0.0
  %386 = vmatpush1.msra.mxu0 %v25
  %387 = vmatprep.subr.mxu0 0.0
  %388 = vmatpush1.msra.mxu0 %v24
  %389 = vmatprep.subr.mxu0 0.0
  %390 = vmatpush1.msra.mxu0 %v23
  %391 = vmatprep.subr.mxu0 0.0
  %392 = vmatpush1.msra.mxu0 %v22
  %393 = vmatprep.subr.mxu0 0.0
  %394 = vmatpush2.msra.mxu0 %v53
  %395 = vmatprep.subr.mxu0 0.0
  %396 = vmatpush2.msra.mxu0 %v52
  %397 = vmatprep.subr.mxu0 0.0
  %398 = vmatpush2.msra.mxu0 %v51
  %399 = vmatprep.subr.mxu0 0.0
  %400 = vmatpush2.msra.mxu0 %v50
  %401 = vmatprep.subr.mxu0 0.0
  %402 = vmatpush2.msra.mxu0 %v49
  %403 = vmatprep.subr.mxu0 0.0
  %404 = vmatpush2.msra.mxu0 %v48
  %405 = vmatprep.subr.mxu0 0.0
  %406 = vmatpush2.msra.mxu0 %v47
  %407 = vmatprep.subr.mxu0 0.0
  %408 = vmatpush2.msra.mxu0 %v46
  %409 = vmatprep.subr.mxu0 0.0
  %410 = vmatpush2.msra.mxu0 %v45
  %411 = vmatprep.subr.mxu0 0.0
  %412 = vmatpush2.msra.mxu0 %v44
  %413 = vmatprep.subr.mxu0 0.0
  %414 = vmatpush2.msra.mxu0 %v43
  %415 = vmatprep.subr.mxu0 0.0
  %416 = vmatpush2.msra.mxu0 %v42
  %417 = vmatprep.subr.mxu0 0.0
  %418 = vmatpush2.msra.mxu0 %v41
  %419 = vmatprep.subr.mxu0 0.0
  %420 = vmatpush2.msra.mxu0 %v40
  %421 = vmatprep.subr.mxu0 0.0
  %422 = vmatpush2.msra.mxu0 %v39
  %423 = vmatprep.subr.mxu0 0.0
  %424 = vmatpush2.msra.mxu0 %v38
  %425 = vmatprep.mubr.f32.mxu0 %v288
  %426 = vmatmul.mubr.f32.gmra.mxu0 %v284
  %v427 = vpop.f32.mrf.mxu0
  %v428 = vadd.f32 %v278, %v427
  %v429 = vpop.f32.mrf.mxu0
  %430 = vdwg.mxu0
  %431 = vmatprep.subr.mxu0 0.0
  %432 = vmatpush1.msra.mxu0 %v69
  %433 = vmatprep.subr.mxu0 0.0
  %434 = vmatpush1.msra.mxu0 %v68
  %435 = vmatprep.subr.mxu0 0.0
  %436 = vmatpush1.msra.mxu0 %v67
  %437 = vmatprep.subr.mxu0 0.0
  %438 = vmatpush1.msra.mxu0 %v66
  %439 = vmatprep.subr.mxu0 0.0
  %440 = vmatpush1.msra.mxu0 %v65
  %441 = vmatprep.subr.mxu0 0.0
  %442 = vmatpush1.msra.mxu0 %v64
  %443 = vmatprep.subr.mxu0 0.0
  %444 = vmatpush1.msra.mxu0 %v63
  %445 = vmatprep.subr.mxu0 0.0
  %446 = vmatpush1.msra.mxu0 %v62
  %447 = vmatprep.subr.mxu0 0.0
  %448 = vmatpush1.msra.mxu0 %v61
  %449 = vmatprep.subr.mxu0 0.0
  %450 = vmatpush1.msra.mxu0 %v60
  %451 = vmatprep.subr.mxu0 0.0
  %452 = vmatpush1.msra.mxu0 %v59
  %453 = vmatprep.subr.mxu0 0.0
  %454 = vmatpush1.msra.mxu0 %v58
  %455 = vmatprep.subr.mxu0 0.0
  %456 = vmatpush1.msra.mxu0 %v57
  %457 = vmatprep.subr.mxu0 0.0
  %458 = vmatpush1.msra.mxu0 %v56
  %459 = vmatprep.subr.mxu0 0.0
  %460 = vmatpush1.msra.mxu0 %v55
  %461 = vmatprep.subr.mxu0 0.0
  %462 = vmatpush1.msra.mxu0 %v54
  %463 = vmatprep.subr.mxu0 0.0
  %464 = vmatpush2.msra.mxu0 %v85
  %465 = vmatprep.subr.mxu0 0.0
  %466 = vmatpush2.msra.mxu0 %v84
  %467 = vmatprep.subr.mxu0 0.0
  %468 = vmatpush2.msra.mxu0 %v83
  %469 = vmatprep.subr.mxu0 0.0
  %470 = vmatpush2.msra.mxu0 %v82
  %471 = vmatprep.subr.mxu0 0.0
  %472 = vmatpush2.msra.mxu0 %v81
  %473 = vmatprep.subr.mxu0 0.0
  %474 = vmatpush2.msra.mxu0 %v80
  %475 = vmatprep.subr.mxu0 0.0
  %476 = vmatpush2.msra.mxu0 %v79
  %477 = vmatprep.subr.mxu0 0.0
  %478 = vmatpush2.msra.mxu0 %v78
  %479 = vmatprep.subr.mxu0 0.0
  %480 = vmatpush2.msra.mxu0 %v77
  %481 = vmatprep.subr.mxu0 0.0
  %482 = vmatpush2.msra.mxu0 %v76
  %483 = vmatprep.subr.mxu0 0.0
  %484 = vmatpush2.msra.mxu0 %v75
  %485 = vmatprep.subr.mxu0 0.0
  %486 = vmatpush2.msra.mxu0 %v74
  %487 = vmatprep.subr.mxu0 0.0
  %488 = vmatpush2.msra.mxu0 %v73
  %489 = vmatprep.subr.mxu0 0.0
  %490 = vmatpush2.msra.mxu0 %v72
  %491 = vmatprep.subr.mxu0 0.0
  %492 = vmatpush2.msra.mxu0 %v71
  %493 = vmatprep.subr.mxu0 0.0
  %494 = vmatpush2.msra.mxu0 %v70
  %495 = vmatprep.mubr.f32.mxu0 %v296
  %496 = vmatmul.mubr.f32.gmra.mxu0 %v292
  %v497 = vpop.f32.mrf.mxu0
  %v498 = vadd.f32 %v428, %v497
  %v499 = vpop.f32.mrf.mxu0
  %500 = vdwg.mxu0
  %501 = vmatprep.subr.mxu0 0.0
  %502 = vmatpush1.msra.mxu0 %v101
  %503 = vmatprep.subr.mxu0 0.0
  %504 = vmatpush1.msra.mxu0 %v100
  %505 = vmatprep.subr.mxu0 0.0
  %506 = vmatpush1.msra.mxu0 %v99
  %507 = vmatprep.subr.mxu0 0.0
  %508 = vmatpush1.msra.mxu0 %v98
  %509 = vmatprep.subr.mxu0 0.0
  %510 = vmatpush1.msra.mxu0 %v97
  %511 = vmatprep.subr.mxu0 0.0
  %512 = vmatpush1.msra.mxu0 %v96
  %513 = vmatprep.subr.mxu0 0.0
  %514 = vmatpush1.msra.mxu0 %v95
  %515 = vmatprep.subr.mxu0 0.0
  %516 = vmatpush1.msra.mxu0 %v94
  %517 = vmatprep.subr.mxu0 0.0
  %518 = vmatpush1.msra.mxu0 %v93
  %519 = vmatprep.subr.mxu0 0.0
  %520 = vmatpush1.msra.mxu0 %v92
  %521 = vmatprep.subr.mxu0 0.0
  %522 = vmatpush1.msra.mxu0 %v91
  %523 = vmatprep.subr.mxu0 0.0
  %524 = vmatpush1.msra.mxu0 %v90
  %525 = vmatprep.subr.mxu0 0.0
  %526 = vmatpush1.msra.mxu0 %v89
  %527 = vmatprep.subr.mxu0 0.0
  %528 = vmatpush1.msra.mxu0 %v88
  %529 = vmatprep.subr.mxu0 0.0
  %530 = vmatpush1.msra.mxu0 %v87
  %531 = vmatprep.subr.mxu0 0.0
  %532 = vmatpush1.msra.mxu0 %v86
  %533 = vmatprep.subr.mxu0 0.0
  %534 = vmatpush2.msra.mxu0 %v117
  %535 = vmatprep.subr.mxu0 0.0
  %536 = vmatpush2.msra.mxu0 %v116
  %537 = vmatprep.subr.mxu0 0.0
  %538 = vmatpush2.msra.mxu0 %v115
  %539 = vmatprep.subr.mxu0 0.0
  %540 = vmatpush2.msra.mxu0 %v114
  %541 = vmatprep.subr.mxu0 0.0
  %542 = vmatpush2.msra.mxu0 %v113
  %543 = vmatprep.subr.mxu0 0.0
  %544 = vmatpush2.msra.mxu0 %v112
  %545 = vmatprep.subr.mxu0 0.0
  %546 = vmatpush2.msra.mxu0 %v111
  %547 = vmatprep.subr.mxu0 0.0
  %548 = vmatpush2.msra.mxu0 %v110
  %549 = vmatprep.subr.mxu0 0.0
  %550 = vmatpush2.msra.mxu0 %v109
  %551 = vmatprep.subr.mxu0 0.0
  %552 = vmatpush2.msra.mxu0 %v108
  %553 = vmatprep.subr.mxu0 0.0
  %554 = vmatpush2.msra.mxu0 %v107
  %555 = vmatprep.subr.mxu0 0.0
  %556 = vmatpush2.msra.mxu0 %v106
  %557 = vmatprep.subr.mxu0 0.0
  %558 = vmatpush2.msra.mxu0 %v105
  %559 = vmatprep.subr.mxu0 0.0
  %560 = vmatpush2.msra.mxu0 %v104
  %561 = vmatprep.subr.mxu0 0.0
  %562 = vmatpush2.msra.mxu0 %v103
  %563 = vmatprep.subr.mxu0 0.0
  %564 = vmatpush2.msra.mxu0 %v102
  %565 = vmatprep.mubr.f32.mxu0 %v304
  %566 = vmatmul.mubr.f32.gmra.mxu0 %v300
  %v567 = vpop.f32.mrf.mxu0
  %v568 = vadd.f32 %v498, %v567
  %v569 = vpop.f32.mrf.mxu0
  %570 = vdwg.mxu0
  %571 = vmatprep.subr.mxu0 0.0
  %572 = vmatpush1.msra.mxu0 %v133
  %573 = vmatprep.subr.mxu0 0.0
  %574 = vmatpush1.msra.mxu0 %v132
  %575 = vmatprep.subr.mxu0 0.0
  %576 = vmatpush1.msra.mxu0 %v131
  %577 = vmatprep.subr.mxu0 0.0
  %578 = vmatpush1.msra.mxu0 %v130
  %579 = vmatprep.subr.mxu0 0.0
  %580 = vmatpush1.msra.mxu0 %v129
  %581 = vmatprep.subr.mxu0 0.0
  %582 = vmatpush1.msra.mxu0 %v128
  %583 = vmatprep.subr.mxu0 0.0
  %584 = vmatpush1.msra.mxu0 %v127
  %585 = vmatprep.subr.mxu0 0.0
  %586 = vmatpush1.msra.mxu0 %v126
  %587 = vmatprep.subr.mxu0 0.0
  %588 = vmatpush1.msra.mxu0 %v125
  %589 = vmatprep.subr.mxu0 0.0
  %590 = vmatpush1.msra.mxu0 %v124
  %591 = vmatprep.subr.mxu0 0.0
  %592 = vmatpush1.msra.mxu0 %v123
  %593 = vmatprep.subr.mxu0 0.0
  %594 = vmatpush1.msra.mxu0 %v122
  %595 = vmatprep.subr.mxu0 0.0
  %596 = vmatpush1.msra.mxu0 %v121
  %597 = vmatprep.subr.mxu0 0.0
  %598 = vmatpush1.msra.mxu0 %v120
  %599 = vmatprep.subr.mxu0 0.0
  %600 = vmatpush1.msra.mxu0 %v119
  %601 = vmatprep.subr.mxu0 0.0
  %602 = vmatpush1.msra.mxu0 %v118
  %603 = vmatprep.subr.mxu0 0.0
  %604 = vmatpush2.msra.mxu0 %v149
  %605 = vmatprep.subr.mxu0 0.0
  %606 = vmatpush2.msra.mxu0 %v148
  %607 = vmatprep.subr.mxu0 0.0
  %608 = vmatpush2.msra.mxu0 %v147
  %609 = vmatprep.subr.mxu0 0.0
  %610 = vmatpush2.msra.mxu0 %v146
  %611 = vmatprep.subr.mxu0 0.0
  %612 = vmatpush2.msra.mxu0 %v145
  %613 = vmatprep.subr.mxu0 0.0
  %614 = vmatpush2.msra.mxu0 %v144
  %615 = vmatprep.subr.mxu0 0.0
  %616 = vmatpush2.msra.mxu0 %v143
  %617 = vmatprep.subr.mxu0 0.0
  %618 = vmatpush2.msra.mxu0 %v142
  %619 = vmatprep.subr.mxu0 0.0
  %620 = vmatpush2.msra.mxu0 %v141
  %621 = vmatprep.subr.mxu0 0.0
  %622 = vmatpush2.msra.mxu0 %v140
  %623 = vmatprep.subr.mxu0 0.0
  %624 = vmatpush2.msra.mxu0 %v139
  %625 = vmatprep.subr.mxu0 0.0
  %626 = vmatpush2.msra.mxu0 %v138
  %627 = vmatprep.subr.mxu0 0.0
  %628 = vmatpush2.msra.mxu0 %v137
  %629 = vmatprep.subr.mxu0 0.0
  %630 = vmatpush2.msra.mxu0 %v136
  %631 = vmatprep.subr.mxu0 0.0
  %632 = vmatpush2.msra.mxu0 %v135
  %633 = vmatprep.subr.mxu0 0.0
  %634 = vmatpush2.msra.mxu0 %v134
  %635 = vmatprep.mubr.f32.mxu0 %v312
  %636 = vmatmul.mubr.f32.gmra.mxu0 %v308
  %v637 = vpop.f32.mrf.mxu0
  %v638 = vadd.f32 %v568, %v637
  %v639 = vpop.f32.mrf.mxu0
  %640 = vdwg.mxu0
  %641 = vmatprep.subr.mxu0 0.0
  %642 = vmatpush1.msra.mxu0 %v165
  %643 = vmatprep.subr.mxu0 0.0
  %644 = vmatpush1.msra.mxu0 %v164
  %645 = vmatprep.subr.mxu0 0.0
  %646 = vmatpush1.msra.mxu0 %v163
  %647 = vmatprep.subr.mxu0 0.0
  %648 = vmatpush1.msra.mxu0 %v162
  %649 = vmatprep.subr.mxu0 0.0
  %650 = vmatpush1.msra.mxu0 %v161
  %651 = vmatprep.subr.mxu0 0.0
  %652 = vmatpush1.msra.mxu0 %v160
  %653 = vmatprep.subr.mxu0 0.0
  %654 = vmatpush1.msra.mxu0 %v159
  %655 = vmatprep.subr.mxu0 0.0
  %656 = vmatpush1.msra.mxu0 %v158
  %657 = vmatprep.subr.mxu0 0.0
  %658 = vmatpush1.msra.mxu0 %v157
  %659 = vmatprep.subr.mxu0 0.0
  %660 = vmatpush1.msra.mxu0 %v156
  %661 = vmatprep.subr.mxu0 0.0
  %662 = vmatpush1.msra.mxu0 %v155
  %663 = vmatprep.subr.mxu0 0.0
  %664 = vmatpush1.msra.mxu0 %v154
  %665 = vmatprep.subr.mxu0 0.0
  %666 = vmatpush1.msra.mxu0 %v153
  %667 = vmatprep.subr.mxu0 0.0
  %668 = vmatpush1.msra.mxu0 %v152
  %669 = vmatprep.subr.mxu0 0.0
  %670 = vmatpush1.msra.mxu0 %v151
  %671 = vmatprep.subr.mxu0 0.0
  %672 = vmatpush1.msra.mxu0 %v150
  %673 = vmatprep.subr.mxu0 0.0
  %674 = vmatpush2.msra.mxu0 %v181
  %675 = vmatprep.subr.mxu0 0.0
  %676 = vmatpush2.msra.mxu0 %v180
  %677 = vmatprep.subr.mxu0 0.0
  %678 = vmatpush2.msra.mxu0 %v179
  %679 = vmatprep.subr.mxu0 0.0
  %680 = vmatpush2.msra.mxu0 %v178
  %681 = vmatprep.subr.mxu0 0.0
  %682 = vmatpush2.msra.mxu0 %v177
  %683 = vmatprep.subr.mxu0 0.0
  %684 = vmatpush2.msra.mxu0 %v176
  %685 = vmatprep.subr.mxu0 0.0
  %686 = vmatpush2.msra.mxu0 %v175
  %687 = vmatprep.subr.mxu0 0.0
  %688 = vmatpush2.msra.mxu0 %v174
  %689 = vmatprep.subr.mxu0 0.0
  %690 = vmatpush2.msra.mxu0 %v173
  %691 = vmatprep.subr.mxu0 0.0
  %692 = vmatpush2.msra.mxu0 %v172
  %693 = vmatprep.subr.mxu0 0.0
  %694 = vmatpush2.msra.mxu0 %v171
  %695 = vmatprep.subr.mxu0 0.0
  %696 = vmatpush2.msra.mxu0 %v170
  %697 = vmatprep.subr.mxu0 0.0
  %698 = vmatpush2.msra.mxu0 %v169
  %699 = vmatprep.subr.mxu0 0.0
  %700 = vmatpush2.msra.mxu0 %v168
  %701 = vmatprep.subr.mxu0 0.0
  %702 = vmatpush2.msra.mxu0 %v167
  %703 = vmatprep.subr.mxu0 0.0
  %704 = vmatpush2.msra.mxu0 %v166
  %705 = vmatprep.mubr.f32.mxu0 %v320
  %706 = vmatmul.mubr.f32.gmra.mxu0 %v316
  %v707 = vpop.f32.mrf.mxu0
  %v708 = vadd.f32 %v638, %v707
  %v709 = vpop.f32.mrf.mxu0
  %710 = vdwg.mxu0
  %711 = vmatprep.subr.mxu0 0.0
  %712 = vmatpush1.msra.mxu0 %v197
  %713 = vmatprep.subr.mxu0 0.0
  %714 = vmatpush1.msra.mxu0 %v196
  %715 = vmatprep.subr.mxu0 0.0
  %716 = vmatpush1.msra.mxu0 %v195
  %717 = vmatprep.subr.mxu0 0.0
  %718 = vmatpush1.msra.mxu0 %v194
  %719 = vmatprep.subr.mxu0 0.0
  %720 = vmatpush1.msra.mxu0 %v193
  %721 = vmatprep.subr.mxu0 0.0
  %722 = vmatpush1.msra.mxu0 %v192
  %723 = vmatprep.subr.mxu0 0.0
  %724 = vmatpush1.msra.mxu0 %v191
  %725 = vmatprep.subr.mxu0 0.0
  %726 = vmatpush1.msra.mxu0 %v190
  %727 = vmatprep.subr.mxu0 0.0
  %728 = vmatpush1.msra.mxu0 %v189
  %729 = vmatprep.subr.mxu0 0.0
  %730 = vmatpush1.msra.mxu0 %v188
  %731 = vmatprep.subr.mxu0 0.0
  %732 = vmatpush1.msra.mxu0 %v187
  %733 = vmatprep.subr.mxu0 0.0
  %734 = vmatpush1.msra.mxu0 %v186
  %735 = vmatprep.subr.mxu0 0.0
  %736 = vmatpush1.msra.mxu0 %v185
  %737 = vmatprep.subr.mxu0 0.0
  %738 = vmatpush1.msra.mxu0 %v184
  %739 = vmatprep.subr.mxu0 0.0
  %740 = vmatpush1.msra.mxu0 %v183
  %741 = vmatprep.subr.mxu0 0.0
  %742 = vmatpush1.msra.mxu0 %v182
  %743 = vmatprep.subr.mxu0 0.0
  %744 = vmatpush2.msra.mxu0 %v213
  %745 = vmatprep.subr.mxu0 0.0
  %746 = vmatpush2.msra.mxu0 %v212
  %747 = vmatprep.subr.mxu0 0.0
  %748 = vmatpush2.msra.mxu0 %v211
  %749 = vmatprep.subr.mxu0 0.0
  %750 = vmatpush2.msra.mxu0 %v210
  %751 = vmatprep.subr.mxu0 0.0
  %752 = vmatpush2.msra.mxu0 %v209
  %753 = vmatprep.subr.mxu0 0.0
  %754 = vmatpush2.msra.mxu0 %v208
  %755 = vmatprep.subr.mxu0 0.0
  %756 = vmatpush2.msra.mxu0 %v207
  %757 = vmatprep.subr.mxu0 0.0
  %758 = vmatpush2.msra.mxu0 %v206
  %759 = vmatprep.subr.mxu0 0.0
  %760 = vmatpush2.msra.mxu0 %v205
  %761 = vmatprep.subr.mxu0 0.0
  %762 = vmatpush2.msra.mxu0 %v204
  %763 = vmatprep.subr.mxu0 0.0
  %764 = vmatpush2.msra.mxu0 %v203
  %765 = vmatprep.subr.mxu0 0.0
  %766 = vmatpush2.msra.mxu0 %v202
  %767 = vmatprep.subr.mxu0 0.0
  %768 = vmatpush2.msra.mxu0 %v201
  %769 = vmatprep.subr.mxu0 0.0
  %770 = vmatpush2.msra.mxu0 %v200
  %771 = vmatprep.subr.mxu0 0.0
  %772 = vmatpush2.msra.mxu0 %v199
  %773 = vmatprep.subr.mxu0 0.0
  %774 = vmatpush2.msra.mxu0 %v198
  %775 = vmatprep.mubr.f32.mxu0 %v328
  %776 = vmatmul.mubr.f32.gmra.mxu0 %v324
  %v777 = vpop.f32.mrf.mxu0
  %v778 = vadd.f32 %v708, %v777
  %v779 = vpop.f32.mrf.mxu0
  %780 = vdwg.mxu0
  %781 = vmatprep.subr.mxu0 0.0
  %782 = vmatpush1.msra.mxu0 %v229
  %783 = vmatprep.subr.mxu0 0.0
  %784 = vmatpush1.msra.mxu0 %v228
  %785 = vmatprep.subr.mxu0 0.0
  %786 = vmatpush1.msra.mxu0 %v227
  %787 = vmatprep.subr.mxu0 0.0
  %788 = vmatpush1.msra.mxu0 %v226
  %789 = vmatprep.subr.mxu0 0.0
  %790 = vmatpush1.msra.mxu0 %v225
  %791 = vmatprep.subr.mxu0 0.0
  %792 = vmatpush1.msra.mxu0 %v224
  %793 = vmatprep.subr.mxu0 0.0
  %794 = vmatpush1.msra.mxu0 %v223
  %795 = vmatprep.subr.mxu0 0.0
  %796 = vmatpush1.msra.mxu0 %v222
  %797 = vmatprep.subr.mxu0 0.0
  %798 = vmatpush1.msra.mxu0 %v221
  %799 = vmatprep.subr.mxu0 0.0
  %800 = vmatpush1.msra.mxu0 %v220
  %801 = vmatprep.subr.mxu0 0.0
  %802 = vmatpush1.msra.mxu0 %v219
  %803 = vmatprep.subr.mxu0 0.0
  %804 = vmatpush1.msra.mxu0 %v218
  %805 = vmatprep.subr.mxu0 0.0
  %806 = vmatpush1.msra.mxu0 %v217
  %807 = vmatprep.subr.mxu0 0.0
  %808 = vmatpush1.msra.mxu0 %v216
  %809 = vmatprep.subr.mxu0 0.0
  %810 = vmatpush1.msra.mxu0 %v215
  %811 = vmatprep.subr.mxu0 0.0
  %812 = vmatpush1.msra.mxu0 %v214
  %813 = vmatprep.subr.mxu0 0.0
  %814 = vmatpush2.msra.mxu0 %v245
  %815 = vmatprep.subr.mxu0 0.0
  %816 = vmatpush2.msra.mxu0 %v244
  %817 = vmatprep.subr.mxu0 0.0
  %818 = vmatpush2.msra.mxu0 %v243
  %819 = vmatprep.subr.mxu0 0.0
  %820 = vmatpush2.msra.mxu0 %v242
  %821 = vmatprep.subr.mxu0 0.0
  %822 = vmatpush2.msra.mxu0 %v241
  %823 = vmatprep.subr.mxu0 0.0
  %824 = vmatpush2.msra.mxu0 %v240
  %825 = vmatprep.subr.mxu0 0.0
  %826 = vmatpush2.msra.mxu0 %v239
  %827 = vmatprep.subr.mxu0 0.0
  %828 = vmatpush2.msra.mxu0 %v238
  %829 = vmatprep.subr.mxu0 0.0
  %830 = vmatpush2.msra.mxu0 %v237
  %831 = vmatprep.subr.mxu0 0.0
  %832 = vmatpush2.msra.mxu0 %v236
  %833 = vmatprep.subr.mxu0 0.0
  %834 = vmatpush2.msra.mxu0 %v235
  %835 = vmatprep.subr.mxu0 0.0
  %836 = vmatpush2.msra.mxu0 %v234
  %837 = vmatprep.subr.mxu0 0.0
  %838 = vmatpush2.msra.mxu0 %v233
  %839 = vmatprep.subr.mxu0 0.0
  %840 = vmatpush2.msra.mxu0 %v232
  %841 = vmatprep.subr.mxu0 0.0
  %842 = vmatpush2.msra.mxu0 %v231
  %843 = vmatprep.subr.mxu0 0.0
  %844 = vmatpush2.msra.mxu0 %v230
  %845 = vmatprep.mubr.f32.mxu0 %v336
  %846 = vmatmul.mubr.f32.gmra.mxu0 %v332
  %v847 = vpop.f32.mrf.mxu0
  %v848 = vadd.f32 %v778, %v847
  %v849 = vpop.f32.mrf.mxu0
  %850 = vdwg.mxu0
  %851 = vmatprep.subr.mxu0 0.0
  %852 = vmatpush1.msra.mxu0 %v261
  %853 = vmatprep.subr.mxu0 0.0
  %854 = vmatpush1.msra.mxu0 %v260
  %855 = vmatprep.subr.mxu0 0.0
  %856 = vmatpush1.msra.mxu0 %v259
  %857 = vmatprep.subr.mxu0 0.0
  %858 = vmatpush1.msra.mxu0 %v258
  %859 = vmatprep.subr.mxu0 0.0
  %860 = vmatpush1.msra.mxu0 %v257
  %861 = vmatprep.subr.mxu0 0.0
  %862 = vmatpush1.msra.mxu0 %v256
  %863 = vmatprep.subr.mxu0 0.0
  %864 = vmatpush1.msra.mxu0 %v255
  %865 = vmatprep.subr.mxu0 0.0
  %866 = vmatpush1.msra.mxu0 %v254
  %867 = vmatprep.subr.mxu0 0.0
  %868 = vmatpush1.msra.mxu0 %v253
  %869 = vmatprep.subr.mxu0 0.0
  %870 = vmatpush1.msra.mxu0 %v252
  %871 = vmatprep.subr.mxu0 0.0
  %872 = vmatpush1.msra.mxu0 %v251
  %873 = vmatprep.subr.mxu0 0.0
  %874 = vmatpush1.msra.mxu0 %v250
  %875 = vmatprep.subr.mxu0 0.0
  %876 = vmatpush1.msra.mxu0 %v249
  %877 = vmatprep.subr.mxu0 0.0
  %878 = vmatpush1.msra.mxu0 %v248
  %879 = vmatprep.subr.mxu0 0.0
  %880 = vmatpush1.msra.mxu0 %v247
  %881 = vmatprep.subr.mxu0 0.0
  %882 = vmatpush1.msra.mxu0 %v246
  %883 = vmatprep.subr.mxu0 0.0
  %884 = vmatpush2.msra.mxu0 %v277
  %885 = vmatprep.subr.mxu0 0.0
  %886 = vmatpush2.msra.mxu0 %v276
  %887 = vmatprep.subr.mxu0 0.0
  %888 = vmatpush2.msra.mxu0 %v275
  %889 = vmatprep.subr.mxu0 0.0
  %890 = vmatpush2.msra.mxu0 %v274
  %891 = vmatprep.subr.mxu0 0.0
  %892 = vmatpush2.msra.mxu0 %v273
  %893 = vmatprep.subr.mxu0 0.0
  %894 = vmatpush2.msra.mxu0 %v272
  %895 = vmatprep.subr.mxu0 0.0
  %896 = vmatpush2.msra.mxu0 %v271
  %897 = vmatprep.subr.mxu0 0.0
  %898 = vmatpush2.msra.mxu0 %v270
  %899 = vmatprep.subr.mxu0 0.0
  %900 = vmatpush2.msra.mxu0 %v269
  %901 = vmatprep.subr.mxu0 0.0
  %902 = vmatpush2.msra.mxu0 %v268
  %903 = vmatprep.subr.mxu0 0.0
  %904 = vmatpush2.msra.mxu0 %v267
  %905 = vmatprep.subr.mxu0 0.0
  %906 = vmatpush2.msra.mxu0 %v266
  %907 = vmatprep.subr.mxu0 0.0
  %908 = vmatpush2.msra.mxu0 %v265
  %909 = vmatprep.subr.mxu0 0.0
  %910 = vmatpush2.msra.mxu0 %v264
  %911 = vmatprep.subr.mxu0 0.0
  %912 = vmatpush2.msra.mxu0 %v263
  %913 = vmatprep.subr.mxu0 0.0
  %914 = vmatpush2.msra.mxu0 %v262
  %915 = vmatprep.mubr.f32.mxu0 %v344
  %916 = vmatmul.mubr.f32.gmra.mxu0 %v340
  %v917 = vpop.f32.mrf.mxu0
  %v918 = vadd.f32 %v848, %v917
  %v919 = vpop.f32.mrf.mxu0
  %920 = vdwg.mxu0
  %v921 = vmax.f32 %v918, 0.0
  %v922 = vld [vmem:[%s3] sm:$0xff]
  %v923 = vld [vmem:[%s3 + $0x8] sm:$0xff]
  %v924 = vld [vmem:[%s3 + $0x10] sm:$0xff]
  %v925 = vld [vmem:[%s3 + $0x18] sm:$0xff]
  %v926 = vld [vmem:[%s3 + $0x20] sm:$0xff]
  %v927 = vld [vmem:[%s3 + $0x28] sm:$0xff]
  %v928 = vld [vmem:[%s3 + $0x30] sm:$0xff]
  %v929 = vld [vmem:[%s3 + $0x38] sm:$0xff]
  %v930 = vld [vmem:[%s3 + $0x40] sm:$0xff]
  %v931 = vld [vmem:[%s3 + $0x48] sm:$0xff]
  %v932 = vld [vmem:[%s3 + $0x50] sm:$0xff]
  %v933 = vld [vmem:[%s3 + $0x58] sm:$0xff]
  %v934 = vld [vmem:[%s3 + $0x60] sm:$0xff]
  %v935 = vld [vmem:[%s3 + $0x68] sm:$0xff]
  %v936 = vld [vmem:[%s3 + $0x70] sm:$0xff]
  %v937 = vld [vmem:[%s3 + $0x78] sm:$0xff]
  %v938 = vld [vmem:[%s4] sm:$0x3]
  %v940 = vlaneseq
  %v941 = vshrl.u32 %v940, 7
  %v942 = vsub.s32 0, %v941
  %v943 = vrot.slane %v938, %v942
  %v944 = vlaneseq
  %v945 = vshrl.u32 %v944, 7
  %v946 = vsub.s32 1, %v945
  %v947 = vrot.slane %v938, %v946
  %vm950 = vcmask 523264
  %v952 = vsel %vm950, %v921, 0
  %954 = vmatprep.subr.mxu0 0.0
  %955 = vmatpush1.msra.mxu0 0.0
  %956 = vmatprep.subr.mxu0 0.0
  %957 = vmatpush1.msra.mxu0 0.0
  %958 = vmatprep.subr.mxu0 0.0
  %959 = vmatpush1.msra.mxu0 0.0
  %960 = vmatprep.subr.mxu0 0.0
  %961 = vmatpush1.msra.mxu0 0.0
  %962 = vmatprep.subr.mxu0 0.0
  %963 = vmatpush1.msra.mxu0 0.0
  %964 = vmatprep.subr.mxu0 0.0
  %965 = vmatpush1.msra.mxu0 0.0
  %966 = vmatprep.subr.mxu0 0.0
  %967 = vmatpush1.msra.mxu0 0.0
  %968 = vmatprep.subr.mxu0 0.0
  %969 = vmatpush1.msra.mxu0 0.0
  %970 = vmatprep.subr.mxu0 %v937
  %971 = vmatpush1.msra.mxu0 %v936
  %972 = vmatprep.subr.mxu0 %v935
  %973 = vmatpush1.msra.mxu0 %v934
  %974 = vmatprep.subr.mxu0 %v933
  %975 = vmatpush1.msra.mxu0 %v932
  %976 = vmatprep.subr.mxu0 %v931
  %977 = vmatpush1.msra.mxu0 %v930
  %978 = vmatprep.subr.mxu0 %v929
  %979 = vmatpush1.msra.mxu0 %v928
  %980 = vmatprep.subr.mxu0 %v927
  %981 = vmatpush1.msra.mxu0 %v926
  %982 = vmatprep.subr.mxu0 %v925
  %983 = vmatpush1.msra.mxu0 %v924
  %984 = vmatprep.subr.mxu0 %v923
  %985 = vmatpush1.msra.mxu0 %v922
  %986 = vmatprep.subr.mxu0 0.0
  %987 = vmatpush2.msra.mxu0 0.0
  %988 = vmatprep.subr.mxu0 0.0
  %989 = vmatpush2.msra.mxu0 0.0
  %990 = vmatprep.subr.mxu0 0.0
  %991 = vmatpush2.msra.mxu0 0.0
  %992 = vmatprep.subr.mxu0 0.0
  %993 = vmatpush2.msra.mxu0 0.0
  %994 = vmatprep.subr.mxu0 0.0
  %995 = vmatpush2.msra.mxu0 0.0
  %996 = vmatprep.subr.mxu0 0.0
  %997 = vmatpush2.msra.mxu0 0.0
  %998 = vmatprep.subr.mxu0 0.0
  %999 = vmatpush2.msra.mxu0 0.0
  %1000 = vmatprep.subr.mxu0 0.0
  %1001 = vmatpush2.msra.mxu0 0.0
  %1002 = vmatprep.subr.mxu0 0.0
  %1003 = vmatpush2.msra.mxu0 0.0
  %1004 = vmatprep.subr.mxu0 0.0
  %1005 = vmatpush2.msra.mxu0 0.0
  %1006 = vmatprep.subr.mxu0 0.0
  %1007 = vmatpush2.msra.mxu0 0.0
  %1008 = vmatprep.subr.mxu0 0.0
  %1009 = vmatpush2.msra.mxu0 0.0
  %1010 = vmatprep.subr.mxu0 0.0
  %1011 = vmatpush2.msra.mxu0 0.0
  %1012 = vmatprep.subr.mxu0 0.0
  %1013 = vmatpush2.msra.mxu0 0.0
  %1014 = vmatprep.subr.mxu0 0.0
  %1015 = vmatpush2.msra.mxu0 0.0
  %1016 = vmatprep.subr.mxu0 0.0
  %1017 = vmatpush2.msra.mxu0 0.0
  %1018 = vmatprep.mubr.f32.mxu0 0.0
  %1019 = vmatmul.mubr.f32.gmra.mxu0 %v952
  %v1020 = vpop.f32.mrf.mxu0
  %v1021 = vadd.f32 %v943, %v1020
  %v1022 = vpop.f32.mrf.mxu0
  %v1023 = vadd.f32 %v947, %v1022
  %1024 = vdwg.mxu0
  %v1025 = vmax.f32 %v1021, 0.0
  %v1026 = vmax.f32 %v1023, 0.0
  %v1029 = vcombine.low %v1025, %v1026
  %v1031 = vunpack.c.l.s4 1966171168
  %v1032 = vunpack.c.0.s8 %v1031
  %v1033 = vlaneseq
  %v1034 = vshrl.u32 %v1033, 7
  %v1035 = vsub.s32 %v1032, %v1034
  %v1036 = vrot.slane %v1029, %v1035
  %v1038 = vunpack.c.l.s4 1966171168
  %v1039 = vunpack.c.0.s8 %v1038
  %v1040 = vlaneseq
  %v1041 = vshrl.u32 %v1040, 7
  %v1042 = vsub.s32 %v1039, %v1041
  %v1043 = vrot.slane %v1036, %v1042
  %v1045 = vlaneseq
  %vm1046 = vcmp.ge.s32.totalorder %v1045, 0
  %vm1047 = vcmp.lt.s32.totalorder %v1045, 256
  %vm1048 = vmand %vm1046, %vm1047
  %1049 = vst.msk [vmem:[%s5] sm:$0x3] %vm1048, %v1043
  // Predicated region
  $region22: #{tsrvfd_forward.35} parent=0 // pred_check
    _
  $region23: #{tsrvfd_forward.35} parent=0 // pred_check_branch
    %1051 = sbr.rel (0) target = $region25
  $region24: #{tsrvfd_forward.35} parent=0 // pred_region
    _
  $region25: #{tsrvfd_forward.35} parent=0 // pred_fallthru
    _
  // Predicated region
  $region26: #{tsrvfd_forward.35} parent=0 // pred_check
    _
  $region27: #{tsrvfd_forward.35} parent=0 // pred_check_branch
    %1053 = sbr.rel (0) target = $region29
  $region28: #{tsrvfd_forward.35} parent=0 // pred_region
    _
  $region29: #{tsrvfd_forward.35} parent=0 // pred_fallthru
    _

// kernel: tsrvfd_forward.30
$region0: #{tsrvfd_forward.30}
  #allocation0 [shape = 'u32[]', space=smem, size = 0x4, offset = 0x4, fixed_abs, tag = 'smem constant byte address 0x4 - core index']
  #allocation1 [shape = 'u32[144,128]{1,0:T(1,128)}', space=vmem, size = 0x12000, scoped, tag = 'internal scratch']
  %s0 = inlined_call_operand.vmem [shape: bf16[8,432], index: 0, kind: input, shape index: {}]
  %s1 = inlined_call_operand.vmem [shape: bf16[432,512], index: 1, kind: input, shape index: {}]
  %s2 = inlined_call_operand.vmem [shape: f32[8,1], index: 2, kind: input, shape index: {}]
  %s3 = inlined_call_operand.vmem [shape: f32[8,512], index: 3, kind: output, shape index: {}]
  %s4 = sld [smem:[#allocation0]]
  $region22: #{tsrvfd_forward.30} parent=0
    _
  %s6 = ssub.s32 1, %s4
  %s7 = scalar_select 0, %s6, %s4
  // Predicated region
  $region2: #{tsrvfd_forward.30} parent=0 // pred_check
    _
  $region3: #{tsrvfd_forward.30} parent=0 // pred_check_branch
    %9 = sbr.rel (0) target = $region5
  $region4: #{tsrvfd_forward.30} parent=0 // pred_region
    _
  $region5: #{tsrvfd_forward.30} parent=0 // pred_fallthru
    _
  // Predicated region
  $region6: #{tsrvfd_forward.30} parent=0 // pred_check
    _
  $region7: #{tsrvfd_forward.30} parent=0 // pred_check_branch
    %11 = sbr.rel (0) target = $region9
  $region8: #{tsrvfd_forward.30} parent=0 // pred_region
    _
  $region9: #{tsrvfd_forward.30} parent=0 // pred_fallthru
    _
  // Predicated region
  $region10: #{tsrvfd_forward.30} parent=0 // pred_check
    _
  $region11: #{tsrvfd_forward.30} parent=0 // pred_check_branch
    %13 = sbr.rel (0) target = $region13
  $region12: #{tsrvfd_forward.30} parent=0 // pred_region
    _
  $region13: #{tsrvfd_forward.30} parent=0 // pred_fallthru
    _
  %v15 = vld [vmem:[%s0] sm:$0xff]
  %v16 = vld [vmem:[%s0 + $0x8] sm:$0xff]
  %v17 = vld [vmem:[%s1] sm:$0xff]
  %v18 = vld [vmem:[%s1 + $0x8] sm:$0xff]
  %v19 = vld [vmem:[%s1 + $0x10] sm:$0xff]
  %v20 = vld [vmem:[%s1 + $0x18] sm:$0xff]
  %v21 = vld [vmem:[%s1 + $0x20] sm:$0xff]
  %v22 = vld [vmem:[%s1 + $0x28] sm:$0xff]
  %v23 = vld [vmem:[%s1 + $0x30] sm:$0xff]
  %v24 = vld [vmem:[%s1 + $0x38] sm:$0xff]
  %v25 = vld [vmem:[%s1 + $0x40] sm:$0xff]
  %v26 = vld [vmem:[%s1 + $0x48] sm:$0xff]
  %v27 = vld [vmem:[%s1 + $0x50] sm:$0xff]
  %v28 = vld [vmem:[%s1 + $0x58] sm:$0xff]
  %v29 = vld [vmem:[%s1 + $0x60] sm:$0xff]
  %v30 = vld [vmem:[%s1 + $0x68] sm:$0xff]
  %v31 = vld [vmem:[%s1 + $0x70] sm:$0xff]
  %v32 = vld [vmem:[%s1 + $0x78] sm:$0xff]
  %v33 = vld [vmem:[%s1 + $0x80] sm:$0xff]
  %v34 = vld [vmem:[%s1 + $0x88] sm:$0xff]
  %v35 = vld [vmem:[%s1 + $0x90] sm:$0xff]
  %v36 = vld [vmem:[%s1 + $0x98] sm:$0xff]
  %v37 = vld [vmem:[%s1 + $0xa0] sm:$0xff]
  %v38 = vld [vmem:[%s1 + $0xa8] sm:$0xff]
  %v39 = vld [vmem:[%s1 + $0xb0] sm:$0xff]
  %v40 = vld [vmem:[%s1 + $0xb8] sm:$0xff]
  %v41 = vld [vmem:[%s1 + $0xc0] sm:$0xff]
  %v42 = vld [vmem:[%s1 + $0xc8] sm:$0xff]
  %v43 = vld [vmem:[%s1 + $0xd0] sm:$0xff]
  %v44 = vld [vmem:[%s1 + $0xd8] sm:$0xff]
  %v45 = vld [vmem:[%s1 + $0xe0] sm:$0xff]
  %v46 = vld [vmem:[%s1 + $0xe8] sm:$0xff]
  %v47 = vld [vmem:[%s1 + $0xf0] sm:$0xff]
  %v48 = vld [vmem:[%s1 + $0xf8] sm:$0xff]
  %v49 = vld [vmem:[%s1 + $0x100] sm:$0xff]
  %v50 = vld [vmem:[%s1 + $0x108] sm:$0xff]
  %v51 = vld [vmem:[%s1 + $0x110] sm:$0xff]
  %v52 = vld [vmem:[%s1 + $0x118] sm:$0xff]
  %v53 = vld [vmem:[%s1 + $0x120] sm:$0xff]
  %v54 = vld [vmem:[%s1 + $0x128] sm:$0xff]
  %v55 = vld [vmem:[%s1 + $0x130] sm:$0xff]
  %v56 = vld [vmem:[%s1 + $0x138] sm:$0xff]
  %v57 = vld [vmem:[%s1 + $0x140] sm:$0xff]
  %v58 = vld [vmem:[%s1 + $0x148] sm:$0xff]
  %v59 = vld [vmem:[%s1 + $0x150] sm:$0xff]
  %v60 = vld [vmem:[%s1 + $0x158] sm:$0xff]
  %v61 = vld [vmem:[%s1 + $0x160] sm:$0xff]
  %v62 = vld [vmem:[%s1 + $0x168] sm:$0xff]
  %v63 = vld [vmem:[%s1 + $0x170] sm:$0xff]
  %v64 = vld [vmem:[%s1 + $0x178] sm:$0xff]
  %v65 = vld [vmem:[%s1 + $0x180] sm:$0xff]
  %v66 = vld [vmem:[%s1 + $0x188] sm:$0xff]
  %v67 = vld [vmem:[%s1 + $0x190] sm:$0xff]
  %v68 = vld [vmem:[%s1 + $0x198] sm:$0xff]
  %v69 = vld [vmem:[%s1 + $0x1a0] sm:$0xff]
  %v70 = vld [vmem:[%s1 + $0x1a8] sm:$0xff]
  %v71 = vld [vmem:[%s1 + $0x1b0] sm:$0xff]
  %v72 = vld [vmem:[%s1 + $0x1b8] sm:$0xff]
  %v73 = vld [vmem:[%s1 + $0x1c0] sm:$0xff]
  %v74 = vld [vmem:[%s1 + $0x1c8] sm:$0xff]
  %v75 = vld [vmem:[%s1 + $0x1d0] sm:$0xff]
  %v76 = vld [vmem:[%s1 + $0x1d8] sm:$0xff]
  %v77 = vld [vmem:[%s1 + $0x1e0] sm:$0xff]
  %v78 = vld [vmem:[%s1 + $0x1e8] sm:$0xff]
  %v79 = vld [vmem:[%s1 + $0x1f0] sm:$0xff]
  %v80 = vld [vmem:[%s1 + $0x1f8] sm:$0xff]
  %v81 = vld [vmem:[%s1 + $0x200] sm:$0xff]
  %v82 = vld [vmem:[%s1 + $0x208] sm:$0xff]
  %v83 = vld [vmem:[%s1 + $0x210] sm:$0xff]
  %v84 = vld [vmem:[%s1 + $0x218] sm:$0xff]
  %v85 = vld [vmem:[%s1 + $0x220] sm:$0xff]
  %v86 = vld [vmem:[%s1 + $0x228] sm:$0xff]
  %v87 = vld [vmem:[%s1 + $0x230] sm:$0xff]
  %v88 = vld [vmem:[%s1 + $0x238] sm:$0xff]
  %v89 = vld [vmem:[%s1 + $0x240] sm:$0xff]
  %v90 = vld [vmem:[%s1 + $0x248] sm:$0xff]
  %v91 = vld [vmem:[%s1 + $0x250] sm:$0xff]
  %v92 = vld [vmem:[%s1 + $0x258] sm:$0xff]
  %v93 = vld [vmem:[%s1 + $0x260] sm:$0xff]
  %v94 = vld [vmem:[%s1 + $0x268] sm:$0xff]
  %v95 = vld [vmem:[%s1 + $0x270] sm:$0xff]
  %v96 = vld [vmem:[%s1 + $0x278] sm:$0xff]
  %v97 = vld [vmem:[%s1 + $0x280] sm:$0xff]
  %v98 = vld [vmem:[%s1 + $0x288] sm:$0xff]
  %v99 = vld [vmem:[%s1 + $0x290] sm:$0xff]
  %v100 = vld [vmem:[%s1 + $0x298] sm:$0xff]
  %v101 = vld [vmem:[%s1 + $0x2a0] sm:$0xff]
  %v102 = vld [vmem:[%s1 + $0x2a8] sm:$0xff]
  %v103 = vld [vmem:[%s1 + $0x2b0] sm:$0xff]
  %v104 = vld [vmem:[%s1 + $0x2b8] sm:$0xff]
  %v105 = vld [vmem:[%s1 + $0x2c0] sm:$0xff]
  %v106 = vld [vmem:[%s1 + $0x2c8] sm:$0xff]
  %v107 = vld [vmem:[%s1 + $0x2d0] sm:$0xff]
  %v108 = vld [vmem:[%s1 + $0x2d8] sm:$0xff]
  %v109 = vld [vmem:[%s1 + $0x2e0] sm:$0xff]
  %v110 = vld [vmem:[%s1 + $0x2e8] sm:$0xff]
  %v111 = vld [vmem:[%s1 + $0x2f0] sm:$0xff]
  %v112 = vld [vmem:[%s1 + $0x2f8] sm:$0xff]
  %v113 = vld [vmem:[%s1 + $0x300] sm:$0xff]
  %v114 = vld [vmem:[%s1 + $0x308] sm:$0xff]
  %v115 = vld [vmem:[%s1 + $0x310] sm:$0xff]
  %v116 = vld [vmem:[%s1 + $0x318] sm:$0xff]
  %v117 = vld [vmem:[%s1 + $0x320] sm:$0xff]
  %v118 = vld [vmem:[%s1 + $0x328] sm:$0xff]
  %v119 = vld [vmem:[%s1 + $0x330] sm:$0xff]
  %v120 = vld [vmem:[%s1 + $0x338] sm:$0xff]
  %v121 = vld [vmem:[%s1 + $0x340] sm:$0xff]
  %v122 = vld [vmem:[%s1 + $0x348] sm:$0xff]
  %v123 = vld [vmem:[%s1 + $0x350] sm:$0xff]
  %v124 = vld [vmem:[%s1 + $0x358] sm:$0xff]
  %v125 = vld [vmem:[%s2] sm:$0xff]
  %127 = vset.pattern.permute.xlu0 0
  %128 = vperm.xlu0 %127, %v125
  %v129 = vpop.permute.xlu0 %128
  %v133 = vunpack.c.l.b16 %v15
  %v134 = vunpack.c.h.b16 %v15
  %v135 = vunpack.c.l.b16 %v16
  %v136 = vunpack.c.h.b16 %v16
  %v137 = vpack.c.b16 %v133, %v133
  %v138 = vpack.c.b16 %v134, %v134
  %v139 = vpack.c.b16 %v135, %v135
  %v140 = vpack.c.b16 %v136, %v136
  %v252 = vunpack.c.l.b16 %v17
  %v253 = vunpack.c.h.b16 %v17
  %v254 = vunpack.c.l.b16 %v18
  %v255 = vunpack.c.h.b16 %v18
  %v256 = vunpack.c.l.b16 %v19
  %v257 = vunpack.c.h.b16 %v19
  %v258 = vunpack.c.l.b16 %v20
  %v259 = vunpack.c.h.b16 %v20
  %v260 = vunpack.c.l.b16 %v21
  %v261 = vunpack.c.h.b16 %v21
  %v262 = vunpack.c.l.b16 %v22
  %v263 = vunpack.c.h.b16 %v22
  %v264 = vunpack.c.l.b16 %v23
  %v265 = vunpack.c.h.b16 %v23
  %v266 = vunpack.c.l.b16 %v24
  %v267 = vunpack.c.h.b16 %v24
  %v268 = vunpack.c.l.b16 %v25
  %v269 = vunpack.c.h.b16 %v25
  %v270 = vunpack.c.l.b16 %v26
  %v271 = vunpack.c.h.b16 %v26
  %v272 = vunpack.c.l.b16 %v27
  %v273 = vunpack.c.h.b16 %v27
  %v274 = vunpack.c.l.b16 %v28
  %v275 = vunpack.c.h.b16 %v28
  %v276 = vunpack.c.l.b16 %v29
  %v277 = vunpack.c.h.b16 %v29
  %v278 = vunpack.c.l.b16 %v30
  %v279 = vunpack.c.h.b16 %v30
  %v280 = vunpack.c.l.b16 %v31
  %v281 = vunpack.c.h.b16 %v31
  %v282 = vunpack.c.l.b16 %v32
  %v283 = vunpack.c.h.b16 %v32
  %v284 = vunpack.c.l.b16 %v33
  %v285 = vunpack.c.h.b16 %v33
  %v286 = vunpack.c.l.b16 %v34
  %v287 = vunpack.c.h.b16 %v34
  %v288 = vunpack.c.l.b16 %v35
  %v289 = vunpack.c.h.b16 %v35
  %v290 = vunpack.c.l.b16 %v36
  %v291 = vunpack.c.h.b16 %v36
  %v292 = vunpack.c.l.b16 %v37
  %v293 = vunpack.c.h.b16 %v37
  %v294 = vunpack.c.l.b16 %v38
  %v295 = vunpack.c.h.b16 %v38
  %v296 = vunpack.c.l.b16 %v39
  %v297 = vunpack.c.h.b16 %v39
  %v298 = vunpack.c.l.b16 %v40
  %v299 = vunpack.c.h.b16 %v40
  %v300 = vunpack.c.l.b16 %v41
  %v301 = vunpack.c.h.b16 %v41
  %v302 = vunpack.c.l.b16 %v42
  %v303 = vunpack.c.h.b16 %v42
  %v304 = vunpack.c.l.b16 %v43
  %v305 = vunpack.c.h.b16 %v43
  %v306 = vunpack.c.l.b16 %v44
  %v307 = vunpack.c.h.b16 %v44
  %v308 = vunpack.c.l.b16 %v45
  %v309 = vunpack.c.h.b16 %v45
  %v310 = vunpack.c.l.b16 %v46
  %v311 = vunpack.c.h.b16 %v46
  %v312 = vunpack.c.l.b16 %v47
  %v313 = vunpack.c.h.b16 %v47
  %v314 = vunpack.c.l.b16 %v48
  %v315 = vunpack.c.h.b16 %v48
  %v316 = vunpack.c.l.b16 %v49
  %v317 = vunpack.c.h.b16 %v49
  %v318 = vunpack.c.l.b16 %v50
  %v319 = vunpack.c.h.b16 %v50
  %v320 = vunpack.c.l.b16 %v51
  %v321 = vunpack.c.h.b16 %v51
  %v322 = vunpack.c.l.b16 %v52
  %v323 = vunpack.c.h.b16 %v52
  %v324 = vunpack.c.l.b16 %v53
  %v325 = vunpack.c.h.b16 %v53
  %v326 = vunpack.c.l.b16 %v54
  %v327 = vunpack.c.h.b16 %v54
  %v328 = vunpack.c.l.b16 %v55
  %v329 = vunpack.c.h.b16 %v55
  %v330 = vunpack.c.l.b16 %v56
  %v331 = vunpack.c.h.b16 %v56
  %v332 = vunpack.c.l.b16 %v57
  %v333 = vunpack.c.h.b16 %v57
  %v334 = vunpack.c.l.b16 %v58
  %v335 = vunpack.c.h.b16 %v58
  %v336 = vunpack.c.l.b16 %v59
  %v337 = vunpack.c.h.b16 %v59
  %v338 = vunpack.c.l.b16 %v60
  %v339 = vunpack.c.h.b16 %v60
  %v340 = vunpack.c.l.b16 %v61
  %v341 = vunpack.c.h.b16 %v61
  %v342 = vunpack.c.l.b16 %v62
  %v343 = vunpack.c.h.b16 %v62
  %v344 = vunpack.c.l.b16 %v63
  %v345 = vunpack.c.h.b16 %v63
  %v346 = vunpack.c.l.b16 %v64
  %v347 = vunpack.c.h.b16 %v64
  %v348 = vunpack.c.l.b16 %v65
  %v349 = vunpack.c.h.b16 %v65
  %v350 = vunpack.c.l.b16 %v66
  %v351 = vunpack.c.h.b16 %v66
  %v352 = vunpack.c.l.b16 %v67
  %v353 = vunpack.c.h.b16 %v67
  %v354 = vunpack.c.l.b16 %v68
  %v355 = vunpack.c.h.b16 %v68
  %v356 = vunpack.c.l.b16 %v69
  %v357 = vunpack.c.h.b16 %v69
  %v358 = vunpack.c.l.b16 %v70
  %v359 = vunpack.c.h.b16 %v70
  %v360 = vunpack.c.l.b16 %v71
  %v361 = vunpack.c.h.b16 %v71
  %v362 = vunpack.c.l.b16 %v72
  %v363 = vunpack.c.h.b16 %v72
  %v364 = vunpack.c.l.b16 %v73
  %v365 = vunpack.c.h.b16 %v73
  %v366 = vunpack.c.l.b16 %v74
  %v367 = vunpack.c.h.b16 %v74
  %v368 = vunpack.c.l.b16 %v75
  %v369 = vunpack.c.h.b16 %v75
  %v370 = vunpack.c.l.b16 %v76
  %v371 = vunpack.c.h.b16 %v76
  %v372 = vunpack.c.l.b16 %v77
  %v373 = vunpack.c.h.b16 %v77
  %v374 = vunpack.c.l.b16 %v78
  %v375 = vunpack.c.h.b16 %v78
  %v376 = vunpack.c.l.b16 %v79
  %v377 = vunpack.c.h.b16 %v79
  %v378 = vunpack.c.l.b16 %v80
  %v379 = vunpack.c.h.b16 %v80
  %v380 = vunpack.c.l.b16 %v81
  %v381 = vunpack.c.h.b16 %v81
  %v382 = vunpack.c.l.b16 %v82
  %v383 = vunpack.c.h.b16 %v82
  %v384 = vunpack.c.l.b16 %v83
  %v385 = vunpack.c.h.b16 %v83
  %v386 = vunpack.c.l.b16 %v84
  %v387 = vunpack.c.h.b16 %v84
  %v388 = vunpack.c.l.b16 %v85
  %v389 = vunpack.c.h.b16 %v85
  %v390 = vunpack.c.l.b16 %v86
  %v391 = vunpack.c.h.b16 %v86
  %v392 = vunpack.c.l.b16 %v87
  %v393 = vunpack.c.h.b16 %v87
  %v394 = vunpack.c.l.b16 %v88
  %v395 = vunpack.c.h.b16 %v88
  %v396 = vunpack.c.l.b16 %v89
  %v397 = vunpack.c.h.b16 %v89
  %v398 = vunpack.c.l.b16 %v90
  %v399 = vunpack.c.h.b16 %v90
  %v400 = vunpack.c.l.b16 %v91
  %v401 = vunpack.c.h.b16 %v91
  %v402 = vunpack.c.l.b16 %v92
  %v403 = vunpack.c.h.b16 %v92
  %v404 = vunpack.c.l.b16 %v93
  %v405 = vunpack.c.h.b16 %v93
  %v406 = vunpack.c.l.b16 %v94
  %v407 = vunpack.c.h.b16 %v94
  %v408 = vunpack.c.l.b16 %v95
  %v409 = vunpack.c.h.b16 %v95
  %v410 = vunpack.c.l.b16 %v96
  %v411 = vunpack.c.h.b16 %v96
  %v412 = vunpack.c.l.b16 %v97
  %v413 = vunpack.c.h.b16 %v97
  %v414 = vunpack.c.l.b16 %v98
  %v415 = vunpack.c.h.b16 %v98
  %v416 = vunpack.c.l.b16 %v99
  %v417 = vunpack.c.h.b16 %v99
  %v418 = vunpack.c.l.b16 %v100
  %v419 = vunpack.c.h.b16 %v100
  %v420 = vunpack.c.l.b16 %v101
  %v421 = vunpack.c.h.b16 %v101
  %v422 = vunpack.c.l.b16 %v102
  %v423 = vunpack.c.h.b16 %v102
  %v424 = vunpack.c.l.b16 %v103
  %v425 = vunpack.c.h.b16 %v103
  %v426 = vunpack.c.l.b16 %v104
  %v427 = vunpack.c.h.b16 %v104
  %v428 = vunpack.c.l.b16 %v105
  %v429 = vunpack.c.h.b16 %v105
  %v430 = vunpack.c.l.b16 %v106
  %v431 = vunpack.c.h.b16 %v106
  %v432 = vunpack.c.l.b16 %v107
  %v433 = vunpack.c.h.b16 %v107
  %v434 = vunpack.c.l.b16 %v108
  %v435 = vunpack.c.h.b16 %v108
  %v436 = vunpack.c.l.b16 %v109
  %v437 = vunpack.c.h.b16 %v109
  %v438 = vunpack.c.l.b16 %v110
  %v439 = vunpack.c.h.b16 %v110
  %v440 = vunpack.c.l.b16 %v111
  %v441 = vunpack.c.h.b16 %v111
  %v442 = vunpack.c.l.b16 %v112
  %v443 = vunpack.c.h.b16 %v112
  %v444 = vunpack.c.l.b16 %v113
  %v445 = vunpack.c.h.b16 %v113
  %v446 = vunpack.c.l.b16 %v114
  %v447 = vunpack.c.h.b16 %v114
  %v448 = vunpack.c.l.b16 %v115
  %v449 = vunpack.c.h.b16 %v115
  %v450 = vunpack.c.l.b16 %v116
  %v451 = vunpack.c.h.b16 %v116
  %v452 = vunpack.c.l.b16 %v117
  %v453 = vunpack.c.h.b16 %v117
  %v454 = vunpack.c.l.b16 %v118
  %v455 = vunpack.c.h.b16 %v118
  %v456 = vunpack.c.l.b16 %v119
  %v457 = vunpack.c.h.b16 %v119
  %v458 = vunpack.c.l.b16 %v120
  %v459 = vunpack.c.h.b16 %v120
  %v460 = vunpack.c.l.b16 %v121
  %v461 = vunpack.c.h.b16 %v121
  %v462 = vunpack.c.l.b16 %v122
  %v463 = vunpack.c.h.b16 %v122
  %v464 = vunpack.c.l.b16 %v123
  %v465 = vunpack.c.h.b16 %v123
  %v466 = vunpack.c.l.b16 %v124
  %v467 = vunpack.c.h.b16 %v124
  %v468 = vpack.c.b16 %v256, %v252
  %v469 = vpack.c.b16 %v257, %v253
  %v470 = vpack.c.b16 %v258, %v254
  %v471 = vpack.c.b16 %v259, %v255
  %v472 = vpack.c.b16 %v264, %v260
  %v473 = vpack.c.b16 %v265, %v261
  %v474 = vpack.c.b16 %v266, %v262
  %v475 = vpack.c.b16 %v267, %v263
  %v476 = vpack.c.b16 %v272, %v268
  %v477 = vpack.c.b16 %v273, %v269
  %v478 = vpack.c.b16 %v274, %v270
  %v479 = vpack.c.b16 %v275, %v271
  %v480 = vpack.c.b16 %v280, %v276
  %v481 = vpack.c.b16 %v281, %v277
  %v482 = vpack.c.b16 %v282, %v278
  %v483 = vpack.c.b16 %v283, %v279
  %v484 = vpack.c.b16 %v288, %v284
  %v485 = vpack.c.b16 %v289, %v285
  %v486 = vpack.c.b16 %v290, %v286
  %v487 = vpack.c.b16 %v291, %v287
  %v488 = vpack.c.b16 %v296, %v292
  %v489 = vpack.c.b16 %v297, %v293
  %v490 = vpack.c.b16 %v298, %v294
  %v491 = vpack.c.b16 %v299, %v295
  %v492 = vpack.c.b16 %v304, %v300
  %v493 = vpack.c.b16 %v305, %v301
  %v494 = vpack.c.b16 %v306, %v302
  %v495 = vpack.c.b16 %v307, %v303
  %v496 = vpack.c.b16 %v312, %v308
  %v497 = vpack.c.b16 %v313, %v309
  %v498 = vpack.c.b16 %v314, %v310
  %v499 = vpack.c.b16 %v315, %v311
  %v500 = vpack.c.b16 %v320, %v316
  %v501 = vpack.c.b16 %v321, %v317
  %v502 = vpack.c.b16 %v322, %v318
  %v503 = vpack.c.b16 %v323, %v319
  %v504 = vpack.c.b16 %v328, %v324
  %v505 = vpack.c.b16 %v329, %v325
  %v506 = vpack.c.b16 %v330, %v326
  %v507 = vpack.c.b16 %v331, %v327
  %v508 = vpack.c.b16 %v336, %v332
  %v509 = vpack.c.b16 %v337, %v333
  %v510 = vpack.c.b16 %v338, %v334
  %v511 = vpack.c.b16 %v339, %v335
  %v512 = vpack.c.b16 %v344, %v340
  %v513 = vpack.c.b16 %v345, %v341
  %v514 = vpack.c.b16 %v346, %v342
  %v515 = vpack.c.b16 %v347, %v343
  %v516 = vpack.c.b16 %v352, %v348
  %v517 = vpack.c.b16 %v353, %v349
  %v518 = vpack.c.b16 %v354, %v350
  %v519 = vpack.c.b16 %v355, %v351
  %v520 = vpack.c.b16 %v360, %v356
  %v521 = vpack.c.b16 %v361, %v357
  %v522 = vpack.c.b16 %v362, %v358
  %v523 = vpack.c.b16 %v363, %v359
  %v524 = vpack.c.b16 %v368, %v364
  %v525 = vpack.c.b16 %v369, %v365
  %v526 = vpack.c.b16 %v370, %v366
  %v527 = vpack.c.b16 %v371, %v367
  %v528 = vpack.c.b16 %v376, %v372
  %v529 = vpack.c.b16 %v377, %v373
  %v530 = vpack.c.b16 %v378, %v374
  %v531 = vpack.c.b16 %v379, %v375
  %v532 = vpack.c.b16 %v384, %v380
  %v533 = vpack.c.b16 %v385, %v381
  %v534 = vpack.c.b16 %v386, %v382
  %v535 = vpack.c.b16 %v387, %v383
  %v536 = vpack.c.b16 %v392, %v388
  %v537 = vpack.c.b16 %v393, %v389
  %v538 = vpack.c.b16 %v394, %v390
  %v539 = vpack.c.b16 %v395, %v391
  %v540 = vpack.c.b16 %v400, %v396
  %v541 = vpack.c.b16 %v401, %v397
  %v542 = vpack.c.b16 %v402, %v398
  %v543 = vpack.c.b16 %v403, %v399
  %v544 = vpack.c.b16 %v408, %v404
  %v545 = vpack.c.b16 %v409, %v405
  %v546 = vpack.c.b16 %v410, %v406
  %v547 = vpack.c.b16 %v411, %v407
  %v548 = vpack.c.b16 %v416, %v412
  %v549 = vpack.c.b16 %v417, %v413
  %v550 = vpack.c.b16 %v418, %v414
  %v551 = vpack.c.b16 %v419, %v415
  %v552 = vpack.c.b16 %v424, %v420
  %v553 = vpack.c.b16 %v425, %v421
  %v554 = vpack.c.b16 %v426, %v422
  %v555 = vpack.c.b16 %v427, %v423
  %v556 = vpack.c.b16 %v432, %v428
  %v557 = vpack.c.b16 %v433, %v429
  %v558 = vpack.c.b16 %v434, %v430
  %v559 = vpack.c.b16 %v435, %v431
  %v560 = vpack.c.b16 %v440, %v436
  %v561 = vpack.c.b16 %v441, %v437
  %v562 = vpack.c.b16 %v442, %v438
  %v563 = vpack.c.b16 %v443, %v439
  %v564 = vpack.c.b16 %v448, %v444
  %v565 = vpack.c.b16 %v449, %v445
  %v566 = vpack.c.b16 %v450, %v446
  %v567 = vpack.c.b16 %v451, %v447
  %v568 = vpack.c.b16 %v456, %v452
  %v569 = vpack.c.b16 %v457, %v453
  %v570 = vpack.c.b16 %v458, %v454
  %v571 = vpack.c.b16 %v459, %v455
  %v572 = vpack.c.b16 %v464, %v460
  %v573 = vpack.c.b16 %v465, %v461
  %v574 = vpack.c.b16 %v466, %v462
  %v575 = vpack.c.b16 %v467, %v463
  %vm684 = vcmask 392192
  %v686 = vsel %vm684, %v140, 0
  %688 = vmatprep.subr.bf16.mxu0 %v497
  %689 = vmatpush1.bf16.msra.mxu0 %v496
  %690 = vmatprep.subr.bf16.mxu0 %v493
  %691 = vmatpush1.bf16.msra.mxu0 %v492
  %692 = vmatprep.subr.bf16.mxu0 %v489
  %693 = vmatpush1.bf16.msra.mxu0 %v488
  %694 = vmatprep.subr.bf16.mxu0 %v485
  %695 = vmatpush1.bf16.msra.mxu0 %v484
  %696 = vmatprep.subr.bf16.mxu0 %v481
  %697 = vmatpush1.bf16.msra.mxu0 %v480
  %698 = vmatprep.subr.bf16.mxu0 %v477
  %699 = vmatpush1.bf16.msra.mxu0 %v476
  %700 = vmatprep.subr.bf16.mxu0 %v473
  %701 = vmatpush1.bf16.msra.mxu0 %v472
  %702 = vmatprep.subr.bf16.mxu0 %v469
  %703 = vmatpush1.bf16.msra.mxu0 %v468
  %704 = vmatprep.subr.bf16.mxu0 %v529
  %705 = vmatpush2.bf16.msra.mxu0 %v528
  %706 = vmatprep.subr.bf16.mxu0 %v525
  %707 = vmatpush2.bf16.msra.mxu0 %v524
  %708 = vmatprep.subr.bf16.mxu0 %v521
  %709 = vmatpush2.bf16.msra.mxu0 %v520
  %710 = vmatprep.subr.bf16.mxu0 %v517
  %711 = vmatpush2.bf16.msra.mxu0 %v516
  %712 = vmatprep.subr.bf16.mxu0 %v513
  %713 = vmatpush2.bf16.msra.mxu0 %v512
  %714 = vmatprep.subr.bf16.mxu0 %v509
  %715 = vmatpush2.bf16.msra.mxu0 %v508
  %716 = vmatprep.subr.bf16.mxu0 %v505
  %717 = vmatpush2.bf16.msra.mxu0 %v504
  %718 = vmatprep.subr.bf16.mxu0 %v501
  %719 = vmatpush2.bf16.msra.mxu0 %v500
  %720 = vmatprep.mubr.bf16.mxu0 %v138
  %721 = vmatmul.mubr.bf16.gmra.mxu0 %v137
  %v722 = vpop.f32.mrf.mxu0
  %v723 = vadd.f32 %v129, %v722
  %v724 = vpop.f32.mrf.mxu0
  %v725 = vadd.f32 %v129, %v724
  %v726 = vpop.f32.mrf.mxu0
  %v727 = vpop.f32.mrf.mxu0
  %728 = vdwg.mxu0
  %729 = vmatprep.subr.bf16.mxu0 %v561
  %730 = vmatpush1.bf16.msra.mxu0 %v560
  %731 = vmatprep.subr.bf16.mxu0 %v557
  %732 = vmatpush1.bf16.msra.mxu0 %v556
  %733 = vmatprep.subr.bf16.mxu0 %v553
  %734 = vmatpush1.bf16.msra.mxu0 %v552
  %735 = vmatprep.subr.bf16.mxu0 %v549
  %736 = vmatpush1.bf16.msra.mxu0 %v548
  %737 = vmatprep.subr.bf16.mxu0 %v545
  %738 = vmatpush1.bf16.msra.mxu0 %v544
  %739 = vmatprep.subr.bf16.mxu0 %v541
  %740 = vmatpush1.bf16.msra.mxu0 %v540
  %741 = vmatprep.subr.bf16.mxu0 %v537
  %742 = vmatpush1.bf16.msra.mxu0 %v536
  %743 = vmatprep.subr.bf16.mxu0 %v533
  %744 = vmatpush1.bf16.msra.mxu0 %v532
  %745 = vmatprep.subr.bf16.mxu0 0
  %746 = vmatpush2.bf16.msra.mxu0 0
  %747 = vmatprep.subr.bf16.mxu0 0
  %748 = vmatpush2.bf16.msra.mxu0 0
  %749 = vmatprep.subr.bf16.mxu0 0
  %750 = vmatpush2.bf16.msra.mxu0 0
  %751 = vmatprep.subr.bf16.mxu0 0
  %752 = vmatpush2.bf16.msra.mxu0 0
  %753 = vmatprep.subr.bf16.mxu0 0
  %754 = vmatpush2.bf16.msra.mxu0 0
  %755 = vmatprep.subr.bf16.mxu0 %v573
  %756 = vmatpush2.bf16.msra.mxu0 %v572
  %757 = vmatprep.subr.bf16.mxu0 %v569
  %758 = vmatpush2.bf16.msra.mxu0 %v568
  %759 = vmatprep.subr.bf16.mxu0 %v565
  %760 = vmatpush2.bf16.msra.mxu0 %v564
  %761 = vmatprep.mubr.bf16.mxu0 %v686
  %762 = vmatmul.mubr.bf16.gmra.mxu0 %v139
  %v763 = vpop.f32.mrf.mxu0
  %v764 = vadd.f32 %v723, %v763
  %v765 = vpop.f32.mrf.mxu0
  %v766 = vadd.f32 %v725, %v765
  %v767 = vpop.f32.mrf.mxu0
  %v768 = vpop.f32.mrf.mxu0
  %769 = vdwg.mxu0
  %770 = vmatprep.subr.bf16.mxu0 %v499
  %771 = vmatpush1.bf16.msra.mxu0 %v498
  %772 = vmatprep.subr.bf16.mxu0 %v495
  %773 = vmatpush1.bf16.msra.mxu0 %v494
  %774 = vmatprep.subr.bf16.mxu0 %v491
  %775 = vmatpush1.bf16.msra.mxu0 %v490
  %776 = vmatprep.subr.bf16.mxu0 %v487
  %777 = vmatpush1.bf16.msra.mxu0 %v486
  %778 = vmatprep.subr.bf16.mxu0 %v483
  %779 = vmatpush1.bf16.msra.mxu0 %v482
  %780 = vmatprep.subr.bf16.mxu0 %v479
  %781 = vmatpush1.bf16.msra.mxu0 %v478
  %782 = vmatprep.subr.bf16.mxu0 %v475
  %783 = vmatpush1.bf16.msra.mxu0 %v474
  %784 = vmatprep.subr.bf16.mxu0 %v471
  %785 = vmatpush1.bf16.msra.mxu0 %v470
  %786 = vmatprep.subr.bf16.mxu0 %v531
  %787 = vmatpush2.bf16.msra.mxu0 %v530
  %788 = vmatprep.subr.bf16.mxu0 %v527
  %789 = vmatpush2.bf16.msra.mxu0 %v526
  %790 = vmatprep.subr.bf16.mxu0 %v523
  %791 = vmatpush2.bf16.msra.mxu0 %v522
  %792 = vmatprep.subr.bf16.mxu0 %v519
  %793 = vmatpush2.bf16.msra.mxu0 %v518
  %794 = vmatprep.subr.bf16.mxu0 %v515
  %795 = vmatpush2.bf16.msra.mxu0 %v514
  %796 = vmatprep.subr.bf16.mxu0 %v511
  %797 = vmatpush2.bf16.msra.mxu0 %v510
  %798 = vmatprep.subr.bf16.mxu0 %v507
  %799 = vmatpush2.bf16.msra.mxu0 %v506
  %800 = vmatprep.subr.bf16.mxu0 %v503
  %801 = vmatpush2.bf16.msra.mxu0 %v502
  %802 = vmatprep.mubr.bf16.mxu0 %v138
  %803 = vmatmul.mubr.bf16.gmra.mxu0 %v137
  %v804 = vpop.f32.mrf.mxu0
  %v805 = vadd.f32 %v129, %v804
  %v806 = vpop.f32.mrf.mxu0
  %v807 = vadd.f32 %v129, %v806
  %v808 = vpop.f32.mrf.mxu0
  %v809 = vpop.f32.mrf.mxu0
  %810 = vdwg.mxu0
  %811 = vmatprep.subr.bf16.mxu0 %v563
  %812 = vmatpush1.bf16.msra.mxu0 %v562
  %813 = vmatprep.subr.bf16.mxu0 %v559
  %814 = vmatpush1.bf16.msra.mxu0 %v558
  %815 = vmatprep.subr.bf16.mxu0 %v555
  %816 = vmatpush1.bf16.msra.mxu0 %v554
  %817 = vmatprep.subr.bf16.mxu0 %v551
  %818 = vmatpush1.bf16.msra.mxu0 %v550
  %819 = vmatprep.subr.bf16.mxu0 %v547
  %820 = vmatpush1.bf16.msra.mxu0 %v546
  %821 = vmatprep.subr.bf16.mxu0 %v543
  %822 = vmatpush1.bf16.msra.mxu0 %v542
  %823 = vmatprep.subr.bf16.mxu0 %v539
  %824 = vmatpush1.bf16.msra.mxu0 %v538
  %825 = vmatprep.subr.bf16.mxu0 %v535
  %826 = vmatpush1.bf16.msra.mxu0 %v534
  %827 = vmatprep.subr.bf16.mxu0 0
  %828 = vmatpush2.bf16.msra.mxu0 0
  %829 = vmatprep.subr.bf16.mxu0 0
  %830 = vmatpush2.bf16.msra.mxu0 0
  %831 = vmatprep.subr.bf16.mxu0 0
  %832 = vmatpush2.bf16.msra.mxu0 0
  %833 = vmatprep.subr.bf16.mxu0 0
  %834 = vmatpush2.bf16.msra.mxu0 0
  %835 = vmatprep.subr.bf16.mxu0 0
  %836 = vmatpush2.bf16.msra.mxu0 0
  %837 = vmatprep.subr.bf16.mxu0 %v575
  %838 = vmatpush2.bf16.msra.mxu0 %v574
  %839 = vmatprep.subr.bf16.mxu0 %v571
  %840 = vmatpush2.bf16.msra.mxu0 %v570
  %841 = vmatprep.subr.bf16.mxu0 %v567
  %842 = vmatpush2.bf16.msra.mxu0 %v566
  %843 = vmatprep.mubr.bf16.mxu0 %v686
  %844 = vmatmul.mubr.bf16.gmra.mxu0 %v139
  %v845 = vpop.f32.mrf.mxu0
  %v846 = vadd.f32 %v805, %v845
  %v847 = vpop.f32.mrf.mxu0
  %v848 = vadd.f32 %v807, %v847
  %v849 = vpop.f32.mrf.mxu0
  %v850 = vpop.f32.mrf.mxu0
  %851 = vdwg.mxu0
  %v852 = vmax.f32 %v764, 0.0
  %v853 = vmax.f32 %v766, 0.0
  %v854 = vmax.f32 %v846, 0.0
  %v855 = vmax.f32 %v848, 0.0
  %856 = vst [vmem:[%s3] sm:$0xff] %v852
  %857 = vst [vmem:[%s3 + $0x8] sm:$0xff] %v853
  %858 = vst [vmem:[%s3 + $0x10] sm:$0xff] %v854
  %859 = vst [vmem:[%s3 + $0x18] sm:$0xff] %v855
  // Predicated region
  $region14: #{tsrvfd_forward.30} parent=0 // pred_check
    _
  $region15: #{tsrvfd_forward.30} parent=0 // pred_check_branch
    %861 = sbr.rel (0) target = $region17
  $region16: #{tsrvfd_forward.30} parent=0 // pred_region
    _
  $region17: #{tsrvfd_forward.30} parent=0 // pred_fallthru
    _
  // Predicated region
  $region18: #{tsrvfd_forward.30} parent=0 // pred_check
    _
  $region19: #{tsrvfd_forward.30} parent=0 // pred_check_branch
    %863 = sbr.rel (0) target = $region21
  $region20: #{tsrvfd_forward.30} parent=0 // pred_region
    _
  $region21: #{tsrvfd_forward.30} parent=0 // pred_fallthru
    _

// kernel: tile.58
$region0: #{tile.58}
  #allocation0 [shape = 's32[1]{0}', space=sflag, size = 0x4, scoped, tag = 'scoped memory for tile.58']
  %s0 = inlined_call_operand.vmem [shape: f32[4], index: 0, kind: input, shape index: {}]
  %s1 = inlined_call_operand.vmem [shape: f32[8,4], index: 1, kind: output, shape index: {}]
  // Predicated region
  $region2: #{tile.58} parent=0 // pred_check
    _
  $region3: #{tile.58} parent=0 // pred_check_branch
    %3 = sbr.rel (0) target = $region5
  $region4: #{tile.58} parent=0 // pred_region
    _
  $region5: #{tile.58} parent=0 // pred_fallthru
    _
  %v4 = vld [vmem:[%s0] ss:$0 sm:$0xff]
  %5 = vst [vmem:[%s1] sm:$0xff] %v4

// kernel: tile.5
$region0: #{tile.5}
  %s0 = inlined_call_operand.vmem [shape: f32[8,4], index: 0, kind: input, shape index: {}]
  %s1 = inlined_call_operand.vmem [shape: f32[32,1], index: 1, kind: output, shape index: {}]
  %v2 = vld [vmem:[%s0] sm:$0xff]
  %vm3 = vcmask 7168
  %4 = vst.msk [vmem:[%s1] ss:$4 sm:$0xff] %vm3, %v2
  %v5 = vld [vmem:[%s0] sm:$0xff]
  %6 = vrot.lane.b32.xlu0 %v5, 127
  %v7 = vpop.permute.xlu0 %6
  %vm8 = vcmask 7168
  %s9 = scalar_lea.vmem %s1, 1
  %10 = vst.msk [vmem:[%s9] ss:$4 sm:$0xff] %vm8, %v7
  %v11 = vld [vmem:[%s0] sm:$0xff]
  %12 = vrot.lane.b32.xlu0 %v11, 126
  %v13 = vpop.permute.xlu0 %12
  %vm14 = vcmask 7168
  %s15 = scalar_lea.vmem %s1, 2
  %16 = vst.msk [vmem:[%s15] ss:$4 sm:$0xff] %vm14, %v13
  %v17 = vld [vmem:[%s0] sm:$0xff]
  %18 = vrot.lane.b32.xlu0 %v17, 125
  %v19 = vpop.permute.xlu0 %18
  %vm20 = vcmask 7168
  %s21 = scalar_lea.vmem %s1, 3
  %22 = vst.msk [vmem:[%s21] ss:$4 sm:$0xff] %vm20, %v19

// kernel: tsrvfd_forward.31
$region0: #{tsrvfd_forward.31}
  #allocation0 [shape = 'u32[]', space=smem, size = 0x4, offset = 0x4, fixed_abs, tag = 'smem constant byte address 0x4 - core index']
  #allocation1 [shape = 'u32[144,128]{1,0:T(1,128)}', space=vmem, size = 0x12000, scoped, tag = 'internal scratch']
  %s0 = inlined_call_operand.vmem [shape: bf16[32,216], index: 0, kind: input, shape index: {}]
  %s1 = inlined_call_operand.vmem [shape: bf16[216,512], index: 1, kind: input, shape index: {}]
  %s2 = inlined_call_operand.vmem [shape: f32[32,1], index: 2, kind: input, shape index: {}]
  %s3 = inlined_call_operand.vmem [shape: f32[32,512], index: 3, kind: output, shape index: {}]
  %s4 = sld [smem:[#allocation0]]
  $region22: #{tsrvfd_forward.31} parent=0
    _
  %s6 = ssub.s32 1, %s4
  %s7 = scalar_select 0, %s6, %s4
  // Predicated region
  $region2: #{tsrvfd_forward.31} parent=0 // pred_check
    _
  $region3: #{tsrvfd_forward.31} parent=0 // pred_check_branch
    %9 = sbr.rel (0) target = $region5
  $region4: #{tsrvfd_forward.31} parent=0 // pred_region
    _
  $region5: #{tsrvfd_forward.31} parent=0 // pred_fallthru
    _
  // Predicated region
  $region6: #{tsrvfd_forward.31} parent=0 // pred_check
    _
  $region7: #{tsrvfd_forward.31} parent=0 // pred_check_branch
    %11 = sbr.rel (0) target = $region9
  $region8: #{tsrvfd_forward.31} parent=0 // pred_region
    _
  $region9: #{tsrvfd_forward.31} parent=0 // pred_fallthru
    _
  // Predicated region
  $region10: #{tsrvfd_forward.31} parent=0 // pred_check
    _
  $region11: #{tsrvfd_forward.31} parent=0 // pred_check_branch
    %13 = sbr.rel (0) target = $region13
  $region12: #{tsrvfd_forward.31} parent=0 // pred_region
    _
  $region13: #{tsrvfd_forward.31} parent=0 // pred_fallthru
    _
  %v15 = vld [vmem:[%s0] sm:$0xff]
  %v16 = vld [vmem:[%s0 + $0x8] sm:$0xff]
  %v17 = vld [vmem:[%s0 + $0x10] sm:$0xff]
  %v18 = vld [vmem:[%s0 + $0x18] sm:$0xff]
  %v19 = vld [vmem:[%s1] sm:$0xff]
  %v20 = vld [vmem:[%s1 + $0x8] sm:$0xff]
  %v21 = vld [vmem:[%s1 + $0x10] sm:$0xff]
  %v22 = vld [vmem:[%s1 + $0x18] sm:$0xff]
  %v23 = vld [vmem:[%s1 + $0x20] sm:$0xff]
  %v24 = vld [vmem:[%s1 + $0x28] sm:$0xff]
  %v25 = vld [vmem:[%s1 + $0x30] sm:$0xff]
  %v26 = vld [vmem:[%s1 + $0x38] sm:$0xff]
  %v27 = vld [vmem:[%s1 + $0x40] sm:$0xff]
  %v28 = vld [vmem:[%s1 + $0x48] sm:$0xff]
  %v29 = vld [vmem:[%s1 + $0x50] sm:$0xff]
  %v30 = vld [vmem:[%s1 + $0x58] sm:$0xff]
  %v31 = vld [vmem:[%s1 + $0x60] sm:$0xff]
  %v32 = vld [vmem:[%s1 + $0x68] sm:$0xff]
  %v33 = vld [vmem:[%s1 + $0x70] sm:$0xff]
  %v34 = vld [vmem:[%s1 + $0x78] sm:$0xff]
  %v35 = vld [vmem:[%s1 + $0x80] sm:$0xff]
  %v36 = vld [vmem:[%s1 + $0x88] sm:$0xff]
  %v37 = vld [vmem:[%s1 + $0x90] sm:$0xff]
  %v38 = vld [vmem:[%s1 + $0x98] sm:$0xff]
  %v39 = vld [vmem:[%s1 + $0xa0] sm:$0xff]
  %v40 = vld [vmem:[%s1 + $0xa8] sm:$0xff]
  %v41 = vld [vmem:[%s1 + $0xb0] sm:$0xff]
  %v42 = vld [vmem:[%s1 + $0xb8] sm:$0xff]
  %v43 = vld [vmem:[%s1 + $0xc0] sm:$0xff]
  %v44 = vld [vmem:[%s1 + $0xc8] sm:$0xff]
  %v45 = vld [vmem:[%s1 + $0xd0] sm:$0xff]
  %v46 = vld [vmem:[%s1 + $0xd8] sm:$0xff]
  %v47 = vld [vmem:[%s1 + $0xe0] sm:$0xff]
  %v48 = vld [vmem:[%s1 + $0xe8] sm:$0xff]
  %v49 = vld [vmem:[%s1 + $0xf0] sm:$0xff]
  %v50 = vld [vmem:[%s1 + $0xf8] sm:$0xff]
  %v51 = vld [vmem:[%s1 + $0x100] sm:$0xff]
  %v52 = vld [vmem:[%s1 + $0x108] sm:$0xff]
  %v53 = vld [vmem:[%s1 + $0x110] sm:$0xff]
  %v54 = vld [vmem:[%s1 + $0x118] sm:$0xff]
  %v55 = vld [vmem:[%s1 + $0x120] sm:$0xff]
  %v56 = vld [vmem:[%s1 + $0x128] sm:$0xff]
  %v57 = vld [vmem:[%s1 + $0x130] sm:$0xff]
  %v58 = vld [vmem:[%s1 + $0x138] sm:$0xff]
  %v59 = vld [vmem:[%s1 + $0x140] sm:$0xff]
  %v60 = vld [vmem:[%s1 + $0x148] sm:$0xff]
  %v61 = vld [vmem:[%s1 + $0x150] sm:$0xff]
  %v62 = vld [vmem:[%s1 + $0x158] sm:$0xff]
  %v63 = vld [vmem:[%s1 + $0x160] sm:$0xff]
  %v64 = vld [vmem:[%s1 + $0x168] sm:$0xff]
  %v65 = vld [vmem:[%s1 + $0x170] sm:$0xff]
  %v66 = vld [vmem:[%s1 + $0x178] sm:$0xff]
  %v67 = vld [vmem:[%s1 + $0x180] sm:$0xff]
  %v68 = vld [vmem:[%s1 + $0x188] sm:$0xff]
  %v69 = vld [vmem:[%s1 + $0x190] sm:$0xff]
  %v70 = vld [vmem:[%s1 + $0x198] sm:$0xff]
  %v71 = vld [vmem:[%s1 + $0x1a0] sm:$0xff]
  %v72 = vld [vmem:[%s1 + $0x1a8] sm:$0xff]
  %v73 = vld [vmem:[%s2] sm:$0xff]
  %v74 = vld [vmem:[%s2 + $0x8] sm:$0xff]
  %v75 = vld [vmem:[%s2 + $0x10] sm:$0xff]
  %v76 = vld [vmem:[%s2 + $0x18] sm:$0xff]
  %78 = vset.pattern.permute.xlu0 0
  %79 = vperm.xlu0 %78, %v73
  %v80 = vpop.permute.xlu0 %79
  %83 = vset.pattern.permute.xlu0 0
  %84 = vperm.xlu0 %83, %v74
  %v85 = vpop.permute.xlu0 %84
  %88 = vset.pattern.permute.xlu0 0
  %89 = vperm.xlu0 %88, %v75
  %v90 = vpop.permute.xlu0 %89
  %93 = vset.pattern.permute.xlu0 0
  %94 = vperm.xlu0 %93, %v76
  %v95 = vpop.permute.xlu0 %94
  %v101 = vunpack.c.l.b16 %v15
  %v102 = vunpack.c.h.b16 %v15
  %v103 = vunpack.c.l.b16 %v16
  %v104 = vunpack.c.h.b16 %v16
  %v105 = vunpack.c.l.b16 %v17
  %v106 = vunpack.c.h.b16 %v17
  %v107 = vunpack.c.l.b16 %v18
  %v108 = vunpack.c.h.b16 %v18
  %v109 = vpack.c.b16 %v103, %v101
  %v110 = vpack.c.b16 %v104, %v102
  %v111 = vpack.c.b16 %v107, %v105
  %v112 = vpack.c.b16 %v108, %v106
  %v169 = vunpack.c.l.b16 %v19
  %v170 = vunpack.c.h.b16 %v19
  %v171 = vunpack.c.l.b16 %v20
  %v172 = vunpack.c.h.b16 %v20
  %v173 = vunpack.c.l.b16 %v21
  %v174 = vunpack.c.h.b16 %v21
  %v175 = vunpack.c.l.b16 %v22
  %v176 = vunpack.c.h.b16 %v22
  %v177 = vunpack.c.l.b16 %v23
  %v178 = vunpack.c.h.b16 %v23
  %v179 = vunpack.c.l.b16 %v24
  %v180 = vunpack.c.h.b16 %v24
  %v181 = vunpack.c.l.b16 %v25
  %v182 = vunpack.c.h.b16 %v25
  %v183 = vunpack.c.l.b16 %v26
  %v184 = vunpack.c.h.b16 %v26
  %v185 = vunpack.c.l.b16 %v27
  %v186 = vunpack.c.h.b16 %v27
  %v187 = vunpack.c.l.b16 %v28
  %v188 = vunpack.c.h.b16 %v28
  %v189 = vunpack.c.l.b16 %v29
  %v190 = vunpack.c.h.b16 %v29
  %v191 = vunpack.c.l.b16 %v30
  %v192 = vunpack.c.h.b16 %v30
  %v193 = vunpack.c.l.b16 %v31
  %v194 = vunpack.c.h.b16 %v31
  %v195 = vunpack.c.l.b16 %v32
  %v196 = vunpack.c.h.b16 %v32
  %v197 = vunpack.c.l.b16 %v33
  %v198 = vunpack.c.h.b16 %v33
  %v199 = vunpack.c.l.b16 %v34
  %v200 = vunpack.c.h.b16 %v34
  %v201 = vunpack.c.l.b16 %v35
  %v202 = vunpack.c.h.b16 %v35
  %v203 = vunpack.c.l.b16 %v36
  %v204 = vunpack.c.h.b16 %v36
  %v205 = vunpack.c.l.b16 %v37
  %v206 = vunpack.c.h.b16 %v37
  %v207 = vunpack.c.l.b16 %v38
  %v208 = vunpack.c.h.b16 %v38
  %v209 = vunpack.c.l.b16 %v39
  %v210 = vunpack.c.h.b16 %v39
  %v211 = vunpack.c.l.b16 %v40
  %v212 = vunpack.c.h.b16 %v40
  %v213 = vunpack.c.l.b16 %v41
  %v214 = vunpack.c.h.b16 %v41
  %v215 = vunpack.c.l.b16 %v42
  %v216 = vunpack.c.h.b16 %v42
  %v217 = vunpack.c.l.b16 %v43
  %v218 = vunpack.c.h.b16 %v43
  %v219 = vunpack.c.l.b16 %v44
  %v220 = vunpack.c.h.b16 %v44
  %v221 = vunpack.c.l.b16 %v45
  %v222 = vunpack.c.h.b16 %v45
  %v223 = vunpack.c.l.b16 %v46
  %v224 = vunpack.c.h.b16 %v46
  %v225 = vunpack.c.l.b16 %v47
  %v226 = vunpack.c.h.b16 %v47
  %v227 = vunpack.c.l.b16 %v48
  %v228 = vunpack.c.h.b16 %v48
  %v229 = vunpack.c.l.b16 %v49
  %v230 = vunpack.c.h.b16 %v49
  %v231 = vunpack.c.l.b16 %v50
  %v232 = vunpack.c.h.b16 %v50
  %v233 = vunpack.c.l.b16 %v51
  %v234 = vunpack.c.h.b16 %v51
  %v235 = vunpack.c.l.b16 %v52
  %v236 = vunpack.c.h.b16 %v52
  %v237 = vunpack.c.l.b16 %v53
  %v238 = vunpack.c.h.b16 %v53
  %v239 = vunpack.c.l.b16 %v54
  %v240 = vunpack.c.h.b16 %v54
  %v241 = vunpack.c.l.b16 %v55
  %v242 = vunpack.c.h.b16 %v55
  %v243 = vunpack.c.l.b16 %v56
  %v244 = vunpack.c.h.b16 %v56
  %v245 = vunpack.c.l.b16 %v57
  %v246 = vunpack.c.h.b16 %v57
  %v247 = vunpack.c.l.b16 %v58
  %v248 = vunpack.c.h.b16 %v58
  %v249 = vunpack.c.l.b16 %v59
  %v250 = vunpack.c.h.b16 %v59
  %v251 = vunpack.c.l.b16 %v60
  %v252 = vunpack.c.h.b16 %v60
  %v253 = vunpack.c.l.b16 %v61
  %v254 = vunpack.c.h.b16 %v61
  %v255 = vunpack.c.l.b16 %v62
  %v256 = vunpack.c.h.b16 %v62
  %v257 = vunpack.c.l.b16 %v63
  %v258 = vunpack.c.h.b16 %v63
  %v259 = vunpack.c.l.b16 %v64
  %v260 = vunpack.c.h.b16 %v64
  %v261 = vunpack.c.l.b16 %v65
  %v262 = vunpack.c.h.b16 %v65
  %v263 = vunpack.c.l.b16 %v66
  %v264 = vunpack.c.h.b16 %v66
  %v265 = vunpack.c.l.b16 %v67
  %v266 = vunpack.c.h.b16 %v67
  %v267 = vunpack.c.l.b16 %v68
  %v268 = vunpack.c.h.b16 %v68
  %v269 = vunpack.c.l.b16 %v69
  %v270 = vunpack.c.h.b16 %v69
  %v271 = vunpack.c.l.b16 %v70
  %v272 = vunpack.c.h.b16 %v70
  %v273 = vunpack.c.l.b16 %v71
  %v274 = vunpack.c.h.b16 %v71
  %v275 = vunpack.c.l.b16 %v72
  %v276 = vunpack.c.h.b16 %v72
  %v277 = vpack.c.b16 %v173, %v169
  %v278 = vpack.c.b16 %v174, %v170
  %v279 = vpack.c.b16 %v175, %v171
  %v280 = vpack.c.b16 %v176, %v172
  %v281 = vpack.c.b16 %v181, %v177
  %v282 = vpack.c.b16 %v182, %v178
  %v283 = vpack.c.b16 %v183, %v179
  %v284 = vpack.c.b16 %v184, %v180
  %v285 = vpack.c.b16 %v189, %v185
  %v286 = vpack.c.b16 %v190, %v186
  %v287 = vpack.c.b16 %v191, %v187
  %v288 = vpack.c.b16 %v192, %v188
  %v289 = vpack.c.b16 %v197, %v193
  %v290 = vpack.c.b16 %v198, %v194
  %v291 = vpack.c.b16 %v199, %v195
  %v292 = vpack.c.b16 %v200, %v196
  %v293 = vpack.c.b16 %v205, %v201
  %v294 = vpack.c.b16 %v206, %v202
  %v295 = vpack.c.b16 %v207, %v203
  %v296 = vpack.c.b16 %v208, %v204
  %v297 = vpack.c.b16 %v213, %v209
  %v298 = vpack.c.b16 %v214, %v210
  %v299 = vpack.c.b16 %v215, %v211
  %v300 = vpack.c.b16 %v216, %v212
  %v301 = vpack.c.b16 %v221, %v217
  %v302 = vpack.c.b16 %v222, %v218
  %v303 = vpack.c.b16 %v223, %v219
  %v304 = vpack.c.b16 %v224, %v220
  %v305 = vpack.c.b16 %v229, %v225
  %v306 = vpack.c.b16 %v230, %v226
  %v307 = vpack.c.b16 %v231, %v227
  %v308 = vpack.c.b16 %v232, %v228
  %v309 = vpack.c.b16 %v237, %v233
  %v310 = vpack.c.b16 %v238, %v234
  %v311 = vpack.c.b16 %v239, %v235
  %v312 = vpack.c.b16 %v240, %v236
  %v313 = vpack.c.b16 %v245, %v241
  %v314 = vpack.c.b16 %v246, %v242
  %v315 = vpack.c.b16 %v247, %v243
  %v316 = vpack.c.b16 %v248, %v244
  %v317 = vpack.c.b16 %v253, %v249
  %v318 = vpack.c.b16 %v254, %v250
  %v319 = vpack.c.b16 %v255, %v251
  %v320 = vpack.c.b16 %v256, %v252
  %v321 = vpack.c.b16 %v261, %v257
  %v322 = vpack.c.b16 %v262, %v258
  %v323 = vpack.c.b16 %v263, %v259
  %v324 = vpack.c.b16 %v264, %v260
  %v325 = vpack.c.b16 %v269, %v265
  %v326 = vpack.c.b16 %v270, %v266
  %v327 = vpack.c.b16 %v271, %v267
  %v328 = vpack.c.b16 %v272, %v268
  %v329 = vpack.c.b16 %v273, %v273
  %v330 = vpack.c.b16 %v274, %v274
  %v331 = vpack.c.b16 %v275, %v275
  %v332 = vpack.c.b16 %v276, %v276
  %vm385 = vcmask 719872
  %v387 = vsel %vm385, %v110, 0
  %v390 = vsel %vm385, %v112, 0
  %vm392 = vcmask 1043456
  %v394 = vsel %vm392, %v329, 0
  %v397 = vsel %vm392, %v330, 0
  %v400 = vsel %vm392, %v331, 0
  %v403 = vsel %vm392, %v332, 0
  %405 = vmatprep.subr.bf16.mxu0 %v306
  %406 = vmatpush1.bf16.msra.mxu0 %v305
  %407 = vmatprep.subr.bf16.mxu0 %v302
  %408 = vmatpush1.bf16.msra.mxu0 %v301
  %409 = vmatprep.subr.bf16.mxu0 %v298
  %410 = vmatpush1.bf16.msra.mxu0 %v297
  %411 = vmatprep.subr.bf16.mxu0 %v294
  %412 = vmatpush1.bf16.msra.mxu0 %v293
  %413 = vmatprep.subr.bf16.mxu0 %v290
  %414 = vmatpush1.bf16.msra.mxu0 %v289
  %415 = vmatprep.subr.bf16.mxu0 %v286
  %416 = vmatpush1.bf16.msra.mxu0 %v285
  %417 = vmatprep.subr.bf16.mxu0 %v282
  %418 = vmatpush1.bf16.msra.mxu0 %v281
  %419 = vmatprep.subr.bf16.mxu0 %v278
  %420 = vmatpush1.bf16.msra.mxu0 %v277
  %421 = vmatprep.subr.bf16.mxu0 0
  %422 = vmatpush2.bf16.msra.mxu0 0
  %423 = vmatprep.subr.bf16.mxu0 0
  %424 = vmatpush2.bf16.msra.mxu0 0
  %425 = vmatprep.subr.bf16.mxu0 %v397
  %426 = vmatpush2.bf16.msra.mxu0 %v394
  %427 = vmatprep.subr.bf16.mxu0 %v326
  %428 = vmatpush2.bf16.msra.mxu0 %v325
  %429 = vmatprep.subr.bf16.mxu0 %v322
  %430 = vmatpush2.bf16.msra.mxu0 %v321
  %431 = vmatprep.subr.bf16.mxu0 %v318
  %432 = vmatpush2.bf16.msra.mxu0 %v317
  %433 = vmatprep.subr.bf16.mxu0 %v314
  %434 = vmatpush2.bf16.msra.mxu0 %v313
  %435 = vmatprep.subr.bf16.mxu0 %v310
  %436 = vmatpush2.bf16.msra.mxu0 %v309
  %437 = vmatprep.mubr.bf16.mxu0 %v387
  %438 = vmatmul.mubr.bf16.gmra.mxu0 %v109
  %v439 = vpop.f32.mrf.mxu0
  %v440 = vadd.f32 %v80, %v439
  %v441 = vpop.f32.mrf.mxu0
  %v442 = vadd.f32 %v80, %v441
  %v443 = vpop.f32.mrf.mxu0
  %v444 = vadd.f32 %v85, %v443
  %v445 = vpop.f32.mrf.mxu0
  %v446 = vadd.f32 %v85, %v445
  %447 = vmatprep.mubr.bf16.mxu0 %v390
  %448 = vmatmul.mubr.bf16.gmra.mxu0 %v111
  %v449 = vpop.f32.mrf.mxu0
  %v450 = vadd.f32 %v90, %v449
  %v451 = vpop.f32.mrf.mxu0
  %v452 = vadd.f32 %v90, %v451
  %v453 = vpop.f32.mrf.mxu0
  %v454 = vadd.f32 %v95, %v453
  %v455 = vpop.f32.mrf.mxu0
  %v456 = vadd.f32 %v95, %v455
  %457 = vdwg.mxu0
  %458 = vmatprep.subr.bf16.mxu0 %v308
  %459 = vmatpush1.bf16.msra.mxu0 %v307
  %460 = vmatprep.subr.bf16.mxu0 %v304
  %461 = vmatpush1.bf16.msra.mxu0 %v303
  %462 = vmatprep.subr.bf16.mxu0 %v300
  %463 = vmatpush1.bf16.msra.mxu0 %v299
  %464 = vmatprep.subr.bf16.mxu0 %v296
  %465 = vmatpush1.bf16.msra.mxu0 %v295
  %466 = vmatprep.subr.bf16.mxu0 %v292
  %467 = vmatpush1.bf16.msra.mxu0 %v291
  %468 = vmatprep.subr.bf16.mxu0 %v288
  %469 = vmatpush1.bf16.msra.mxu0 %v287
  %470 = vmatprep.subr.bf16.mxu0 %v284
  %471 = vmatpush1.bf16.msra.mxu0 %v283
  %472 = vmatprep.subr.bf16.mxu0 %v280
  %473 = vmatpush1.bf16.msra.mxu0 %v279
  %474 = vmatprep.subr.bf16.mxu0 0
  %475 = vmatpush2.bf16.msra.mxu0 0
  %476 = vmatprep.subr.bf16.mxu0 0
  %477 = vmatpush2.bf16.msra.mxu0 0
  %478 = vmatprep.subr.bf16.mxu0 %v403
  %479 = vmatpush2.bf16.msra.mxu0 %v400
  %480 = vmatprep.subr.bf16.mxu0 %v328
  %481 = vmatpush2.bf16.msra.mxu0 %v327
  %482 = vmatprep.subr.bf16.mxu0 %v324
  %483 = vmatpush2.bf16.msra.mxu0 %v323
  %484 = vmatprep.subr.bf16.mxu0 %v320
  %485 = vmatpush2.bf16.msra.mxu0 %v319
  %486 = vmatprep.subr.bf16.mxu0 %v316
  %487 = vmatpush2.bf16.msra.mxu0 %v315
  %488 = vmatprep.subr.bf16.mxu0 %v312
  %489 = vmatpush2.bf16.msra.mxu0 %v311
  %490 = vmatprep.mubr.bf16.mxu0 %v387
  %491 = vmatmul.mubr.bf16.gmra.mxu0 %v109
  %v492 = vpop.f32.mrf.mxu0
  %v493 = vadd.f32 %v80, %v492
  %v494 = vpop.f32.mrf.mxu0
  %v495 = vadd.f32 %v80, %v494
  %v496 = vpop.f32.mrf.mxu0
  %v497 = vadd.f32 %v85, %v496
  %v498 = vpop.f32.mrf.mxu0
  %v499 = vadd.f32 %v85, %v498
  %500 = vmatprep.mubr.bf16.mxu0 %v390
  %501 = vmatmul.mubr.bf16.gmra.mxu0 %v111
  %v502 = vpop.f32.mrf.mxu0
  %v503 = vadd.f32 %v90, %v502
  %v504 = vpop.f32.mrf.mxu0
  %v505 = vadd.f32 %v90, %v504
  %v506 = vpop.f32.mrf.mxu0
  %v507 = vadd.f32 %v95, %v506
  %v508 = vpop.f32.mrf.mxu0
  %v509 = vadd.f32 %v95, %v508
  %510 = vdwg.mxu0
  %v511 = vmax.f32 %v440, 0.0
  %v512 = vmax.f32 %v442, 0.0
  %v513 = vmax.f32 %v493, 0.0
  %v514 = vmax.f32 %v495, 0.0
  %v515 = vmax.f32 %v444, 0.0
  %v516 = vmax.f32 %v446, 0.0
  %v517 = vmax.f32 %v497, 0.0
  %v518 = vmax.f32 %v499, 0.0
  %v519 = vmax.f32 %v450, 0.0
  %v520 = vmax.f32 %v452, 0.0
  %v521 = vmax.f32 %v503, 0.0
  %v522 = vmax.f32 %v505, 0.0
  %v523 = vmax.f32 %v454, 0.0
  %v524 = vmax.f32 %v456, 0.0
  %v525 = vmax.f32 %v507, 0.0
  %v526 = vmax.f32 %v509, 0.0
  %527 = vst [vmem:[%s3] sm:$0xff] %v511
  %528 = vst [vmem:[%s3 + $0x8] sm:$0xff] %v512
  %529 = vst [vmem:[%s3 + $0x10] sm:$0xff] %v513
  %530 = vst [vmem:[%s3 + $0x18] sm:$0xff] %v514
  %531 = vst [vmem:[%s3 + $0x20] sm:$0xff] %v515
  %532 = vst [vmem:[%s3 + $0x28] sm:$0xff] %v516
  %533 = vst [vmem:[%s3 + $0x30] sm:$0xff] %v517
  %534 = vst [vmem:[%s3 + $0x38] sm:$0xff] %v518
  %535 = vst [vmem:[%s3 + $0x40] sm:$0xff] %v519
  %536 = vst [vmem:[%s3 + $0x48] sm:$0xff] %v520
  %537 = vst [vmem:[%s3 + $0x50] sm:$0xff] %v521
  %538 = vst [vmem:[%s3 + $0x58] sm:$0xff] %v522
  %539 = vst [vmem:[%s3 + $0x60] sm:$0xff] %v523
  %540 = vst [vmem:[%s3 + $0x68] sm:$0xff] %v524
  %541 = vst [vmem:[%s3 + $0x70] sm:$0xff] %v525
  %542 = vst [vmem:[%s3 + $0x78] sm:$0xff] %v526
  // Predicated region
  $region14: #{tsrvfd_forward.31} parent=0 // pred_check
    _
  $region15: #{tsrvfd_forward.31} parent=0 // pred_check_branch
    %544 = sbr.rel (0) target = $region17
  $region16: #{tsrvfd_forward.31} parent=0 // pred_region
    _
  $region17: #{tsrvfd_forward.31} parent=0 // pred_fallthru
    _
  // Predicated region
  $region18: #{tsrvfd_forward.31} parent=0 // pred_check
    _
  $region19: #{tsrvfd_forward.31} parent=0 // pred_check_branch
    %546 = sbr.rel (0) target = $region21
  $region20: #{tsrvfd_forward.31} parent=0 // pred_region
    _
  $region21: #{tsrvfd_forward.31} parent=0 // pred_fallthru
    _

// kernel: tsrvfd_forward.32
$region0: #{tsrvfd_forward.32}
  #allocation0 [shape = 'u32[]', space=smem, size = 0x4, offset = 0x4, fixed_abs, tag = 'smem constant byte address 0x4 - core index']
  #allocation1 [shape = 'u32[144,128]{1,0:T(1,128)}', space=vmem, size = 0x12000, scoped, tag = 'internal scratch']
  %s0 = inlined_call_operand.vmem [shape: bf16[8,108], index: 0, kind: input, shape index: {}]
  %s1 = inlined_call_operand.vmem [shape: bf16[108,4096], index: 1, kind: input, shape index: {}]
  %s2 = inlined_call_operand.vmem [shape: f32[8,1], index: 2, kind: input, shape index: {}]
  %s3 = inlined_call_operand.vmem [shape: f32[8,4096], index: 3, kind: output, shape index: {}]
  %s4 = sld [smem:[#allocation0]]
  $region22: #{tsrvfd_forward.32} parent=0
    _
  %s6 = ssub.s32 1, %s4
  %s7 = scalar_select 0, %s6, %s4
  // Predicated region
  $region2: #{tsrvfd_forward.32} parent=0 // pred_check
    _
  $region3: #{tsrvfd_forward.32} parent=0 // pred_check_branch
    %9 = sbr.rel (0) target = $region5
  $region4: #{tsrvfd_forward.32} parent=0 // pred_region
    _
  $region5: #{tsrvfd_forward.32} parent=0 // pred_fallthru
    _
  // Predicated region
  $region6: #{tsrvfd_forward.32} parent=0 // pred_check
    _
  $region7: #{tsrvfd_forward.32} parent=0 // pred_check_branch
    %11 = sbr.rel (0) target = $region9
  $region8: #{tsrvfd_forward.32} parent=0 // pred_region
    _
  $region9: #{tsrvfd_forward.32} parent=0 // pred_fallthru
    _
  // Predicated region
  $region10: #{tsrvfd_forward.32} parent=0 // pred_check
    _
  $region11: #{tsrvfd_forward.32} parent=0 // pred_check_branch
    %13 = sbr.rel (0) target = $region13
  $region12: #{tsrvfd_forward.32} parent=0 // pred_region
    _
  $region13: #{tsrvfd_forward.32} parent=0 // pred_fallthru
    _
  %v15 = vld [vmem:[%s0] sm:$0xf]
  %v16 = vld [vmem:[%s1] sm:$0xff]
  %v17 = vld [vmem:[%s1 + $0x8] sm:$0xff]
  %v18 = vld [vmem:[%s1 + $0x10] sm:$0xff]
  %v19 = vld [vmem:[%s1 + $0x18] sm:$0xff]
  %v20 = vld [vmem:[%s1 + $0x20] sm:$0xff]
  %v21 = vld [vmem:[%s1 + $0x28] sm:$0xff]
  %v22 = vld [vmem:[%s1 + $0x30] sm:$0xff]
  %v23 = vld [vmem:[%s1 + $0x38] sm:$0xff]
  %v24 = vld [vmem:[%s1 + $0x40] sm:$0xff]
  %v25 = vld [vmem:[%s1 + $0x48] sm:$0xff]
  %v26 = vld [vmem:[%s1 + $0x50] sm:$0xff]
  %v27 = vld [vmem:[%s1 + $0x58] sm:$0xff]
  %v28 = vld [vmem:[%s1 + $0x60] sm:$0xff]
  %v29 = vld [vmem:[%s1 + $0x68] sm:$0xff]
  %v30 = vld [vmem:[%s1 + $0x70] sm:$0xff]
  %v31 = vld [vmem:[%s1 + $0x78] sm:$0xff]
  %v32 = vld [vmem:[%s1 + $0x80] sm:$0xff]
  %v33 = vld [vmem:[%s1 + $0x88] sm:$0xff]
  %v34 = vld [vmem:[%s1 + $0x90] sm:$0xff]
  %v35 = vld [vmem:[%s1 + $0x98] sm:$0xff]
  %v36 = vld [vmem:[%s1 + $0xa0] sm:$0xff]
  %v37 = vld [vmem:[%s1 + $0xa8] sm:$0xff]
  %v38 = vld [vmem:[%s1 + $0xb0] sm:$0xff]
  %v39 = vld [vmem:[%s1 + $0xb8] sm:$0xff]
  %v40 = vld [vmem:[%s1 + $0xc0] sm:$0xff]
  %v41 = vld [vmem:[%s1 + $0xc8] sm:$0xff]
  %v42 = vld [vmem:[%s1 + $0xd0] sm:$0xff]
  %v43 = vld [vmem:[%s1 + $0xd8] sm:$0xff]
  %v44 = vld [vmem:[%s1 + $0xe0] sm:$0xff]
  %v45 = vld [vmem:[%s1 + $0xe8] sm:$0xff]
  %v46 = vld [vmem:[%s1 + $0xf0] sm:$0xff]
  %v47 = vld [vmem:[%s1 + $0xf8] sm:$0xff]
  %v48 = vld [vmem:[%s1 + $0x100] sm:$0xff]
  %v49 = vld [vmem:[%s1 + $0x108] sm:$0xff]
  %v50 = vld [vmem:[%s1 + $0x110] sm:$0xff]
  %v51 = vld [vmem:[%s1 + $0x118] sm:$0xff]
  %v52 = vld [vmem:[%s1 + $0x120] sm:$0xff]
  %v53 = vld [vmem:[%s1 + $0x128] sm:$0xff]
  %v54 = vld [vmem:[%s1 + $0x130] sm:$0xff]
  %v55 = vld [vmem:[%s1 + $0x138] sm:$0xff]
  %v56 = vld [vmem:[%s1 + $0x140] sm:$0xff]
  %v57 = vld [vmem:[%s1 + $0x148] sm:$0xff]
  %v58 = vld [vmem:[%s1 + $0x150] sm:$0xff]
  %v59 = vld [vmem:[%s1 + $0x158] sm:$0xff]
  %v60 = vld [vmem:[%s1 + $0x160] sm:$0xff]
  %v61 = vld [vmem:[%s1 + $0x168] sm:$0xff]
  %v62 = vld [vmem:[%s1 + $0x170] sm:$0xff]
  %v63 = vld [vmem:[%s1 + $0x178] sm:$0xff]
  %v64 = vld [vmem:[%s1 + $0x180] sm:$0xff]
  %v65 = vld [vmem:[%s1 + $0x188] sm:$0xff]
  %v66 = vld [vmem:[%s1 + $0x190] sm:$0xff]
  %v67 = vld [vmem:[%s1 + $0x198] sm:$0xff]
  %v68 = vld [vmem:[%s1 + $0x1a0] sm:$0xff]
  %v69 = vld [vmem:[%s1 + $0x1a8] sm:$0xff]
  %v70 = vld [vmem:[%s1 + $0x1b0] sm:$0xff]
  %v71 = vld [vmem:[%s1 + $0x1b8] sm:$0xff]
  %v72 = vld [vmem:[%s1 + $0x1c0] sm:$0xff]
  %v73 = vld [vmem:[%s1 + $0x1c8] sm:$0xff]
  %v74 = vld [vmem:[%s1 + $0x1d0] sm:$0xff]
  %v75 = vld [vmem:[%s1 + $0x1d8] sm:$0xff]
  %v76 = vld [vmem:[%s1 + $0x1e0] sm:$0xff]
  %v77 = vld [vmem:[%s1 + $0x1e8] sm:$0xff]
  %v78 = vld [vmem:[%s1 + $0x1f0] sm:$0xff]
  %v79 = vld [vmem:[%s1 + $0x1f8] sm:$0xff]
  %v80 = vld [vmem:[%s1 + $0x200] sm:$0xff]
  %v81 = vld [vmem:[%s1 + $0x208] sm:$0xff]
  %v82 = vld [vmem:[%s1 + $0x210] sm:$0xff]
  %v83 = vld [vmem:[%s1 + $0x218] sm:$0xff]
  %v84 = vld [vmem:[%s1 + $0x220] sm:$0xff]
  %v85 = vld [vmem:[%s1 + $0x228] sm:$0xff]
  %v86 = vld [vmem:[%s1 + $0x230] sm:$0xff]
  %v87 = vld [vmem:[%s1 + $0x238] sm:$0xff]
  %v88 = vld [vmem:[%s1 + $0x240] sm:$0xff]
  %v89 = vld [vmem:[%s1 + $0x248] sm:$0xff]
  %v90 = vld [vmem:[%s1 + $0x250] sm:$0xff]
  %v91 = vld [vmem:[%s1 + $0x258] sm:$0xff]
  %v92 = vld [vmem:[%s1 + $0x260] sm:$0xff]
  %v93 = vld [vmem:[%s1 + $0x268] sm:$0xff]
  %v94 = vld [vmem:[%s1 + $0x270] sm:$0xff]
  %v95 = vld [vmem:[%s1 + $0x278] sm:$0xff]
  %v96 = vld [vmem:[%s1 + $0x280] sm:$0xff]
  %v97 = vld [vmem:[%s1 + $0x288] sm:$0xff]
  %v98 = vld [vmem:[%s1 + $0x290] sm:$0xff]
  %v99 = vld [vmem:[%s1 + $0x298] sm:$0xff]
  %v100 = vld [vmem:[%s1 + $0x2a0] sm:$0xff]
  %v101 = vld [vmem:[%s1 + $0x2a8] sm:$0xff]
  %v102 = vld [vmem:[%s1 + $0x2b0] sm:$0xff]
  %v103 = vld [vmem:[%s1 + $0x2b8] sm:$0xff]
  %v104 = vld [vmem:[%s1 + $0x2c0] sm:$0xff]
  %v105 = vld [vmem:[%s1 + $0x2c8] sm:$0xff]
  %v106 = vld [vmem:[%s1 + $0x2d0] sm:$0xff]
  %v107 = vld [vmem:[%s1 + $0x2d8] sm:$0xff]
  %v108 = vld [vmem:[%s1 + $0x2e0] sm:$0xff]
  %v109 = vld [vmem:[%s1 + $0x2e8] sm:$0xff]
  %v110 = vld [vmem:[%s1 + $0x2f0] sm:$0xff]
  %v111 = vld [vmem:[%s1 + $0x2f8] sm:$0xff]
  %v112 = vld [vmem:[%s1 + $0x300] sm:$0xff]
  %v113 = vld [vmem:[%s1 + $0x308] sm:$0xff]
  %v114 = vld [vmem:[%s1 + $0x310] sm:$0xff]
  %v115 = vld [vmem:[%s1 + $0x318] sm:$0xff]
  %v116 = vld [vmem:[%s1 + $0x320] sm:$0xff]
  %v117 = vld [vmem:[%s1 + $0x328] sm:$0xff]
  %v118 = vld [vmem:[%s1 + $0x330] sm:$0xff]
  %v119 = vld [vmem:[%s1 + $0x338] sm:$0xff]
  %v120 = vld [vmem:[%s1 + $0x340] sm:$0xff]
  %v121 = vld [vmem:[%s1 + $0x348] sm:$0xff]
  %v122 = vld [vmem:[%s1 + $0x350] sm:$0xff]
  %v123 = vld [vmem:[%s1 + $0x358] sm:$0xff]
  %v124 = vld [vmem:[%s1 + $0x360] sm:$0xff]
  %v125 = vld [vmem:[%s1 + $0x368] sm:$0xff]
  %v126 = vld [vmem:[%s1 + $0x370] sm:$0xff]
  %v127 = vld [vmem:[%s1 + $0x378] sm:$0xff]
  %v128 = vld [vmem:[%s1 + $0x380] sm:$0xff]
  %v129 = vld [vmem:[%s1 + $0x388] sm:$0xff]
  %v130 = vld [vmem:[%s1 + $0x390] sm:$0xff]
  %v131 = vld [vmem:[%s1 + $0x398] sm:$0xff]
  %v132 = vld [vmem:[%s1 + $0x3a0] sm:$0xff]
  %v133 = vld [vmem:[%s1 + $0x3a8] sm:$0xff]
  %v134 = vld [vmem:[%s1 + $0x3b0] sm:$0xff]
  %v135 = vld [vmem:[%s1 + $0x3b8] sm:$0xff]
  %v136 = vld [vmem:[%s1 + $0x3c0] sm:$0xff]
  %v137 = vld [vmem:[%s1 + $0x3c8] sm:$0xff]
  %v138 = vld [vmem:[%s1 + $0x3d0] sm:$0xff]
  %v139 = vld [vmem:[%s1 + $0x3d8] sm:$0xff]
  %v140 = vld [vmem:[%s1 + $0x3e0] sm:$0xff]
  %v141 = vld [vmem:[%s1 + $0x3e8] sm:$0xff]
  %v142 = vld [vmem:[%s1 + $0x3f0] sm:$0xff]
  %v143 = vld [vmem:[%s1 + $0x3f8] sm:$0xff]
  %v144 = vld [vmem:[%s1 + $0x400] sm:$0xff]
  %v145 = vld [vmem:[%s1 + $0x408] sm:$0xff]
  %v146 = vld [vmem:[%s1 + $0x410] sm:$0xff]
  %v147 = vld [vmem:[%s1 + $0x418] sm:$0xff]
  %v148 = vld [vmem:[%s1 + $0x420] sm:$0xff]
  %v149 = vld [vmem:[%s1 + $0x428] sm:$0xff]
  %v150 = vld [vmem:[%s1 + $0x430] sm:$0xff]
  %v151 = vld [vmem:[%s1 + $0x438] sm:$0xff]
  %v152 = vld [vmem:[%s1 + $0x440] sm:$0xff]
  %v153 = vld [vmem:[%s1 + $0x448] sm:$0xff]
  %v154 = vld [vmem:[%s1 + $0x450] sm:$0xff]
  %v155 = vld [vmem:[%s1 + $0x458] sm:$0xff]
  %v156 = vld [vmem:[%s1 + $0x460] sm:$0xff]
  %v157 = vld [vmem:[%s1 + $0x468] sm:$0xff]
  %v158 = vld [vmem:[%s1 + $0x470] sm:$0xff]
  %v159 = vld [vmem:[%s1 + $0x478] sm:$0xff]
  %v160 = vld [vmem:[%s1 + $0x480] sm:$0xff]
  %v161 = vld [vmem:[%s1 + $0x488] sm:$0xff]
  %v162 = vld [vmem:[%s1 + $0x490] sm:$0xff]
  %v163 = vld [vmem:[%s1 + $0x498] sm:$0xff]
  %v164 = vld [vmem:[%s1 + $0x4a0] sm:$0xff]
  %v165 = vld [vmem:[%s1 + $0x4a8] sm:$0xff]
  %v166 = vld [vmem:[%s1 + $0x4b0] sm:$0xff]
  %v167 = vld [vmem:[%s1 + $0x4b8] sm:$0xff]
  %v168 = vld [vmem:[%s1 + $0x4c0] sm:$0xff]
  %v169 = vld [vmem:[%s1 + $0x4c8] sm:$0xff]
  %v170 = vld [vmem:[%s1 + $0x4d0] sm:$0xff]
  %v171 = vld [vmem:[%s1 + $0x4d8] sm:$0xff]
  %v172 = vld [vmem:[%s1 + $0x4e0] sm:$0xff]
  %v173 = vld [vmem:[%s1 + $0x4e8] sm:$0xff]
  %v174 = vld [vmem:[%s1 + $0x4f0] sm:$0xff]
  %v175 = vld [vmem:[%s1 + $0x4f8] sm:$0xff]
  %v176 = vld [vmem:[%s1 + $0x500] sm:$0xff]
  %v177 = vld [vmem:[%s1 + $0x508] sm:$0xff]
  %v178 = vld [vmem:[%s1 + $0x510] sm:$0xff]
  %v179 = vld [vmem:[%s1 + $0x518] sm:$0xff]
  %v180 = vld [vmem:[%s1 + $0x520] sm:$0xff]
  %v181 = vld [vmem:[%s1 + $0x528] sm:$0xff]
  %v182 = vld [vmem:[%s1 + $0x530] sm:$0xff]
  %v183 = vld [vmem:[%s1 + $0x538] sm:$0xff]
  %v184 = vld [vmem:[%s1 + $0x540] sm:$0xff]
  %v185 = vld [vmem:[%s1 + $0x548] sm:$0xff]
  %v186 = vld [vmem:[%s1 + $0x550] sm:$0xff]
  %v187 = vld [vmem:[%s1 + $0x558] sm:$0xff]
  %v188 = vld [vmem:[%s1 + $0x560] sm:$0xff]
  %v189 = vld [vmem:[%s1 + $0x568] sm:$0xff]
  %v190 = vld [vmem:[%s1 + $0x570] sm:$0xff]
  %v191 = vld [vmem:[%s1 + $0x578] sm:$0xff]
  %v192 = vld [vmem:[%s1 + $0x580] sm:$0xff]
  %v193 = vld [vmem:[%s1 + $0x588] sm:$0xff]
  %v194 = vld [vmem:[%s1 + $0x590] sm:$0xff]
  %v195 = vld [vmem:[%s1 + $0x598] sm:$0xff]
  %v196 = vld [vmem:[%s1 + $0x5a0] sm:$0xff]
  %v197 = vld [vmem:[%s1 + $0x5a8] sm:$0xff]
  %v198 = vld [vmem:[%s1 + $0x5b0] sm:$0xff]
  %v199 = vld [vmem:[%s1 + $0x5b8] sm:$0xff]
  %v200 = vld [vmem:[%s1 + $0x5c0] sm:$0xff]
  %v201 = vld [vmem:[%s1 + $0x5c8] sm:$0xff]
  %v202 = vld [vmem:[%s1 + $0x5d0] sm:$0xff]
  %v203 = vld [vmem:[%s1 + $0x5d8] sm:$0xff]
  %v204 = vld [vmem:[%s1 + $0x5e0] sm:$0xff]
  %v205 = vld [vmem:[%s1 + $0x5e8] sm:$0xff]
  %v206 = vld [vmem:[%s1 + $0x5f0] sm:$0xff]
  %v207 = vld [vmem:[%s1 + $0x5f8] sm:$0xff]
  %v208 = vld [vmem:[%s1 + $0x600] sm:$0xff]
  %v209 = vld [vmem:[%s1 + $0x608] sm:$0xff]
  %v210 = vld [vmem:[%s1 + $0x610] sm:$0xff]
  %v211 = vld [vmem:[%s1 + $0x618] sm:$0xff]
  %v212 = vld [vmem:[%s1 + $0x620] sm:$0xff]
  %v213 = vld [vmem:[%s1 + $0x628] sm:$0xff]
  %v214 = vld [vmem:[%s1 + $0x630] sm:$0xff]
  %v215 = vld [vmem:[%s1 + $0x638] sm:$0xff]
  %v216 = vld [vmem:[%s1 + $0x640] sm:$0xff]
  %v217 = vld [vmem:[%s1 + $0x648] sm:$0xff]
  %v218 = vld [vmem:[%s1 + $0x650] sm:$0xff]
  %v219 = vld [vmem:[%s1 + $0x658] sm:$0xff]
  %v220 = vld [vmem:[%s1 + $0x660] sm:$0xff]
  %v221 = vld [vmem:[%s1 + $0x668] sm:$0xff]
  %v222 = vld [vmem:[%s1 + $0x670] sm:$0xff]
  %v223 = vld [vmem:[%s1 + $0x678] sm:$0xff]
  %v224 = vld [vmem:[%s1 + $0x680] sm:$0x33]
  %v225 = vld [vmem:[%s1 + $0x688] sm:$0x33]
  %v226 = vld [vmem:[%s1 + $0x690] sm:$0x33]
  %v227 = vld [vmem:[%s1 + $0x698] sm:$0x33]
  %v228 = vld [vmem:[%s1 + $0x6a0] sm:$0x33]
  %v229 = vld [vmem:[%s1 + $0x6a8] sm:$0x33]
  %v230 = vld [vmem:[%s1 + $0x6b0] sm:$0x33]
  %v231 = vld [vmem:[%s1 + $0x6b8] sm:$0x33]
  %v232 = vld [vmem:[%s1 + $0x6c0] sm:$0x33]
  %v233 = vld [vmem:[%s1 + $0x6c8] sm:$0x33]
  %v234 = vld [vmem:[%s1 + $0x6d0] sm:$0x33]
  %v235 = vld [vmem:[%s1 + $0x6d8] sm:$0x33]
  %v236 = vld [vmem:[%s1 + $0x6e0] sm:$0x33]
  %v237 = vld [vmem:[%s1 + $0x6e8] sm:$0x33]
  %v238 = vld [vmem:[%s1 + $0x6f0] sm:$0x33]
  %v239 = vld [vmem:[%s1 + $0x6f8] sm:$0x33]
  %v240 = vld [vmem:[%s2] sm:$0xff]
  %242 = vset.pattern.permute.xlu0 0
  %243 = vperm.xlu0 %242, %v240
  %v244 = vpop.permute.xlu0 %243
  %v470 = vunpack.c.l.b16 %v16
  %v471 = vunpack.c.h.b16 %v16
  %v472 = vunpack.c.l.b16 %v17
  %v473 = vunpack.c.h.b16 %v17
  %v474 = vunpack.c.l.b16 %v18
  %v475 = vunpack.c.h.b16 %v18
  %v476 = vunpack.c.l.b16 %v19
  %v477 = vunpack.c.h.b16 %v19
  %v478 = vunpack.c.l.b16 %v20
  %v479 = vunpack.c.h.b16 %v20
  %v480 = vunpack.c.l.b16 %v21
  %v481 = vunpack.c.h.b16 %v21
  %v482 = vunpack.c.l.b16 %v22
  %v483 = vunpack.c.h.b16 %v22
  %v484 = vunpack.c.l.b16 %v23
  %v485 = vunpack.c.h.b16 %v23
  %v486 = vunpack.c.l.b16 %v24
  %v487 = vunpack.c.h.b16 %v24
  %v488 = vunpack.c.l.b16 %v25
  %v489 = vunpack.c.h.b16 %v25
  %v490 = vunpack.c.l.b16 %v26
  %v491 = vunpack.c.h.b16 %v26
  %v492 = vunpack.c.l.b16 %v27
  %v493 = vunpack.c.h.b16 %v27
  %v494 = vunpack.c.l.b16 %v28
  %v495 = vunpack.c.h.b16 %v28
  %v496 = vunpack.c.l.b16 %v29
  %v497 = vunpack.c.h.b16 %v29
  %v498 = vunpack.c.l.b16 %v30
  %v499 = vunpack.c.h.b16 %v30
  %v500 = vunpack.c.l.b16 %v31
  %v501 = vunpack.c.h.b16 %v31
  %v502 = vunpack.c.l.b16 %v32
  %v503 = vunpack.c.h.b16 %v32
  %v504 = vunpack.c.l.b16 %v33
  %v505 = vunpack.c.h.b16 %v33
  %v506 = vunpack.c.l.b16 %v34
  %v507 = vunpack.c.h.b16 %v34
  %v508 = vunpack.c.l.b16 %v35
  %v509 = vunpack.c.h.b16 %v35
  %v510 = vunpack.c.l.b16 %v36
  %v511 = vunpack.c.h.b16 %v36
  %v512 = vunpack.c.l.b16 %v37
  %v513 = vunpack.c.h.b16 %v37
  %v514 = vunpack.c.l.b16 %v38
  %v515 = vunpack.c.h.b16 %v38
  %v516 = vunpack.c.l.b16 %v39
  %v517 = vunpack.c.h.b16 %v39
  %v518 = vunpack.c.l.b16 %v40
  %v519 = vunpack.c.h.b16 %v40
  %v520 = vunpack.c.l.b16 %v41
  %v521 = vunpack.c.h.b16 %v41
  %v522 = vunpack.c.l.b16 %v42
  %v523 = vunpack.c.h.b16 %v42
  %v524 = vunpack.c.l.b16 %v43
  %v525 = vunpack.c.h.b16 %v43
  %v526 = vunpack.c.l.b16 %v44
  %v527 = vunpack.c.h.b16 %v44
  %v528 = vunpack.c.l.b16 %v45
  %v529 = vunpack.c.h.b16 %v45
  %v530 = vunpack.c.l.b16 %v46
  %v531 = vunpack.c.h.b16 %v46
  %v532 = vunpack.c.l.b16 %v47
  %v533 = vunpack.c.h.b16 %v47
  %v534 = vunpack.c.l.b16 %v48
  %v535 = vunpack.c.h.b16 %v48
  %v536 = vunpack.c.l.b16 %v49
  %v537 = vunpack.c.h.b16 %v49
  %v538 = vunpack.c.l.b16 %v50
  %v539 = vunpack.c.h.b16 %v50
  %v540 = vunpack.c.l.b16 %v51
  %v541 = vunpack.c.h.b16 %v51
  %v542 = vunpack.c.l.b16 %v52
  %v543 = vunpack.c.h.b16 %v52
  %v544 = vunpack.c.l.b16 %v53
  %v545 = vunpack.c.h.b16 %v53
  %v546 = vunpack.c.l.b16 %v54
  %v547 = vunpack.c.h.b16 %v54
  %v548 = vunpack.c.l.b16 %v55
  %v549 = vunpack.c.h.b16 %v55
  %v550 = vunpack.c.l.b16 %v56
  %v551 = vunpack.c.h.b16 %v56
  %v552 = vunpack.c.l.b16 %v57
  %v553 = vunpack.c.h.b16 %v57
  %v554 = vunpack.c.l.b16 %v58
  %v555 = vunpack.c.h.b16 %v58
  %v556 = vunpack.c.l.b16 %v59
  %v557 = vunpack.c.h.b16 %v59
  %v558 = vunpack.c.l.b16 %v60
  %v559 = vunpack.c.h.b16 %v60
  %v560 = vunpack.c.l.b16 %v61
  %v561 = vunpack.c.h.b16 %v61
  %v562 = vunpack.c.l.b16 %v62
  %v563 = vunpack.c.h.b16 %v62
  %v564 = vunpack.c.l.b16 %v63
  %v565 = vunpack.c.h.b16 %v63
  %v566 = vunpack.c.l.b16 %v64
  %v567 = vunpack.c.h.b16 %v64
  %v568 = vunpack.c.l.b16 %v65
  %v569 = vunpack.c.h.b16 %v65
  %v570 = vunpack.c.l.b16 %v66
  %v571 = vunpack.c.h.b16 %v66
  %v572 = vunpack.c.l.b16 %v67
  %v573 = vunpack.c.h.b16 %v67
  %v574 = vunpack.c.l.b16 %v68
  %v575 = vunpack.c.h.b16 %v68
  %v576 = vunpack.c.l.b16 %v69
  %v577 = vunpack.c.h.b16 %v69
  %v578 = vunpack.c.l.b16 %v70
  %v579 = vunpack.c.h.b16 %v70
  %v580 = vunpack.c.l.b16 %v71
  %v581 = vunpack.c.h.b16 %v71
  %v582 = vunpack.c.l.b16 %v72
  %v583 = vunpack.c.h.b16 %v72
  %v584 = vunpack.c.l.b16 %v73
  %v585 = vunpack.c.h.b16 %v73
  %v586 = vunpack.c.l.b16 %v74
  %v587 = vunpack.c.h.b16 %v74
  %v588 = vunpack.c.l.b16 %v75
  %v589 = vunpack.c.h.b16 %v75
  %v590 = vunpack.c.l.b16 %v76
  %v591 = vunpack.c.h.b16 %v76
  %v592 = vunpack.c.l.b16 %v77
  %v593 = vunpack.c.h.b16 %v77
  %v594 = vunpack.c.l.b16 %v78
  %v595 = vunpack.c.h.b16 %v78
  %v596 = vunpack.c.l.b16 %v79
  %v597 = vunpack.c.h.b16 %v79
  %v598 = vunpack.c.l.b16 %v80
  %v599 = vunpack.c.h.b16 %v80
  %v600 = vunpack.c.l.b16 %v81
  %v601 = vunpack.c.h.b16 %v81
  %v602 = vunpack.c.l.b16 %v82
  %v603 = vunpack.c.h.b16 %v82
  %v604 = vunpack.c.l.b16 %v83
  %v605 = vunpack.c.h.b16 %v83
  %v606 = vunpack.c.l.b16 %v84
  %v607 = vunpack.c.h.b16 %v84
  %v608 = vunpack.c.l.b16 %v85
  %v609 = vunpack.c.h.b16 %v85
  %v610 = vunpack.c.l.b16 %v86
  %v611 = vunpack.c.h.b16 %v86
  %v612 = vunpack.c.l.b16 %v87
  %v613 = vunpack.c.h.b16 %v87
  %v614 = vunpack.c.l.b16 %v88
  %v615 = vunpack.c.h.b16 %v88
  %v616 = vunpack.c.l.b16 %v89
  %v617 = vunpack.c.h.b16 %v89
  %v618 = vunpack.c.l.b16 %v90
  %v619 = vunpack.c.h.b16 %v90
  %v620 = vunpack.c.l.b16 %v91
  %v621 = vunpack.c.h.b16 %v91
  %v622 = vunpack.c.l.b16 %v92
  %v623 = vunpack.c.h.b16 %v92
  %v624 = vunpack.c.l.b16 %v93
  %v625 = vunpack.c.h.b16 %v93
  %v626 = vunpack.c.l.b16 %v94
  %v627 = vunpack.c.h.b16 %v94
  %v628 = vunpack.c.l.b16 %v95
  %v629 = vunpack.c.h.b16 %v95
  %v630 = vunpack.c.l.b16 %v96
  %v631 = vunpack.c.h.b16 %v96
  %v632 = vunpack.c.l.b16 %v97
  %v633 = vunpack.c.h.b16 %v97
  %v634 = vunpack.c.l.b16 %v98
  %v635 = vunpack.c.h.b16 %v98
  %v636 = vunpack.c.l.b16 %v99
  %v637 = vunpack.c.h.b16 %v99
  %v638 = vunpack.c.l.b16 %v100
  %v639 = vunpack.c.h.b16 %v100
  %v640 = vunpack.c.l.b16 %v101
  %v641 = vunpack.c.h.b16 %v101
  %v642 = vunpack.c.l.b16 %v102
  %v643 = vunpack.c.h.b16 %v102
  %v644 = vunpack.c.l.b16 %v103
  %v645 = vunpack.c.h.b16 %v103
  %v646 = vunpack.c.l.b16 %v104
  %v647 = vunpack.c.h.b16 %v104
  %v648 = vunpack.c.l.b16 %v105
  %v649 = vunpack.c.h.b16 %v105
  %v650 = vunpack.c.l.b16 %v106
  %v651 = vunpack.c.h.b16 %v106
  %v652 = vunpack.c.l.b16 %v107
  %v653 = vunpack.c.h.b16 %v107
  %v654 = vunpack.c.l.b16 %v108
  %v655 = vunpack.c.h.b16 %v108
  %v656 = vunpack.c.l.b16 %v109
  %v657 = vunpack.c.h.b16 %v109
  %v658 = vunpack.c.l.b16 %v110
  %v659 = vunpack.c.h.b16 %v110
  %v660 = vunpack.c.l.b16 %v111
  %v661 = vunpack.c.h.b16 %v111
  %v662 = vunpack.c.l.b16 %v112
  %v663 = vunpack.c.h.b16 %v112
  %v664 = vunpack.c.l.b16 %v113
  %v665 = vunpack.c.h.b16 %v113
  %v666 = vunpack.c.l.b16 %v114
  %v667 = vunpack.c.h.b16 %v114
  %v668 = vunpack.c.l.b16 %v115
  %v669 = vunpack.c.h.b16 %v115
  %v670 = vunpack.c.l.b16 %v116
  %v671 = vunpack.c.h.b16 %v116
  %v672 = vunpack.c.l.b16 %v117
  %v673 = vunpack.c.h.b16 %v117
  %v674 = vunpack.c.l.b16 %v118
  %v675 = vunpack.c.h.b16 %v118
  %v676 = vunpack.c.l.b16 %v119
  %v677 = vunpack.c.h.b16 %v119
  %v678 = vunpack.c.l.b16 %v120
  %v679 = vunpack.c.h.b16 %v120
  %v680 = vunpack.c.l.b16 %v121
  %v681 = vunpack.c.h.b16 %v121
  %v682 = vunpack.c.l.b16 %v122
  %v683 = vunpack.c.h.b16 %v122
  %v684 = vunpack.c.l.b16 %v123
  %v685 = vunpack.c.h.b16 %v123
  %v686 = vunpack.c.l.b16 %v124
  %v687 = vunpack.c.h.b16 %v124
  %v688 = vunpack.c.l.b16 %v125
  %v689 = vunpack.c.h.b16 %v125
  %v690 = vunpack.c.l.b16 %v126
  %v691 = vunpack.c.h.b16 %v126
  %v692 = vunpack.c.l.b16 %v127
  %v693 = vunpack.c.h.b16 %v127
  %v694 = vunpack.c.l.b16 %v128
  %v695 = vunpack.c.h.b16 %v128
  %v696 = vunpack.c.l.b16 %v129
  %v697 = vunpack.c.h.b16 %v129
  %v698 = vunpack.c.l.b16 %v130
  %v699 = vunpack.c.h.b16 %v130
  %v700 = vunpack.c.l.b16 %v131
  %v701 = vunpack.c.h.b16 %v131
  %v702 = vunpack.c.l.b16 %v132
  %v703 = vunpack.c.h.b16 %v132
  %v704 = vunpack.c.l.b16 %v133
  %v705 = vunpack.c.h.b16 %v133
  %v706 = vunpack.c.l.b16 %v134
  %v707 = vunpack.c.h.b16 %v134
  %v708 = vunpack.c.l.b16 %v135
  %v709 = vunpack.c.h.b16 %v135
  %v710 = vunpack.c.l.b16 %v136
  %v711 = vunpack.c.h.b16 %v136
  %v712 = vunpack.c.l.b16 %v137
  %v713 = vunpack.c.h.b16 %v137
  %v714 = vunpack.c.l.b16 %v138
  %v715 = vunpack.c.h.b16 %v138
  %v716 = vunpack.c.l.b16 %v139
  %v717 = vunpack.c.h.b16 %v139
  %v718 = vunpack.c.l.b16 %v140
  %v719 = vunpack.c.h.b16 %v140
  %v720 = vunpack.c.l.b16 %v141
  %v721 = vunpack.c.h.b16 %v141
  %v722 = vunpack.c.l.b16 %v142
  %v723 = vunpack.c.h.b16 %v142
  %v724 = vunpack.c.l.b16 %v143
  %v725 = vunpack.c.h.b16 %v143
  %v726 = vunpack.c.l.b16 %v144
  %v727 = vunpack.c.h.b16 %v144
  %v728 = vunpack.c.l.b16 %v145
  %v729 = vunpack.c.h.b16 %v145
  %v730 = vunpack.c.l.b16 %v146
  %v731 = vunpack.c.h.b16 %v146
  %v732 = vunpack.c.l.b16 %v147
  %v733 = vunpack.c.h.b16 %v147
  %v734 = vunpack.c.l.b16 %v148
  %v735 = vunpack.c.h.b16 %v148
  %v736 = vunpack.c.l.b16 %v149
  %v737 = vunpack.c.h.b16 %v149
  %v738 = vunpack.c.l.b16 %v150
  %v739 = vunpack.c.h.b16 %v150
  %v740 = vunpack.c.l.b16 %v151
  %v741 = vunpack.c.h.b16 %v151
  %v742 = vunpack.c.l.b16 %v152
  %v743 = vunpack.c.h.b16 %v152
  %v744 = vunpack.c.l.b16 %v153
  %v745 = vunpack.c.h.b16 %v153
  %v746 = vunpack.c.l.b16 %v154
  %v747 = vunpack.c.h.b16 %v154
  %v748 = vunpack.c.l.b16 %v155
  %v749 = vunpack.c.h.b16 %v155
  %v750 = vunpack.c.l.b16 %v156
  %v751 = vunpack.c.h.b16 %v156
  %v752 = vunpack.c.l.b16 %v157
  %v753 = vunpack.c.h.b16 %v157
  %v754 = vunpack.c.l.b16 %v158
  %v755 = vunpack.c.h.b16 %v158
  %v756 = vunpack.c.l.b16 %v159
  %v757 = vunpack.c.h.b16 %v159
  %v758 = vunpack.c.l.b16 %v160
  %v759 = vunpack.c.h.b16 %v160
  %v760 = vunpack.c.l.b16 %v161
  %v761 = vunpack.c.h.b16 %v161
  %v762 = vunpack.c.l.b16 %v162
  %v763 = vunpack.c.h.b16 %v162
  %v764 = vunpack.c.l.b16 %v163
  %v765 = vunpack.c.h.b16 %v163
  %v766 = vunpack.c.l.b16 %v164
  %v767 = vunpack.c.h.b16 %v164
  %v768 = vunpack.c.l.b16 %v165
  %v769 = vunpack.c.h.b16 %v165
  %v770 = vunpack.c.l.b16 %v166
  %v771 = vunpack.c.h.b16 %v166
  %v772 = vunpack.c.l.b16 %v167
  %v773 = vunpack.c.h.b16 %v167
  %v774 = vunpack.c.l.b16 %v168
  %v775 = vunpack.c.h.b16 %v168
  %v776 = vunpack.c.l.b16 %v169
  %v777 = vunpack.c.h.b16 %v169
  %v778 = vunpack.c.l.b16 %v170
  %v779 = vunpack.c.h.b16 %v170
  %v780 = vunpack.c.l.b16 %v171
  %v781 = vunpack.c.h.b16 %v171
  %v782 = vunpack.c.l.b16 %v172
  %v783 = vunpack.c.h.b16 %v172
  %v784 = vunpack.c.l.b16 %v173
  %v785 = vunpack.c.h.b16 %v173
  %v786 = vunpack.c.l.b16 %v174
  %v787 = vunpack.c.h.b16 %v174
  %v788 = vunpack.c.l.b16 %v175
  %v789 = vunpack.c.h.b16 %v175
  %v790 = vunpack.c.l.b16 %v176
  %v791 = vunpack.c.h.b16 %v176
  %v792 = vunpack.c.l.b16 %v177
  %v793 = vunpack.c.h.b16 %v177
  %v794 = vunpack.c.l.b16 %v178
  %v795 = vunpack.c.h.b16 %v178
  %v796 = vunpack.c.l.b16 %v179
  %v797 = vunpack.c.h.b16 %v179
  %v798 = vunpack.c.l.b16 %v180
  %v799 = vunpack.c.h.b16 %v180
  %v800 = vunpack.c.l.b16 %v181
  %v801 = vunpack.c.h.b16 %v181
  %v802 = vunpack.c.l.b16 %v182
  %v803 = vunpack.c.h.b16 %v182
  %v804 = vunpack.c.l.b16 %v183
  %v805 = vunpack.c.h.b16 %v183
  %v806 = vunpack.c.l.b16 %v184
  %v807 = vunpack.c.h.b16 %v184
  %v808 = vunpack.c.l.b16 %v185
  %v809 = vunpack.c.h.b16 %v185
  %v810 = vunpack.c.l.b16 %v186
  %v811 = vunpack.c.h.b16 %v186
  %v812 = vunpack.c.l.b16 %v187
  %v813 = vunpack.c.h.b16 %v187
  %v814 = vunpack.c.l.b16 %v188
  %v815 = vunpack.c.h.b16 %v188
  %v816 = vunpack.c.l.b16 %v189
  %v817 = vunpack.c.h.b16 %v189
  %v818 = vunpack.c.l.b16 %v190
  %v819 = vunpack.c.h.b16 %v190
  %v820 = vunpack.c.l.b16 %v191
  %v821 = vunpack.c.h.b16 %v191
  %v822 = vunpack.c.l.b16 %v192
  %v823 = vunpack.c.h.b16 %v192
  %v824 = vunpack.c.l.b16 %v193
  %v825 = vunpack.c.h.b16 %v193
  %v826 = vunpack.c.l.b16 %v194
  %v827 = vunpack.c.h.b16 %v194
  %v828 = vunpack.c.l.b16 %v195
  %v829 = vunpack.c.h.b16 %v195
  %v830 = vunpack.c.l.b16 %v196
  %v831 = vunpack.c.h.b16 %v196
  %v832 = vunpack.c.l.b16 %v197
  %v833 = vunpack.c.h.b16 %v197
  %v834 = vunpack.c.l.b16 %v198
  %v835 = vunpack.c.h.b16 %v198
  %v836 = vunpack.c.l.b16 %v199
  %v837 = vunpack.c.h.b16 %v199
  %v838 = vunpack.c.l.b16 %v200
  %v839 = vunpack.c.h.b16 %v200
  %v840 = vunpack.c.l.b16 %v201
  %v841 = vunpack.c.h.b16 %v201
  %v842 = vunpack.c.l.b16 %v202
  %v843 = vunpack.c.h.b16 %v202
  %v844 = vunpack.c.l.b16 %v203
  %v845 = vunpack.c.h.b16 %v203
  %v846 = vunpack.c.l.b16 %v204
  %v847 = vunpack.c.h.b16 %v204
  %v848 = vunpack.c.l.b16 %v205
  %v849 = vunpack.c.h.b16 %v205
  %v850 = vunpack.c.l.b16 %v206
  %v851 = vunpack.c.h.b16 %v206
  %v852 = vunpack.c.l.b16 %v207
  %v853 = vunpack.c.h.b16 %v207
  %v854 = vunpack.c.l.b16 %v208
  %v855 = vunpack.c.h.b16 %v208
  %v856 = vunpack.c.l.b16 %v209
  %v857 = vunpack.c.h.b16 %v209
  %v858 = vunpack.c.l.b16 %v210
  %v859 = vunpack.c.h.b16 %v210
  %v860 = vunpack.c.l.b16 %v211
  %v861 = vunpack.c.h.b16 %v211
  %v862 = vunpack.c.l.b16 %v212
  %v863 = vunpack.c.h.b16 %v212
  %v864 = vunpack.c.l.b16 %v213
  %v865 = vunpack.c.h.b16 %v213
  %v866 = vunpack.c.l.b16 %v214
  %v867 = vunpack.c.h.b16 %v214
  %v868 = vunpack.c.l.b16 %v215
  %v869 = vunpack.c.h.b16 %v215
  %v870 = vunpack.c.l.b16 %v216
  %v871 = vunpack.c.h.b16 %v216
  %v872 = vunpack.c.l.b16 %v217
  %v873 = vunpack.c.h.b16 %v217
  %v874 = vunpack.c.l.b16 %v218
  %v875 = vunpack.c.h.b16 %v218
  %v876 = vunpack.c.l.b16 %v219
  %v877 = vunpack.c.h.b16 %v219
  %v878 = vunpack.c.l.b16 %v220
  %v879 = vunpack.c.h.b16 %v220
  %v880 = vunpack.c.l.b16 %v221
  %v881 = vunpack.c.h.b16 %v221
  %v882 = vunpack.c.l.b16 %v222
  %v883 = vunpack.c.h.b16 %v222
  %v884 = vunpack.c.l.b16 %v223
  %v885 = vunpack.c.h.b16 %v223
  %v886 = vunpack.c.l.b16 %v224
  %v887 = vunpack.c.h.b16 %v224
  %v888 = vunpack.c.l.b16 %v225
  %v889 = vunpack.c.h.b16 %v225
  %v890 = vunpack.c.l.b16 %v226
  %v891 = vunpack.c.h.b16 %v226
  %v892 = vunpack.c.l.b16 %v227
  %v893 = vunpack.c.h.b16 %v227
  %v894 = vunpack.c.l.b16 %v228
  %v895 = vunpack.c.h.b16 %v228
  %v896 = vunpack.c.l.b16 %v229
  %v897 = vunpack.c.h.b16 %v229
  %v898 = vunpack.c.l.b16 %v230
  %v899 = vunpack.c.h.b16 %v230
  %v900 = vunpack.c.l.b16 %v231
  %v901 = vunpack.c.h.b16 %v231
  %v902 = vunpack.c.l.b16 %v232
  %v903 = vunpack.c.h.b16 %v232
  %v904 = vunpack.c.l.b16 %v233
  %v905 = vunpack.c.h.b16 %v233
  %v906 = vunpack.c.l.b16 %v234
  %v907 = vunpack.c.h.b16 %v234
  %v908 = vunpack.c.l.b16 %v235
  %v909 = vunpack.c.h.b16 %v235
  %v910 = vunpack.c.l.b16 %v236
  %v911 = vunpack.c.h.b16 %v236
  %v912 = vunpack.c.l.b16 %v237
  %v913 = vunpack.c.h.b16 %v237
  %v914 = vunpack.c.l.b16 %v238
  %v915 = vunpack.c.h.b16 %v238
  %v916 = vunpack.c.l.b16 %v239
  %v917 = vunpack.c.h.b16 %v239
  %v918 = vpack.c.b16 %v502, %v470
  %v919 = vpack.c.b16 %v503, %v471
  %v920 = vpack.c.b16 %v504, %v472
  %v921 = vpack.c.b16 %v505, %v473
  %v922 = vpack.c.b16 %v506, %v474
  %v923 = vpack.c.b16 %v507, %v475
  %v924 = vpack.c.b16 %v508, %v476
  %v925 = vpack.c.b16 %v509, %v477
  %v926 = vpack.c.b16 %v510, %v478
  %v927 = vpack.c.b16 %v511, %v479
  %v928 = vpack.c.b16 %v512, %v480
  %v929 = vpack.c.b16 %v513, %v481
  %v930 = vpack.c.b16 %v514, %v482
  %v931 = vpack.c.b16 %v515, %v483
  %v932 = vpack.c.b16 %v516, %v484
  %v933 = vpack.c.b16 %v517, %v485
  %v934 = vpack.c.b16 %v518, %v486
  %v935 = vpack.c.b16 %v519, %v487
  %v936 = vpack.c.b16 %v520, %v488
  %v937 = vpack.c.b16 %v521, %v489
  %v938 = vpack.c.b16 %v522, %v490
  %v939 = vpack.c.b16 %v523, %v491
  %v940 = vpack.c.b16 %v524, %v492
  %v941 = vpack.c.b16 %v525, %v493
  %v942 = vpack.c.b16 %v526, %v494
  %v943 = vpack.c.b16 %v527, %v495
  %v944 = vpack.c.b16 %v528, %v496
  %v945 = vpack.c.b16 %v529, %v497
  %v946 = vpack.c.b16 %v530, %v498
  %v947 = vpack.c.b16 %v531, %v499
  %v948 = vpack.c.b16 %v532, %v500
  %v949 = vpack.c.b16 %v533, %v501
  %v950 = vpack.c.b16 %v566, %v534
  %v951 = vpack.c.b16 %v567, %v535
  %v952 = vpack.c.b16 %v568, %v536
  %v953 = vpack.c.b16 %v569, %v537
  %v954 = vpack.c.b16 %v570, %v538
  %v955 = vpack.c.b16 %v571, %v539
  %v956 = vpack.c.b16 %v572, %v540
  %v957 = vpack.c.b16 %v573, %v541
  %v958 = vpack.c.b16 %v574, %v542
  %v959 = vpack.c.b16 %v575, %v543
  %v960 = vpack.c.b16 %v576, %v544
  %v961 = vpack.c.b16 %v577, %v545
  %v962 = vpack.c.b16 %v578, %v546
  %v963 = vpack.c.b16 %v579, %v547
  %v964 = vpack.c.b16 %v580, %v548
  %v965 = vpack.c.b16 %v581, %v549
  %v966 = vpack.c.b16 %v582, %v550
  %v967 = vpack.c.b16 %v583, %v551
  %v968 = vpack.c.b16 %v584, %v552
  %v969 = vpack.c.b16 %v585, %v553
  %v970 = vpack.c.b16 %v586, %v554
  %v971 = vpack.c.b16 %v587, %v555
  %v972 = vpack.c.b16 %v588, %v556
  %v973 = vpack.c.b16 %v589, %v557
  %v974 = vpack.c.b16 %v590, %v558
  %v975 = vpack.c.b16 %v591, %v559
  %v976 = vpack.c.b16 %v592, %v560
  %v977 = vpack.c.b16 %v593, %v561
  %v978 = vpack.c.b16 %v594, %v562
  %v979 = vpack.c.b16 %v595, %v563
  %v980 = vpack.c.b16 %v596, %v564
  %v981 = vpack.c.b16 %v597, %v565
  %v982 = vpack.c.b16 %v630, %v598
  %v983 = vpack.c.b16 %v631, %v599
  %v984 = vpack.c.b16 %v632, %v600
  %v985 = vpack.c.b16 %v633, %v601
  %v986 = vpack.c.b16 %v634, %v602
  %v987 = vpack.c.b16 %v635, %v603
  %v988 = vpack.c.b16 %v636, %v604
  %v989 = vpack.c.b16 %v637, %v605
  %v990 = vpack.c.b16 %v638, %v606
  %v991 = vpack.c.b16 %v639, %v607
  %v992 = vpack.c.b16 %v640, %v608
  %v993 = vpack.c.b16 %v641, %v609
  %v994 = vpack.c.b16 %v642, %v610
  %v995 = vpack.c.b16 %v643, %v611
  %v996 = vpack.c.b16 %v644, %v612
  %v997 = vpack.c.b16 %v645, %v613
  %v998 = vpack.c.b16 %v646, %v614
  %v999 = vpack.c.b16 %v647, %v615
  %v1000 = vpack.c.b16 %v648, %v616
  %v1001 = vpack.c.b16 %v649, %v617
  %v1002 = vpack.c.b16 %v650, %v618
  %v1003 = vpack.c.b16 %v651, %v619
  %v1004 = vpack.c.b16 %v652, %v620
  %v1005 = vpack.c.b16 %v653, %v621
  %v1006 = vpack.c.b16 %v654, %v622
  %v1007 = vpack.c.b16 %v655, %v623
  %v1008 = vpack.c.b16 %v656, %v624
  %v1009 = vpack.c.b16 %v657, %v625
  %v1010 = vpack.c.b16 %v658, %v626
  %v1011 = vpack.c.b16 %v659, %v627
  %v1012 = vpack.c.b16 %v660, %v628
  %v1013 = vpack.c.b16 %v661, %v629
  %v1014 = vpack.c.b16 %v694, %v662
  %v1015 = vpack.c.b16 %v695, %v663
  %v1016 = vpack.c.b16 %v696, %v664
  %v1017 = vpack.c.b16 %v697, %v665
  %v1018 = vpack.c.b16 %v698, %v666
  %v1019 = vpack.c.b16 %v699, %v667
  %v1020 = vpack.c.b16 %v700, %v668
  %v1021 = vpack.c.b16 %v701, %v669
  %v1022 = vpack.c.b16 %v702, %v670
  %v1023 = vpack.c.b16 %v703, %v671
  %v1024 = vpack.c.b16 %v704, %v672
  %v1025 = vpack.c.b16 %v705, %v673
  %v1026 = vpack.c.b16 %v706, %v674
  %v1027 = vpack.c.b16 %v707, %v675
  %v1028 = vpack.c.b16 %v708, %v676
  %v1029 = vpack.c.b16 %v709, %v677
  %v1030 = vpack.c.b16 %v710, %v678
  %v1031 = vpack.c.b16 %v711, %v679
  %v1032 = vpack.c.b16 %v712, %v680
  %v1033 = vpack.c.b16 %v713, %v681
  %v1034 = vpack.c.b16 %v714, %v682
  %v1035 = vpack.c.b16 %v715, %v683
  %v1036 = vpack.c.b16 %v716, %v684
  %v1037 = vpack.c.b16 %v717, %v685
  %v1038 = vpack.c.b16 %v718, %v686
  %v1039 = vpack.c.b16 %v719, %v687
  %v1040 = vpack.c.b16 %v720, %v688
  %v1041 = vpack.c.b16 %v721, %v689
  %v1042 = vpack.c.b16 %v722, %v690
  %v1043 = vpack.c.b16 %v723, %v691
  %v1044 = vpack.c.b16 %v724, %v692
  %v1045 = vpack.c.b16 %v725, %v693
  %v1046 = vpack.c.b16 %v758, %v726
  %v1047 = vpack.c.b16 %v759, %v727
  %v1048 = vpack.c.b16 %v760, %v728
  %v1049 = vpack.c.b16 %v761, %v729
  %v1050 = vpack.c.b16 %v762, %v730
  %v1051 = vpack.c.b16 %v763, %v731
  %v1052 = vpack.c.b16 %v764, %v732
  %v1053 = vpack.c.b16 %v765, %v733
  %v1054 = vpack.c.b16 %v766, %v734
  %v1055 = vpack.c.b16 %v767, %v735
  %v1056 = vpack.c.b16 %v768, %v736
  %v1057 = vpack.c.b16 %v769, %v737
  %v1058 = vpack.c.b16 %v770, %v738
  %v1059 = vpack.c.b16 %v771, %v739
  %v1060 = vpack.c.b16 %v772, %v740
  %v1061 = vpack.c.b16 %v773, %v741
  %v1062 = vpack.c.b16 %v774, %v742
  %v1063 = vpack.c.b16 %v775, %v743
  %v1064 = vpack.c.b16 %v776, %v744
  %v1065 = vpack.c.b16 %v777, %v745
  %v1066 = vpack.c.b16 %v778, %v746
  %v1067 = vpack.c.b16 %v779, %v747
  %v1068 = vpack.c.b16 %v780, %v748
  %v1069 = vpack.c.b16 %v781, %v749
  %v1070 = vpack.c.b16 %v782, %v750
  %v1071 = vpack.c.b16 %v783, %v751
  %v1072 = vpack.c.b16 %v784, %v752
  %v1073 = vpack.c.b16 %v785, %v753
  %v1074 = vpack.c.b16 %v786, %v754
  %v1075 = vpack.c.b16 %v787, %v755
  %v1076 = vpack.c.b16 %v788, %v756
  %v1077 = vpack.c.b16 %v789, %v757
  %v1078 = vpack.c.b16 %v822, %v790
  %v1079 = vpack.c.b16 %v823, %v791
  %v1080 = vpack.c.b16 %v824, %v792
  %v1081 = vpack.c.b16 %v825, %v793
  %v1082 = vpack.c.b16 %v826, %v794
  %v1083 = vpack.c.b16 %v827, %v795
  %v1084 = vpack.c.b16 %v828, %v796
  %v1085 = vpack.c.b16 %v829, %v797
  %v1086 = vpack.c.b16 %v830, %v798
  %v1087 = vpack.c.b16 %v831, %v799
  %v1088 = vpack.c.b16 %v832, %v800
  %v1089 = vpack.c.b16 %v833, %v801
  %v1090 = vpack.c.b16 %v834, %v802
  %v1091 = vpack.c.b16 %v835, %v803
  %v1092 = vpack.c.b16 %v836, %v804
  %v1093 = vpack.c.b16 %v837, %v805
  %v1094 = vpack.c.b16 %v838, %v806
  %v1095 = vpack.c.b16 %v839, %v807
  %v1096 = vpack.c.b16 %v840, %v808
  %v1097 = vpack.c.b16 %v841, %v809
  %v1098 = vpack.c.b16 %v842, %v810
  %v1099 = vpack.c.b16 %v843, %v811
  %v1100 = vpack.c.b16 %v844, %v812
  %v1101 = vpack.c.b16 %v845, %v813
  %v1102 = vpack.c.b16 %v846, %v814
  %v1103 = vpack.c.b16 %v847, %v815
  %v1104 = vpack.c.b16 %v848, %v816
  %v1105 = vpack.c.b16 %v849, %v817
  %v1106 = vpack.c.b16 %v850, %v818
  %v1107 = vpack.c.b16 %v851, %v819
  %v1108 = vpack.c.b16 %v852, %v820
  %v1109 = vpack.c.b16 %v853, %v821
  %v1110 = vpack.c.b16 %v886, %v854
  %v1111 = vpack.c.b16 %v887, %v855
  %v1112 = vpack.c.b16 %v888, %v856
  %v1113 = vpack.c.b16 %v889, %v857
  %v1114 = vpack.c.b16 %v890, %v858
  %v1115 = vpack.c.b16 %v891, %v859
  %v1116 = vpack.c.b16 %v892, %v860
  %v1117 = vpack.c.b16 %v893, %v861
  %v1118 = vpack.c.b16 %v894, %v862
  %v1119 = vpack.c.b16 %v895, %v863
  %v1120 = vpack.c.b16 %v896, %v864
  %v1121 = vpack.c.b16 %v897, %v865
  %v1122 = vpack.c.b16 %v898, %v866
  %v1123 = vpack.c.b16 %v899, %v867
  %v1124 = vpack.c.b16 %v900, %v868
  %v1125 = vpack.c.b16 %v901, %v869
  %v1126 = vpack.c.b16 %v902, %v870
  %v1127 = vpack.c.b16 %v903, %v871
  %v1128 = vpack.c.b16 %v904, %v872
  %v1129 = vpack.c.b16 %v905, %v873
  %v1130 = vpack.c.b16 %v906, %v874
  %v1131 = vpack.c.b16 %v907, %v875
  %v1132 = vpack.c.b16 %v908, %v876
  %v1133 = vpack.c.b16 %v909, %v877
  %v1134 = vpack.c.b16 %v910, %v878
  %v1135 = vpack.c.b16 %v911, %v879
  %v1136 = vpack.c.b16 %v912, %v880
  %v1137 = vpack.c.b16 %v913, %v881
  %v1138 = vpack.c.b16 %v914, %v882
  %v1139 = vpack.c.b16 %v915, %v883
  %v1140 = vpack.c.b16 %v916, %v884
  %v1141 = vpack.c.b16 %v917, %v885
  %vm1334 = vcmask 883712
  %v1336 = vsel %vm1334, %v15, 0
  %vm1338 = vcmask 1045504
  %v1340 = vsel %vm1338, %v1110, 0
  %v1343 = vsel %vm1338, %v1111, 0
  %v1346 = vsel %vm1338, %v1112, 0
  %v1349 = vsel %vm1338, %v1113, 0
  %v1352 = vsel %vm1338, %v1114, 0
  %v1355 = vsel %vm1338, %v1115, 0
  %v1358 = vsel %vm1338, %v1116, 0
  %v1361 = vsel %vm1338, %v1117, 0
  %v1364 = vsel %vm1338, %v1118, 0
  %v1367 = vsel %vm1338, %v1119, 0
  %v1370 = vsel %vm1338, %v1120, 0
  %v1373 = vsel %vm1338, %v1121, 0
  %v1376 = vsel %vm1338, %v1122, 0
  %v1379 = vsel %vm1338, %v1123, 0
  %v1382 = vsel %vm1338, %v1124, 0
  %v1385 = vsel %vm1338, %v1125, 0
  %v1388 = vsel %vm1338, %v1126, 0
  %v1391 = vsel %vm1338, %v1127, 0
  %v1394 = vsel %vm1338, %v1128, 0
  %v1397 = vsel %vm1338, %v1129, 0
  %v1400 = vsel %vm1338, %v1130, 0
  %v1403 = vsel %vm1338, %v1131, 0
  %v1406 = vsel %vm1338, %v1132, 0
  %v1409 = vsel %vm1338, %v1133, 0
  %v1412 = vsel %vm1338, %v1134, 0
  %v1415 = vsel %vm1338, %v1135, 0
  %v1418 = vsel %vm1338, %v1136, 0
  %v1421 = vsel %vm1338, %v1137, 0
  %v1424 = vsel %vm1338, %v1138, 0
  %v1427 = vsel %vm1338, %v1139, 0
  %v1430 = vsel %vm1338, %v1140, 0
  %v1433 = vsel %vm1338, %v1141, 0
  %1435 = vmatprep.subr.bf16.mxu0 0
  %1436 = vmatpush1.bf16.msra.mxu0 0
  %1437 = vmatprep.subr.bf16.mxu0 %v1343
  %1438 = vmatpush1.bf16.msra.mxu0 %v1340
  %1439 = vmatprep.subr.bf16.mxu0 %v1079
  %1440 = vmatpush1.bf16.msra.mxu0 %v1078
  %1441 = vmatprep.subr.bf16.mxu0 %v1047
  %1442 = vmatpush1.bf16.msra.mxu0 %v1046
  %1443 = vmatprep.subr.bf16.mxu0 %v1015
  %1444 = vmatpush1.bf16.msra.mxu0 %v1014
  %1445 = vmatprep.subr.bf16.mxu0 %v983
  %1446 = vmatpush1.bf16.msra.mxu0 %v982
  %1447 = vmatprep.subr.bf16.mxu0 %v951
  %1448 = vmatpush1.bf16.msra.mxu0 %v950
  %1449 = vmatprep.subr.bf16.mxu0 %v919
  %1450 = vmatpush1.bf16.msra.mxu0 %v918
  %1451 = vmatprep.subr.bf16.mxu0 0
  %1452 = vmatpush2.bf16.msra.mxu0 0
  %1453 = vmatprep.subr.bf16.mxu0 0
  %1454 = vmatpush2.bf16.msra.mxu0 0
  %1455 = vmatprep.subr.bf16.mxu0 0
  %1456 = vmatpush2.bf16.msra.mxu0 0
  %1457 = vmatprep.subr.bf16.mxu0 0
  %1458 = vmatpush2.bf16.msra.mxu0 0
  %1459 = vmatprep.subr.bf16.mxu0 0
  %1460 = vmatpush2.bf16.msra.mxu0 0
  %1461 = vmatprep.subr.bf16.mxu0 0
  %1462 = vmatpush2.bf16.msra.mxu0 0
  %1463 = vmatprep.subr.bf16.mxu0 0
  %1464 = vmatpush2.bf16.msra.mxu0 0
  %1465 = vmatprep.subr.bf16.mxu0 0
  %1466 = vmatpush2.bf16.msra.mxu0 0
  %1467 = vmatprep.mubr.bf16.mxu0 0
  %1468 = vmatmul.mubr.bf16.gmra.mxu0 %v1336
  %v1469 = vpop.f32.mrf.mxu0
  %v1470 = vadd.f32 %v244, %v1469
  %v1471 = vpop.f32.mrf.mxu0
  %v1472 = vadd.f32 %v244, %v1471
  %v1473 = vpop.f32.mrf.mxu0
  %v1474 = vpop.f32.mrf.mxu0
  %1475 = vdwg.mxu0
  %1476 = vmatprep.subr.bf16.mxu0 0
  %1477 = vmatpush1.bf16.msra.mxu0 0
  %1478 = vmatprep.subr.bf16.mxu0 %v1349
  %1479 = vmatpush1.bf16.msra.mxu0 %v1346
  %1480 = vmatprep.subr.bf16.mxu0 %v1081
  %1481 = vmatpush1.bf16.msra.mxu0 %v1080
  %1482 = vmatprep.subr.bf16.mxu0 %v1049
  %1483 = vmatpush1.bf16.msra.mxu0 %v1048
  %1484 = vmatprep.subr.bf16.mxu0 %v1017
  %1485 = vmatpush1.bf16.msra.mxu0 %v1016
  %1486 = vmatprep.subr.bf16.mxu0 %v985
  %1487 = vmatpush1.bf16.msra.mxu0 %v984
  %1488 = vmatprep.subr.bf16.mxu0 %v953
  %1489 = vmatpush1.bf16.msra.mxu0 %v952
  %1490 = vmatprep.subr.bf16.mxu0 %v921
  %1491 = vmatpush1.bf16.msra.mxu0 %v920
  %1492 = vmatprep.subr.bf16.mxu0 0
  %1493 = vmatpush2.bf16.msra.mxu0 0
  %1494 = vmatprep.subr.bf16.mxu0 0
  %1495 = vmatpush2.bf16.msra.mxu0 0
  %1496 = vmatprep.subr.bf16.mxu0 0
  %1497 = vmatpush2.bf16.msra.mxu0 0
  %1498 = vmatprep.subr.bf16.mxu0 0
  %1499 = vmatpush2.bf16.msra.mxu0 0
  %1500 = vmatprep.subr.bf16.mxu0 0
  %1501 = vmatpush2.bf16.msra.mxu0 0
  %1502 = vmatprep.subr.bf16.mxu0 0
  %1503 = vmatpush2.bf16.msra.mxu0 0
  %1504 = vmatprep.subr.bf16.mxu0 0
  %1505 = vmatpush2.bf16.msra.mxu0 0
  %1506 = vmatprep.subr.bf16.mxu0 0
  %1507 = vmatpush2.bf16.msra.mxu0 0
  %1508 = vmatprep.mubr.bf16.mxu0 0
  %1509 = vmatmul.mubr.bf16.gmra.mxu0 %v1336
  %v1510 = vpop.f32.mrf.mxu0
  %v1511 = vadd.f32 %v244, %v1510
  %v1512 = vpop.f32.mrf.mxu0
  %v1513 = vadd.f32 %v244, %v1512
  %v1514 = vpop.f32.mrf.mxu0
  %v1515 = vpop.f32.mrf.mxu0
  %1516 = vdwg.mxu0
  %1517 = vmatprep.subr.bf16.mxu0 0
  %1518 = vmatpush1.bf16.msra.mxu0 0
  %1519 = vmatprep.subr.bf16.mxu0 %v1355
  %1520 = vmatpush1.bf16.msra.mxu0 %v1352
  %1521 = vmatprep.subr.bf16.mxu0 %v1083
  %1522 = vmatpush1.bf16.msra.mxu0 %v1082
  %1523 = vmatprep.subr.bf16.mxu0 %v1051
  %1524 = vmatpush1.bf16.msra.mxu0 %v1050
  %1525 = vmatprep.subr.bf16.mxu0 %v1019
  %1526 = vmatpush1.bf16.msra.mxu0 %v1018
  %1527 = vmatprep.subr.bf16.mxu0 %v987
  %1528 = vmatpush1.bf16.msra.mxu0 %v986
  %1529 = vmatprep.subr.bf16.mxu0 %v955
  %1530 = vmatpush1.bf16.msra.mxu0 %v954
  %1531 = vmatprep.subr.bf16.mxu0 %v923
  %1532 = vmatpush1.bf16.msra.mxu0 %v922
  %1533 = vmatprep.subr.bf16.mxu0 0
  %1534 = vmatpush2.bf16.msra.mxu0 0
  %1535 = vmatprep.subr.bf16.mxu0 0
  %1536 = vmatpush2.bf16.msra.mxu0 0
  %1537 = vmatprep.subr.bf16.mxu0 0
  %1538 = vmatpush2.bf16.msra.mxu0 0
  %1539 = vmatprep.subr.bf16.mxu0 0
  %1540 = vmatpush2.bf16.msra.mxu0 0
  %1541 = vmatprep.subr.bf16.mxu0 0
  %1542 = vmatpush2.bf16.msra.mxu0 0
  %1543 = vmatprep.subr.bf16.mxu0 0
  %1544 = vmatpush2.bf16.msra.mxu0 0
  %1545 = vmatprep.subr.bf16.mxu0 0
  %1546 = vmatpush2.bf16.msra.mxu0 0
  %1547 = vmatprep.subr.bf16.mxu0 0
  %1548 = vmatpush2.bf16.msra.mxu0 0
  %1549 = vmatprep.mubr.bf16.mxu0 0
  %1550 = vmatmul.mubr.bf16.gmra.mxu0 %v1336
  %v1551 = vpop.f32.mrf.mxu0
  %v1552 = vadd.f32 %v244, %v1551
  %v1553 = vpop.f32.mrf.mxu0
  %v1554 = vadd.f32 %v244, %v1553
  %v1555 = vpop.f32.mrf.mxu0
  %v1556 = vpop.f32.mrf.mxu0
  %1557 = vdwg.mxu0
  %1558 = vmatprep.subr.bf16.mxu0 0
  %1559 = vmatpush1.bf16.msra.mxu0 0
  %1560 = vmatprep.subr.bf16.mxu0 %v1361
  %1561 = vmatpush1.bf16.msra.mxu0 %v1358
  %1562 = vmatprep.subr.bf16.mxu0 %v1085
  %1563 = vmatpush1.bf16.msra.mxu0 %v1084
  %1564 = vmatprep.subr.bf16.mxu0 %v1053
  %1565 = vmatpush1.bf16.msra.mxu0 %v1052
  %1566 = vmatprep.subr.bf16.mxu0 %v1021
  %1567 = vmatpush1.bf16.msra.mxu0 %v1020
  %1568 = vmatprep.subr.bf16.mxu0 %v989
  %1569 = vmatpush1.bf16.msra.mxu0 %v988
  %1570 = vmatprep.subr.bf16.mxu0 %v957
  %1571 = vmatpush1.bf16.msra.mxu0 %v956
  %1572 = vmatprep.subr.bf16.mxu0 %v925
  %1573 = vmatpush1.bf16.msra.mxu0 %v924
  %1574 = vmatprep.subr.bf16.mxu0 0
  %1575 = vmatpush2.bf16.msra.mxu0 0
  %1576 = vmatprep.subr.bf16.mxu0 0
  %1577 = vmatpush2.bf16.msra.mxu0 0
  %1578 = vmatprep.subr.bf16.mxu0 0
  %1579 = vmatpush2.bf16.msra.mxu0 0
  %1580 = vmatprep.subr.bf16.mxu0 0
  %1581 = vmatpush2.bf16.msra.mxu0 0
  %1582 = vmatprep.subr.bf16.mxu0 0
  %1583 = vmatpush2.bf16.msra.mxu0 0
  %1584 = vmatprep.subr.bf16.mxu0 0
  %1585 = vmatpush2.bf16.msra.mxu0 0
  %1586 = vmatprep.subr.bf16.mxu0 0
  %1587 = vmatpush2.bf16.msra.mxu0 0
  %1588 = vmatprep.subr.bf16.mxu0 0
  %1589 = vmatpush2.bf16.msra.mxu0 0
  %1590 = vmatprep.mubr.bf16.mxu0 0
  %1591 = vmatmul.mubr.bf16.gmra.mxu0 %v1336
  %v1592 = vpop.f32.mrf.mxu0
  %v1593 = vadd.f32 %v244, %v1592
  %v1594 = vpop.f32.mrf.mxu0
  %v1595 = vadd.f32 %v244, %v1594
  %v1596 = vpop.f32.mrf.mxu0
  %v1597 = vpop.f32.mrf.mxu0
  %1598 = vdwg.mxu0
  %1599 = vmatprep.subr.bf16.mxu0 0
  %1600 = vmatpush1.bf16.msra.mxu0 0
  %1601 = vmatprep.subr.bf16.mxu0 %v1367
  %1602 = vmatpush1.bf16.msra.mxu0 %v1364
  %1603 = vmatprep.subr.bf16.mxu0 %v1087
  %1604 = vmatpush1.bf16.msra.mxu0 %v1086
  %1605 = vmatprep.subr.bf16.mxu0 %v1055
  %1606 = vmatpush1.bf16.msra.mxu0 %v1054
  %1607 = vmatprep.subr.bf16.mxu0 %v1023
  %1608 = vmatpush1.bf16.msra.mxu0 %v1022
  %1609 = vmatprep.subr.bf16.mxu0 %v991
  %1610 = vmatpush1.bf16.msra.mxu0 %v990
  %1611 = vmatprep.subr.bf16.mxu0 %v959
  %1612 = vmatpush1.bf16.msra.mxu0 %v958
  %1613 = vmatprep.subr.bf16.mxu0 %v927
  %1614 = vmatpush1.bf16.msra.mxu0 %v926
  %1615 = vmatprep.subr.bf16.mxu0 0
  %1616 = vmatpush2.bf16.msra.mxu0 0
  %1617 = vmatprep.subr.bf16.mxu0 0
  %1618 = vmatpush2.bf16.msra.mxu0 0
  %1619 = vmatprep.subr.bf16.mxu0 0
  %1620 = vmatpush2.bf16.msra.mxu0 0
  %1621 = vmatprep.subr.bf16.mxu0 0
  %1622 = vmatpush2.bf16.msra.mxu0 0
  %1623 = vmatprep.subr.bf16.mxu0 0
  %1624 = vmatpush2.bf16.msra.mxu0 0
  %1625 = vmatprep.subr.bf16.mxu0 0
  %1626 = vmatpush2.bf16.msra.mxu0 0
  %1627 = vmatprep.subr.bf16.mxu0 0
  %1628 = vmatpush2.bf16.msra.mxu0 0
  %1629 = vmatprep.subr.bf16.mxu0 0
  %1630 = vmatpush2.bf16.msra.mxu0 0
  %1631 = vmatprep.mubr.bf16.mxu0 0
  %1632 = vmatmul.mubr.bf16.gmra.mxu0 %v1336
  %v1633 = vpop.f32.mrf.mxu0
  %v1634 = vadd.f32 %v244, %v1633
  %v1635 = vpop.f32.mrf.mxu0
  %v1636 = vadd.f32 %v244, %v1635
  %v1637 = vpop.f32.mrf.mxu0
  %v1638 = vpop.f32.mrf.mxu0
  %1639 = vdwg.mxu0
  %1640 = vmatprep.subr.bf16.mxu0 0
  %1641 = vmatpush1.bf16.msra.mxu0 0
  %1642 = vmatprep.subr.bf16.mxu0 %v1373
  %1643 = vmatpush1.bf16.msra.mxu0 %v1370
  %1644 = vmatprep.subr.bf16.mxu0 %v1089
  %1645 = vmatpush1.bf16.msra.mxu0 %v1088
  %1646 = vmatprep.subr.bf16.mxu0 %v1057
  %1647 = vmatpush1.bf16.msra.mxu0 %v1056
  %1648 = vmatprep.subr.bf16.mxu0 %v1025
  %1649 = vmatpush1.bf16.msra.mxu0 %v1024
  %1650 = vmatprep.subr.bf16.mxu0 %v993
  %1651 = vmatpush1.bf16.msra.mxu0 %v992
  %1652 = vmatprep.subr.bf16.mxu0 %v961
  %1653 = vmatpush1.bf16.msra.mxu0 %v960
  %1654 = vmatprep.subr.bf16.mxu0 %v929
  %1655 = vmatpush1.bf16.msra.mxu0 %v928
  %1656 = vmatprep.subr.bf16.mxu0 0
  %1657 = vmatpush2.bf16.msra.mxu0 0
  %1658 = vmatprep.subr.bf16.mxu0 0
  %1659 = vmatpush2.bf16.msra.mxu0 0
  %1660 = vmatprep.subr.bf16.mxu0 0
  %1661 = vmatpush2.bf16.msra.mxu0 0
  %1662 = vmatprep.subr.bf16.mxu0 0
  %1663 = vmatpush2.bf16.msra.mxu0 0
  %1664 = vmatprep.subr.bf16.mxu0 0
  %1665 = vmatpush2.bf16.msra.mxu0 0
  %1666 = vmatprep.subr.bf16.mxu0 0
  %1667 = vmatpush2.bf16.msra.mxu0 0
  %1668 = vmatprep.subr.bf16.mxu0 0
  %1669 = vmatpush2.bf16.msra.mxu0 0
  %1670 = vmatprep.subr.bf16.mxu0 0
  %1671 = vmatpush2.bf16.msra.mxu0 0
  %1672 = vmatprep.mubr.bf16.mxu0 0
  %1673 = vmatmul.mubr.bf16.gmra.mxu0 %v1336
  %v1674 = vpop.f32.mrf.mxu0
  %v1675 = vadd.f32 %v244, %v1674
  %v1676 = vpop.f32.mrf.mxu0
  %v1677 = vadd.f32 %v244, %v1676
  %v1678 = vpop.f32.mrf.mxu0
  %v1679 = vpop.f32.mrf.mxu0
  %1680 = vdwg.mxu0
  %1681 = vmatprep.subr.bf16.mxu0 0
  %1682 = vmatpush1.bf16.msra.mxu0 0
  %1683 = vmatprep.subr.bf16.mxu0 %v1379
  %1684 = vmatpush1.bf16.msra.mxu0 %v1376
  %1685 = vmatprep.subr.bf16.mxu0 %v1091
  %1686 = vmatpush1.bf16.msra.mxu0 %v1090
  %1687 = vmatprep.subr.bf16.mxu0 %v1059
  %1688 = vmatpush1.bf16.msra.mxu0 %v1058
  %1689 = vmatprep.subr.bf16.mxu0 %v1027
  %1690 = vmatpush1.bf16.msra.mxu0 %v1026
  %1691 = vmatprep.subr.bf16.mxu0 %v995
  %1692 = vmatpush1.bf16.msra.mxu0 %v994
  %1693 = vmatprep.subr.bf16.mxu0 %v963
  %1694 = vmatpush1.bf16.msra.mxu0 %v962
  %1695 = vmatprep.subr.bf16.mxu0 %v931
  %1696 = vmatpush1.bf16.msra.mxu0 %v930
  %1697 = vmatprep.subr.bf16.mxu0 0
  %1698 = vmatpush2.bf16.msra.mxu0 0
  %1699 = vmatprep.subr.bf16.mxu0 0
  %1700 = vmatpush2.bf16.msra.mxu0 0
  %1701 = vmatprep.subr.bf16.mxu0 0
  %1702 = vmatpush2.bf16.msra.mxu0 0
  %1703 = vmatprep.subr.bf16.mxu0 0
  %1704 = vmatpush2.bf16.msra.mxu0 0
  %1705 = vmatprep.subr.bf16.mxu0 0
  %1706 = vmatpush2.bf16.msra.mxu0 0
  %1707 = vmatprep.subr.bf16.mxu0 0
  %1708 = vmatpush2.bf16.msra.mxu0 0
  %1709 = vmatprep.subr.bf16.mxu0 0
  %1710 = vmatpush2.bf16.msra.mxu0 0
  %1711 = vmatprep.subr.bf16.mxu0 0
  %1712 = vmatpush2.bf16.msra.mxu0 0
  %1713 = vmatprep.mubr.bf16.mxu0 0
  %1714 = vmatmul.mubr.bf16.gmra.mxu0 %v1336
  %v1715 = vpop.f32.mrf.mxu0
  %v1716 = vadd.f32 %v244, %v1715
  %v1717 = vpop.f32.mrf.mxu0
  %v1718 = vadd.f32 %v244, %v1717
  %v1719 = vpop.f32.mrf.mxu0
  %v1720 = vpop.f32.mrf.mxu0
  %1721 = vdwg.mxu0
  %1722 = vmatprep.subr.bf16.mxu0 0
  %1723 = vmatpush1.bf16.msra.mxu0 0
  %1724 = vmatprep.subr.bf16.mxu0 %v1385
  %1725 = vmatpush1.bf16.msra.mxu0 %v1382
  %1726 = vmatprep.subr.bf16.mxu0 %v1093
  %1727 = vmatpush1.bf16.msra.mxu0 %v1092
  %1728 = vmatprep.subr.bf16.mxu0 %v1061
  %1729 = vmatpush1.bf16.msra.mxu0 %v1060
  %1730 = vmatprep.subr.bf16.mxu0 %v1029
  %1731 = vmatpush1.bf16.msra.mxu0 %v1028
  %1732 = vmatprep.subr.bf16.mxu0 %v997
  %1733 = vmatpush1.bf16.msra.mxu0 %v996
  %1734 = vmatprep.subr.bf16.mxu0 %v965
  %1735 = vmatpush1.bf16.msra.mxu0 %v964
  %1736 = vmatprep.subr.bf16.mxu0 %v933
  %1737 = vmatpush1.bf16.msra.mxu0 %v932
  %1738 = vmatprep.subr.bf16.mxu0 0
  %1739 = vmatpush2.bf16.msra.mxu0 0
  %1740 = vmatprep.subr.bf16.mxu0 0
  %1741 = vmatpush2.bf16.msra.mxu0 0
  %1742 = vmatprep.subr.bf16.mxu0 0
  %1743 = vmatpush2.bf16.msra.mxu0 0
  %1744 = vmatprep.subr.bf16.mxu0 0
  %1745 = vmatpush2.bf16.msra.mxu0 0
  %1746 = vmatprep.subr.bf16.mxu0 0
  %1747 = vmatpush2.bf16.msra.mxu0 0
  %1748 = vmatprep.subr.bf16.mxu0 0
  %1749 = vmatpush2.bf16.msra.mxu0 0
  %1750 = vmatprep.subr.bf16.mxu0 0
  %1751 = vmatpush2.bf16.msra.mxu0 0
  %1752 = vmatprep.subr.bf16.mxu0 0
  %1753 = vmatpush2.bf16.msra.mxu0 0
  %1754 = vmatprep.mubr.bf16.mxu0 0
  %1755 = vmatmul.mubr.bf16.gmra.mxu0 %v1336
  %v1756 = vpop.f32.mrf.mxu0
  %v1757 = vadd.f32 %v244, %v1756
  %v1758 = vpop.f32.mrf.mxu0
  %v1759 = vadd.f32 %v244, %v1758
  %v1760 = vpop.f32.mrf.mxu0
  %v1761 = vpop.f32.mrf.mxu0
  %1762 = vdwg.mxu0
  %1763 = vmatprep.subr.bf16.mxu0 0
  %1764 = vmatpush1.bf16.msra.mxu0 0
  %1765 = vmatprep.subr.bf16.mxu0 %v1391
  %1766 = vmatpush1.bf16.msra.mxu0 %v1388
  %1767 = vmatprep.subr.bf16.mxu0 %v1095
  %1768 = vmatpush1.bf16.msra.mxu0 %v1094
  %1769 = vmatprep.subr.bf16.mxu0 %v1063
  %1770 = vmatpush1.bf16.msra.mxu0 %v1062
  %1771 = vmatprep.subr.bf16.mxu0 %v1031
  %1772 = vmatpush1.bf16.msra.mxu0 %v1030
  %1773 = vmatprep.subr.bf16.mxu0 %v999
  %1774 = vmatpush1.bf16.msra.mxu0 %v998
  %1775 = vmatprep.subr.bf16.mxu0 %v967
  %1776 = vmatpush1.bf16.msra.mxu0 %v966
  %1777 = vmatprep.subr.bf16.mxu0 %v935
  %1778 = vmatpush1.bf16.msra.mxu0 %v934
  %1779 = vmatprep.subr.bf16.mxu0 0
  %1780 = vmatpush2.bf16.msra.mxu0 0
  %1781 = vmatprep.subr.bf16.mxu0 0
  %1782 = vmatpush2.bf16.msra.mxu0 0
  %1783 = vmatprep.subr.bf16.mxu0 0
  %1784 = vmatpush2.bf16.msra.mxu0 0
  %1785 = vmatprep.subr.bf16.mxu0 0
  %1786 = vmatpush2.bf16.msra.mxu0 0
  %1787 = vmatprep.subr.bf16.mxu0 0
  %1788 = vmatpush2.bf16.msra.mxu0 0
  %1789 = vmatprep.subr.bf16.mxu0 0
  %1790 = vmatpush2.bf16.msra.mxu0 0
  %1791 = vmatprep.subr.bf16.mxu0 0
  %1792 = vmatpush2.bf16.msra.mxu0 0
  %1793 = vmatprep.subr.bf16.mxu0 0
  %1794 = vmatpush2.bf16.msra.mxu0 0
  %1795 = vmatprep.mubr.bf16.mxu0 0
  %1796 = vmatmul.mubr.bf16.gmra.mxu0 %v1336
  %v1797 = vpop.f32.mrf.mxu0
  %v1798 = vadd.f32 %v244, %v1797
  %v1799 = vpop.f32.mrf.mxu0
  %v1800 = vadd.f32 %v244, %v1799
  %v1801 = vpop.f32.mrf.mxu0
  %v1802 = vpop.f32.mrf.mxu0
  %1803 = vdwg.mxu0
  %1804 = vmatprep.subr.bf16.mxu0 0
  %1805 = vmatpush1.bf16.msra.mxu0 0
  %1806 = vmatprep.subr.bf16.mxu0 %v1397
  %1807 = vmatpush1.bf16.msra.mxu0 %v1394
  %1808 = vmatprep.subr.bf16.mxu0 %v1097
  %1809 = vmatpush1.bf16.msra.mxu0 %v1096
  %1810 = vmatprep.subr.bf16.mxu0 %v1065
  %1811 = vmatpush1.bf16.msra.mxu0 %v1064
  %1812 = vmatprep.subr.bf16.mxu0 %v1033
  %1813 = vmatpush1.bf16.msra.mxu0 %v1032
  %1814 = vmatprep.subr.bf16.mxu0 %v1001
  %1815 = vmatpush1.bf16.msra.mxu0 %v1000
  %1816 = vmatprep.subr.bf16.mxu0 %v969
  %1817 = vmatpush1.bf16.msra.mxu0 %v968
  %1818 = vmatprep.subr.bf16.mxu0 %v937
  %1819 = vmatpush1.bf16.msra.mxu0 %v936
  %1820 = vmatprep.subr.bf16.mxu0 0
  %1821 = vmatpush2.bf16.msra.mxu0 0
  %1822 = vmatprep.subr.bf16.mxu0 0
  %1823 = vmatpush2.bf16.msra.mxu0 0
  %1824 = vmatprep.subr.bf16.mxu0 0
  %1825 = vmatpush2.bf16.msra.mxu0 0
  %1826 = vmatprep.subr.bf16.mxu0 0
  %1827 = vmatpush2.bf16.msra.mxu0 0
  %1828 = vmatprep.subr.bf16.mxu0 0
  %1829 = vmatpush2.bf16.msra.mxu0 0
  %1830 = vmatprep.subr.bf16.mxu0 0
  %1831 = vmatpush2.bf16.msra.mxu0 0
  %1832 = vmatprep.subr.bf16.mxu0 0
  %1833 = vmatpush2.bf16.msra.mxu0 0
  %1834 = vmatprep.subr.bf16.mxu0 0
  %1835 = vmatpush2.bf16.msra.mxu0 0
  %1836 = vmatprep.mubr.bf16.mxu0 0
  %1837 = vmatmul.mubr.bf16.gmra.mxu0 %v1336
  %v1838 = vpop.f32.mrf.mxu0
  %v1839 = vadd.f32 %v244, %v1838
  %v1840 = vpop.f32.mrf.mxu0
  %v1841 = vadd.f32 %v244, %v1840
  %v1842 = vpop.f32.mrf.mxu0
  %v1843 = vpop.f32.mrf.mxu0
  %1844 = vdwg.mxu0
  %1845 = vmatprep.subr.bf16.mxu0 0
  %1846 = vmatpush1.bf16.msra.mxu0 0
  %1847 = vmatprep.subr.bf16.mxu0 %v1403
  %1848 = vmatpush1.bf16.msra.mxu0 %v1400
  %1849 = vmatprep.subr.bf16.mxu0 %v1099
  %1850 = vmatpush1.bf16.msra.mxu0 %v1098
  %1851 = vmatprep.subr.bf16.mxu0 %v1067
  %1852 = vmatpush1.bf16.msra.mxu0 %v1066
  %1853 = vmatprep.subr.bf16.mxu0 %v1035
  %1854 = vmatpush1.bf16.msra.mxu0 %v1034
  %1855 = vmatprep.subr.bf16.mxu0 %v1003
  %1856 = vmatpush1.bf16.msra.mxu0 %v1002
  %1857 = vmatprep.subr.bf16.mxu0 %v971
  %1858 = vmatpush1.bf16.msra.mxu0 %v970
  %1859 = vmatprep.subr.bf16.mxu0 %v939
  %1860 = vmatpush1.bf16.msra.mxu0 %v938
  %1861 = vmatprep.subr.bf16.mxu0 0
  %1862 = vmatpush2.bf16.msra.mxu0 0
  %1863 = vmatprep.subr.bf16.mxu0 0
  %1864 = vmatpush2.bf16.msra.mxu0 0
  %1865 = vmatprep.subr.bf16.mxu0 0
  %1866 = vmatpush2.bf16.msra.mxu0 0
  %1867 = vmatprep.subr.bf16.mxu0 0
  %1868 = vmatpush2.bf16.msra.mxu0 0
  %1869 = vmatprep.subr.bf16.mxu0 0
  %1870 = vmatpush2.bf16.msra.mxu0 0
  %1871 = vmatprep.subr.bf16.mxu0 0
  %1872 = vmatpush2.bf16.msra.mxu0 0
  %1873 = vmatprep.subr.bf16.mxu0 0
  %1874 = vmatpush2.bf16.msra.mxu0 0
  %1875 = vmatprep.subr.bf16.mxu0 0
  %1876 = vmatpush2.bf16.msra.mxu0 0
  %1877 = vmatprep.mubr.bf16.mxu0 0
  %1878 = vmatmul.mubr.bf16.gmra.mxu0 %v1336
  %v1879 = vpop.f32.mrf.mxu0
  %v1880 = vadd.f32 %v244, %v1879
  %v1881 = vpop.f32.mrf.mxu0
  %v1882 = vadd.f32 %v244, %v1881
  %v1883 = vpop.f32.mrf.mxu0
  %v1884 = vpop.f32.mrf.mxu0
  %1885 = vdwg.mxu0
  %1886 = vmatprep.subr.bf16.mxu0 0
  %1887 = vmatpush1.bf16.msra.mxu0 0
  %1888 = vmatprep.subr.bf16.mxu0 %v1409
  %1889 = vmatpush1.bf16.msra.mxu0 %v1406
  %1890 = vmatprep.subr.bf16.mxu0 %v1101
  %1891 = vmatpush1.bf16.msra.mxu0 %v1100
  %1892 = vmatprep.subr.bf16.mxu0 %v1069
  %1893 = vmatpush1.bf16.msra.mxu0 %v1068
  %1894 = vmatprep.subr.bf16.mxu0 %v1037
  %1895 = vmatpush1.bf16.msra.mxu0 %v1036
  %1896 = vmatprep.subr.bf16.mxu0 %v1005
  %1897 = vmatpush1.bf16.msra.mxu0 %v1004
  %1898 = vmatprep.subr.bf16.mxu0 %v973
  %1899 = vmatpush1.bf16.msra.mxu0 %v972
  %1900 = vmatprep.subr.bf16.mxu0 %v941
  %1901 = vmatpush1.bf16.msra.mxu0 %v940
  %1902 = vmatprep.subr.bf16.mxu0 0
  %1903 = vmatpush2.bf16.msra.mxu0 0
  %1904 = vmatprep.subr.bf16.mxu0 0
  %1905 = vmatpush2.bf16.msra.mxu0 0
  %1906 = vmatprep.subr.bf16.mxu0 0
  %1907 = vmatpush2.bf16.msra.mxu0 0
  %1908 = vmatprep.subr.bf16.mxu0 0
  %1909 = vmatpush2.bf16.msra.mxu0 0
  %1910 = vmatprep.subr.bf16.mxu0 0
  %1911 = vmatpush2.bf16.msra.mxu0 0
  %1912 = vmatprep.subr.bf16.mxu0 0
  %1913 = vmatpush2.bf16.msra.mxu0 0
  %1914 = vmatprep.subr.bf16.mxu0 0
  %1915 = vmatpush2.bf16.msra.mxu0 0
  %1916 = vmatprep.subr.bf16.mxu0 0
  %1917 = vmatpush2.bf16.msra.mxu0 0
  %1918 = vmatprep.mubr.bf16.mxu0 0
  %1919 = vmatmul.mubr.bf16.gmra.mxu0 %v1336
  %v1920 = vpop.f32.mrf.mxu0
  %v1921 = vadd.f32 %v244, %v1920
  %v1922 = vpop.f32.mrf.mxu0
  %v1923 = vadd.f32 %v244, %v1922
  %v1924 = vpop.f32.mrf.mxu0
  %v1925 = vpop.f32.mrf.mxu0
  %1926 = vdwg.mxu0
  %1927 = vmatprep.subr.bf16.mxu0 0
  %1928 = vmatpush1.bf16.msra.mxu0 0
  %1929 = vmatprep.subr.bf16.mxu0 %v1415
  %1930 = vmatpush1.bf16.msra.mxu0 %v1412
  %1931 = vmatprep.subr.bf16.mxu0 %v1103
  %1932 = vmatpush1.bf16.msra.mxu0 %v1102
  %1933 = vmatprep.subr.bf16.mxu0 %v1071
  %1934 = vmatpush1.bf16.msra.mxu0 %v1070
  %1935 = vmatprep.subr.bf16.mxu0 %v1039
  %1936 = vmatpush1.bf16.msra.mxu0 %v1038
  %1937 = vmatprep.subr.bf16.mxu0 %v1007
  %1938 = vmatpush1.bf16.msra.mxu0 %v1006
  %1939 = vmatprep.subr.bf16.mxu0 %v975
  %1940 = vmatpush1.bf16.msra.mxu0 %v974
  %1941 = vmatprep.subr.bf16.mxu0 %v943
  %1942 = vmatpush1.bf16.msra.mxu0 %v942
  %1943 = vmatprep.subr.bf16.mxu0 0
  %1944 = vmatpush2.bf16.msra.mxu0 0
  %1945 = vmatprep.subr.bf16.mxu0 0
  %1946 = vmatpush2.bf16.msra.mxu0 0
  %1947 = vmatprep.subr.bf16.mxu0 0
  %1948 = vmatpush2.bf16.msra.mxu0 0
  %1949 = vmatprep.subr.bf16.mxu0 0
  %1950 = vmatpush2.bf16.msra.mxu0 0
  %1951 = vmatprep.subr.bf16.mxu0 0
  %1952 = vmatpush2.bf16.msra.mxu0 0
  %1953 = vmatprep.subr.bf16.mxu0 0
  %1954 = vmatpush2.bf16.msra.mxu0 0
  %1955 = vmatprep.subr.bf16.mxu0 0
  %1956 = vmatpush2.bf16.msra.mxu0 0
  %1957 = vmatprep.subr.bf16.mxu0 0
  %1958 = vmatpush2.bf16.msra.mxu0 0
  %1959 = vmatprep.mubr.bf16.mxu0 0
  %1960 = vmatmul.mubr.bf16.gmra.mxu0 %v1336
  %v1961 = vpop.f32.mrf.mxu0
  %v1962 = vadd.f32 %v244, %v1961
  %v1963 = vpop.f32.mrf.mxu0
  %v1964 = vadd.f32 %v244, %v1963
  %v1965 = vpop.f32.mrf.mxu0
  %v1966 = vpop.f32.mrf.mxu0
  %1967 = vdwg.mxu0
  %1968 = vmatprep.subr.bf16.mxu0 0
  %1969 = vmatpush1.bf16.msra.mxu0 0
  %1970 = vmatprep.subr.bf16.mxu0 %v1421
  %1971 = vmatpush1.bf16.msra.mxu0 %v1418
  %1972 = vmatprep.subr.bf16.mxu0 %v1105
  %1973 = vmatpush1.bf16.msra.mxu0 %v1104
  %1974 = vmatprep.subr.bf16.mxu0 %v1073
  %1975 = vmatpush1.bf16.msra.mxu0 %v1072
  %1976 = vmatprep.subr.bf16.mxu0 %v1041
  %1977 = vmatpush1.bf16.msra.mxu0 %v1040
  %1978 = vmatprep.subr.bf16.mxu0 %v1009
  %1979 = vmatpush1.bf16.msra.mxu0 %v1008
  %1980 = vmatprep.subr.bf16.mxu0 %v977
  %1981 = vmatpush1.bf16.msra.mxu0 %v976
  %1982 = vmatprep.subr.bf16.mxu0 %v945
  %1983 = vmatpush1.bf16.msra.mxu0 %v944
  %1984 = vmatprep.subr.bf16.mxu0 0
  %1985 = vmatpush2.bf16.msra.mxu0 0
  %1986 = vmatprep.subr.bf16.mxu0 0
  %1987 = vmatpush2.bf16.msra.mxu0 0
  %1988 = vmatprep.subr.bf16.mxu0 0
  %1989 = vmatpush2.bf16.msra.mxu0 0
  %1990 = vmatprep.subr.bf16.mxu0 0
  %1991 = vmatpush2.bf16.msra.mxu0 0
  %1992 = vmatprep.subr.bf16.mxu0 0
  %1993 = vmatpush2.bf16.msra.mxu0 0
  %1994 = vmatprep.subr.bf16.mxu0 0
  %1995 = vmatpush2.bf16.msra.mxu0 0
  %1996 = vmatprep.subr.bf16.mxu0 0
  %1997 = vmatpush2.bf16.msra.mxu0 0
  %1998 = vmatprep.subr.bf16.mxu0 0
  %1999 = vmatpush2.bf16.msra.mxu0 0
  %2000 = vmatprep.mubr.bf16.mxu0 0
  %2001 = vmatmul.mubr.bf16.gmra.mxu0 %v1336
  %v2002 = vpop.f32.mrf.mxu0
  %v2003 = vadd.f32 %v244, %v2002
  %v2004 = vpop.f32.mrf.mxu0
  %v2005 = vadd.f32 %v244, %v2004
  %v2006 = vpop.f32.mrf.mxu0
  %v2007 = vpop.f32.mrf.mxu0
  %2008 = vdwg.mxu0
  %2009 = vmatprep.subr.bf16.mxu0 0
  %2010 = vmatpush1.bf16.msra.mxu0 0
  %2011 = vmatprep.subr.bf16.mxu0 %v1427
  %2012 = vmatpush1.bf16.msra.mxu0 %v1424
  %2013 = vmatprep.subr.bf16.mxu0 %v1107
  %2014 = vmatpush1.bf16.msra.mxu0 %v1106
  %2015 = vmatprep.subr.bf16.mxu0 %v1075
  %2016 = vmatpush1.bf16.msra.mxu0 %v1074
  %2017 = vmatprep.subr.bf16.mxu0 %v1043
  %2018 = vmatpush1.bf16.msra.mxu0 %v1042
  %2019 = vmatprep.subr.bf16.mxu0 %v1011
  %2020 = vmatpush1.bf16.msra.mxu0 %v1010
  %2021 = vmatprep.subr.bf16.mxu0 %v979
  %2022 = vmatpush1.bf16.msra.mxu0 %v978
  %2023 = vmatprep.subr.bf16.mxu0 %v947
  %2024 = vmatpush1.bf16.msra.mxu0 %v946
  %2025 = vmatprep.subr.bf16.mxu0 0
  %2026 = vmatpush2.bf16.msra.mxu0 0
  %2027 = vmatprep.subr.bf16.mxu0 0
  %2028 = vmatpush2.bf16.msra.mxu0 0
  %2029 = vmatprep.subr.bf16.mxu0 0
  %2030 = vmatpush2.bf16.msra.mxu0 0
  %2031 = vmatprep.subr.bf16.mxu0 0
  %2032 = vmatpush2.bf16.msra.mxu0 0
  %2033 = vmatprep.subr.bf16.mxu0 0
  %2034 = vmatpush2.bf16.msra.mxu0 0
  %2035 = vmatprep.subr.bf16.mxu0 0
  %2036 = vmatpush2.bf16.msra.mxu0 0
  %2037 = vmatprep.subr.bf16.mxu0 0
  %2038 = vmatpush2.bf16.msra.mxu0 0
  %2039 = vmatprep.subr.bf16.mxu0 0
  %2040 = vmatpush2.bf16.msra.mxu0 0
  %2041 = vmatprep.mubr.bf16.mxu0 0
  %2042 = vmatmul.mubr.bf16.gmra.mxu0 %v1336
  %v2043 = vpop.f32.mrf.mxu0
  %v2044 = vadd.f32 %v244, %v2043
  %v2045 = vpop.f32.mrf.mxu0
  %v2046 = vadd.f32 %v244, %v2045
  %v2047 = vpop.f32.mrf.mxu0
  %v2048 = vpop.f32.mrf.mxu0
  %2049 = vdwg.mxu0
  %2050 = vmatprep.subr.bf16.mxu0 0
  %2051 = vmatpush1.bf16.msra.mxu0 0
  %2052 = vmatprep.subr.bf16.mxu0 %v1433
  %2053 = vmatpush1.bf16.msra.mxu0 %v1430
  %2054 = vmatprep.subr.bf16.mxu0 %v1109
  %2055 = vmatpush1.bf16.msra.mxu0 %v1108
  %2056 = vmatprep.subr.bf16.mxu0 %v1077
  %2057 = vmatpush1.bf16.msra.mxu0 %v1076
  %2058 = vmatprep.subr.bf16.mxu0 %v1045
  %2059 = vmatpush1.bf16.msra.mxu0 %v1044
  %2060 = vmatprep.subr.bf16.mxu0 %v1013
  %2061 = vmatpush1.bf16.msra.mxu0 %v1012
  %2062 = vmatprep.subr.bf16.mxu0 %v981
  %2063 = vmatpush1.bf16.msra.mxu0 %v980
  %2064 = vmatprep.subr.bf16.mxu0 %v949
  %2065 = vmatpush1.bf16.msra.mxu0 %v948
  %2066 = vmatprep.subr.bf16.mxu0 0
  %2067 = vmatpush2.bf16.msra.mxu0 0
  %2068 = vmatprep.subr.bf16.mxu0 0
  %2069 = vmatpush2.bf16.msra.mxu0 0
  %2070 = vmatprep.subr.bf16.mxu0 0
  %2071 = vmatpush2.bf16.msra.mxu0 0
  %2072 = vmatprep.subr.bf16.mxu0 0
  %2073 = vmatpush2.bf16.msra.mxu0 0
  %2074 = vmatprep.subr.bf16.mxu0 0
  %2075 = vmatpush2.bf16.msra.mxu0 0
  %2076 = vmatprep.subr.bf16.mxu0 0
  %2077 = vmatpush2.bf16.msra.mxu0 0
  %2078 = vmatprep.subr.bf16.mxu0 0
  %2079 = vmatpush2.bf16.msra.mxu0 0
  %2080 = vmatprep.subr.bf16.mxu0 0
  %2081 = vmatpush2.bf16.msra.mxu0 0
  %2082 = vmatprep.mubr.bf16.mxu0 0
  %2083 = vmatmul.mubr.bf16.gmra.mxu0 %v1336
  %v2084 = vpop.f32.mrf.mxu0
  %v2085 = vadd.f32 %v244, %v2084
  %v2086 = vpop.f32.mrf.mxu0
  %v2087 = vadd.f32 %v244, %v2086
  %v2088 = vpop.f32.mrf.mxu0
  %v2089 = vpop.f32.mrf.mxu0
  %2090 = vdwg.mxu0
  %2091 = vst [vmem:[%s3] sm:$0xff] %v1470
  %2092 = vst [vmem:[%s3 + $0x8] sm:$0xff] %v1472
  %2093 = vst [vmem:[%s3 + $0x10] sm:$0xff] %v1511
  %2094 = vst [vmem:[%s3 + $0x18] sm:$0xff] %v1513
  %2095 = vst [vmem:[%s3 + $0x20] sm:$0xff] %v1552
  %2096 = vst [vmem:[%s3 + $0x28] sm:$0xff] %v1554
  %2097 = vst [vmem:[%s3 + $0x30] sm:$0xff] %v1593
  %2098 = vst [vmem:[%s3 + $0x38] sm:$0xff] %v1595
  %2099 = vst [vmem:[%s3 + $0x40] sm:$0xff] %v1634
  %2100 = vst [vmem:[%s3 + $0x48] sm:$0xff] %v1636
  %2101 = vst [vmem:[%s3 + $0x50] sm:$0xff] %v1675
  %2102 = vst [vmem:[%s3 + $0x58] sm:$0xff] %v1677
  %2103 = vst [vmem:[%s3 + $0x60] sm:$0xff] %v1716
  %2104 = vst [vmem:[%s3 + $0x68] sm:$0xff] %v1718
  %2105 = vst [vmem:[%s3 + $0x70] sm:$0xff] %v1757
  %2106 = vst [vmem:[%s3 + $0x78] sm:$0xff] %v1759
  %2107 = vst [vmem:[%s3 + $0x80] sm:$0xff] %v1798
  %2108 = vst [vmem:[%s3 + $0x88] sm:$0xff] %v1800
  %2109 = vst [vmem:[%s3 + $0x90] sm:$0xff] %v1839
  %2110 = vst [vmem:[%s3 + $0x98] sm:$0xff] %v1841
  %2111 = vst [vmem:[%s3 + $0xa0] sm:$0xff] %v1880
  %2112 = vst [vmem:[%s3 + $0xa8] sm:$0xff] %v1882
  %2113 = vst [vmem:[%s3 + $0xb0] sm:$0xff] %v1921
  %2114 = vst [vmem:[%s3 + $0xb8] sm:$0xff] %v1923
  %2115 = vst [vmem:[%s3 + $0xc0] sm:$0xff] %v1962
  %2116 = vst [vmem:[%s3 + $0xc8] sm:$0xff] %v1964
  %2117 = vst [vmem:[%s3 + $0xd0] sm:$0xff] %v2003
  %2118 = vst [vmem:[%s3 + $0xd8] sm:$0xff] %v2005
  %2119 = vst [vmem:[%s3 + $0xe0] sm:$0xff] %v2044
  %2120 = vst [vmem:[%s3 + $0xe8] sm:$0xff] %v2046
  %2121 = vst [vmem:[%s3 + $0xf0] sm:$0xff] %v2085
  %2122 = vst [vmem:[%s3 + $0xf8] sm:$0xff] %v2087
  // Predicated region
  $region14: #{tsrvfd_forward.32} parent=0 // pred_check
    _
  $region15: #{tsrvfd_forward.32} parent=0 // pred_check_branch
    %2124 = sbr.rel (0) target = $region17
  $region16: #{tsrvfd_forward.32} parent=0 // pred_region
    _
  $region17: #{tsrvfd_forward.32} parent=0 // pred_fallthru
    _
  // Predicated region
  $region18: #{tsrvfd_forward.32} parent=0 // pred_check
    _
  $region19: #{tsrvfd_forward.32} parent=0 // pred_check_branch
    %2126 = sbr.rel (0) target = $region21
  $region20: #{tsrvfd_forward.32} parent=0 // pred_region
    _
  $region21: #{tsrvfd_forward.32} parent=0 // pred_fallthru
    _

// kernel: tsrvfd_forward.43
$region0: #{tsrvfd_forward.43}
  #allocation0 [shape = 'u32[]', space=smem, size = 0x4, offset = 0x4, fixed_abs, tag = 'smem constant byte address 0x4 - core index']
  #allocation1 [shape = 'u32[144,128]{1,0:T(1,128)}', space=vmem, size = 0x12000, scoped, tag = 'internal scratch']
  %s0 = inlined_call_operand.vmem [shape: f32[1,2,3,4096], index: 0, kind: input, shape index: {}]
  %s1 = inlined_call_operand.vmem [shape: f32[1,2,3,4096], index: 1, kind: input, shape index: {}]
  %s2 = inlined_call_operand.vmem [shape: f32[1,3,4096], index: 2, kind: input, shape index: {}]
  %s3 = inlined_call_operand.vmem [shape: f32[1,3,4096], index: 3, kind: input, shape index: {}]
  %s4 = inlined_call_operand.vmem [shape: f32[2,1,3,4096], index: 4, kind: output, shape index: {}]
  %s5 = sld [smem:[#allocation0]]
  $region49: #{tsrvfd_forward.43} parent=0
    _
  %s7 = ssub.s32 1, %s5
  %s8 = scalar_select 0, %s7, %s5
  loop: start=0, step=1, limit=4
  $region2: #{tsrvfd_forward.43} parent=0 // loop_pre_header
    _
  $region3: #{tsrvfd_forward.43} parent=0 // loop_header
    %s10 = sphi 0, %s14
    %p11 = scmp.ge.s32.totalorder %s10, 4
    %s20 = sphi 0, %s22
    %s23 = sphi 0, %s20
    %s24 = sphi 0, %s23
    %s40 = sphi 0, %s24
    %s46 = sphi 0, %s48
    %s49 = sphi 0, %s46
    %s50 = sphi 0, %s49
    %s66 = sphi 0, %s50
    %s70 = sphi 0, %s70
    %s72 = sphi 0, %s70
    %s73 = sphi 0, %s72
    %s87 = sphi 0, %s73
    %s91 = sphi 0, %s91
    %s93 = sphi 0, %s91
    %s94 = sphi 0, %s93
    %s108 = sphi 0, %s94
    %s114 = sphi 0, %s116
    %s117 = sphi 0, %s114
    %s118 = sphi 0, %s117
    %s134 = sphi 0, %s118
  $region4: #{tsrvfd_forward.43} parent=0 // loop_header_branch
    %13 = sbr.rel (%p11) target = $region8
  $region5: #{tsrvfd_forward.43} parent=0 // loop_body
    %s15 = ssub.s32 %s10, 1
    %s16 = ssub.s32 %s10, 2
    %s17 = sadd.s32 %s10, 1
    %s18 = ssub.s32 %s10, %s17
    %p19 = scmp.eq.s32.totalorder %s18, 0
    %s21 = sadd.s32 %s20, 1
    %s22 = scalar_select %p19, %s20, %s21
    %p25 = pneg %p19
    %p26 = scmp.eq.s32.totalorder %s10, 1
    %p27 = por %p25, %p26
    %p28 = scmp.ne.s32.totalorder %s20, %s23
    %p29 = scmp.eq.s32.totalorder %s10, 0
    %p30 = por %p28, %p29
    %p31 = scmp.ne.s32.totalorder %s20, %s23
    %p32 = scmp.eq.s32.totalorder %s15, 1
    %p33 = por %p31, %p32
    %p34 = scmp.ne.s32.totalorder %s23, %s24
    %p35 = scmp.eq.s32.totalorder %s15, 0
    %p36 = por %p34, %p35
    %p37 = scmp.ne.s32.totalorder %s23, %s24
    %p38 = scmp.eq.s32.totalorder %s16, 1
    %p39 = por %p37, %p38
    %p41 = scmp.ne.s32.totalorder %s24, %s40
    %p42 = scmp.eq.s32.totalorder %s16, 0
    %p43 = por %p41, %p42
    %s44 = ssub.s32 %s10, %s17
    %p45 = scmp.eq.s32.totalorder %s44, 0
    %s47 = sadd.s32 %s46, 1
    %s48 = scalar_select %p45, %s46, %s47
    %p51 = pneg %p45
    %p52 = scmp.eq.s32.totalorder %s10, 1
    %p53 = por %p51, %p52
    %p54 = scmp.ne.s32.totalorder %s46, %s49
    %p55 = scmp.eq.s32.totalorder %s10, 0
    %p56 = por %p54, %p55
    %p57 = scmp.ne.s32.totalorder %s46, %s49
    %p58 = scmp.eq.s32.totalorder %s15, 1
    %p59 = por %p57, %p58
    %p60 = scmp.ne.s32.totalorder %s49, %s50
    %p61 = scmp.eq.s32.totalorder %s15, 0
    %p62 = por %p60, %p61
    %p63 = scmp.ne.s32.totalorder %s49, %s50
    %p64 = scmp.eq.s32.totalorder %s16, 1
    %p65 = por %p63, %p64
    %p67 = scmp.ne.s32.totalorder %s50, %s66
    %p68 = scmp.eq.s32.totalorder %s16, 0
    %p69 = por %p67, %p68
    %s71 = sadd.s32 %s70, 1
    %p74 = scmp.eq.s32.totalorder %s10, 1
    %p75 = scmp.ne.s32.totalorder %s70, %s72
    %p76 = scmp.eq.s32.totalorder %s10, 0
    %p77 = por %p75, %p76
    %p78 = scmp.ne.s32.totalorder %s70, %s72
    %p79 = scmp.eq.s32.totalorder %s15, 1
    %p80 = por %p78, %p79
    %p81 = scmp.ne.s32.totalorder %s72, %s73
    %p82 = scmp.eq.s32.totalorder %s15, 0
    %p83 = por %p81, %p82
    %p84 = scmp.ne.s32.totalorder %s72, %s73
    %p85 = scmp.eq.s32.totalorder %s16, 1
    %p86 = por %p84, %p85
    %p88 = scmp.ne.s32.totalorder %s73, %s87
    %p89 = scmp.eq.s32.totalorder %s16, 0
    %p90 = por %p88, %p89
    %s92 = sadd.s32 %s91, 1
    %p95 = scmp.eq.s32.totalorder %s10, 1
    %p96 = scmp.ne.s32.totalorder %s91, %s93
    %p97 = scmp.eq.s32.totalorder %s10, 0
    %p98 = por %p96, %p97
    %p99 = scmp.ne.s32.totalorder %s91, %s93
    %p100 = scmp.eq.s32.totalorder %s15, 1
    %p101 = por %p99, %p100
    %p102 = scmp.ne.s32.totalorder %s93, %s94
    %p103 = scmp.eq.s32.totalorder %s15, 0
    %p104 = por %p102, %p103
    %p105 = scmp.ne.s32.totalorder %s93, %s94
    %p106 = scmp.eq.s32.totalorder %s16, 1
    %p107 = por %p105, %p106
    %p109 = scmp.ne.s32.totalorder %s94, %s108
    %p110 = scmp.eq.s32.totalorder %s16, 0
    %p111 = por %p109, %p110
    %s112 = ssub.s32 %s10, %s17
    %p113 = scmp.eq.s32.totalorder %s112, 0
    %s115 = sadd.s32 %s114, 1
    %s116 = scalar_select %p113, %s114, %s115
    %p119 = pneg %p113
    %p120 = scmp.eq.s32.totalorder %s10, 1
    %p121 = por %p119, %p120
    %p122 = scmp.ne.s32.totalorder %s114, %s117
    %p123 = scmp.eq.s32.totalorder %s10, 0
    %p124 = por %p122, %p123
    %p125 = scmp.ne.s32.totalorder %s114, %s117
    %p126 = scmp.eq.s32.totalorder %s15, 1
    %p127 = por %p125, %p126
    %p128 = scmp.ne.s32.totalorder %s117, %s118
    %p129 = scmp.eq.s32.totalorder %s15, 0
    %p130 = por %p128, %p129
    %p131 = scmp.ne.s32.totalorder %s117, %s118
    %p132 = scmp.eq.s32.totalorder %s16, 1
    %p133 = por %p131, %p132
    %p135 = scmp.ne.s32.totalorder %s118, %s134
    %p136 = scmp.eq.s32.totalorder %s16, 0
    %p137 = por %p135, %p136
    %p138 = scmp.le.s32.totalorder 1, %s10
    %p139 = scmp.lt.s32.totalorder %s10, 3
    %p140 = pnand %p138, %p139
    %p141 = pneg %p140
    // Predicated region
    $region9: #{tsrvfd_forward.43} parent=5 // pred_check
      _
    $region10: #{tsrvfd_forward.43} parent=5 // pred_check_branch
      %143 = sbr.rel (%p140) target = $region12
    $region11: #{tsrvfd_forward.43} parent=5 // pred_region
      %s144 = ssub.s32 %s10, 1
      // Predicated region
      $region13: #{tsrvfd_forward.43} parent=11 // pred_check
        %p145 = pneg %p83
      $region14: #{tsrvfd_forward.43} parent=11 // pred_check_branch
        %147 = sbr.rel (%p145) target = $region16
      $region15: #{tsrvfd_forward.43} parent=11 // pred_region
        _
      $region16: #{tsrvfd_forward.43} parent=11 // pred_fallthru
        _
      // Predicated region
      $region17: #{tsrvfd_forward.43} parent=11 // pred_check
        %p148 = pneg %p104
      $region18: #{tsrvfd_forward.43} parent=11 // pred_check_branch
        %150 = sbr.rel (%p148) target = $region20
      $region19: #{tsrvfd_forward.43} parent=11 // pred_region
        _
      $region20: #{tsrvfd_forward.43} parent=11 // pred_fallthru
        _
    $region12: #{tsrvfd_forward.43} parent=5 // pred_fallthru
      _
    %p151 = scmp.lt.s32.totalorder %s10, 2
    // Predicated region
    $region21: #{tsrvfd_forward.43} parent=5 // pred_check
      %p152 = pneg %p151
    $region22: #{tsrvfd_forward.43} parent=5 // pred_check_branch
      %154 = sbr.rel (%p152) target = $region24
    $region23: #{tsrvfd_forward.43} parent=5 // pred_region
      // Predicated region
      $region25: #{tsrvfd_forward.43} parent=23 // pred_check
        %p155 = pneg %p30
      $region26: #{tsrvfd_forward.43} parent=23 // pred_check_branch
        %157 = sbr.rel (%p155) target = $region28
      $region27: #{tsrvfd_forward.43} parent=23 // pred_region
        %p158 = scmp.lt.s32.totalorder %s10, 1
        %s159 = scalar_select %p158, %s10, 1
        %s160 = smul.addr %s159, 32
        %s161 = smul.addr %s160, 4
        %s162 = scalar_lea.vmem %s0, %s161
      $region28: #{tsrvfd_forward.43} parent=23 // pred_fallthru
        _
      // Predicated region
      $region29: #{tsrvfd_forward.43} parent=23 // pred_check
        %p163 = pneg %p56
      $region30: #{tsrvfd_forward.43} parent=23 // pred_check_branch
        %165 = sbr.rel (%p163) target = $region32
      $region31: #{tsrvfd_forward.43} parent=23 // pred_region
        %p166 = scmp.lt.s32.totalorder %s10, 1
        %s167 = scalar_select %p166, %s10, 1
        %s168 = smul.addr %s167, 32
        %s169 = smul.addr %s168, 4
        %s170 = scalar_lea.vmem %s1, %s169
      $region32: #{tsrvfd_forward.43} parent=23 // pred_fallthru
        _
    $region24: #{tsrvfd_forward.43} parent=5 // pred_fallthru
      _
    %p171 = scmp.le.s32.totalorder 1, %s10
    %p172 = scmp.lt.s32.totalorder %s10, 3
    %p173 = pnand %p171, %p172
    %p174 = pneg %p173
    // Predicated region
    $region33: #{tsrvfd_forward.43} parent=5 // pred_check
      _
    $region34: #{tsrvfd_forward.43} parent=5 // pred_check_branch
      %176 = sbr.rel (%p173) target = $region36
    $region35: #{tsrvfd_forward.43} parent=5 // pred_region
      %s177 = ssub.s32 %s10, 1
      %p178 = scmp.lt.s32.totalorder %s15, 1
      %s179 = scalar_select %p178, %s15, 1
      %s180 = smul.addr %s179, 32
      %s181 = smul.addr %s180, 4
      %s182 = scalar_lea.vmem %s0, %s181
      %p183 = pneg %p36
      %p184 = pneg %p33
      %p185 = scmp.lt.s32.totalorder %s15, 1
      %s186 = scalar_select %p185, %s15, 1
      %s187 = smul.addr %s186, 32
      %s188 = smul.addr %s187, 4
      %s189 = scalar_lea.vmem %s1, %s188
      %p190 = pneg %p62
      %p191 = pneg %p59
      %p192 = pneg %p83
      %p193 = pneg %p80
      %p194 = pneg %p104
      %p195 = pneg %p101
      %p196 = pneg %p130
      %p197 = pneg %p127
      %p198 = scmp.lt.s32.totalorder %s15, 1
      %s199 = scalar_select %p198, %s15, 1
      %s200 = smul.addr %s199, 32
      %s201 = smul.addr %s200, 4
      %s202 = scalar_lea.vmem %s4, %s201
      %p203 = scmp.lt.s32.totalorder %s15, 1
      %s204 = scalar_select %p203, %s15, 1
      %s205 = smul.addr %s204, 32
      %s206 = smul.addr %s205, 4
      %s207 = scalar_lea.vmem %s0, %s206
      %p208 = scmp.lt.s32.totalorder %s15, 1
      %s209 = scalar_select %p208, %s15, 1
      %s210 = smul.addr %s209, 32
      %s211 = smul.addr %s210, 4
      %s212 = scalar_lea.vmem %s1, %s211
      %p213 = scmp.lt.s32.totalorder %s15, 1
      %s214 = scalar_select %p213, %s15, 1
      %s215 = smul.addr %s214, 32
      %s216 = smul.addr %s215, 4
      %s217 = scalar_lea.vmem %s4, %s216
      %s218 = scvt.s32.f32 %s15
      %s219 = sadd.f32 %s218, 1.0
      %v220 = vrcp.pop 3.0
      %s221 = vtos %v220
      %s222 = smul.f32 %s219, %s221
      %v223 = vld [vmem:[%s3] sm:$0x77]
      %v224 = vld [vmem:[%s3 + $0x8] sm:$0x77]
      %v225 = vld [vmem:[%s3 + $0x10] sm:$0x77]
      %v226 = vld [vmem:[%s3 + $0x18] sm:$0x77]
      %v227 = vld [vmem:[%s3 + $0x20] sm:$0x77]
      %v228 = vld [vmem:[%s3 + $0x28] sm:$0x77]
      %v229 = vld [vmem:[%s3 + $0x30] sm:$0x77]
      %v230 = vld [vmem:[%s3 + $0x38] sm:$0x77]
      %v231 = vld [vmem:[%s3 + $0x40] sm:$0x77]
      %v232 = vld [vmem:[%s3 + $0x48] sm:$0x77]
      %v233 = vld [vmem:[%s3 + $0x50] sm:$0x77]
      %v234 = vld [vmem:[%s3 + $0x58] sm:$0x77]
      %v235 = vld [vmem:[%s3 + $0x60] sm:$0x77]
      %v236 = vld [vmem:[%s3 + $0x68] sm:$0x77]
      %v237 = vld [vmem:[%s3 + $0x70] sm:$0x77]
      %v238 = vld [vmem:[%s3 + $0x78] sm:$0x77]
      %v239 = vstv %s222
      %v240 = vmul.f32 %v239, %v223
      %v241 = vmul.f32 %v239, %v224
      %v242 = vmul.f32 %v239, %v225
      %v243 = vmul.f32 %v239, %v226
      %v244 = vmul.f32 %v239, %v227
      %v245 = vmul.f32 %v239, %v228
      %v246 = vmul.f32 %v239, %v229
      %v247 = vmul.f32 %v239, %v230
      %v248 = vmul.f32 %v239, %v231
      %v249 = vmul.f32 %v239, %v232
      %v250 = vmul.f32 %v239, %v233
      %v251 = vmul.f32 %v239, %v234
      %v252 = vmul.f32 %v239, %v235
      %v253 = vmul.f32 %v239, %v236
      %v254 = vmul.f32 %v239, %v237
      %v255 = vmul.f32 %v239, %v238
      %s256 = ssub.f32 1.0, %s222
      %v257 = vld [vmem:[%s2] sm:$0x77]
      %v258 = vld [vmem:[%s2 + $0x8] sm:$0x77]
      %v259 = vld [vmem:[%s2 + $0x10] sm:$0x77]
      %v260 = vld [vmem:[%s2 + $0x18] sm:$0x77]
      %v261 = vld [vmem:[%s2 + $0x20] sm:$0x77]
      %v262 = vld [vmem:[%s2 + $0x28] sm:$0x77]
      %v263 = vld [vmem:[%s2 + $0x30] sm:$0x77]
      %v264 = vld [vmem:[%s2 + $0x38] sm:$0x77]
      %v265 = vld [vmem:[%s2 + $0x40] sm:$0x77]
      %v266 = vld [vmem:[%s2 + $0x48] sm:$0x77]
      %v267 = vld [vmem:[%s2 + $0x50] sm:$0x77]
      %v268 = vld [vmem:[%s2 + $0x58] sm:$0x77]
      %v269 = vld [vmem:[%s2 + $0x60] sm:$0x77]
      %v270 = vld [vmem:[%s2 + $0x68] sm:$0x77]
      %v271 = vld [vmem:[%s2 + $0x70] sm:$0x77]
      %v272 = vld [vmem:[%s2 + $0x78] sm:$0x77]
      %v273 = vstv %s256
      %v274 = vmul.f32 %v273, %v257
      %v275 = vmul.f32 %v273, %v258
      %v276 = vmul.f32 %v273, %v259
      %v277 = vmul.f32 %v273, %v260
      %v278 = vmul.f32 %v273, %v261
      %v279 = vmul.f32 %v273, %v262
      %v280 = vmul.f32 %v273, %v263
      %v281 = vmul.f32 %v273, %v264
      %v282 = vmul.f32 %v273, %v265
      %v283 = vmul.f32 %v273, %v266
      %v284 = vmul.f32 %v273, %v267
      %v285 = vmul.f32 %v273, %v268
      %v286 = vmul.f32 %v273, %v269
      %v287 = vmul.f32 %v273, %v270
      %v288 = vmul.f32 %v273, %v271
      %v289 = vmul.f32 %v273, %v272
      %v290 = vadd.f32 %v240, %v274
      %v291 = vadd.f32 %v241, %v275
      %v292 = vadd.f32 %v242, %v276
      %v293 = vadd.f32 %v243, %v277
      %v294 = vadd.f32 %v244, %v278
      %v295 = vadd.f32 %v245, %v279
      %v296 = vadd.f32 %v246, %v280
      %v297 = vadd.f32 %v247, %v281
      %v298 = vadd.f32 %v248, %v282
      %v299 = vadd.f32 %v249, %v283
      %v300 = vadd.f32 %v250, %v284
      %v301 = vadd.f32 %v251, %v285
      %v302 = vadd.f32 %v252, %v286
      %v303 = vadd.f32 %v253, %v287
      %v304 = vadd.f32 %v254, %v288
      %v305 = vadd.f32 %v255, %v289
      %v306 = vld [vmem:[%s207] sm:$0x77]
      %v307 = vld [vmem:[%s207 + $0x8] sm:$0x77]
      %v308 = vld [vmem:[%s207 + $0x10] sm:$0x77]
      %v309 = vld [vmem:[%s207 + $0x18] sm:$0x77]
      %v310 = vld [vmem:[%s207 + $0x20] sm:$0x77]
      %v311 = vld [vmem:[%s207 + $0x28] sm:$0x77]
      %v312 = vld [vmem:[%s207 + $0x30] sm:$0x77]
      %v313 = vld [vmem:[%s207 + $0x38] sm:$0x77]
      %v314 = vld [vmem:[%s207 + $0x40] sm:$0x77]
      %v315 = vld [vmem:[%s207 + $0x48] sm:$0x77]
      %v316 = vld [vmem:[%s207 + $0x50] sm:$0x77]
      %v317 = vld [vmem:[%s207 + $0x58] sm:$0x77]
      %v318 = vld [vmem:[%s207 + $0x60] sm:$0x77]
      %v319 = vld [vmem:[%s207 + $0x68] sm:$0x77]
      %v320 = vld [vmem:[%s207 + $0x70] sm:$0x77]
      %v321 = vld [vmem:[%s207 + $0x78] sm:$0x77]
      %v322 = vld [vmem:[%s212] sm:$0x77]
      %v323 = vld [vmem:[%s212 + $0x8] sm:$0x77]
      %v324 = vld [vmem:[%s212 + $0x10] sm:$0x77]
      %v325 = vld [vmem:[%s212 + $0x18] sm:$0x77]
      %v326 = vld [vmem:[%s212 + $0x20] sm:$0x77]
      %v327 = vld [vmem:[%s212 + $0x28] sm:$0x77]
      %v328 = vld [vmem:[%s212 + $0x30] sm:$0x77]
      %v329 = vld [vmem:[%s212 + $0x38] sm:$0x77]
      %v330 = vld [vmem:[%s212 + $0x40] sm:$0x77]
      %v331 = vld [vmem:[%s212 + $0x48] sm:$0x77]
      %v332 = vld [vmem:[%s212 + $0x50] sm:$0x77]
      %v333 = vld [vmem:[%s212 + $0x58] sm:$0x77]
      %v334 = vld [vmem:[%s212 + $0x60] sm:$0x77]
      %v335 = vld [vmem:[%s212 + $0x68] sm:$0x77]
      %v336 = vld [vmem:[%s212 + $0x70] sm:$0x77]
      %v337 = vld [vmem:[%s212 + $0x78] sm:$0x77]
      %v338 = vmul.f32 %v306, %v322
      %v339 = vmul.f32 %v307, %v323
      %v340 = vmul.f32 %v308, %v324
      %v341 = vmul.f32 %v309, %v325
      %v342 = vmul.f32 %v310, %v326
      %v343 = vmul.f32 %v311, %v327
      %v344 = vmul.f32 %v312, %v328
      %v345 = vmul.f32 %v313, %v329
      %v346 = vmul.f32 %v314, %v330
      %v347 = vmul.f32 %v315, %v331
      %v348 = vmul.f32 %v316, %v332
      %v349 = vmul.f32 %v317, %v333
      %v350 = vmul.f32 %v318, %v334
      %v351 = vmul.f32 %v319, %v335
      %v352 = vmul.f32 %v320, %v336
      %v353 = vmul.f32 %v321, %v337
      %v354 = vsub.f32 1.0, %v306
      %v355 = vsub.f32 1.0, %v307
      %v356 = vsub.f32 1.0, %v308
      %v357 = vsub.f32 1.0, %v309
      %v358 = vsub.f32 1.0, %v310
      %v359 = vsub.f32 1.0, %v311
      %v360 = vsub.f32 1.0, %v312
      %v361 = vsub.f32 1.0, %v313
      %v362 = vsub.f32 1.0, %v314
      %v363 = vsub.f32 1.0, %v315
      %v364 = vsub.f32 1.0, %v316
      %v365 = vsub.f32 1.0, %v317
      %v366 = vsub.f32 1.0, %v318
      %v367 = vsub.f32 1.0, %v319
      %v368 = vsub.f32 1.0, %v320
      %v369 = vsub.f32 1.0, %v321
      %v370 = vmul.f32 %v354, %v290
      %v371 = vmul.f32 %v355, %v291
      %v372 = vmul.f32 %v356, %v292
      %v373 = vmul.f32 %v357, %v293
      %v374 = vmul.f32 %v358, %v294
      %v375 = vmul.f32 %v359, %v295
      %v376 = vmul.f32 %v360, %v296
      %v377 = vmul.f32 %v361, %v297
      %v378 = vmul.f32 %v362, %v298
      %v379 = vmul.f32 %v363, %v299
      %v380 = vmul.f32 %v364, %v300
      %v381 = vmul.f32 %v365, %v301
      %v382 = vmul.f32 %v366, %v302
      %v383 = vmul.f32 %v367, %v303
      %v384 = vmul.f32 %v368, %v304
      %v385 = vmul.f32 %v369, %v305
      %v386 = vadd.f32 %v338, %v370
      %v387 = vadd.f32 %v339, %v371
      %v388 = vadd.f32 %v340, %v372
      %v389 = vadd.f32 %v341, %v373
      %v390 = vadd.f32 %v342, %v374
      %v391 = vadd.f32 %v343, %v375
      %v392 = vadd.f32 %v344, %v376
      %v393 = vadd.f32 %v345, %v377
      %v394 = vadd.f32 %v346, %v378
      %v395 = vadd.f32 %v347, %v379
      %v396 = vadd.f32 %v348, %v380
      %v397 = vadd.f32 %v349, %v381
      %v398 = vadd.f32 %v350, %v382
      %v399 = vadd.f32 %v351, %v383
      %v400 = vadd.f32 %v352, %v384
      %v401 = vadd.f32 %v353, %v385
      %402 = vst [vmem:[%s217] sm:$0x77] %v386
      %403 = vst [vmem:[%s217 + $0x8] sm:$0x77] %v387
      %404 = vst [vmem:[%s217 + $0x10] sm:$0x77] %v388
      %405 = vst [vmem:[%s217 + $0x18] sm:$0x77] %v389
      %406 = vst [vmem:[%s217 + $0x20] sm:$0x77] %v390
      %407 = vst [vmem:[%s217 + $0x28] sm:$0x77] %v391
      %408 = vst [vmem:[%s217 + $0x30] sm:$0x77] %v392
      %409 = vst [vmem:[%s217 + $0x38] sm:$0x77] %v393
      %410 = vst [vmem:[%s217 + $0x40] sm:$0x77] %v394
      %411 = vst [vmem:[%s217 + $0x48] sm:$0x77] %v395
      %412 = vst [vmem:[%s217 + $0x50] sm:$0x77] %v396
      %413 = vst [vmem:[%s217 + $0x58] sm:$0x77] %v397
      %414 = vst [vmem:[%s217 + $0x60] sm:$0x77] %v398
      %415 = vst [vmem:[%s217 + $0x68] sm:$0x77] %v399
      %416 = vst [vmem:[%s217 + $0x70] sm:$0x77] %v400
      %417 = vst [vmem:[%s217 + $0x78] sm:$0x77] %v401
      %p418 = scmp.lt.s32.totalorder %s15, 1
      %s419 = scalar_select %p418, %s15, 1
      %s420 = smul.addr %s419, 32
      %s421 = smul.addr %s420, 4
      %s422 = scalar_lea.vmem %s4, %s421
      // Predicated region
      $region37: #{tsrvfd_forward.43} parent=35 // pred_check
        %p423 = pneg %p127
      $region38: #{tsrvfd_forward.43} parent=35 // pred_check_branch
        %425 = sbr.rel (%p423) target = $region40
      $region39: #{tsrvfd_forward.43} parent=35 // pred_region
        _
      $region40: #{tsrvfd_forward.43} parent=35 // pred_fallthru
        _
    $region36: #{tsrvfd_forward.43} parent=5 // pred_fallthru
      _
    %p426 = scmp.le.s32.totalorder 2, %s10
    // Predicated region
    $region41: #{tsrvfd_forward.43} parent=5 // pred_check
      %p427 = pneg %p426
    $region42: #{tsrvfd_forward.43} parent=5 // pred_check_branch
      %429 = sbr.rel (%p427) target = $region44
    $region43: #{tsrvfd_forward.43} parent=5 // pred_region
      %s430 = ssub.s32 %s10, 2
      // Predicated region
      $region45: #{tsrvfd_forward.43} parent=43 // pred_check
        %p431 = pneg %p133
      $region46: #{tsrvfd_forward.43} parent=43 // pred_check_branch
        %433 = sbr.rel (%p431) target = $region48
      $region47: #{tsrvfd_forward.43} parent=43 // pred_region
        %p434 = scmp.lt.s32.totalorder %s16, 1
        %s435 = scalar_select %p434, %s16, 1
        %s436 = smul.addr %s435, 32
        %s437 = smul.addr %s436, 4
        %s438 = scalar_lea.vmem %s4, %s437
      $region48: #{tsrvfd_forward.43} parent=43 // pred_fallthru
        _
    $region44: #{tsrvfd_forward.43} parent=5 // pred_fallthru
      _
  $region6: #{tsrvfd_forward.43} parent=0 // loop_footer
    %s14 = sadd.s32 1, %s10
  $region7: #{tsrvfd_forward.43} parent=0 // loop_footer_branch
    %9 = sbr.rel target = $region3
  $region8: #{tsrvfd_forward.43} parent=0 // loop_exit
    _

</llo_original>
